<compile_context>
chip_gen: v7x
topology: tpu7x:2x2x1
jax: 0.10.0
libtpu: 0.0.40
codegen_flags: <defaults>
</compile_context>

<pallas_src>
import functools

import numpy as np

import jax
import jax.numpy as jnp
from jax.experimental import pallas as pl
from jax.experimental.pallas import tpu as pltpu


# ----------------------------------------------------------------------------
# Static network plan, shared by init_params and the kernel so the flat weight
# list and its consumption order can never diverge.
#   ("conv3", cin, cout, act, hw)   3x3 conv, stride 1, pad 1 (+ ELU / tanh)
#   ("conv1", cin, cout, hw)        1x1 conv (no activation)
#   ("pool",  c, hw)                AvgPool2d(2, 2)         hw -> hw // 2
#   ("ups",   c, hw)                nearest x2 upsample     hw -> 2 * hw
#   ("encode", 4d, z, s)            Conv2d(4d, z, kernel=s) on the s x s map
#   ("decode", z, g, s)             ConvTranspose2d(z, g, kernel=s) on 1 x 1
# ----------------------------------------------------------------------------
def build_plan(d, g, z, image_size):
    s = image_size // 16
    plan = []
    hw = image_size

    def enc_block(ci, co):
        nonlocal hw
        plan.append(("conv3", ci, ci, "elu", hw))
        plan.append(("conv3", ci, ci, "elu", hw))
        plan.append(("conv1", ci, co, hw))
        plan.append(("pool", co, hw))
        hw //= 2

    def dec_block(c):
        nonlocal hw
        plan.append(("conv3", c, c, "elu", hw))
        plan.append(("conv3", c, c, "elu", hw))
        plan.append(("ups", c, hw))
        hw *= 2

    # Discriminator (encoder)
    plan.append(("conv3", 3, d, "elu", hw))   # conv1
    enc_block(d, d)                           # conv2
    enc_block(d, 2 * d)                       # conv3
    enc_block(2 * d, 3 * d)                   # conv4
    enc_block(3 * d, 4 * d)                   # conv5
    assert hw == s
    plan.append(("encode", 4 * d, z, s))
    # Generator (decoder)
    plan.append(("decode", z, g, s))
    dec_block(g)                              # de_conv6
    dec_block(g)                              # de_conv5
    dec_block(g)                              # de_conv4
    dec_block(g)                              # de_conv3
    assert hw == image_size
    plan.append(("conv3", g, g, "elu", hw))   # de_conv1
    plan.append(("conv3", g, g, "elu", hw))
    plan.append(("conv3", g, 3, "tanh", hw))
    return plan


# ----------------------------------------------------------------------------
# Fixed pooling / upsampling matrices (constants passed as kernel inputs).
# ----------------------------------------------------------------------------
def _pool_matrix(hw):
    """(hw*hw, (hw//2)**2) bf16: AvgPool2d(2,2) over a row-major hw x hw map."""
    oh = hw // 2
    P = np.zeros((hw * hw, oh * oh), np.float32)
    for h in range(hw):
        for w in range(hw):
            P[h * hw + w, (h // 2) * oh + (w // 2)] = 0.25
    return jnp.asarray(P, dtype=jnp.bfloat16)


def _upsample_matrix(hw):
    """(hw*hw, (2*hw)**2) bf16: nearest x2 upsample of a row-major hw x hw map."""
    ow = 2 * hw
    U = np.zeros((hw * hw, ow * ow), np.float32)
    for h in range(hw):
        for w in range(hw):
            for a in range(2):
                for b in range(2):
                    U[h * hw + w, (2 * h + a) * ow + (2 * w + b)] = 1.0
    return jnp.asarray(U, dtype=jnp.bfloat16)


# ----------------------------------------------------------------------------
# Synthetic parameters (flat list, plan order).
# ----------------------------------------------------------------------------
def init_params(key, plan):
    std = 0.05
    n_keys = 2 * sum(op[0] in ("conv3", "conv1", "encode", "decode") for op in plan)
    keys = iter(jax.random.split(key, n_keys))

    def rnd(shape, dtype):
        return (std * jax.random.normal(next(keys), shape, jnp.float32)).astype(dtype)

    params = []
    for op in plan:
        kind = op[0]
        if kind == "conv3":
            _, ci, co, _act, _hw = op
            params.append(rnd((co, 9 * ci), jnp.bfloat16))
            params.append(rnd((co, 1), jnp.float32))
        elif kind == "conv1":
            _, ci, co, _hw = op
            params.append(rnd((co, ci), jnp.bfloat16))
            params.append(rnd((co, 1), jnp.float32))
        elif kind == "pool":
            _, _c, hw = op
            params.append(_pool_matrix(hw))
        elif kind == "ups":
            _, _c, hw = op
            if hw > 1:                 # 1x1 -> 2x2 upsample is a concat in-kernel
                params.append(_upsample_matrix(hw))
        elif kind == "encode":
            _, ci, zz, s = op
            params.append(rnd((s * s, zz, ci), jnp.bfloat16))
            params.append(rnd((zz, 1), jnp.float32))
        elif kind == "decode":
            _, zz, go, s = op
            params.append(rnd((s * s, go, zz), jnp.bfloat16))
            params.append(rnd((go, 1), jnp.float32))
    return params


# ----------------------------------------------------------------------------
# In-kernel building blocks (channel-major (C, H*W) f32 values).
# ----------------------------------------------------------------------------
def _elu(x):
    # nn.ELU(alpha=1): x if x > 0 else exp(x) - 1 (min() guards exp overflow).
    return jnp.where(x > 0.0, x, jnp.exp(jnp.minimum(x, 0.0)) - 1.0)


def _conv3x3(y, w, b, ci, co, hw):
    """3x3 conv, stride 1, zero-pad 1, as ONE lane-dense im2col MXU matmul.

    y: (ci, hw*hw) f32 (row-major (h, w) on lanes)
    w: (co, 9*ci) bf16, tap-major K;  b: (co, 1) f32.
    Returns (co, hw*hw) f32.
    """
    n = hw * hw
    if hw > 1:
        col = jax.lax.broadcasted_iota(jnp.int32, (1, n), 1) % hw
        mask_l = col >= 1            # valid output columns for ox = -1
        mask_r = col < (hw - 1)      # valid output columns for ox = +1
    taps = []
    for oy in (-1, 0, 1):
        for ox in (-1, 0, 1):
            if hw == 1:              # 1x1 map: only the centre tap is real
                taps.append(y if (oy == 0 and ox == 0)
                            else jnp.zeros((ci, n), y.dtype))
                continue
            k = oy * hw + ox         # flat lane shift: tap[p] = y[p + k]
            if k > 0:
                t = jnp.concatenate(
                    [y[:, k:], jnp.zeros((ci, k), y.dtype)], axis=1)
            elif k < 0:
                t = jnp.concatenate(
                    [jnp.zeros((ci, -k), y.dtype), y[:, :k]], axis=1)
            else:
                t = y
            if ox == -1:
                t = jnp.where(mask_l, t, 0.0)
            elif ox == 1:
                t = jnp.where(mask_r, t, 0.0)
            taps.append(t)
    patches = jnp.concatenate(taps, axis=0).astype(jnp.bfloat16)   # (9*ci, n)
    return jnp.dot(w, patches, preferred_element_type=jnp.float32) + b


# ----------------------------------------------------------------------------
# The fused kernel: whole D.forward for one batch element.
# ----------------------------------------------------------------------------
def _make_kernel(plan):
    def kernel(*refs):
        x_ref, o_ref = refs[0], refs[-1]
        it = iter(refs[1:-1])

        y = x_ref[0].astype(jnp.float32)            # (3, H*W), channel-major
        for op in plan:
            kind = op[0]
            if kind == "conv3":
                _, ci, co, act, hw = op
                w = next(it)[...]
                b = next(it)[...]
                y = _conv3x3(y, w, b, ci, co, hw)
                if act == "elu":
                    y = _elu(y)
                elif act == "tanh":
                    y = jnp.tanh(y)
            elif kind == "conv1":
                _, ci, co, hw = op
                w = next(it)[...]
                b = next(it)[...]
                y = jnp.dot(w, y.astype(jnp.bfloat16),
                            preferred_element_type=jnp.float32) + b
            elif kind == "pool":
                _, _c, hw = op
                P = next(it)[...]
                y = jnp.dot(y.astype(jnp.bfloat16), P,
                            preferred_element_type=jnp.float32)
            elif kind == "ups":
                _, _c, hw = op
                if hw == 1:                          # 1x1 -> 2x2 nearest
                    y = jnp.concatenate([y, y, y, y], axis=1)
                else:
                    U = next(it)[...]
                    y = jnp.dot(y.astype(jnp.bfloat16), U,
                                preferred_element_type=jnp.float32)
            elif kind == "encode":
                _, ci, zz, s = op
                we_ref = next(it)                    # (s*s, z, 4d) bf16
                be = next(it)[...]                   # (z, 1)       f32
                yb = y.astype(jnp.bfloat16)          # (4d, s*s)
                acc = be
                for p in range(s * s):               # single dot when s == 1
                    acc = acc + jnp.dot(we_ref[p], yb[:, p:p + 1],
                                        preferred_element_type=jnp.float32)
                y = acc                              # h: (z, 1)
            elif kind == "decode":
                _, zz, go, s = op
                wd_ref = next(it)                    # (s*s, g, z) bf16
                bd = next(it)[...]                   # (g, 1)      f32
                hb = y.astype(jnp.bfloat16)          # (z, 1)
                cols = [jnp.dot(wd_ref[p], hb, preferred_element_type=jnp.float32)
                        for p in range(s * s)]
                y = (cols[0] if len(cols) == 1
                     else jnp.concatenate(cols, axis=1)) + bd      # (g, s*s)
        o_ref[...] = y[None].astype(o_ref.dtype)     # (1, 3, H*W), lane-dense
    return kernel


# ----------------------------------------------------------------------------
# Wrapper: one pallas_call for the whole forward pass, grid=(batch,) parallel.
# ----------------------------------------------------------------------------
def d_forward(params, x_nchw, *, plan):
    N, C, H, W = x_nchw.shape
    n = H * W
    x = x_nchw.reshape(N, C, n)      # flattened NCHW == channel-major layout

    def const_map(nd):
        return lambda i: (0,) * nd

    in_specs = [pl.BlockSpec((1, C, n), lambda i: (i, 0, 0))]
    in_specs += [pl.BlockSpec(tuple(p.shape), const_map(p.ndim)) for p in params]

    out = pl.pallas_call(
        _make_kernel(plan),
        out_shape=jax.ShapeDtypeStruct((N, 3, n), jnp.float32),
        grid=(N,),
        in_specs=in_specs,
        out_specs=pl.BlockSpec((1, 3, n), lambda i: (i, 0, 0)),
        compiler_params=pltpu.CompilerParams(
            dimension_semantics=("parallel",),
            vmem_limit_bytes=32 * 1024 * 1024,
        ),
    )(x, *params)
    return out.reshape(N, 3, H, W)


# ----------------------------------------------------------------------------
if __name__ == "__main__":
    d_conv_dim, g_conv_dim, image_size, z_dim = 4, 4, 16, 8
    batch = 2

    key = jax.random.PRNGKey(0)
    kp, kx = jax.random.split(key)
    plan = build_plan(d_conv_dim, g_conv_dim, z_dim, image_size)
    params = init_params(kp, plan)
    x = jax.random.normal(kx, (batch, 3, image_size, image_size), jnp.float32)

    fwd = jax.jit(functools.partial(d_forward, plan=plan))
    out = fwd(params, x)
    jax.block_until_ready(out)

    assert out.shape == (batch, 3, image_size, image_size), out.shape
    assert out.dtype == jnp.float32
    assert bool(jnp.all(jnp.isfinite(out)))
    print("KERNEL_OK")
</pallas_src>

<mosaic_0001>
module attributes {stable_mosaic.version = 11 : i64} {
  func.func @kernel(%arg0: i32, %arg1: memref<1x3x256xf32, #tpu.memory_space<vmem>>, %arg2: memref<4x27xbf16, #tpu.memory_space<vmem>>, %arg3: memref<4x1xf32, #tpu.memory_space<vmem>>, %arg4: memref<4x36xbf16, #tpu.memory_space<vmem>>, %arg5: memref<4x1xf32, #tpu.memory_space<vmem>>, %arg6: memref<4x36xbf16, #tpu.memory_space<vmem>>, %arg7: memref<4x1xf32, #tpu.memory_space<vmem>>, %arg8: memref<4x4xbf16, #tpu.memory_space<vmem>>, %arg9: memref<4x1xf32, #tpu.memory_space<vmem>>, %arg10: memref<256x64xbf16, #tpu.memory_space<vmem>>, %arg11: memref<4x36xbf16, #tpu.memory_space<vmem>>, %arg12: memref<4x1xf32, #tpu.memory_space<vmem>>, %arg13: memref<4x36xbf16, #tpu.memory_space<vmem>>, %arg14: memref<4x1xf32, #tpu.memory_space<vmem>>, %arg15: memref<8x4xbf16, #tpu.memory_space<vmem>>, %arg16: memref<8x1xf32, #tpu.memory_space<vmem>>, %arg17: memref<64x16xbf16, #tpu.memory_space<vmem>>, %arg18: memref<8x72xbf16, #tpu.memory_space<vmem>>, %arg19: memref<8x1xf32, #tpu.memory_space<vmem>>, %arg20: memref<8x72xbf16, #tpu.memory_space<vmem>>, %arg21: memref<8x1xf32, #tpu.memory_space<vmem>>, %arg22: memref<12x8xbf16, #tpu.memory_space<vmem>>, %arg23: memref<12x1xf32, #tpu.memory_space<vmem>>, %arg24: memref<16x4xbf16, #tpu.memory_space<vmem>>, %arg25: memref<12x108xbf16, #tpu.memory_space<vmem>>, %arg26: memref<12x1xf32, #tpu.memory_space<vmem>>, %arg27: memref<12x108xbf16, #tpu.memory_space<vmem>>, %arg28: memref<12x1xf32, #tpu.memory_space<vmem>>, %arg29: memref<16x12xbf16, #tpu.memory_space<vmem>>, %arg30: memref<16x1xf32, #tpu.memory_space<vmem>>, %arg31: memref<4x1xbf16, #tpu.memory_space<vmem>>, %arg32: memref<1x8x16xbf16, #tpu.memory_space<vmem>>, %arg33: memref<8x1xf32, #tpu.memory_space<vmem>>, %arg34: memref<1x4x8xbf16, #tpu.memory_space<vmem>>, %arg35: memref<4x1xf32, #tpu.memory_space<vmem>>, %arg36: memref<4x36xbf16, #tpu.memory_space<vmem>>, %arg37: memref<4x1xf32, #tpu.memory_space<vmem>>, %arg38: memref<4x36xbf16, #tpu.memory_space<vmem>>, %arg39: memref<4x1xf32, #tpu.memory_space<vmem>>, %arg40: memref<4x36xbf16, #tpu.memory_space<vmem>>, %arg41: memref<4x1xf32, #tpu.memory_space<vmem>>, %arg42: memref<4x36xbf16, #tpu.memory_space<vmem>>, %arg43: memref<4x1xf32, #tpu.memory_space<vmem>>, %arg44: memref<4x16xbf16, #tpu.memory_space<vmem>>, %arg45: memref<4x36xbf16, #tpu.memory_space<vmem>>, %arg46: memref<4x1xf32, #tpu.memory_space<vmem>>, %arg47: memref<4x36xbf16, #tpu.memory_space<vmem>>, %arg48: memref<4x1xf32, #tpu.memory_space<vmem>>, %arg49: memref<16x64xbf16, #tpu.memory_space<vmem>>, %arg50: memref<4x36xbf16, #tpu.memory_space<vmem>>, %arg51: memref<4x1xf32, #tpu.memory_space<vmem>>, %arg52: memref<4x36xbf16, #tpu.memory_space<vmem>>, %arg53: memref<4x1xf32, #tpu.memory_space<vmem>>, %arg54: memref<64x256xbf16, #tpu.memory_space<vmem>>, %arg55: memref<4x36xbf16, #tpu.memory_space<vmem>>, %arg56: memref<4x1xf32, #tpu.memory_space<vmem>>, %arg57: memref<4x36xbf16, #tpu.memory_space<vmem>>, %arg58: memref<4x1xf32, #tpu.memory_space<vmem>>, %arg59: memref<3x36xbf16, #tpu.memory_space<vmem>>, %arg60: memref<3x1xf32, #tpu.memory_space<vmem>>, %arg61: memref<1x3x256xf32, #tpu.memory_space<vmem>>) attributes {dimension_semantics = [#tpu.dimension_semantics<parallel>], iteration_bounds = array<i64: 2>, scalar_prefetch = 0 : i64, scratch_operands = 0 : i64, tpu.core_type = #tpu.core_type<tc>, window_params = [{transform_indices = @transform_0, window_bounds = array<i64: 1, 3, 256>}, {pipeline_mode = #tpu.pipeline_mode<synchronous>, transform_indices = @transform_1, window_bounds = array<i64: 4, 27>}, {pipeline_mode = #tpu.pipeline_mode<synchronous>, transform_indices = @transform_2, window_bounds = array<i64: 4, 1>}, {pipeline_mode = #tpu.pipeline_mode<synchronous>, transform_indices = @transform_3, window_bounds = array<i64: 4, 36>}, {pipeline_mode = #tpu.pipeline_mode<synchronous>, transform_indices = @transform_4, window_bounds = array<i64: 4, 1>}, {pipeline_mode = #tpu.pipeline_mode<synchronous>, transform_indices = @transform_5, window_bounds = array<i64: 4, 36>}, {pipeline_mode = #tpu.pipeline_mode<synchronous>, transform_indices = @transform_6, window_bounds = array<i64: 4, 1>}, {pipeline_mode = #tpu.pipeline_mode<synchronous>, transform_indices = @transform_7, window_bounds = array<i64: 4, 4>}, {pipeline_mode = #tpu.pipeline_mode<synchronous>, transform_indices = @transform_8, window_bounds = array<i64: 4, 1>}, {pipeline_mode = #tpu.pipeline_mode<synchronous>, transform_indices = @transform_9, window_bounds = array<i64: 256, 64>}, {pipeline_mode = #tpu.pipeline_mode<synchronous>, transform_indices = @transform_10, window_bounds = array<i64: 4, 36>}, {pipeline_mode = #tpu.pipeline_mode<synchronous>, transform_indices = @transform_11, window_bounds = array<i64: 4, 1>}, {pipeline_mode = #tpu.pipeline_mode<synchronous>, transform_indices = @transform_12, window_bounds = array<i64: 4, 36>}, {pipeline_mode = #tpu.pipeline_mode<synchronous>, transform_indices = @transform_13, window_bounds = array<i64: 4, 1>}, {pipeline_mode = #tpu.pipeline_mode<synchronous>, transform_indices = @transform_14, window_bounds = array<i64: 8, 4>}, {pipeline_mode = #tpu.pipeline_mode<synchronous>, transform_indices = @transform_15, window_bounds = array<i64: 8, 1>}, {pipeline_mode = #tpu.pipeline_mode<synchronous>, transform_indices = @transform_16, window_bounds = array<i64: 64, 16>}, {pipeline_mode = #tpu.pipeline_mode<synchronous>, transform_indices = @transform_17, window_bounds = array<i64: 8, 72>}, {pipeline_mode = #tpu.pipeline_mode<synchronous>, transform_indices = @transform_18, window_bounds = array<i64: 8, 1>}, {pipeline_mode = #tpu.pipeline_mode<synchronous>, transform_indices = @transform_19, window_bounds = array<i64: 8, 72>}, {pipeline_mode = #tpu.pipeline_mode<synchronous>, transform_indices = @transform_20, window_bounds = array<i64: 8, 1>}, {pipeline_mode = #tpu.pipeline_mode<synchronous>, transform_indices = @transform_21, window_bounds = array<i64: 12, 8>}, {pipeline_mode = #tpu.pipeline_mode<synchronous>, transform_indices = @transform_22, window_bounds = array<i64: 12, 1>}, {pipeline_mode = #tpu.pipeline_mode<synchronous>, transform_indices = @transform_23, window_bounds = array<i64: 16, 4>}, {pipeline_mode = #tpu.pipeline_mode<synchronous>, transform_indices = @transform_24, window_bounds = array<i64: 12, 108>}, {pipeline_mode = #tpu.pipeline_mode<synchronous>, transform_indices = @transform_25, window_bounds = array<i64: 12, 1>}, {pipeline_mode = #tpu.pipeline_mode<synchronous>, transform_indices = @transform_26, window_bounds = array<i64: 12, 108>}, {pipeline_mode = #tpu.pipeline_mode<synchronous>, transform_indices = @transform_27, window_bounds = array<i64: 12, 1>}, {pipeline_mode = #tpu.pipeline_mode<synchronous>, transform_indices = @transform_28, window_bounds = array<i64: 16, 12>}, {pipeline_mode = #tpu.pipeline_mode<synchronous>, transform_indices = @transform_29, window_bounds = array<i64: 16, 1>}, {pipeline_mode = #tpu.pipeline_mode<synchronous>, transform_indices = @transform_30, window_bounds = array<i64: 4, 1>}, {pipeline_mode = #tpu.pipeline_mode<synchronous>, transform_indices = @transform_31, window_bounds = array<i64: 1, 8, 16>}, {pipeline_mode = #tpu.pipeline_mode<synchronous>, transform_indices = @transform_32, window_bounds = array<i64: 8, 1>}, {pipeline_mode = #tpu.pipeline_mode<synchronous>, transform_indices = @transform_33, window_bounds = array<i64: 1, 4, 8>}, {pipeline_mode = #tpu.pipeline_mode<synchronous>, transform_indices = @transform_34, window_bounds = array<i64: 4, 1>}, {pipeline_mode = #tpu.pipeline_mode<synchronous>, transform_indices = @transform_35, window_bounds = array<i64: 4, 36>}, {pipeline_mode = #tpu.pipeline_mode<synchronous>, transform_indices = @transform_36, window_bounds = array<i64: 4, 1>}, {pipeline_mode = #tpu.pipeline_mode<synchronous>, transform_indices = @transform_37, window_bounds = array<i64: 4, 36>}, {pipeline_mode = #tpu.pipeline_mode<synchronous>, transform_indices = @transform_38, window_bounds = array<i64: 4, 1>}, {pipeline_mode = #tpu.pipeline_mode<synchronous>, transform_indices = @transform_39, window_bounds = array<i64: 4, 36>}, {pipeline_mode = #tpu.pipeline_mode<synchronous>, transform_indices = @transform_40, window_bounds = array<i64: 4, 1>}, {pipeline_mode = #tpu.pipeline_mode<synchronous>, transform_indices = @transform_41, window_bounds = array<i64: 4, 36>}, {pipeline_mode = #tpu.pipeline_mode<synchronous>, transform_indices = @transform_42, window_bounds = array<i64: 4, 1>}, {pipeline_mode = #tpu.pipeline_mode<synchronous>, transform_indices = @transform_43, window_bounds = array<i64: 4, 16>}, {pipeline_mode = #tpu.pipeline_mode<synchronous>, transform_indices = @transform_44, window_bounds = array<i64: 4, 36>}, {pipeline_mode = #tpu.pipeline_mode<synchronous>, transform_indices = @transform_45, window_bounds = array<i64: 4, 1>}, {pipeline_mode = #tpu.pipeline_mode<synchronous>, transform_indices = @transform_46, window_bounds = array<i64: 4, 36>}, {pipeline_mode = #tpu.pipeline_mode<synchronous>, transform_indices = @transform_47, window_bounds = array<i64: 4, 1>}, {pipeline_mode = #tpu.pipeline_mode<synchronous>, transform_indices = @transform_48, window_bounds = array<i64: 16, 64>}, {pipeline_mode = #tpu.pipeline_mode<synchronous>, transform_indices = @transform_49, window_bounds = array<i64: 4, 36>}, {pipeline_mode = #tpu.pipeline_mode<synchronous>, transform_indices = @transform_50, window_bounds = array<i64: 4, 1>}, {pipeline_mode = #tpu.pipeline_mode<synchronous>, transform_indices = @transform_51, window_bounds = array<i64: 4, 36>}, {pipeline_mode = #tpu.pipeline_mode<synchronous>, transform_indices = @transform_52, window_bounds = array<i64: 4, 1>}, {pipeline_mode = #tpu.pipeline_mode<synchronous>, transform_indices = @transform_53, window_bounds = array<i64: 64, 256>}, {pipeline_mode = #tpu.pipeline_mode<synchronous>, transform_indices = @transform_54, window_bounds = array<i64: 4, 36>}, {pipeline_mode = #tpu.pipeline_mode<synchronous>, transform_indices = @transform_55, window_bounds = array<i64: 4, 1>}, {pipeline_mode = #tpu.pipeline_mode<synchronous>, transform_indices = @transform_56, window_bounds = array<i64: 4, 36>}, {pipeline_mode = #tpu.pipeline_mode<synchronous>, transform_indices = @transform_57, window_bounds = array<i64: 4, 1>}, {pipeline_mode = #tpu.pipeline_mode<synchronous>, transform_indices = @transform_58, window_bounds = array<i64: 3, 36>}, {pipeline_mode = #tpu.pipeline_mode<synchronous>, transform_indices = @transform_59, window_bounds = array<i64: 3, 1>}, {transform_indices = @transform_60, window_bounds = array<i64: 1, 3, 256>}]} {
    %c0 = arith.constant 0 : index
    %c0_0 = arith.constant 0 : index
    %c0_1 = arith.constant 0 : index
    %0 = vector.load %arg1[%c0, %c0_0, %c0_1] : memref<1x3x256xf32, #tpu.memory_space<vmem>>, vector<1x3x256xf32>
    %1 = vector.shape_cast %0 : vector<1x3x256xf32> to vector<3x256xf32>
    %c0_2 = arith.constant 0 : index
    %c0_3 = arith.constant 0 : index
    %2 = vector.load %arg2[%c0_2, %c0_3] : memref<4x27xbf16, #tpu.memory_space<vmem>>, vector<4x27xbf16>
    %c0_4 = arith.constant 0 : index
    %c0_5 = arith.constant 0 : index
    %3 = vector.load %arg3[%c0_4, %c0_5] : memref<4x1xf32, #tpu.memory_space<vmem>>, vector<4x1xf32>
    %4 = tpu.iota {dimensions = array<i32: 1>} : vector<1x256xi32>
    %c16_i32 = arith.constant 16 : i32
    %c0_i32 = arith.constant 0 : i32
    %5 = arith.cmpi eq, %c16_i32, %c0_i32 : i32
    %c1_i32 = arith.constant 1 : i32
    %6 = arith.select %5, %c1_i32, %c16_i32 : i32
    %7 = vector.broadcast %6 : i32 to vector<1x256xi32>
    %8 = arith.remsi %4, %7 : vector<1x256xi32>
    %c0_i32_6 = arith.constant 0 : i32
    %9 = vector.broadcast %c0_i32_6 : i32 to vector<1x256xi32>
    %10 = arith.cmpi ne, %8, %9 : vector<1x256xi32>
    %c0_i32_7 = arith.constant 0 : i32
    %11 = vector.broadcast %c0_i32_7 : i32 to vector<1x256xi32>
    %12 = arith.cmpi slt, %8, %11 : vector<1x256xi32>
    %c0_i32_8 = arith.constant 0 : i32
    %13 = arith.cmpi slt, %6, %c0_i32_8 : i32
    %14 = vector.broadcast %13 : i1 to vector<1x256xi1>
    %15 = vector.broadcast %14 : vector<1x256xi1> to vector<1x256xi1>
    %16 = arith.xori %12, %15 : vector<1x256xi1>
    %17 = arith.andi %16, %10 : vector<1x256xi1>
    %18 = vector.broadcast %6 : i32 to vector<1x256xi32>
    %19 = arith.addi %8, %18 : vector<1x256xi32>
    %20 = arith.select %17, %19, %8 : vector<1x256xi1>, vector<1x256xi32>
    %c1_i32_9 = arith.constant 1 : i32
    %21 = vector.broadcast %c1_i32_9 : i32 to vector<1x256xi32>
    %22 = arith.cmpi sge, %20, %21 : vector<1x256xi32>
    %c15_i32 = arith.constant 15 : i32
    %23 = vector.broadcast %c15_i32 : i32 to vector<1x256xi32>
    %24 = arith.cmpi slt, %20, %23 : vector<1x256xi32>
    %cst = arith.constant 0.000000e+00 : f32
    %25 = vector.broadcast %cst : f32 to vector<3x17xf32>
    %26 = vector.extract_strided_slice %1 {offsets = [0, 0], sizes = [3, 239], strides = [1, 1]} : vector<3x256xf32> to vector<3x239xf32>
    %27 = tpu.concatenate %25, %26 in 1 : vector<3x17xf32>, vector<3x239xf32> -> vector<3x256xf32>
    %cst_10 = arith.constant 0.000000e+00 : f32
    %28 = vector.shape_cast %22 : vector<1x256xi1> to vector<1x256xi1>
    %29 = vector.broadcast %28 : vector<1x256xi1> to vector<3x256xi1>
    %30 = vector.broadcast %cst_10 : f32 to vector<3x256xf32>
    %31 = arith.select %29, %27, %30 : vector<3x256xi1>, vector<3x256xf32>
    %cst_11 = arith.constant 0.000000e+00 : f32
    %32 = vector.broadcast %cst_11 : f32 to vector<3x16xf32>
    %33 = vector.extract_strided_slice %1 {offsets = [0, 0], sizes = [3, 240], strides = [1, 1]} : vector<3x256xf32> to vector<3x240xf32>
    %34 = tpu.concatenate %32, %33 in 1 : vector<3x16xf32>, vector<3x240xf32> -> vector<3x256xf32>
    %cst_12 = arith.constant 0.000000e+00 : f32
    %35 = vector.broadcast %cst_12 : f32 to vector<3x15xf32>
    %36 = vector.extract_strided_slice %1 {offsets = [0, 0], sizes = [3, 241], strides = [1, 1]} : vector<3x256xf32> to vector<3x241xf32>
    %37 = tpu.concatenate %35, %36 in 1 : vector<3x15xf32>, vector<3x241xf32> -> vector<3x256xf32>
    %cst_13 = arith.constant 0.000000e+00 : f32
    %38 = vector.shape_cast %24 : vector<1x256xi1> to vector<1x256xi1>
    %39 = vector.broadcast %38 : vector<1x256xi1> to vector<3x256xi1>
    %40 = vector.broadcast %cst_13 : f32 to vector<3x256xf32>
    %41 = arith.select %39, %37, %40 : vector<3x256xi1>, vector<3x256xf32>
    %cst_14 = arith.constant 0.000000e+00 : f32
    %42 = vector.broadcast %cst_14 : f32 to vector<3x1xf32>
    %43 = vector.extract_strided_slice %1 {offsets = [0, 0], sizes = [3, 255], strides = [1, 1]} : vector<3x256xf32> to vector<3x255xf32>
    %44 = tpu.concatenate %42, %43 in 1 : vector<3x1xf32>, vector<3x255xf32> -> vector<3x256xf32>
    %cst_15 = arith.constant 0.000000e+00 : f32
    %45 = vector.shape_cast %22 : vector<1x256xi1> to vector<1x256xi1>
    %46 = vector.broadcast %45 : vector<1x256xi1> to vector<3x256xi1>
    %47 = vector.broadcast %cst_15 : f32 to vector<3x256xf32>
    %48 = arith.select %46, %44, %47 : vector<3x256xi1>, vector<3x256xf32>
    %49 = vector.extract_strided_slice %1 {offsets = [0, 1], sizes = [3, 255], strides = [1, 1]} : vector<3x256xf32> to vector<3x255xf32>
    %cst_16 = arith.constant 0.000000e+00 : f32
    %50 = vector.broadcast %cst_16 : f32 to vector<3x1xf32>
    %51 = tpu.concatenate %49, %50 in 1 : vector<3x255xf32>, vector<3x1xf32> -> vector<3x256xf32>
    %cst_17 = arith.constant 0.000000e+00 : f32
    %52 = vector.shape_cast %24 : vector<1x256xi1> to vector<1x256xi1>
    %53 = vector.broadcast %52 : vector<1x256xi1> to vector<3x256xi1>
    %54 = vector.broadcast %cst_17 : f32 to vector<3x256xf32>
    %55 = arith.select %53, %51, %54 : vector<3x256xi1>, vector<3x256xf32>
    %56 = vector.extract_strided_slice %1 {offsets = [0, 15], sizes = [3, 241], strides = [1, 1]} : vector<3x256xf32> to vector<3x241xf32>
    %cst_18 = arith.constant 0.000000e+00 : f32
    %57 = vector.broadcast %cst_18 : f32 to vector<3x15xf32>
    %58 = tpu.concatenate %56, %57 in 1 : vector<3x241xf32>, vector<3x15xf32> -> vector<3x256xf32>
    %cst_19 = arith.constant 0.000000e+00 : f32
    %59 = vector.shape_cast %22 : vector<1x256xi1> to vector<1x256xi1>
    %60 = vector.broadcast %59 : vector<1x256xi1> to vector<3x256xi1>
    %61 = vector.broadcast %cst_19 : f32 to vector<3x256xf32>
    %62 = arith.select %60, %58, %61 : vector<3x256xi1>, vector<3x256xf32>
    %63 = vector.extract_strided_slice %1 {offsets = [0, 16], sizes = [3, 240], strides = [1, 1]} : vector<3x256xf32> to vector<3x240xf32>
    %cst_20 = arith.constant 0.000000e+00 : f32
    %64 = vector.broadcast %cst_20 : f32 to vector<3x16xf32>
    %65 = tpu.concatenate %63, %64 in 1 : vector<3x240xf32>, vector<3x16xf32> -> vector<3x256xf32>
    %66 = vector.extract_strided_slice %1 {offsets = [0, 17], sizes = [3, 239], strides = [1, 1]} : vector<3x256xf32> to vector<3x239xf32>
    %cst_21 = arith.constant 0.000000e+00 : f32
    %67 = vector.broadcast %cst_21 : f32 to vector<3x17xf32>
    %68 = tpu.concatenate %66, %67 in 1 : vector<3x239xf32>, vector<3x17xf32> -> vector<3x256xf32>
    %cst_22 = arith.constant 0.000000e+00 : f32
    %69 = vector.shape_cast %24 : vector<1x256xi1> to vector<1x256xi1>
    %70 = vector.broadcast %69 : vector<1x256xi1> to vector<3x256xi1>
    %71 = vector.broadcast %cst_22 : f32 to vector<3x256xf32>
    %72 = arith.select %70, %68, %71 : vector<3x256xi1>, vector<3x256xf32>
    %73 = tpu.concatenate %31, %34, %41, %48, %1, %55, %62, %65, %72 in 0 : vector<3x256xf32>, vector<3x256xf32>, vector<3x256xf32>, vector<3x256xf32>, vector<3x256xf32>, vector<3x256xf32>, vector<3x256xf32>, vector<3x256xf32>, vector<3x256xf32> -> vector<27x256xf32>
    %74 = arith.truncf %73 : vector<27x256xf32> to vector<27x256xbf16>
    %cst_23 = arith.constant dense<0.000000e+00> : vector<4x256xf32>
    %75 = tpu.matmul %2, %74, %cst_23 {dimension_numbers = #tpu.dot_dimension_numbers<[1], [0], [0], [1], [0, 0, 1, 1], [], []>} : vector<4x27xbf16>, vector<27x256xbf16>, vector<4x256xf32> -> vector<4x256xf32>
    %76 = vector.broadcast %3 : vector<4x1xf32> to vector<4x256xf32>
    %77 = arith.addf %75, %76 : vector<4x256xf32>
    %cst_24 = arith.constant 0.000000e+00 : f32
    %78 = vector.broadcast %cst_24 : f32 to vector<4x256xf32>
    %79 = arith.cmpf ogt, %77, %78 : vector<4x256xf32>
    %cst_25 = arith.constant 0.000000e+00 : f32
    %80 = vector.broadcast %cst_25 : f32 to vector<4x256xf32>
    %81 = arith.minimumf %77, %80 : vector<4x256xf32>
    %82 = math.exp %81 : vector<4x256xf32>
    %cst_26 = arith.constant 1.000000e+00 : f32
    %83 = vector.broadcast %cst_26 : f32 to vector<4x256xf32>
    %84 = arith.subf %82, %83 : vector<4x256xf32>
    %85 = arith.select %79, %77, %84 : vector<4x256xi1>, vector<4x256xf32>
    %c0_27 = arith.constant 0 : index
    %c0_28 = arith.constant 0 : index
    %86 = vector.load %arg4[%c0_27, %c0_28] : memref<4x36xbf16, #tpu.memory_space<vmem>>, vector<4x36xbf16>
    %c0_29 = arith.constant 0 : index
    %c0_30 = arith.constant 0 : index
    %87 = vector.load %arg5[%c0_29, %c0_30] : memref<4x1xf32, #tpu.memory_space<vmem>>, vector<4x1xf32>
    %88 = tpu.iota {dimensions = array<i32: 1>} : vector<1x256xi32>
    %c16_i32_31 = arith.constant 16 : i32
    %c0_i32_32 = arith.constant 0 : i32
    %89 = arith.cmpi eq, %c16_i32_31, %c0_i32_32 : i32
    %c1_i32_33 = arith.constant 1 : i32
    %90 = arith.select %89, %c1_i32_33, %c16_i32_31 : i32
    %91 = vector.broadcast %90 : i32 to vector<1x256xi32>
    %92 = arith.remsi %88, %91 : vector<1x256xi32>
    %c0_i32_34 = arith.constant 0 : i32
    %93 = vector.broadcast %c0_i32_34 : i32 to vector<1x256xi32>
    %94 = arith.cmpi ne, %92, %93 : vector<1x256xi32>
    %c0_i32_35 = arith.constant 0 : i32
    %95 = vector.broadcast %c0_i32_35 : i32 to vector<1x256xi32>
    %96 = arith.cmpi slt, %92, %95 : vector<1x256xi32>
    %c0_i32_36 = arith.constant 0 : i32
    %97 = arith.cmpi slt, %90, %c0_i32_36 : i32
    %98 = vector.broadcast %97 : i1 to vector<1x256xi1>
    %99 = vector.broadcast %98 : vector<1x256xi1> to vector<1x256xi1>
    %100 = arith.xori %96, %99 : vector<1x256xi1>
    %101 = arith.andi %100, %94 : vector<1x256xi1>
    %102 = vector.broadcast %90 : i32 to vector<1x256xi32>
    %103 = arith.addi %92, %102 : vector<1x256xi32>
    %104 = arith.select %101, %103, %92 : vector<1x256xi1>, vector<1x256xi32>
    %c1_i32_37 = arith.constant 1 : i32
    %105 = vector.broadcast %c1_i32_37 : i32 to vector<1x256xi32>
    %106 = arith.cmpi sge, %104, %105 : vector<1x256xi32>
    %c15_i32_38 = arith.constant 15 : i32
    %107 = vector.broadcast %c15_i32_38 : i32 to vector<1x256xi32>
    %108 = arith.cmpi slt, %104, %107 : vector<1x256xi32>
    %cst_39 = arith.constant 0.000000e+00 : f32
    %109 = vector.broadcast %cst_39 : f32 to vector<4x17xf32>
    %110 = vector.extract_strided_slice %85 {offsets = [0, 0], sizes = [4, 239], strides = [1, 1]} : vector<4x256xf32> to vector<4x239xf32>
    %111 = tpu.concatenate %109, %110 in 1 : vector<4x17xf32>, vector<4x239xf32> -> vector<4x256xf32>
    %cst_40 = arith.constant 0.000000e+00 : f32
    %112 = vector.shape_cast %106 : vector<1x256xi1> to vector<1x256xi1>
    %113 = vector.broadcast %112 : vector<1x256xi1> to vector<4x256xi1>
    %114 = vector.broadcast %cst_40 : f32 to vector<4x256xf32>
    %115 = arith.select %113, %111, %114 : vector<4x256xi1>, vector<4x256xf32>
    %cst_41 = arith.constant 0.000000e+00 : f32
    %116 = vector.broadcast %cst_41 : f32 to vector<4x16xf32>
    %117 = vector.extract_strided_slice %85 {offsets = [0, 0], sizes = [4, 240], strides = [1, 1]} : vector<4x256xf32> to vector<4x240xf32>
    %118 = tpu.concatenate %116, %117 in 1 : vector<4x16xf32>, vector<4x240xf32> -> vector<4x256xf32>
    %cst_42 = arith.constant 0.000000e+00 : f32
    %119 = vector.broadcast %cst_42 : f32 to vector<4x15xf32>
    %120 = vector.extract_strided_slice %85 {offsets = [0, 0], sizes = [4, 241], strides = [1, 1]} : vector<4x256xf32> to vector<4x241xf32>
    %121 = tpu.concatenate %119, %120 in 1 : vector<4x15xf32>, vector<4x241xf32> -> vector<4x256xf32>
    %cst_43 = arith.constant 0.000000e+00 : f32
    %122 = vector.shape_cast %108 : vector<1x256xi1> to vector<1x256xi1>
    %123 = vector.broadcast %122 : vector<1x256xi1> to vector<4x256xi1>
    %124 = vector.broadcast %cst_43 : f32 to vector<4x256xf32>
    %125 = arith.select %123, %121, %124 : vector<4x256xi1>, vector<4x256xf32>
    %cst_44 = arith.constant 0.000000e+00 : f32
    %126 = vector.broadcast %cst_44 : f32 to vector<4x1xf32>
    %127 = vector.extract_strided_slice %85 {offsets = [0, 0], sizes = [4, 255], strides = [1, 1]} : vector<4x256xf32> to vector<4x255xf32>
    %128 = tpu.concatenate %126, %127 in 1 : vector<4x1xf32>, vector<4x255xf32> -> vector<4x256xf32>
    %cst_45 = arith.constant 0.000000e+00 : f32
    %129 = vector.shape_cast %106 : vector<1x256xi1> to vector<1x256xi1>
    %130 = vector.broadcast %129 : vector<1x256xi1> to vector<4x256xi1>
    %131 = vector.broadcast %cst_45 : f32 to vector<4x256xf32>
    %132 = arith.select %130, %128, %131 : vector<4x256xi1>, vector<4x256xf32>
    %133 = vector.extract_strided_slice %85 {offsets = [0, 1], sizes = [4, 255], strides = [1, 1]} : vector<4x256xf32> to vector<4x255xf32>
    %cst_46 = arith.constant 0.000000e+00 : f32
    %134 = vector.broadcast %cst_46 : f32 to vector<4x1xf32>
    %135 = tpu.concatenate %133, %134 in 1 : vector<4x255xf32>, vector<4x1xf32> -> vector<4x256xf32>
    %cst_47 = arith.constant 0.000000e+00 : f32
    %136 = vector.shape_cast %108 : vector<1x256xi1> to vector<1x256xi1>
    %137 = vector.broadcast %136 : vector<1x256xi1> to vector<4x256xi1>
    %138 = vector.broadcast %cst_47 : f32 to vector<4x256xf32>
    %139 = arith.select %137, %135, %138 : vector<4x256xi1>, vector<4x256xf32>
    %140 = vector.extract_strided_slice %85 {offsets = [0, 15], sizes = [4, 241], strides = [1, 1]} : vector<4x256xf32> to vector<4x241xf32>
    %cst_48 = arith.constant 0.000000e+00 : f32
    %141 = vector.broadcast %cst_48 : f32 to vector<4x15xf32>
    %142 = tpu.concatenate %140, %141 in 1 : vector<4x241xf32>, vector<4x15xf32> -> vector<4x256xf32>
    %cst_49 = arith.constant 0.000000e+00 : f32
    %143 = vector.shape_cast %106 : vector<1x256xi1> to vector<1x256xi1>
    %144 = vector.broadcast %143 : vector<1x256xi1> to vector<4x256xi1>
    %145 = vector.broadcast %cst_49 : f32 to vector<4x256xf32>
    %146 = arith.select %144, %142, %145 : vector<4x256xi1>, vector<4x256xf32>
    %147 = vector.extract_strided_slice %85 {offsets = [0, 16], sizes = [4, 240], strides = [1, 1]} : vector<4x256xf32> to vector<4x240xf32>
    %cst_50 = arith.constant 0.000000e+00 : f32
    %148 = vector.broadcast %cst_50 : f32 to vector<4x16xf32>
    %149 = tpu.concatenate %147, %148 in 1 : vector<4x240xf32>, vector<4x16xf32> -> vector<4x256xf32>
    %150 = vector.extract_strided_slice %85 {offsets = [0, 17], sizes = [4, 239], strides = [1, 1]} : vector<4x256xf32> to vector<4x239xf32>
    %cst_51 = arith.constant 0.000000e+00 : f32
    %151 = vector.broadcast %cst_51 : f32 to vector<4x17xf32>
    %152 = tpu.concatenate %150, %151 in 1 : vector<4x239xf32>, vector<4x17xf32> -> vector<4x256xf32>
    %cst_52 = arith.constant 0.000000e+00 : f32
    %153 = vector.shape_cast %108 : vector<1x256xi1> to vector<1x256xi1>
    %154 = vector.broadcast %153 : vector<1x256xi1> to vector<4x256xi1>
    %155 = vector.broadcast %cst_52 : f32 to vector<4x256xf32>
    %156 = arith.select %154, %152, %155 : vector<4x256xi1>, vector<4x256xf32>
    %157 = tpu.concatenate %115, %118, %125, %132, %85, %139, %146, %149, %156 in 0 : vector<4x256xf32>, vector<4x256xf32>, vector<4x256xf32>, vector<4x256xf32>, vector<4x256xf32>, vector<4x256xf32>, vector<4x256xf32>, vector<4x256xf32>, vector<4x256xf32> -> vector<36x256xf32>
    %158 = arith.truncf %157 : vector<36x256xf32> to vector<36x256xbf16>
    %cst_53 = arith.constant dense<0.000000e+00> : vector<4x256xf32>
    %159 = tpu.matmul %86, %158, %cst_53 {dimension_numbers = #tpu.dot_dimension_numbers<[1], [0], [0], [1], [0, 0, 1, 1], [], []>} : vector<4x36xbf16>, vector<36x256xbf16>, vector<4x256xf32> -> vector<4x256xf32>
    %160 = vector.broadcast %87 : vector<4x1xf32> to vector<4x256xf32>
    %161 = arith.addf %159, %160 : vector<4x256xf32>
    %cst_54 = arith.constant 0.000000e+00 : f32
    %162 = vector.broadcast %cst_54 : f32 to vector<4x256xf32>
    %163 = arith.cmpf ogt, %161, %162 : vector<4x256xf32>
    %cst_55 = arith.constant 0.000000e+00 : f32
    %164 = vector.broadcast %cst_55 : f32 to vector<4x256xf32>
    %165 = arith.minimumf %161, %164 : vector<4x256xf32>
    %166 = math.exp %165 : vector<4x256xf32>
    %cst_56 = arith.constant 1.000000e+00 : f32
    %167 = vector.broadcast %cst_56 : f32 to vector<4x256xf32>
    %168 = arith.subf %166, %167 : vector<4x256xf32>
    %169 = arith.select %163, %161, %168 : vector<4x256xi1>, vector<4x256xf32>
    %c0_57 = arith.constant 0 : index
    %c0_58 = arith.constant 0 : index
    %170 = vector.load %arg6[%c0_57, %c0_58] : memref<4x36xbf16, #tpu.memory_space<vmem>>, vector<4x36xbf16>
    %c0_59 = arith.constant 0 : index
    %c0_60 = arith.constant 0 : index
    %171 = vector.load %arg7[%c0_59, %c0_60] : memref<4x1xf32, #tpu.memory_space<vmem>>, vector<4x1xf32>
    %172 = tpu.iota {dimensions = array<i32: 1>} : vector<1x256xi32>
    %c16_i32_61 = arith.constant 16 : i32
    %c0_i32_62 = arith.constant 0 : i32
    %173 = arith.cmpi eq, %c16_i32_61, %c0_i32_62 : i32
    %c1_i32_63 = arith.constant 1 : i32
    %174 = arith.select %173, %c1_i32_63, %c16_i32_61 : i32
    %175 = vector.broadcast %174 : i32 to vector<1x256xi32>
    %176 = arith.remsi %172, %175 : vector<1x256xi32>
    %c0_i32_64 = arith.constant 0 : i32
    %177 = vector.broadcast %c0_i32_64 : i32 to vector<1x256xi32>
    %178 = arith.cmpi ne, %176, %177 : vector<1x256xi32>
    %c0_i32_65 = arith.constant 0 : i32
    %179 = vector.broadcast %c0_i32_65 : i32 to vector<1x256xi32>
    %180 = arith.cmpi slt, %176, %179 : vector<1x256xi32>
    %c0_i32_66 = arith.constant 0 : i32
    %181 = arith.cmpi slt, %174, %c0_i32_66 : i32
    %182 = vector.broadcast %181 : i1 to vector<1x256xi1>
    %183 = vector.broadcast %182 : vector<1x256xi1> to vector<1x256xi1>
    %184 = arith.xori %180, %183 : vector<1x256xi1>
    %185 = arith.andi %184, %178 : vector<1x256xi1>
    %186 = vector.broadcast %174 : i32 to vector<1x256xi32>
    %187 = arith.addi %176, %186 : vector<1x256xi32>
    %188 = arith.select %185, %187, %176 : vector<1x256xi1>, vector<1x256xi32>
    %c1_i32_67 = arith.constant 1 : i32
    %189 = vector.broadcast %c1_i32_67 : i32 to vector<1x256xi32>
    %190 = arith.cmpi sge, %188, %189 : vector<1x256xi32>
    %c15_i32_68 = arith.constant 15 : i32
    %191 = vector.broadcast %c15_i32_68 : i32 to vector<1x256xi32>
    %192 = arith.cmpi slt, %188, %191 : vector<1x256xi32>
    %cst_69 = arith.constant 0.000000e+00 : f32
    %193 = vector.broadcast %cst_69 : f32 to vector<4x17xf32>
    %194 = vector.extract_strided_slice %169 {offsets = [0, 0], sizes = [4, 239], strides = [1, 1]} : vector<4x256xf32> to vector<4x239xf32>
    %195 = tpu.concatenate %193, %194 in 1 : vector<4x17xf32>, vector<4x239xf32> -> vector<4x256xf32>
    %cst_70 = arith.constant 0.000000e+00 : f32
    %196 = vector.shape_cast %190 : vector<1x256xi1> to vector<1x256xi1>
    %197 = vector.broadcast %196 : vector<1x256xi1> to vector<4x256xi1>
    %198 = vector.broadcast %cst_70 : f32 to vector<4x256xf32>
    %199 = arith.select %197, %195, %198 : vector<4x256xi1>, vector<4x256xf32>
    %cst_71 = arith.constant 0.000000e+00 : f32
    %200 = vector.broadcast %cst_71 : f32 to vector<4x16xf32>
    %201 = vector.extract_strided_slice %169 {offsets = [0, 0], sizes = [4, 240], strides = [1, 1]} : vector<4x256xf32> to vector<4x240xf32>
    %202 = tpu.concatenate %200, %201 in 1 : vector<4x16xf32>, vector<4x240xf32> -> vector<4x256xf32>
    %cst_72 = arith.constant 0.000000e+00 : f32
    %203 = vector.broadcast %cst_72 : f32 to vector<4x15xf32>
    %204 = vector.extract_strided_slice %169 {offsets = [0, 0], sizes = [4, 241], strides = [1, 1]} : vector<4x256xf32> to vector<4x241xf32>
    %205 = tpu.concatenate %203, %204 in 1 : vector<4x15xf32>, vector<4x241xf32> -> vector<4x256xf32>
    %cst_73 = arith.constant 0.000000e+00 : f32
    %206 = vector.shape_cast %192 : vector<1x256xi1> to vector<1x256xi1>
    %207 = vector.broadcast %206 : vector<1x256xi1> to vector<4x256xi1>
    %208 = vector.broadcast %cst_73 : f32 to vector<4x256xf32>
    %209 = arith.select %207, %205, %208 : vector<4x256xi1>, vector<4x256xf32>
    %cst_74 = arith.constant 0.000000e+00 : f32
    %210 = vector.broadcast %cst_74 : f32 to vector<4x1xf32>
    %211 = vector.extract_strided_slice %169 {offsets = [0, 0], sizes = [4, 255], strides = [1, 1]} : vector<4x256xf32> to vector<4x255xf32>
    %212 = tpu.concatenate %210, %211 in 1 : vector<4x1xf32>, vector<4x255xf32> -> vector<4x256xf32>
    %cst_75 = arith.constant 0.000000e+00 : f32
    %213 = vector.shape_cast %190 : vector<1x256xi1> to vector<1x256xi1>
    %214 = vector.broadcast %213 : vector<1x256xi1> to vector<4x256xi1>
    %215 = vector.broadcast %cst_75 : f32 to vector<4x256xf32>
    %216 = arith.select %214, %212, %215 : vector<4x256xi1>, vector<4x256xf32>
    %217 = vector.extract_strided_slice %169 {offsets = [0, 1], sizes = [4, 255], strides = [1, 1]} : vector<4x256xf32> to vector<4x255xf32>
    %cst_76 = arith.constant 0.000000e+00 : f32
    %218 = vector.broadcast %cst_76 : f32 to vector<4x1xf32>
    %219 = tpu.concatenate %217, %218 in 1 : vector<4x255xf32>, vector<4x1xf32> -> vector<4x256xf32>
    %cst_77 = arith.constant 0.000000e+00 : f32
    %220 = vector.shape_cast %192 : vector<1x256xi1> to vector<1x256xi1>
    %221 = vector.broadcast %220 : vector<1x256xi1> to vector<4x256xi1>
    %222 = vector.broadcast %cst_77 : f32 to vector<4x256xf32>
    %223 = arith.select %221, %219, %222 : vector<4x256xi1>, vector<4x256xf32>
    %224 = vector.extract_strided_slice %169 {offsets = [0, 15], sizes = [4, 241], strides = [1, 1]} : vector<4x256xf32> to vector<4x241xf32>
    %cst_78 = arith.constant 0.000000e+00 : f32
    %225 = vector.broadcast %cst_78 : f32 to vector<4x15xf32>
    %226 = tpu.concatenate %224, %225 in 1 : vector<4x241xf32>, vector<4x15xf32> -> vector<4x256xf32>
    %cst_79 = arith.constant 0.000000e+00 : f32
    %227 = vector.shape_cast %190 : vector<1x256xi1> to vector<1x256xi1>
    %228 = vector.broadcast %227 : vector<1x256xi1> to vector<4x256xi1>
    %229 = vector.broadcast %cst_79 : f32 to vector<4x256xf32>
    %230 = arith.select %228, %226, %229 : vector<4x256xi1>, vector<4x256xf32>
    %231 = vector.extract_strided_slice %169 {offsets = [0, 16], sizes = [4, 240], strides = [1, 1]} : vector<4x256xf32> to vector<4x240xf32>
    %cst_80 = arith.constant 0.000000e+00 : f32
    %232 = vector.broadcast %cst_80 : f32 to vector<4x16xf32>
    %233 = tpu.concatenate %231, %232 in 1 : vector<4x240xf32>, vector<4x16xf32> -> vector<4x256xf32>
    %234 = vector.extract_strided_slice %169 {offsets = [0, 17], sizes = [4, 239], strides = [1, 1]} : vector<4x256xf32> to vector<4x239xf32>
    %cst_81 = arith.constant 0.000000e+00 : f32
    %235 = vector.broadcast %cst_81 : f32 to vector<4x17xf32>
    %236 = tpu.concatenate %234, %235 in 1 : vector<4x239xf32>, vector<4x17xf32> -> vector<4x256xf32>
    %cst_82 = arith.constant 0.000000e+00 : f32
    %237 = vector.shape_cast %192 : vector<1x256xi1> to vector<1x256xi1>
    %238 = vector.broadcast %237 : vector<1x256xi1> to vector<4x256xi1>
    %239 = vector.broadcast %cst_82 : f32 to vector<4x256xf32>
    %240 = arith.select %238, %236, %239 : vector<4x256xi1>, vector<4x256xf32>
    %241 = tpu.concatenate %199, %202, %209, %216, %169, %223, %230, %233, %240 in 0 : vector<4x256xf32>, vector<4x256xf32>, vector<4x256xf32>, vector<4x256xf32>, vector<4x256xf32>, vector<4x256xf32>, vector<4x256xf32>, vector<4x256xf32>, vector<4x256xf32> -> vector<36x256xf32>
    %242 = arith.truncf %241 : vector<36x256xf32> to vector<36x256xbf16>
    %cst_83 = arith.constant dense<0.000000e+00> : vector<4x256xf32>
    %243 = tpu.matmul %170, %242, %cst_83 {dimension_numbers = #tpu.dot_dimension_numbers<[1], [0], [0], [1], [0, 0, 1, 1], [], []>} : vector<4x36xbf16>, vector<36x256xbf16>, vector<4x256xf32> -> vector<4x256xf32>
    %244 = vector.broadcast %171 : vector<4x1xf32> to vector<4x256xf32>
    %245 = arith.addf %243, %244 : vector<4x256xf32>
    %cst_84 = arith.constant 0.000000e+00 : f32
    %246 = vector.broadcast %cst_84 : f32 to vector<4x256xf32>
    %247 = arith.cmpf ogt, %245, %246 : vector<4x256xf32>
    %cst_85 = arith.constant 0.000000e+00 : f32
    %248 = vector.broadcast %cst_85 : f32 to vector<4x256xf32>
    %249 = arith.minimumf %245, %248 : vector<4x256xf32>
    %250 = math.exp %249 : vector<4x256xf32>
    %cst_86 = arith.constant 1.000000e+00 : f32
    %251 = vector.broadcast %cst_86 : f32 to vector<4x256xf32>
    %252 = arith.subf %250, %251 : vector<4x256xf32>
    %253 = arith.select %247, %245, %252 : vector<4x256xi1>, vector<4x256xf32>
    %c0_87 = arith.constant 0 : index
    %c0_88 = arith.constant 0 : index
    %254 = vector.load %arg8[%c0_87, %c0_88] : memref<4x4xbf16, #tpu.memory_space<vmem>>, vector<4x4xbf16>
    %c0_89 = arith.constant 0 : index
    %c0_90 = arith.constant 0 : index
    %255 = vector.load %arg9[%c0_89, %c0_90] : memref<4x1xf32, #tpu.memory_space<vmem>>, vector<4x1xf32>
    %256 = arith.truncf %253 : vector<4x256xf32> to vector<4x256xbf16>
    %cst_91 = arith.constant dense<0.000000e+00> : vector<4x256xf32>
    %257 = tpu.matmul %254, %256, %cst_91 {dimension_numbers = #tpu.dot_dimension_numbers<[1], [0], [0], [1], [0, 0, 1, 1], [], []>} : vector<4x4xbf16>, vector<4x256xbf16>, vector<4x256xf32> -> vector<4x256xf32>
    %258 = vector.broadcast %255 : vector<4x1xf32> to vector<4x256xf32>
    %259 = arith.addf %257, %258 : vector<4x256xf32>
    %c0_92 = arith.constant 0 : index
    %c0_93 = arith.constant 0 : index
    %260 = vector.load %arg10[%c0_92, %c0_93] : memref<256x64xbf16, #tpu.memory_space<vmem>>, vector<256x64xbf16>
    %261 = arith.truncf %259 : vector<4x256xf32> to vector<4x256xbf16>
    %cst_94 = arith.constant dense<0.000000e+00> : vector<4x64xf32>
    %262 = tpu.matmul %261, %260, %cst_94 {dimension_numbers = #tpu.dot_dimension_numbers<[1], [0], [0], [1], [0, 0, 1, 1], [], []>} : vector<4x256xbf16>, vector<256x64xbf16>, vector<4x64xf32> -> vector<4x64xf32>
    %c0_95 = arith.constant 0 : index
    %c0_96 = arith.constant 0 : index
    %263 = vector.load %arg11[%c0_95, %c0_96] : memref<4x36xbf16, #tpu.memory_space<vmem>>, vector<4x36xbf16>
    %c0_97 = arith.constant 0 : index
    %c0_98 = arith.constant 0 : index
    %264 = vector.load %arg12[%c0_97, %c0_98] : memref<4x1xf32, #tpu.memory_space<vmem>>, vector<4x1xf32>
    %265 = tpu.iota {dimensions = array<i32: 1>} : vector<1x64xi32>
    %c8_i32 = arith.constant 8 : i32
    %c0_i32_99 = arith.constant 0 : i32
    %266 = arith.cmpi eq, %c8_i32, %c0_i32_99 : i32
    %c1_i32_100 = arith.constant 1 : i32
    %267 = arith.select %266, %c1_i32_100, %c8_i32 : i32
    %268 = vector.broadcast %267 : i32 to vector<1x64xi32>
    %269 = arith.remsi %265, %268 : vector<1x64xi32>
    %c0_i32_101 = arith.constant 0 : i32
    %270 = vector.broadcast %c0_i32_101 : i32 to vector<1x64xi32>
    %271 = arith.cmpi ne, %269, %270 : vector<1x64xi32>
    %c0_i32_102 = arith.constant 0 : i32
    %272 = vector.broadcast %c0_i32_102 : i32 to vector<1x64xi32>
    %273 = arith.cmpi slt, %269, %272 : vector<1x64xi32>
    %c0_i32_103 = arith.constant 0 : i32
    %274 = arith.cmpi slt, %267, %c0_i32_103 : i32
    %275 = vector.broadcast %274 : i1 to vector<1x64xi1>
    %276 = vector.broadcast %275 : vector<1x64xi1> to vector<1x64xi1>
    %277 = arith.xori %273, %276 : vector<1x64xi1>
    %278 = arith.andi %277, %271 : vector<1x64xi1>
    %279 = vector.broadcast %267 : i32 to vector<1x64xi32>
    %280 = arith.addi %269, %279 : vector<1x64xi32>
    %281 = arith.select %278, %280, %269 : vector<1x64xi1>, vector<1x64xi32>
    %c1_i32_104 = arith.constant 1 : i32
    %282 = vector.broadcast %c1_i32_104 : i32 to vector<1x64xi32>
    %283 = arith.cmpi sge, %281, %282 : vector<1x64xi32>
    %c7_i32 = arith.constant 7 : i32
    %284 = vector.broadcast %c7_i32 : i32 to vector<1x64xi32>
    %285 = arith.cmpi slt, %281, %284 : vector<1x64xi32>
    %cst_105 = arith.constant 0.000000e+00 : f32
    %286 = vector.broadcast %cst_105 : f32 to vector<4x9xf32>
    %287 = vector.extract_strided_slice %262 {offsets = [0, 0], sizes = [4, 55], strides = [1, 1]} : vector<4x64xf32> to vector<4x55xf32>
    %288 = tpu.concatenate %286, %287 in 1 : vector<4x9xf32>, vector<4x55xf32> -> vector<4x64xf32>
    %cst_106 = arith.constant 0.000000e+00 : f32
    %289 = vector.shape_cast %283 : vector<1x64xi1> to vector<1x64xi1>
    %290 = vector.broadcast %289 : vector<1x64xi1> to vector<4x64xi1>
    %291 = vector.broadcast %cst_106 : f32 to vector<4x64xf32>
    %292 = arith.select %290, %288, %291 : vector<4x64xi1>, vector<4x64xf32>
    %cst_107 = arith.constant 0.000000e+00 : f32
    %293 = vector.broadcast %cst_107 : f32 to vector<4x8xf32>
    %294 = vector.extract_strided_slice %262 {offsets = [0, 0], sizes = [4, 56], strides = [1, 1]} : vector<4x64xf32> to vector<4x56xf32>
    %295 = tpu.concatenate %293, %294 in 1 : vector<4x8xf32>, vector<4x56xf32> -> vector<4x64xf32>
    %cst_108 = arith.constant 0.000000e+00 : f32
    %296 = vector.broadcast %cst_108 : f32 to vector<4x7xf32>
    %297 = vector.extract_strided_slice %262 {offsets = [0, 0], sizes = [4, 57], strides = [1, 1]} : vector<4x64xf32> to vector<4x57xf32>
    %298 = tpu.concatenate %296, %297 in 1 : vector<4x7xf32>, vector<4x57xf32> -> vector<4x64xf32>
    %cst_109 = arith.constant 0.000000e+00 : f32
    %299 = vector.shape_cast %285 : vector<1x64xi1> to vector<1x64xi1>
    %300 = vector.broadcast %299 : vector<1x64xi1> to vector<4x64xi1>
    %301 = vector.broadcast %cst_109 : f32 to vector<4x64xf32>
    %302 = arith.select %300, %298, %301 : vector<4x64xi1>, vector<4x64xf32>
    %cst_110 = arith.constant 0.000000e+00 : f32
    %303 = vector.broadcast %cst_110 : f32 to vector<4x1xf32>
    %304 = vector.extract_strided_slice %262 {offsets = [0, 0], sizes = [4, 63], strides = [1, 1]} : vector<4x64xf32> to vector<4x63xf32>
    %305 = tpu.concatenate %303, %304 in 1 : vector<4x1xf32>, vector<4x63xf32> -> vector<4x64xf32>
    %cst_111 = arith.constant 0.000000e+00 : f32
    %306 = vector.shape_cast %283 : vector<1x64xi1> to vector<1x64xi1>
    %307 = vector.broadcast %306 : vector<1x64xi1> to vector<4x64xi1>
    %308 = vector.broadcast %cst_111 : f32 to vector<4x64xf32>
    %309 = arith.select %307, %305, %308 : vector<4x64xi1>, vector<4x64xf32>
    %310 = vector.extract_strided_slice %262 {offsets = [0, 1], sizes = [4, 63], strides = [1, 1]} : vector<4x64xf32> to vector<4x63xf32>
    %cst_112 = arith.constant 0.000000e+00 : f32
    %311 = vector.broadcast %cst_112 : f32 to vector<4x1xf32>
    %312 = tpu.concatenate %310, %311 in 1 : vector<4x63xf32>, vector<4x1xf32> -> vector<4x64xf32>
    %cst_113 = arith.constant 0.000000e+00 : f32
    %313 = vector.shape_cast %285 : vector<1x64xi1> to vector<1x64xi1>
    %314 = vector.broadcast %313 : vector<1x64xi1> to vector<4x64xi1>
    %315 = vector.broadcast %cst_113 : f32 to vector<4x64xf32>
    %316 = arith.select %314, %312, %315 : vector<4x64xi1>, vector<4x64xf32>
    %317 = vector.extract_strided_slice %262 {offsets = [0, 7], sizes = [4, 57], strides = [1, 1]} : vector<4x64xf32> to vector<4x57xf32>
    %cst_114 = arith.constant 0.000000e+00 : f32
    %318 = vector.broadcast %cst_114 : f32 to vector<4x7xf32>
    %319 = tpu.concatenate %317, %318 in 1 : vector<4x57xf32>, vector<4x7xf32> -> vector<4x64xf32>
    %cst_115 = arith.constant 0.000000e+00 : f32
    %320 = vector.shape_cast %283 : vector<1x64xi1> to vector<1x64xi1>
    %321 = vector.broadcast %320 : vector<1x64xi1> to vector<4x64xi1>
    %322 = vector.broadcast %cst_115 : f32 to vector<4x64xf32>
    %323 = arith.select %321, %319, %322 : vector<4x64xi1>, vector<4x64xf32>
    %324 = vector.extract_strided_slice %262 {offsets = [0, 8], sizes = [4, 56], strides = [1, 1]} : vector<4x64xf32> to vector<4x56xf32>
    %cst_116 = arith.constant 0.000000e+00 : f32
    %325 = vector.broadcast %cst_116 : f32 to vector<4x8xf32>
    %326 = tpu.concatenate %324, %325 in 1 : vector<4x56xf32>, vector<4x8xf32> -> vector<4x64xf32>
    %327 = vector.extract_strided_slice %262 {offsets = [0, 9], sizes = [4, 55], strides = [1, 1]} : vector<4x64xf32> to vector<4x55xf32>
    %cst_117 = arith.constant 0.000000e+00 : f32
    %328 = vector.broadcast %cst_117 : f32 to vector<4x9xf32>
    %329 = tpu.concatenate %327, %328 in 1 : vector<4x55xf32>, vector<4x9xf32> -> vector<4x64xf32>
    %cst_118 = arith.constant 0.000000e+00 : f32
    %330 = vector.shape_cast %285 : vector<1x64xi1> to vector<1x64xi1>
    %331 = vector.broadcast %330 : vector<1x64xi1> to vector<4x64xi1>
    %332 = vector.broadcast %cst_118 : f32 to vector<4x64xf32>
    %333 = arith.select %331, %329, %332 : vector<4x64xi1>, vector<4x64xf32>
    %334 = tpu.concatenate %292, %295, %302, %309, %262, %316, %323, %326, %333 in 0 : vector<4x64xf32>, vector<4x64xf32>, vector<4x64xf32>, vector<4x64xf32>, vector<4x64xf32>, vector<4x64xf32>, vector<4x64xf32>, vector<4x64xf32>, vector<4x64xf32> -> vector<36x64xf32>
    %335 = arith.truncf %334 : vector<36x64xf32> to vector<36x64xbf16>
    %cst_119 = arith.constant dense<0.000000e+00> : vector<4x64xf32>
    %336 = tpu.matmul %263, %335, %cst_119 {dimension_numbers = #tpu.dot_dimension_numbers<[1], [0], [0], [1], [0, 0, 1, 1], [], []>} : vector<4x36xbf16>, vector<36x64xbf16>, vector<4x64xf32> -> vector<4x64xf32>
    %337 = vector.broadcast %264 : vector<4x1xf32> to vector<4x64xf32>
    %338 = arith.addf %336, %337 : vector<4x64xf32>
    %cst_120 = arith.constant 0.000000e+00 : f32
    %339 = vector.broadcast %cst_120 : f32 to vector<4x64xf32>
    %340 = arith.cmpf ogt, %338, %339 : vector<4x64xf32>
    %cst_121 = arith.constant 0.000000e+00 : f32
    %341 = vector.broadcast %cst_121 : f32 to vector<4x64xf32>
    %342 = arith.minimumf %338, %341 : vector<4x64xf32>
    %343 = math.exp %342 : vector<4x64xf32>
    %cst_122 = arith.constant 1.000000e+00 : f32
    %344 = vector.broadcast %cst_122 : f32 to vector<4x64xf32>
    %345 = arith.subf %343, %344 : vector<4x64xf32>
    %346 = arith.select %340, %338, %345 : vector<4x64xi1>, vector<4x64xf32>
    %c0_123 = arith.constant 0 : index
    %c0_124 = arith.constant 0 : index
    %347 = vector.load %arg13[%c0_123, %c0_124] : memref<4x36xbf16, #tpu.memory_space<vmem>>, vector<4x36xbf16>
    %c0_125 = arith.constant 0 : index
    %c0_126 = arith.constant 0 : index
    %348 = vector.load %arg14[%c0_125, %c0_126] : memref<4x1xf32, #tpu.memory_space<vmem>>, vector<4x1xf32>
    %349 = tpu.iota {dimensions = array<i32: 1>} : vector<1x64xi32>
    %c8_i32_127 = arith.constant 8 : i32
    %c0_i32_128 = arith.constant 0 : i32
    %350 = arith.cmpi eq, %c8_i32_127, %c0_i32_128 : i32
    %c1_i32_129 = arith.constant 1 : i32
    %351 = arith.select %350, %c1_i32_129, %c8_i32_127 : i32
    %352 = vector.broadcast %351 : i32 to vector<1x64xi32>
    %353 = arith.remsi %349, %352 : vector<1x64xi32>
    %c0_i32_130 = arith.constant 0 : i32
    %354 = vector.broadcast %c0_i32_130 : i32 to vector<1x64xi32>
    %355 = arith.cmpi ne, %353, %354 : vector<1x64xi32>
    %c0_i32_131 = arith.constant 0 : i32
    %356 = vector.broadcast %c0_i32_131 : i32 to vector<1x64xi32>
    %357 = arith.cmpi slt, %353, %356 : vector<1x64xi32>
    %c0_i32_132 = arith.constant 0 : i32
    %358 = arith.cmpi slt, %351, %c0_i32_132 : i32
    %359 = vector.broadcast %358 : i1 to vector<1x64xi1>
    %360 = vector.broadcast %359 : vector<1x64xi1> to vector<1x64xi1>
    %361 = arith.xori %357, %360 : vector<1x64xi1>
    %362 = arith.andi %361, %355 : vector<1x64xi1>
    %363 = vector.broadcast %351 : i32 to vector<1x64xi32>
    %364 = arith.addi %353, %363 : vector<1x64xi32>
    %365 = arith.select %362, %364, %353 : vector<1x64xi1>, vector<1x64xi32>
    %c1_i32_133 = arith.constant 1 : i32
    %366 = vector.broadcast %c1_i32_133 : i32 to vector<1x64xi32>
    %367 = arith.cmpi sge, %365, %366 : vector<1x64xi32>
    %c7_i32_134 = arith.constant 7 : i32
    %368 = vector.broadcast %c7_i32_134 : i32 to vector<1x64xi32>
    %369 = arith.cmpi slt, %365, %368 : vector<1x64xi32>
    %cst_135 = arith.constant 0.000000e+00 : f32
    %370 = vector.broadcast %cst_135 : f32 to vector<4x9xf32>
    %371 = vector.extract_strided_slice %346 {offsets = [0, 0], sizes = [4, 55], strides = [1, 1]} : vector<4x64xf32> to vector<4x55xf32>
    %372 = tpu.concatenate %370, %371 in 1 : vector<4x9xf32>, vector<4x55xf32> -> vector<4x64xf32>
    %cst_136 = arith.constant 0.000000e+00 : f32
    %373 = vector.shape_cast %367 : vector<1x64xi1> to vector<1x64xi1>
    %374 = vector.broadcast %373 : vector<1x64xi1> to vector<4x64xi1>
    %375 = vector.broadcast %cst_136 : f32 to vector<4x64xf32>
    %376 = arith.select %374, %372, %375 : vector<4x64xi1>, vector<4x64xf32>
    %cst_137 = arith.constant 0.000000e+00 : f32
    %377 = vector.broadcast %cst_137 : f32 to vector<4x8xf32>
    %378 = vector.extract_strided_slice %346 {offsets = [0, 0], sizes = [4, 56], strides = [1, 1]} : vector<4x64xf32> to vector<4x56xf32>
    %379 = tpu.concatenate %377, %378 in 1 : vector<4x8xf32>, vector<4x56xf32> -> vector<4x64xf32>
    %cst_138 = arith.constant 0.000000e+00 : f32
    %380 = vector.broadcast %cst_138 : f32 to vector<4x7xf32>
    %381 = vector.extract_strided_slice %346 {offsets = [0, 0], sizes = [4, 57], strides = [1, 1]} : vector<4x64xf32> to vector<4x57xf32>
    %382 = tpu.concatenate %380, %381 in 1 : vector<4x7xf32>, vector<4x57xf32> -> vector<4x64xf32>
    %cst_139 = arith.constant 0.000000e+00 : f32
    %383 = vector.shape_cast %369 : vector<1x64xi1> to vector<1x64xi1>
    %384 = vector.broadcast %383 : vector<1x64xi1> to vector<4x64xi1>
    %385 = vector.broadcast %cst_139 : f32 to vector<4x64xf32>
    %386 = arith.select %384, %382, %385 : vector<4x64xi1>, vector<4x64xf32>
    %cst_140 = arith.constant 0.000000e+00 : f32
    %387 = vector.broadcast %cst_140 : f32 to vector<4x1xf32>
    %388 = vector.extract_strided_slice %346 {offsets = [0, 0], sizes = [4, 63], strides = [1, 1]} : vector<4x64xf32> to vector<4x63xf32>
    %389 = tpu.concatenate %387, %388 in 1 : vector<4x1xf32>, vector<4x63xf32> -> vector<4x64xf32>
    %cst_141 = arith.constant 0.000000e+00 : f32
    %390 = vector.shape_cast %367 : vector<1x64xi1> to vector<1x64xi1>
    %391 = vector.broadcast %390 : vector<1x64xi1> to vector<4x64xi1>
    %392 = vector.broadcast %cst_141 : f32 to vector<4x64xf32>
    %393 = arith.select %391, %389, %392 : vector<4x64xi1>, vector<4x64xf32>
    %394 = vector.extract_strided_slice %346 {offsets = [0, 1], sizes = [4, 63], strides = [1, 1]} : vector<4x64xf32> to vector<4x63xf32>
    %cst_142 = arith.constant 0.000000e+00 : f32
    %395 = vector.broadcast %cst_142 : f32 to vector<4x1xf32>
    %396 = tpu.concatenate %394, %395 in 1 : vector<4x63xf32>, vector<4x1xf32> -> vector<4x64xf32>
    %cst_143 = arith.constant 0.000000e+00 : f32
    %397 = vector.shape_cast %369 : vector<1x64xi1> to vector<1x64xi1>
    %398 = vector.broadcast %397 : vector<1x64xi1> to vector<4x64xi1>
    %399 = vector.broadcast %cst_143 : f32 to vector<4x64xf32>
    %400 = arith.select %398, %396, %399 : vector<4x64xi1>, vector<4x64xf32>
    %401 = vector.extract_strided_slice %346 {offsets = [0, 7], sizes = [4, 57], strides = [1, 1]} : vector<4x64xf32> to vector<4x57xf32>
    %cst_144 = arith.constant 0.000000e+00 : f32
    %402 = vector.broadcast %cst_144 : f32 to vector<4x7xf32>
    %403 = tpu.concatenate %401, %402 in 1 : vector<4x57xf32>, vector<4x7xf32> -> vector<4x64xf32>
    %cst_145 = arith.constant 0.000000e+00 : f32
    %404 = vector.shape_cast %367 : vector<1x64xi1> to vector<1x64xi1>
    %405 = vector.broadcast %404 : vector<1x64xi1> to vector<4x64xi1>
    %406 = vector.broadcast %cst_145 : f32 to vector<4x64xf32>
    %407 = arith.select %405, %403, %406 : vector<4x64xi1>, vector<4x64xf32>
    %408 = vector.extract_strided_slice %346 {offsets = [0, 8], sizes = [4, 56], strides = [1, 1]} : vector<4x64xf32> to vector<4x56xf32>
    %cst_146 = arith.constant 0.000000e+00 : f32
    %409 = vector.broadcast %cst_146 : f32 to vector<4x8xf32>
    %410 = tpu.concatenate %408, %409 in 1 : vector<4x56xf32>, vector<4x8xf32> -> vector<4x64xf32>
    %411 = vector.extract_strided_slice %346 {offsets = [0, 9], sizes = [4, 55], strides = [1, 1]} : vector<4x64xf32> to vector<4x55xf32>
    %cst_147 = arith.constant 0.000000e+00 : f32
    %412 = vector.broadcast %cst_147 : f32 to vector<4x9xf32>
    %413 = tpu.concatenate %411, %412 in 1 : vector<4x55xf32>, vector<4x9xf32> -> vector<4x64xf32>
    %cst_148 = arith.constant 0.000000e+00 : f32
    %414 = vector.shape_cast %369 : vector<1x64xi1> to vector<1x64xi1>
    %415 = vector.broadcast %414 : vector<1x64xi1> to vector<4x64xi1>
    %416 = vector.broadcast %cst_148 : f32 to vector<4x64xf32>
    %417 = arith.select %415, %413, %416 : vector<4x64xi1>, vector<4x64xf32>
    %418 = tpu.concatenate %376, %379, %386, %393, %346, %400, %407, %410, %417 in 0 : vector<4x64xf32>, vector<4x64xf32>, vector<4x64xf32>, vector<4x64xf32>, vector<4x64xf32>, vector<4x64xf32>, vector<4x64xf32>, vector<4x64xf32>, vector<4x64xf32> -> vector<36x64xf32>
    %419 = arith.truncf %418 : vector<36x64xf32> to vector<36x64xbf16>
    %cst_149 = arith.constant dense<0.000000e+00> : vector<4x64xf32>
    %420 = tpu.matmul %347, %419, %cst_149 {dimension_numbers = #tpu.dot_dimension_numbers<[1], [0], [0], [1], [0, 0, 1, 1], [], []>} : vector<4x36xbf16>, vector<36x64xbf16>, vector<4x64xf32> -> vector<4x64xf32>
    %421 = vector.broadcast %348 : vector<4x1xf32> to vector<4x64xf32>
    %422 = arith.addf %420, %421 : vector<4x64xf32>
    %cst_150 = arith.constant 0.000000e+00 : f32
    %423 = vector.broadcast %cst_150 : f32 to vector<4x64xf32>
    %424 = arith.cmpf ogt, %422, %423 : vector<4x64xf32>
    %cst_151 = arith.constant 0.000000e+00 : f32
    %425 = vector.broadcast %cst_151 : f32 to vector<4x64xf32>
    %426 = arith.minimumf %422, %425 : vector<4x64xf32>
    %427 = math.exp %426 : vector<4x64xf32>
    %cst_152 = arith.constant 1.000000e+00 : f32
    %428 = vector.broadcast %cst_152 : f32 to vector<4x64xf32>
    %429 = arith.subf %427, %428 : vector<4x64xf32>
    %430 = arith.select %424, %422, %429 : vector<4x64xi1>, vector<4x64xf32>
    %c0_153 = arith.constant 0 : index
    %c0_154 = arith.constant 0 : index
    %431 = vector.load %arg15[%c0_153, %c0_154] : memref<8x4xbf16, #tpu.memory_space<vmem>>, vector<8x4xbf16>
    %c0_155 = arith.constant 0 : index
    %c0_156 = arith.constant 0 : index
    %432 = vector.load %arg16[%c0_155, %c0_156] : memref<8x1xf32, #tpu.memory_space<vmem>>, vector<8x1xf32>
    %433 = arith.truncf %430 : vector<4x64xf32> to vector<4x64xbf16>
    %cst_157 = arith.constant dense<0.000000e+00> : vector<8x64xf32>
    %434 = tpu.matmul %431, %433, %cst_157 {dimension_numbers = #tpu.dot_dimension_numbers<[1], [0], [0], [1], [0, 0, 1, 1], [], []>} : vector<8x4xbf16>, vector<4x64xbf16>, vector<8x64xf32> -> vector<8x64xf32>
    %435 = vector.broadcast %432 : vector<8x1xf32> to vector<8x64xf32>
    %436 = arith.addf %434, %435 : vector<8x64xf32>
    %c0_158 = arith.constant 0 : index
    %c0_159 = arith.constant 0 : index
    %437 = vector.load %arg17[%c0_158, %c0_159] : memref<64x16xbf16, #tpu.memory_space<vmem>>, vector<64x16xbf16>
    %438 = arith.truncf %436 : vector<8x64xf32> to vector<8x64xbf16>
    %cst_160 = arith.constant dense<0.000000e+00> : vector<8x16xf32>
    %439 = tpu.matmul %438, %437, %cst_160 {dimension_numbers = #tpu.dot_dimension_numbers<[1], [0], [0], [1], [0, 0, 1, 1], [], []>} : vector<8x64xbf16>, vector<64x16xbf16>, vector<8x16xf32> -> vector<8x16xf32>
    %c0_161 = arith.constant 0 : index
    %c0_162 = arith.constant 0 : index
    %440 = vector.load %arg18[%c0_161, %c0_162] : memref<8x72xbf16, #tpu.memory_space<vmem>>, vector<8x72xbf16>
    %c0_163 = arith.constant 0 : index
    %c0_164 = arith.constant 0 : index
    %441 = vector.load %arg19[%c0_163, %c0_164] : memref<8x1xf32, #tpu.memory_space<vmem>>, vector<8x1xf32>
    %442 = tpu.iota {dimensions = array<i32: 1>} : vector<1x16xi32>
    %c4_i32 = arith.constant 4 : i32
    %c0_i32_165 = arith.constant 0 : i32
    %443 = arith.cmpi eq, %c4_i32, %c0_i32_165 : i32
    %c1_i32_166 = arith.constant 1 : i32
    %444 = arith.select %443, %c1_i32_166, %c4_i32 : i32
    %445 = vector.broadcast %444 : i32 to vector<1x16xi32>
    %446 = arith.remsi %442, %445 : vector<1x16xi32>
    %c0_i32_167 = arith.constant 0 : i32
    %447 = vector.broadcast %c0_i32_167 : i32 to vector<1x16xi32>
    %448 = arith.cmpi ne, %446, %447 : vector<1x16xi32>
    %c0_i32_168 = arith.constant 0 : i32
    %449 = vector.broadcast %c0_i32_168 : i32 to vector<1x16xi32>
    %450 = arith.cmpi slt, %446, %449 : vector<1x16xi32>
    %c0_i32_169 = arith.constant 0 : i32
    %451 = arith.cmpi slt, %444, %c0_i32_169 : i32
    %452 = vector.broadcast %451 : i1 to vector<1x16xi1>
    %453 = vector.broadcast %452 : vector<1x16xi1> to vector<1x16xi1>
    %454 = arith.xori %450, %453 : vector<1x16xi1>
    %455 = arith.andi %454, %448 : vector<1x16xi1>
    %456 = vector.broadcast %444 : i32 to vector<1x16xi32>
    %457 = arith.addi %446, %456 : vector<1x16xi32>
    %458 = arith.select %455, %457, %446 : vector<1x16xi1>, vector<1x16xi32>
    %c1_i32_170 = arith.constant 1 : i32
    %459 = vector.broadcast %c1_i32_170 : i32 to vector<1x16xi32>
    %460 = arith.cmpi sge, %458, %459 : vector<1x16xi32>
    %c3_i32 = arith.constant 3 : i32
    %461 = vector.broadcast %c3_i32 : i32 to vector<1x16xi32>
    %462 = arith.cmpi slt, %458, %461 : vector<1x16xi32>
    %cst_171 = arith.constant 0.000000e+00 : f32
    %463 = vector.broadcast %cst_171 : f32 to vector<8x5xf32>
    %464 = vector.extract_strided_slice %439 {offsets = [0, 0], sizes = [8, 11], strides = [1, 1]} : vector<8x16xf32> to vector<8x11xf32>
    %465 = tpu.concatenate %463, %464 in 1 : vector<8x5xf32>, vector<8x11xf32> -> vector<8x16xf32>
    %cst_172 = arith.constant 0.000000e+00 : f32
    %466 = vector.shape_cast %460 : vector<1x16xi1> to vector<1x16xi1>
    %467 = vector.broadcast %466 : vector<1x16xi1> to vector<8x16xi1>
    %468 = vector.broadcast %cst_172 : f32 to vector<8x16xf32>
    %469 = arith.select %467, %465, %468 : vector<8x16xi1>, vector<8x16xf32>
    %cst_173 = arith.constant 0.000000e+00 : f32
    %470 = vector.broadcast %cst_173 : f32 to vector<8x4xf32>
    %471 = vector.extract_strided_slice %439 {offsets = [0, 0], sizes = [8, 12], strides = [1, 1]} : vector<8x16xf32> to vector<8x12xf32>
    %472 = tpu.concatenate %470, %471 in 1 : vector<8x4xf32>, vector<8x12xf32> -> vector<8x16xf32>
    %cst_174 = arith.constant 0.000000e+00 : f32
    %473 = vector.broadcast %cst_174 : f32 to vector<8x3xf32>
    %474 = vector.extract_strided_slice %439 {offsets = [0, 0], sizes = [8, 13], strides = [1, 1]} : vector<8x16xf32> to vector<8x13xf32>
    %475 = tpu.concatenate %473, %474 in 1 : vector<8x3xf32>, vector<8x13xf32> -> vector<8x16xf32>
    %cst_175 = arith.constant 0.000000e+00 : f32
    %476 = vector.shape_cast %462 : vector<1x16xi1> to vector<1x16xi1>
    %477 = vector.broadcast %476 : vector<1x16xi1> to vector<8x16xi1>
    %478 = vector.broadcast %cst_175 : f32 to vector<8x16xf32>
    %479 = arith.select %477, %475, %478 : vector<8x16xi1>, vector<8x16xf32>
    %cst_176 = arith.constant 0.000000e+00 : f32
    %480 = vector.broadcast %cst_176 : f32 to vector<8x1xf32>
    %481 = vector.extract_strided_slice %439 {offsets = [0, 0], sizes = [8, 15], strides = [1, 1]} : vector<8x16xf32> to vector<8x15xf32>
    %482 = tpu.concatenate %480, %481 in 1 : vector<8x1xf32>, vector<8x15xf32> -> vector<8x16xf32>
    %cst_177 = arith.constant 0.000000e+00 : f32
    %483 = vector.shape_cast %460 : vector<1x16xi1> to vector<1x16xi1>
    %484 = vector.broadcast %483 : vector<1x16xi1> to vector<8x16xi1>
    %485 = vector.broadcast %cst_177 : f32 to vector<8x16xf32>
    %486 = arith.select %484, %482, %485 : vector<8x16xi1>, vector<8x16xf32>
    %487 = vector.extract_strided_slice %439 {offsets = [0, 1], sizes = [8, 15], strides = [1, 1]} : vector<8x16xf32> to vector<8x15xf32>
    %cst_178 = arith.constant 0.000000e+00 : f32
    %488 = vector.broadcast %cst_178 : f32 to vector<8x1xf32>
    %489 = tpu.concatenate %487, %488 in 1 : vector<8x15xf32>, vector<8x1xf32> -> vector<8x16xf32>
    %cst_179 = arith.constant 0.000000e+00 : f32
    %490 = vector.shape_cast %462 : vector<1x16xi1> to vector<1x16xi1>
    %491 = vector.broadcast %490 : vector<1x16xi1> to vector<8x16xi1>
    %492 = vector.broadcast %cst_179 : f32 to vector<8x16xf32>
    %493 = arith.select %491, %489, %492 : vector<8x16xi1>, vector<8x16xf32>
    %494 = vector.extract_strided_slice %439 {offsets = [0, 3], sizes = [8, 13], strides = [1, 1]} : vector<8x16xf32> to vector<8x13xf32>
    %cst_180 = arith.constant 0.000000e+00 : f32
    %495 = vector.broadcast %cst_180 : f32 to vector<8x3xf32>
    %496 = tpu.concatenate %494, %495 in 1 : vector<8x13xf32>, vector<8x3xf32> -> vector<8x16xf32>
    %cst_181 = arith.constant 0.000000e+00 : f32
    %497 = vector.shape_cast %460 : vector<1x16xi1> to vector<1x16xi1>
    %498 = vector.broadcast %497 : vector<1x16xi1> to vector<8x16xi1>
    %499 = vector.broadcast %cst_181 : f32 to vector<8x16xf32>
    %500 = arith.select %498, %496, %499 : vector<8x16xi1>, vector<8x16xf32>
    %501 = vector.extract_strided_slice %439 {offsets = [0, 4], sizes = [8, 12], strides = [1, 1]} : vector<8x16xf32> to vector<8x12xf32>
    %cst_182 = arith.constant 0.000000e+00 : f32
    %502 = vector.broadcast %cst_182 : f32 to vector<8x4xf32>
    %503 = tpu.concatenate %501, %502 in 1 : vector<8x12xf32>, vector<8x4xf32> -> vector<8x16xf32>
    %504 = vector.extract_strided_slice %439 {offsets = [0, 5], sizes = [8, 11], strides = [1, 1]} : vector<8x16xf32> to vector<8x11xf32>
    %cst_183 = arith.constant 0.000000e+00 : f32
    %505 = vector.broadcast %cst_183 : f32 to vector<8x5xf32>
    %506 = tpu.concatenate %504, %505 in 1 : vector<8x11xf32>, vector<8x5xf32> -> vector<8x16xf32>
    %cst_184 = arith.constant 0.000000e+00 : f32
    %507 = vector.shape_cast %462 : vector<1x16xi1> to vector<1x16xi1>
    %508 = vector.broadcast %507 : vector<1x16xi1> to vector<8x16xi1>
    %509 = vector.broadcast %cst_184 : f32 to vector<8x16xf32>
    %510 = arith.select %508, %506, %509 : vector<8x16xi1>, vector<8x16xf32>
    %511 = tpu.concatenate %469, %472, %479, %486, %439, %493, %500, %503, %510 in 0 : vector<8x16xf32>, vector<8x16xf32>, vector<8x16xf32>, vector<8x16xf32>, vector<8x16xf32>, vector<8x16xf32>, vector<8x16xf32>, vector<8x16xf32>, vector<8x16xf32> -> vector<72x16xf32>
    %512 = arith.truncf %511 : vector<72x16xf32> to vector<72x16xbf16>
    %cst_185 = arith.constant dense<0.000000e+00> : vector<8x16xf32>
    %513 = tpu.matmul %440, %512, %cst_185 {dimension_numbers = #tpu.dot_dimension_numbers<[1], [0], [0], [1], [0, 0, 1, 1], [], []>} : vector<8x72xbf16>, vector<72x16xbf16>, vector<8x16xf32> -> vector<8x16xf32>
    %514 = vector.broadcast %441 : vector<8x1xf32> to vector<8x16xf32>
    %515 = arith.addf %513, %514 : vector<8x16xf32>
    %cst_186 = arith.constant 0.000000e+00 : f32
    %516 = vector.broadcast %cst_186 : f32 to vector<8x16xf32>
    %517 = arith.cmpf ogt, %515, %516 : vector<8x16xf32>
    %cst_187 = arith.constant 0.000000e+00 : f32
    %518 = vector.broadcast %cst_187 : f32 to vector<8x16xf32>
    %519 = arith.minimumf %515, %518 : vector<8x16xf32>
    %520 = math.exp %519 : vector<8x16xf32>
    %cst_188 = arith.constant 1.000000e+00 : f32
    %521 = vector.broadcast %cst_188 : f32 to vector<8x16xf32>
    %522 = arith.subf %520, %521 : vector<8x16xf32>
    %523 = arith.select %517, %515, %522 : vector<8x16xi1>, vector<8x16xf32>
    %c0_189 = arith.constant 0 : index
    %c0_190 = arith.constant 0 : index
    %524 = vector.load %arg20[%c0_189, %c0_190] : memref<8x72xbf16, #tpu.memory_space<vmem>>, vector<8x72xbf16>
    %c0_191 = arith.constant 0 : index
    %c0_192 = arith.constant 0 : index
    %525 = vector.load %arg21[%c0_191, %c0_192] : memref<8x1xf32, #tpu.memory_space<vmem>>, vector<8x1xf32>
    %526 = tpu.iota {dimensions = array<i32: 1>} : vector<1x16xi32>
    %c4_i32_193 = arith.constant 4 : i32
    %c0_i32_194 = arith.constant 0 : i32
    %527 = arith.cmpi eq, %c4_i32_193, %c0_i32_194 : i32
    %c1_i32_195 = arith.constant 1 : i32
    %528 = arith.select %527, %c1_i32_195, %c4_i32_193 : i32
    %529 = vector.broadcast %528 : i32 to vector<1x16xi32>
    %530 = arith.remsi %526, %529 : vector<1x16xi32>
    %c0_i32_196 = arith.constant 0 : i32
    %531 = vector.broadcast %c0_i32_196 : i32 to vector<1x16xi32>
    %532 = arith.cmpi ne, %530, %531 : vector<1x16xi32>
    %c0_i32_197 = arith.constant 0 : i32
    %533 = vector.broadcast %c0_i32_197 : i32 to vector<1x16xi32>
    %534 = arith.cmpi slt, %530, %533 : vector<1x16xi32>
    %c0_i32_198 = arith.constant 0 : i32
    %535 = arith.cmpi slt, %528, %c0_i32_198 : i32
    %536 = vector.broadcast %535 : i1 to vector<1x16xi1>
    %537 = vector.broadcast %536 : vector<1x16xi1> to vector<1x16xi1>
    %538 = arith.xori %534, %537 : vector<1x16xi1>
    %539 = arith.andi %538, %532 : vector<1x16xi1>
    %540 = vector.broadcast %528 : i32 to vector<1x16xi32>
    %541 = arith.addi %530, %540 : vector<1x16xi32>
    %542 = arith.select %539, %541, %530 : vector<1x16xi1>, vector<1x16xi32>
    %c1_i32_199 = arith.constant 1 : i32
    %543 = vector.broadcast %c1_i32_199 : i32 to vector<1x16xi32>
    %544 = arith.cmpi sge, %542, %543 : vector<1x16xi32>
    %c3_i32_200 = arith.constant 3 : i32
    %545 = vector.broadcast %c3_i32_200 : i32 to vector<1x16xi32>
    %546 = arith.cmpi slt, %542, %545 : vector<1x16xi32>
    %cst_201 = arith.constant 0.000000e+00 : f32
    %547 = vector.broadcast %cst_201 : f32 to vector<8x5xf32>
    %548 = vector.extract_strided_slice %523 {offsets = [0, 0], sizes = [8, 11], strides = [1, 1]} : vector<8x16xf32> to vector<8x11xf32>
    %549 = tpu.concatenate %547, %548 in 1 : vector<8x5xf32>, vector<8x11xf32> -> vector<8x16xf32>
    %cst_202 = arith.constant 0.000000e+00 : f32
    %550 = vector.shape_cast %544 : vector<1x16xi1> to vector<1x16xi1>
    %551 = vector.broadcast %550 : vector<1x16xi1> to vector<8x16xi1>
    %552 = vector.broadcast %cst_202 : f32 to vector<8x16xf32>
    %553 = arith.select %551, %549, %552 : vector<8x16xi1>, vector<8x16xf32>
    %cst_203 = arith.constant 0.000000e+00 : f32
    %554 = vector.broadcast %cst_203 : f32 to vector<8x4xf32>
    %555 = vector.extract_strided_slice %523 {offsets = [0, 0], sizes = [8, 12], strides = [1, 1]} : vector<8x16xf32> to vector<8x12xf32>
    %556 = tpu.concatenate %554, %555 in 1 : vector<8x4xf32>, vector<8x12xf32> -> vector<8x16xf32>
    %cst_204 = arith.constant 0.000000e+00 : f32
    %557 = vector.broadcast %cst_204 : f32 to vector<8x3xf32>
    %558 = vector.extract_strided_slice %523 {offsets = [0, 0], sizes = [8, 13], strides = [1, 1]} : vector<8x16xf32> to vector<8x13xf32>
    %559 = tpu.concatenate %557, %558 in 1 : vector<8x3xf32>, vector<8x13xf32> -> vector<8x16xf32>
    %cst_205 = arith.constant 0.000000e+00 : f32
    %560 = vector.shape_cast %546 : vector<1x16xi1> to vector<1x16xi1>
    %561 = vector.broadcast %560 : vector<1x16xi1> to vector<8x16xi1>
    %562 = vector.broadcast %cst_205 : f32 to vector<8x16xf32>
    %563 = arith.select %561, %559, %562 : vector<8x16xi1>, vector<8x16xf32>
    %cst_206 = arith.constant 0.000000e+00 : f32
    %564 = vector.broadcast %cst_206 : f32 to vector<8x1xf32>
    %565 = vector.extract_strided_slice %523 {offsets = [0, 0], sizes = [8, 15], strides = [1, 1]} : vector<8x16xf32> to vector<8x15xf32>
    %566 = tpu.concatenate %564, %565 in 1 : vector<8x1xf32>, vector<8x15xf32> -> vector<8x16xf32>
    %cst_207 = arith.constant 0.000000e+00 : f32
    %567 = vector.shape_cast %544 : vector<1x16xi1> to vector<1x16xi1>
    %568 = vector.broadcast %567 : vector<1x16xi1> to vector<8x16xi1>
    %569 = vector.broadcast %cst_207 : f32 to vector<8x16xf32>
    %570 = arith.select %568, %566, %569 : vector<8x16xi1>, vector<8x16xf32>
    %571 = vector.extract_strided_slice %523 {offsets = [0, 1], sizes = [8, 15], strides = [1, 1]} : vector<8x16xf32> to vector<8x15xf32>
    %cst_208 = arith.constant 0.000000e+00 : f32
    %572 = vector.broadcast %cst_208 : f32 to vector<8x1xf32>
    %573 = tpu.concatenate %571, %572 in 1 : vector<8x15xf32>, vector<8x1xf32> -> vector<8x16xf32>
    %cst_209 = arith.constant 0.000000e+00 : f32
    %574 = vector.shape_cast %546 : vector<1x16xi1> to vector<1x16xi1>
    %575 = vector.broadcast %574 : vector<1x16xi1> to vector<8x16xi1>
    %576 = vector.broadcast %cst_209 : f32 to vector<8x16xf32>
    %577 = arith.select %575, %573, %576 : vector<8x16xi1>, vector<8x16xf32>
    %578 = vector.extract_strided_slice %523 {offsets = [0, 3], sizes = [8, 13], strides = [1, 1]} : vector<8x16xf32> to vector<8x13xf32>
    %cst_210 = arith.constant 0.000000e+00 : f32
    %579 = vector.broadcast %cst_210 : f32 to vector<8x3xf32>
    %580 = tpu.concatenate %578, %579 in 1 : vector<8x13xf32>, vector<8x3xf32> -> vector<8x16xf32>
    %cst_211 = arith.constant 0.000000e+00 : f32
    %581 = vector.shape_cast %544 : vector<1x16xi1> to vector<1x16xi1>
    %582 = vector.broadcast %581 : vector<1x16xi1> to vector<8x16xi1>
    %583 = vector.broadcast %cst_211 : f32 to vector<8x16xf32>
    %584 = arith.select %582, %580, %583 : vector<8x16xi1>, vector<8x16xf32>
    %585 = vector.extract_strided_slice %523 {offsets = [0, 4], sizes = [8, 12], strides = [1, 1]} : vector<8x16xf32> to vector<8x12xf32>
    %cst_212 = arith.constant 0.000000e+00 : f32
    %586 = vector.broadcast %cst_212 : f32 to vector<8x4xf32>
    %587 = tpu.concatenate %585, %586 in 1 : vector<8x12xf32>, vector<8x4xf32> -> vector<8x16xf32>
    %588 = vector.extract_strided_slice %523 {offsets = [0, 5], sizes = [8, 11], strides = [1, 1]} : vector<8x16xf32> to vector<8x11xf32>
    %cst_213 = arith.constant 0.000000e+00 : f32
    %589 = vector.broadcast %cst_213 : f32 to vector<8x5xf32>
    %590 = tpu.concatenate %588, %589 in 1 : vector<8x11xf32>, vector<8x5xf32> -> vector<8x16xf32>
    %cst_214 = arith.constant 0.000000e+00 : f32
    %591 = vector.shape_cast %546 : vector<1x16xi1> to vector<1x16xi1>
    %592 = vector.broadcast %591 : vector<1x16xi1> to vector<8x16xi1>
    %593 = vector.broadcast %cst_214 : f32 to vector<8x16xf32>
    %594 = arith.select %592, %590, %593 : vector<8x16xi1>, vector<8x16xf32>
    %595 = tpu.concatenate %553, %556, %563, %570, %523, %577, %584, %587, %594 in 0 : vector<8x16xf32>, vector<8x16xf32>, vector<8x16xf32>, vector<8x16xf32>, vector<8x16xf32>, vector<8x16xf32>, vector<8x16xf32>, vector<8x16xf32>, vector<8x16xf32> -> vector<72x16xf32>
    %596 = arith.truncf %595 : vector<72x16xf32> to vector<72x16xbf16>
    %cst_215 = arith.constant dense<0.000000e+00> : vector<8x16xf32>
    %597 = tpu.matmul %524, %596, %cst_215 {dimension_numbers = #tpu.dot_dimension_numbers<[1], [0], [0], [1], [0, 0, 1, 1], [], []>} : vector<8x72xbf16>, vector<72x16xbf16>, vector<8x16xf32> -> vector<8x16xf32>
    %598 = vector.broadcast %525 : vector<8x1xf32> to vector<8x16xf32>
    %599 = arith.addf %597, %598 : vector<8x16xf32>
    %cst_216 = arith.constant 0.000000e+00 : f32
    %600 = vector.broadcast %cst_216 : f32 to vector<8x16xf32>
    %601 = arith.cmpf ogt, %599, %600 : vector<8x16xf32>
    %cst_217 = arith.constant 0.000000e+00 : f32
    %602 = vector.broadcast %cst_217 : f32 to vector<8x16xf32>
    %603 = arith.minimumf %599, %602 : vector<8x16xf32>
    %604 = math.exp %603 : vector<8x16xf32>
    %cst_218 = arith.constant 1.000000e+00 : f32
    %605 = vector.broadcast %cst_218 : f32 to vector<8x16xf32>
    %606 = arith.subf %604, %605 : vector<8x16xf32>
    %607 = arith.select %601, %599, %606 : vector<8x16xi1>, vector<8x16xf32>
    %c0_219 = arith.constant 0 : index
    %c0_220 = arith.constant 0 : index
    %608 = vector.load %arg22[%c0_219, %c0_220] : memref<12x8xbf16, #tpu.memory_space<vmem>>, vector<12x8xbf16>
    %c0_221 = arith.constant 0 : index
    %c0_222 = arith.constant 0 : index
    %609 = vector.load %arg23[%c0_221, %c0_222] : memref<12x1xf32, #tpu.memory_space<vmem>>, vector<12x1xf32>
    %610 = arith.truncf %607 : vector<8x16xf32> to vector<8x16xbf16>
    %cst_223 = arith.constant dense<0.000000e+00> : vector<12x16xf32>
    %611 = tpu.matmul %608, %610, %cst_223 {dimension_numbers = #tpu.dot_dimension_numbers<[1], [0], [0], [1], [0, 0, 1, 1], [], []>} : vector<12x8xbf16>, vector<8x16xbf16>, vector<12x16xf32> -> vector<12x16xf32>
    %612 = vector.broadcast %609 : vector<12x1xf32> to vector<12x16xf32>
    %613 = arith.addf %611, %612 : vector<12x16xf32>
    %c0_224 = arith.constant 0 : index
    %c0_225 = arith.constant 0 : index
    %614 = vector.load %arg24[%c0_224, %c0_225] : memref<16x4xbf16, #tpu.memory_space<vmem>>, vector<16x4xbf16>
    %615 = arith.truncf %613 : vector<12x16xf32> to vector<12x16xbf16>
    %cst_226 = arith.constant dense<0.000000e+00> : vector<12x4xf32>
    %616 = tpu.matmul %615, %614, %cst_226 {dimension_numbers = #tpu.dot_dimension_numbers<[1], [0], [0], [1], [0, 0, 1, 1], [], []>} : vector<12x16xbf16>, vector<16x4xbf16>, vector<12x4xf32> -> vector<12x4xf32>
    %c0_227 = arith.constant 0 : index
    %c0_228 = arith.constant 0 : index
    %617 = vector.load %arg25[%c0_227, %c0_228] : memref<12x108xbf16, #tpu.memory_space<vmem>>, vector<12x108xbf16>
    %c0_229 = arith.constant 0 : index
    %c0_230 = arith.constant 0 : index
    %618 = vector.load %arg26[%c0_229, %c0_230] : memref<12x1xf32, #tpu.memory_space<vmem>>, vector<12x1xf32>
    %619 = tpu.iota {dimensions = array<i32: 1>} : vector<1x4xi32>
    %c2_i32 = arith.constant 2 : i32
    %c0_i32_231 = arith.constant 0 : i32
    %620 = arith.cmpi eq, %c2_i32, %c0_i32_231 : i32
    %c1_i32_232 = arith.constant 1 : i32
    %621 = arith.select %620, %c1_i32_232, %c2_i32 : i32
    %622 = vector.broadcast %621 : i32 to vector<1x4xi32>
    %623 = arith.remsi %619, %622 : vector<1x4xi32>
    %c0_i32_233 = arith.constant 0 : i32
    %624 = vector.broadcast %c0_i32_233 : i32 to vector<1x4xi32>
    %625 = arith.cmpi ne, %623, %624 : vector<1x4xi32>
    %c0_i32_234 = arith.constant 0 : i32
    %626 = vector.broadcast %c0_i32_234 : i32 to vector<1x4xi32>
    %627 = arith.cmpi slt, %623, %626 : vector<1x4xi32>
    %c0_i32_235 = arith.constant 0 : i32
    %628 = arith.cmpi slt, %621, %c0_i32_235 : i32
    %629 = vector.broadcast %628 : i1 to vector<1x4xi1>
    %630 = vector.broadcast %629 : vector<1x4xi1> to vector<1x4xi1>
    %631 = arith.xori %627, %630 : vector<1x4xi1>
    %632 = arith.andi %631, %625 : vector<1x4xi1>
    %633 = vector.broadcast %621 : i32 to vector<1x4xi32>
    %634 = arith.addi %623, %633 : vector<1x4xi32>
    %635 = arith.select %632, %634, %623 : vector<1x4xi1>, vector<1x4xi32>
    %c1_i32_236 = arith.constant 1 : i32
    %636 = vector.broadcast %c1_i32_236 : i32 to vector<1x4xi32>
    %637 = arith.cmpi sge, %635, %636 : vector<1x4xi32>
    %c1_i32_237 = arith.constant 1 : i32
    %638 = vector.broadcast %c1_i32_237 : i32 to vector<1x4xi32>
    %639 = arith.cmpi slt, %635, %638 : vector<1x4xi32>
    %cst_238 = arith.constant 0.000000e+00 : f32
    %640 = vector.broadcast %cst_238 : f32 to vector<12x3xf32>
    %641 = vector.extract_strided_slice %616 {offsets = [0, 0], sizes = [12, 1], strides = [1, 1]} : vector<12x4xf32> to vector<12x1xf32>
    %642 = tpu.concatenate %640, %641 in 1 : vector<12x3xf32>, vector<12x1xf32> -> vector<12x4xf32>
    %cst_239 = arith.constant 0.000000e+00 : f32
    %643 = vector.shape_cast %637 : vector<1x4xi1> to vector<1x4xi1>
    %644 = vector.broadcast %643 : vector<1x4xi1> to vector<12x4xi1>
    %645 = vector.broadcast %cst_239 : f32 to vector<12x4xf32>
    %646 = arith.select %644, %642, %645 : vector<12x4xi1>, vector<12x4xf32>
    %cst_240 = arith.constant 0.000000e+00 : f32
    %647 = vector.broadcast %cst_240 : f32 to vector<12x2xf32>
    %648 = vector.extract_strided_slice %616 {offsets = [0, 0], sizes = [12, 2], strides = [1, 1]} : vector<12x4xf32> to vector<12x2xf32>
    %649 = tpu.concatenate %647, %648 in 1 : vector<12x2xf32>, vector<12x2xf32> -> vector<12x4xf32>
    %cst_241 = arith.constant 0.000000e+00 : f32
    %650 = vector.broadcast %cst_241 : f32 to vector<12x1xf32>
    %651 = vector.extract_strided_slice %616 {offsets = [0, 0], sizes = [12, 3], strides = [1, 1]} : vector<12x4xf32> to vector<12x3xf32>
    %652 = tpu.concatenate %650, %651 in 1 : vector<12x1xf32>, vector<12x3xf32> -> vector<12x4xf32>
    %cst_242 = arith.constant 0.000000e+00 : f32
    %653 = vector.shape_cast %639 : vector<1x4xi1> to vector<1x4xi1>
    %654 = vector.broadcast %653 : vector<1x4xi1> to vector<12x4xi1>
    %655 = vector.broadcast %cst_242 : f32 to vector<12x4xf32>
    %656 = arith.select %654, %652, %655 : vector<12x4xi1>, vector<12x4xf32>
    %cst_243 = arith.constant 0.000000e+00 : f32
    %657 = vector.broadcast %cst_243 : f32 to vector<12x1xf32>
    %658 = vector.extract_strided_slice %616 {offsets = [0, 0], sizes = [12, 3], strides = [1, 1]} : vector<12x4xf32> to vector<12x3xf32>
    %659 = tpu.concatenate %657, %658 in 1 : vector<12x1xf32>, vector<12x3xf32> -> vector<12x4xf32>
    %cst_244 = arith.constant 0.000000e+00 : f32
    %660 = vector.shape_cast %637 : vector<1x4xi1> to vector<1x4xi1>
    %661 = vector.broadcast %660 : vector<1x4xi1> to vector<12x4xi1>
    %662 = vector.broadcast %cst_244 : f32 to vector<12x4xf32>
    %663 = arith.select %661, %659, %662 : vector<12x4xi1>, vector<12x4xf32>
    %664 = vector.extract_strided_slice %616 {offsets = [0, 1], sizes = [12, 3], strides = [1, 1]} : vector<12x4xf32> to vector<12x3xf32>
    %cst_245 = arith.constant 0.000000e+00 : f32
    %665 = vector.broadcast %cst_245 : f32 to vector<12x1xf32>
    %666 = tpu.concatenate %664, %665 in 1 : vector<12x3xf32>, vector<12x1xf32> -> vector<12x4xf32>
    %cst_246 = arith.constant 0.000000e+00 : f32
    %667 = vector.shape_cast %639 : vector<1x4xi1> to vector<1x4xi1>
    %668 = vector.broadcast %667 : vector<1x4xi1> to vector<12x4xi1>
    %669 = vector.broadcast %cst_246 : f32 to vector<12x4xf32>
    %670 = arith.select %668, %666, %669 : vector<12x4xi1>, vector<12x4xf32>
    %671 = vector.extract_strided_slice %616 {offsets = [0, 1], sizes = [12, 3], strides = [1, 1]} : vector<12x4xf32> to vector<12x3xf32>
    %cst_247 = arith.constant 0.000000e+00 : f32
    %672 = vector.broadcast %cst_247 : f32 to vector<12x1xf32>
    %673 = tpu.concatenate %671, %672 in 1 : vector<12x3xf32>, vector<12x1xf32> -> vector<12x4xf32>
    %cst_248 = arith.constant 0.000000e+00 : f32
    %674 = vector.shape_cast %637 : vector<1x4xi1> to vector<1x4xi1>
    %675 = vector.broadcast %674 : vector<1x4xi1> to vector<12x4xi1>
    %676 = vector.broadcast %cst_248 : f32 to vector<12x4xf32>
    %677 = arith.select %675, %673, %676 : vector<12x4xi1>, vector<12x4xf32>
    %678 = vector.extract_strided_slice %616 {offsets = [0, 2], sizes = [12, 2], strides = [1, 1]} : vector<12x4xf32> to vector<12x2xf32>
    %cst_249 = arith.constant 0.000000e+00 : f32
    %679 = vector.broadcast %cst_249 : f32 to vector<12x2xf32>
    %680 = tpu.concatenate %678, %679 in 1 : vector<12x2xf32>, vector<12x2xf32> -> vector<12x4xf32>
    %681 = vector.extract_strided_slice %616 {offsets = [0, 3], sizes = [12, 1], strides = [1, 1]} : vector<12x4xf32> to vector<12x1xf32>
    %cst_250 = arith.constant 0.000000e+00 : f32
    %682 = vector.broadcast %cst_250 : f32 to vector<12x3xf32>
    %683 = tpu.concatenate %681, %682 in 1 : vector<12x1xf32>, vector<12x3xf32> -> vector<12x4xf32>
    %cst_251 = arith.constant 0.000000e+00 : f32
    %684 = vector.shape_cast %639 : vector<1x4xi1> to vector<1x4xi1>
    %685 = vector.broadcast %684 : vector<1x4xi1> to vector<12x4xi1>
    %686 = vector.broadcast %cst_251 : f32 to vector<12x4xf32>
    %687 = arith.select %685, %683, %686 : vector<12x4xi1>, vector<12x4xf32>
    %688 = tpu.concatenate %646, %649, %656, %663, %616, %670, %677, %680, %687 in 0 : vector<12x4xf32>, vector<12x4xf32>, vector<12x4xf32>, vector<12x4xf32>, vector<12x4xf32>, vector<12x4xf32>, vector<12x4xf32>, vector<12x4xf32>, vector<12x4xf32> -> vector<108x4xf32>
    %689 = arith.truncf %688 : vector<108x4xf32> to vector<108x4xbf16>
    %cst_252 = arith.constant dense<0.000000e+00> : vector<12x4xf32>
    %690 = tpu.matmul %617, %689, %cst_252 {dimension_numbers = #tpu.dot_dimension_numbers<[1], [0], [0], [1], [0, 0, 1, 1], [], []>} : vector<12x108xbf16>, vector<108x4xbf16>, vector<12x4xf32> -> vector<12x4xf32>
    %691 = vector.broadcast %618 : vector<12x1xf32> to vector<12x4xf32>
    %692 = arith.addf %690, %691 : vector<12x4xf32>
    %cst_253 = arith.constant 0.000000e+00 : f32
    %693 = vector.broadcast %cst_253 : f32 to vector<12x4xf32>
    %694 = arith.cmpf ogt, %692, %693 : vector<12x4xf32>
    %cst_254 = arith.constant 0.000000e+00 : f32
    %695 = vector.broadcast %cst_254 : f32 to vector<12x4xf32>
    %696 = arith.minimumf %692, %695 : vector<12x4xf32>
    %697 = math.exp %696 : vector<12x4xf32>
    %cst_255 = arith.constant 1.000000e+00 : f32
    %698 = vector.broadcast %cst_255 : f32 to vector<12x4xf32>
    %699 = arith.subf %697, %698 : vector<12x4xf32>
    %700 = arith.select %694, %692, %699 : vector<12x4xi1>, vector<12x4xf32>
    %c0_256 = arith.constant 0 : index
    %c0_257 = arith.constant 0 : index
    %701 = vector.load %arg27[%c0_256, %c0_257] : memref<12x108xbf16, #tpu.memory_space<vmem>>, vector<12x108xbf16>
    %c0_258 = arith.constant 0 : index
    %c0_259 = arith.constant 0 : index
    %702 = vector.load %arg28[%c0_258, %c0_259] : memref<12x1xf32, #tpu.memory_space<vmem>>, vector<12x1xf32>
    %703 = tpu.iota {dimensions = array<i32: 1>} : vector<1x4xi32>
    %c2_i32_260 = arith.constant 2 : i32
    %c0_i32_261 = arith.constant 0 : i32
    %704 = arith.cmpi eq, %c2_i32_260, %c0_i32_261 : i32
    %c1_i32_262 = arith.constant 1 : i32
    %705 = arith.select %704, %c1_i32_262, %c2_i32_260 : i32
    %706 = vector.broadcast %705 : i32 to vector<1x4xi32>
    %707 = arith.remsi %703, %706 : vector<1x4xi32>
    %c0_i32_263 = arith.constant 0 : i32
    %708 = vector.broadcast %c0_i32_263 : i32 to vector<1x4xi32>
    %709 = arith.cmpi ne, %707, %708 : vector<1x4xi32>
    %c0_i32_264 = arith.constant 0 : i32
    %710 = vector.broadcast %c0_i32_264 : i32 to vector<1x4xi32>
    %711 = arith.cmpi slt, %707, %710 : vector<1x4xi32>
    %c0_i32_265 = arith.constant 0 : i32
    %712 = arith.cmpi slt, %705, %c0_i32_265 : i32
    %713 = vector.broadcast %712 : i1 to vector<1x4xi1>
    %714 = vector.broadcast %713 : vector<1x4xi1> to vector<1x4xi1>
    %715 = arith.xori %711, %714 : vector<1x4xi1>
    %716 = arith.andi %715, %709 : vector<1x4xi1>
    %717 = vector.broadcast %705 : i32 to vector<1x4xi32>
    %718 = arith.addi %707, %717 : vector<1x4xi32>
    %719 = arith.select %716, %718, %707 : vector<1x4xi1>, vector<1x4xi32>
    %c1_i32_266 = arith.constant 1 : i32
    %720 = vector.broadcast %c1_i32_266 : i32 to vector<1x4xi32>
    %721 = arith.cmpi sge, %719, %720 : vector<1x4xi32>
    %c1_i32_267 = arith.constant 1 : i32
    %722 = vector.broadcast %c1_i32_267 : i32 to vector<1x4xi32>
    %723 = arith.cmpi slt, %719, %722 : vector<1x4xi32>
    %cst_268 = arith.constant 0.000000e+00 : f32
    %724 = vector.broadcast %cst_268 : f32 to vector<12x3xf32>
    %725 = vector.extract_strided_slice %700 {offsets = [0, 0], sizes = [12, 1], strides = [1, 1]} : vector<12x4xf32> to vector<12x1xf32>
    %726 = tpu.concatenate %724, %725 in 1 : vector<12x3xf32>, vector<12x1xf32> -> vector<12x4xf32>
    %cst_269 = arith.constant 0.000000e+00 : f32
    %727 = vector.shape_cast %721 : vector<1x4xi1> to vector<1x4xi1>
    %728 = vector.broadcast %727 : vector<1x4xi1> to vector<12x4xi1>
    %729 = vector.broadcast %cst_269 : f32 to vector<12x4xf32>
    %730 = arith.select %728, %726, %729 : vector<12x4xi1>, vector<12x4xf32>
    %cst_270 = arith.constant 0.000000e+00 : f32
    %731 = vector.broadcast %cst_270 : f32 to vector<12x2xf32>
    %732 = vector.extract_strided_slice %700 {offsets = [0, 0], sizes = [12, 2], strides = [1, 1]} : vector<12x4xf32> to vector<12x2xf32>
    %733 = tpu.concatenate %731, %732 in 1 : vector<12x2xf32>, vector<12x2xf32> -> vector<12x4xf32>
    %cst_271 = arith.constant 0.000000e+00 : f32
    %734 = vector.broadcast %cst_271 : f32 to vector<12x1xf32>
    %735 = vector.extract_strided_slice %700 {offsets = [0, 0], sizes = [12, 3], strides = [1, 1]} : vector<12x4xf32> to vector<12x3xf32>
    %736 = tpu.concatenate %734, %735 in 1 : vector<12x1xf32>, vector<12x3xf32> -> vector<12x4xf32>
    %cst_272 = arith.constant 0.000000e+00 : f32
    %737 = vector.shape_cast %723 : vector<1x4xi1> to vector<1x4xi1>
    %738 = vector.broadcast %737 : vector<1x4xi1> to vector<12x4xi1>
    %739 = vector.broadcast %cst_272 : f32 to vector<12x4xf32>
    %740 = arith.select %738, %736, %739 : vector<12x4xi1>, vector<12x4xf32>
    %cst_273 = arith.constant 0.000000e+00 : f32
    %741 = vector.broadcast %cst_273 : f32 to vector<12x1xf32>
    %742 = vector.extract_strided_slice %700 {offsets = [0, 0], sizes = [12, 3], strides = [1, 1]} : vector<12x4xf32> to vector<12x3xf32>
    %743 = tpu.concatenate %741, %742 in 1 : vector<12x1xf32>, vector<12x3xf32> -> vector<12x4xf32>
    %cst_274 = arith.constant 0.000000e+00 : f32
    %744 = vector.shape_cast %721 : vector<1x4xi1> to vector<1x4xi1>
    %745 = vector.broadcast %744 : vector<1x4xi1> to vector<12x4xi1>
    %746 = vector.broadcast %cst_274 : f32 to vector<12x4xf32>
    %747 = arith.select %745, %743, %746 : vector<12x4xi1>, vector<12x4xf32>
    %748 = vector.extract_strided_slice %700 {offsets = [0, 1], sizes = [12, 3], strides = [1, 1]} : vector<12x4xf32> to vector<12x3xf32>
    %cst_275 = arith.constant 0.000000e+00 : f32
    %749 = vector.broadcast %cst_275 : f32 to vector<12x1xf32>
    %750 = tpu.concatenate %748, %749 in 1 : vector<12x3xf32>, vector<12x1xf32> -> vector<12x4xf32>
    %cst_276 = arith.constant 0.000000e+00 : f32
    %751 = vector.shape_cast %723 : vector<1x4xi1> to vector<1x4xi1>
    %752 = vector.broadcast %751 : vector<1x4xi1> to vector<12x4xi1>
    %753 = vector.broadcast %cst_276 : f32 to vector<12x4xf32>
    %754 = arith.select %752, %750, %753 : vector<12x4xi1>, vector<12x4xf32>
    %755 = vector.extract_strided_slice %700 {offsets = [0, 1], sizes = [12, 3], strides = [1, 1]} : vector<12x4xf32> to vector<12x3xf32>
    %cst_277 = arith.constant 0.000000e+00 : f32
    %756 = vector.broadcast %cst_277 : f32 to vector<12x1xf32>
    %757 = tpu.concatenate %755, %756 in 1 : vector<12x3xf32>, vector<12x1xf32> -> vector<12x4xf32>
    %cst_278 = arith.constant 0.000000e+00 : f32
    %758 = vector.shape_cast %721 : vector<1x4xi1> to vector<1x4xi1>
    %759 = vector.broadcast %758 : vector<1x4xi1> to vector<12x4xi1>
    %760 = vector.broadcast %cst_278 : f32 to vector<12x4xf32>
    %761 = arith.select %759, %757, %760 : vector<12x4xi1>, vector<12x4xf32>
    %762 = vector.extract_strided_slice %700 {offsets = [0, 2], sizes = [12, 2], strides = [1, 1]} : vector<12x4xf32> to vector<12x2xf32>
    %cst_279 = arith.constant 0.000000e+00 : f32
    %763 = vector.broadcast %cst_279 : f32 to vector<12x2xf32>
    %764 = tpu.concatenate %762, %763 in 1 : vector<12x2xf32>, vector<12x2xf32> -> vector<12x4xf32>
    %765 = vector.extract_strided_slice %700 {offsets = [0, 3], sizes = [12, 1], strides = [1, 1]} : vector<12x4xf32> to vector<12x1xf32>
    %cst_280 = arith.constant 0.000000e+00 : f32
    %766 = vector.broadcast %cst_280 : f32 to vector<12x3xf32>
    %767 = tpu.concatenate %765, %766 in 1 : vector<12x1xf32>, vector<12x3xf32> -> vector<12x4xf32>
    %cst_281 = arith.constant 0.000000e+00 : f32
    %768 = vector.shape_cast %723 : vector<1x4xi1> to vector<1x4xi1>
    %769 = vector.broadcast %768 : vector<1x4xi1> to vector<12x4xi1>
    %770 = vector.broadcast %cst_281 : f32 to vector<12x4xf32>
    %771 = arith.select %769, %767, %770 : vector<12x4xi1>, vector<12x4xf32>
    %772 = tpu.concatenate %730, %733, %740, %747, %700, %754, %761, %764, %771 in 0 : vector<12x4xf32>, vector<12x4xf32>, vector<12x4xf32>, vector<12x4xf32>, vector<12x4xf32>, vector<12x4xf32>, vector<12x4xf32>, vector<12x4xf32>, vector<12x4xf32> -> vector<108x4xf32>
    %773 = arith.truncf %772 : vector<108x4xf32> to vector<108x4xbf16>
    %cst_282 = arith.constant dense<0.000000e+00> : vector<12x4xf32>
    %774 = tpu.matmul %701, %773, %cst_282 {dimension_numbers = #tpu.dot_dimension_numbers<[1], [0], [0], [1], [0, 0, 1, 1], [], []>} : vector<12x108xbf16>, vector<108x4xbf16>, vector<12x4xf32> -> vector<12x4xf32>
    %775 = vector.broadcast %702 : vector<12x1xf32> to vector<12x4xf32>
    %776 = arith.addf %774, %775 : vector<12x4xf32>
    %cst_283 = arith.constant 0.000000e+00 : f32
    %777 = vector.broadcast %cst_283 : f32 to vector<12x4xf32>
    %778 = arith.cmpf ogt, %776, %777 : vector<12x4xf32>
    %cst_284 = arith.constant 0.000000e+00 : f32
    %779 = vector.broadcast %cst_284 : f32 to vector<12x4xf32>
    %780 = arith.minimumf %776, %779 : vector<12x4xf32>
    %781 = math.exp %780 : vector<12x4xf32>
    %cst_285 = arith.constant 1.000000e+00 : f32
    %782 = vector.broadcast %cst_285 : f32 to vector<12x4xf32>
    %783 = arith.subf %781, %782 : vector<12x4xf32>
    %784 = arith.select %778, %776, %783 : vector<12x4xi1>, vector<12x4xf32>
    %c0_286 = arith.constant 0 : index
    %c0_287 = arith.constant 0 : index
    %785 = vector.load %arg29[%c0_286, %c0_287] : memref<16x12xbf16, #tpu.memory_space<vmem>>, vector<16x12xbf16>
    %c0_288 = arith.constant 0 : index
    %c0_289 = arith.constant 0 : index
    %786 = vector.load %arg30[%c0_288, %c0_289] : memref<16x1xf32, #tpu.memory_space<vmem>>, vector<16x1xf32>
    %787 = arith.truncf %784 : vector<12x4xf32> to vector<12x4xbf16>
    %cst_290 = arith.constant dense<0.000000e+00> : vector<16x4xf32>
    %788 = tpu.matmul %785, %787, %cst_290 {dimension_numbers = #tpu.dot_dimension_numbers<[1], [0], [0], [1], [0, 0, 1, 1], [], []>} : vector<16x12xbf16>, vector<12x4xbf16>, vector<16x4xf32> -> vector<16x4xf32>
    %789 = vector.broadcast %786 : vector<16x1xf32> to vector<16x4xf32>
    %790 = arith.addf %788, %789 : vector<16x4xf32>
    %c0_291 = arith.constant 0 : index
    %c0_292 = arith.constant 0 : index
    %791 = vector.load %arg31[%c0_291, %c0_292] : memref<4x1xbf16, #tpu.memory_space<vmem>>, vector<4x1xbf16>
    %792 = arith.truncf %790 : vector<16x4xf32> to vector<16x4xbf16>
    %cst_293 = arith.constant dense<0.000000e+00> : vector<16x1xf32>
    %793 = tpu.matmul %792, %791, %cst_293 {dimension_numbers = #tpu.dot_dimension_numbers<[1], [0], [0], [1], [0, 0, 1, 1], [], []>} : vector<16x4xbf16>, vector<4x1xbf16>, vector<16x1xf32> -> vector<16x1xf32>
    %c0_294 = arith.constant 0 : index
    %c0_295 = arith.constant 0 : index
    %794 = vector.load %arg33[%c0_294, %c0_295] : memref<8x1xf32, #tpu.memory_space<vmem>>, vector<8x1xf32>
    %795 = arith.truncf %793 : vector<16x1xf32> to vector<16x1xbf16>
    %c0_296 = arith.constant 0 : index
    %c0_297 = arith.constant 0 : index
    %c0_298 = arith.constant 0 : index
    %796 = vector.load %arg32[%c0_296, %c0_297, %c0_298] : memref<1x8x16xbf16, #tpu.memory_space<vmem>>, vector<1x8x16xbf16>
    %797 = vector.shape_cast %796 : vector<1x8x16xbf16> to vector<8x16xbf16>
    %cst_299 = arith.constant dense<0.000000e+00> : vector<8x1xf32>
    %798 = tpu.matmul %797, %795, %cst_299 {dimension_numbers = #tpu.dot_dimension_numbers<[1], [0], [0], [1], [0, 0, 1, 1], [], []>} : vector<8x16xbf16>, vector<16x1xbf16>, vector<8x1xf32> -> vector<8x1xf32>
    %799 = arith.addf %794, %798 : vector<8x1xf32>
    %c0_300 = arith.constant 0 : index
    %c0_301 = arith.constant 0 : index
    %800 = vector.load %arg35[%c0_300, %c0_301] : memref<4x1xf32, #tpu.memory_space<vmem>>, vector<4x1xf32>
    %801 = arith.truncf %799 : vector<8x1xf32> to vector<8x1xbf16>
    %c0_302 = arith.constant 0 : index
    %c0_303 = arith.constant 0 : index
    %c0_304 = arith.constant 0 : index
    %802 = vector.load %arg34[%c0_302, %c0_303, %c0_304] : memref<1x4x8xbf16, #tpu.memory_space<vmem>>, vector<1x4x8xbf16>
    %803 = vector.shape_cast %802 : vector<1x4x8xbf16> to vector<4x8xbf16>
    %cst_305 = arith.constant dense<0.000000e+00> : vector<4x1xf32>
    %804 = tpu.matmul %803, %801, %cst_305 {dimension_numbers = #tpu.dot_dimension_numbers<[1], [0], [0], [1], [0, 0, 1, 1], [], []>} : vector<4x8xbf16>, vector<8x1xbf16>, vector<4x1xf32> -> vector<4x1xf32>
    %805 = arith.addf %804, %800 : vector<4x1xf32>
    %c0_306 = arith.constant 0 : index
    %c0_307 = arith.constant 0 : index
    %806 = vector.load %arg36[%c0_306, %c0_307] : memref<4x36xbf16, #tpu.memory_space<vmem>>, vector<4x36xbf16>
    %c0_308 = arith.constant 0 : index
    %c0_309 = arith.constant 0 : index
    %807 = vector.load %arg37[%c0_308, %c0_309] : memref<4x1xf32, #tpu.memory_space<vmem>>, vector<4x1xf32>
    %cst_310 = arith.constant 0.000000e+00 : f32
    %808 = vector.broadcast %cst_310 : f32 to vector<4x1xf32>
    %cst_311 = arith.constant 0.000000e+00 : f32
    %809 = vector.broadcast %cst_311 : f32 to vector<4x1xf32>
    %cst_312 = arith.constant 0.000000e+00 : f32
    %810 = vector.broadcast %cst_312 : f32 to vector<4x1xf32>
    %cst_313 = arith.constant 0.000000e+00 : f32
    %811 = vector.broadcast %cst_313 : f32 to vector<4x1xf32>
    %cst_314 = arith.constant 0.000000e+00 : f32
    %812 = vector.broadcast %cst_314 : f32 to vector<4x1xf32>
    %cst_315 = arith.constant 0.000000e+00 : f32
    %813 = vector.broadcast %cst_315 : f32 to vector<4x1xf32>
    %cst_316 = arith.constant 0.000000e+00 : f32
    %814 = vector.broadcast %cst_316 : f32 to vector<4x1xf32>
    %cst_317 = arith.constant 0.000000e+00 : f32
    %815 = vector.broadcast %cst_317 : f32 to vector<4x1xf32>
    %816 = tpu.concatenate %808, %809, %810, %811, %805, %812, %813, %814, %815 in 0 : vector<4x1xf32>, vector<4x1xf32>, vector<4x1xf32>, vector<4x1xf32>, vector<4x1xf32>, vector<4x1xf32>, vector<4x1xf32>, vector<4x1xf32>, vector<4x1xf32> -> vector<36x1xf32>
    %817 = arith.truncf %816 : vector<36x1xf32> to vector<36x1xbf16>
    %cst_318 = arith.constant dense<0.000000e+00> : vector<4x1xf32>
    %818 = tpu.matmul %806, %817, %cst_318 {dimension_numbers = #tpu.dot_dimension_numbers<[1], [0], [0], [1], [0, 0, 1, 1], [], []>} : vector<4x36xbf16>, vector<36x1xbf16>, vector<4x1xf32> -> vector<4x1xf32>
    %819 = arith.addf %818, %807 : vector<4x1xf32>
    %cst_319 = arith.constant 0.000000e+00 : f32
    %820 = vector.broadcast %cst_319 : f32 to vector<4x1xf32>
    %821 = arith.cmpf ogt, %819, %820 : vector<4x1xf32>
    %cst_320 = arith.constant 0.000000e+00 : f32
    %822 = vector.broadcast %cst_320 : f32 to vector<4x1xf32>
    %823 = arith.minimumf %819, %822 : vector<4x1xf32>
    %824 = math.exp %823 : vector<4x1xf32>
    %cst_321 = arith.constant 1.000000e+00 : f32
    %825 = vector.broadcast %cst_321 : f32 to vector<4x1xf32>
    %826 = arith.subf %824, %825 : vector<4x1xf32>
    %827 = arith.select %821, %819, %826 : vector<4x1xi1>, vector<4x1xf32>
    %c0_322 = arith.constant 0 : index
    %c0_323 = arith.constant 0 : index
    %828 = vector.load %arg38[%c0_322, %c0_323] : memref<4x36xbf16, #tpu.memory_space<vmem>>, vector<4x36xbf16>
    %c0_324 = arith.constant 0 : index
    %c0_325 = arith.constant 0 : index
    %829 = vector.load %arg39[%c0_324, %c0_325] : memref<4x1xf32, #tpu.memory_space<vmem>>, vector<4x1xf32>
    %cst_326 = arith.constant 0.000000e+00 : f32
    %830 = vector.broadcast %cst_326 : f32 to vector<4x1xf32>
    %cst_327 = arith.constant 0.000000e+00 : f32
    %831 = vector.broadcast %cst_327 : f32 to vector<4x1xf32>
    %cst_328 = arith.constant 0.000000e+00 : f32
    %832 = vector.broadcast %cst_328 : f32 to vector<4x1xf32>
    %cst_329 = arith.constant 0.000000e+00 : f32
    %833 = vector.broadcast %cst_329 : f32 to vector<4x1xf32>
    %cst_330 = arith.constant 0.000000e+00 : f32
    %834 = vector.broadcast %cst_330 : f32 to vector<4x1xf32>
    %cst_331 = arith.constant 0.000000e+00 : f32
    %835 = vector.broadcast %cst_331 : f32 to vector<4x1xf32>
    %cst_332 = arith.constant 0.000000e+00 : f32
    %836 = vector.broadcast %cst_332 : f32 to vector<4x1xf32>
    %cst_333 = arith.constant 0.000000e+00 : f32
    %837 = vector.broadcast %cst_333 : f32 to vector<4x1xf32>
    %838 = tpu.concatenate %830, %831, %832, %833, %827, %834, %835, %836, %837 in 0 : vector<4x1xf32>, vector<4x1xf32>, vector<4x1xf32>, vector<4x1xf32>, vector<4x1xf32>, vector<4x1xf32>, vector<4x1xf32>, vector<4x1xf32>, vector<4x1xf32> -> vector<36x1xf32>
    %839 = arith.truncf %838 : vector<36x1xf32> to vector<36x1xbf16>
    %cst_334 = arith.constant dense<0.000000e+00> : vector<4x1xf32>
    %840 = tpu.matmul %828, %839, %cst_334 {dimension_numbers = #tpu.dot_dimension_numbers<[1], [0], [0], [1], [0, 0, 1, 1], [], []>} : vector<4x36xbf16>, vector<36x1xbf16>, vector<4x1xf32> -> vector<4x1xf32>
    %841 = arith.addf %840, %829 : vector<4x1xf32>
    %cst_335 = arith.constant 0.000000e+00 : f32
    %842 = vector.broadcast %cst_335 : f32 to vector<4x1xf32>
    %843 = arith.cmpf ogt, %841, %842 : vector<4x1xf32>
    %cst_336 = arith.constant 0.000000e+00 : f32
    %844 = vector.broadcast %cst_336 : f32 to vector<4x1xf32>
    %845 = arith.minimumf %841, %844 : vector<4x1xf32>
    %846 = math.exp %845 : vector<4x1xf32>
    %cst_337 = arith.constant 1.000000e+00 : f32
    %847 = vector.broadcast %cst_337 : f32 to vector<4x1xf32>
    %848 = arith.subf %846, %847 : vector<4x1xf32>
    %849 = arith.select %843, %841, %848 : vector<4x1xi1>, vector<4x1xf32>
    %850 = tpu.concatenate %849, %849, %849, %849 in 1 : vector<4x1xf32>, vector<4x1xf32>, vector<4x1xf32>, vector<4x1xf32> -> vector<4x4xf32>
    %c0_338 = arith.constant 0 : index
    %c0_339 = arith.constant 0 : index
    %851 = vector.load %arg40[%c0_338, %c0_339] : memref<4x36xbf16, #tpu.memory_space<vmem>>, vector<4x36xbf16>
    %c0_340 = arith.constant 0 : index
    %c0_341 = arith.constant 0 : index
    %852 = vector.load %arg41[%c0_340, %c0_341] : memref<4x1xf32, #tpu.memory_space<vmem>>, vector<4x1xf32>
    %853 = tpu.iota {dimensions = array<i32: 1>} : vector<1x4xi32>
    %c2_i32_342 = arith.constant 2 : i32
    %c0_i32_343 = arith.constant 0 : i32
    %854 = arith.cmpi eq, %c2_i32_342, %c0_i32_343 : i32
    %c1_i32_344 = arith.constant 1 : i32
    %855 = arith.select %854, %c1_i32_344, %c2_i32_342 : i32
    %856 = vector.broadcast %855 : i32 to vector<1x4xi32>
    %857 = arith.remsi %853, %856 : vector<1x4xi32>
    %c0_i32_345 = arith.constant 0 : i32
    %858 = vector.broadcast %c0_i32_345 : i32 to vector<1x4xi32>
    %859 = arith.cmpi ne, %857, %858 : vector<1x4xi32>
    %c0_i32_346 = arith.constant 0 : i32
    %860 = vector.broadcast %c0_i32_346 : i32 to vector<1x4xi32>
    %861 = arith.cmpi slt, %857, %860 : vector<1x4xi32>
    %c0_i32_347 = arith.constant 0 : i32
    %862 = arith.cmpi slt, %855, %c0_i32_347 : i32
    %863 = vector.broadcast %862 : i1 to vector<1x4xi1>
    %864 = vector.broadcast %863 : vector<1x4xi1> to vector<1x4xi1>
    %865 = arith.xori %861, %864 : vector<1x4xi1>
    %866 = arith.andi %865, %859 : vector<1x4xi1>
    %867 = vector.broadcast %855 : i32 to vector<1x4xi32>
    %868 = arith.addi %857, %867 : vector<1x4xi32>
    %869 = arith.select %866, %868, %857 : vector<1x4xi1>, vector<1x4xi32>
    %c1_i32_348 = arith.constant 1 : i32
    %870 = vector.broadcast %c1_i32_348 : i32 to vector<1x4xi32>
    %871 = arith.cmpi sge, %869, %870 : vector<1x4xi32>
    %c1_i32_349 = arith.constant 1 : i32
    %872 = vector.broadcast %c1_i32_349 : i32 to vector<1x4xi32>
    %873 = arith.cmpi slt, %869, %872 : vector<1x4xi32>
    %cst_350 = arith.constant 0.000000e+00 : f32
    %874 = vector.broadcast %cst_350 : f32 to vector<4x3xf32>
    %875 = vector.extract_strided_slice %850 {offsets = [0, 0], sizes = [4, 1], strides = [1, 1]} : vector<4x4xf32> to vector<4x1xf32>
    %876 = tpu.concatenate %874, %875 in 1 : vector<4x3xf32>, vector<4x1xf32> -> vector<4x4xf32>
    %cst_351 = arith.constant 0.000000e+00 : f32
    %877 = vector.shape_cast %871 : vector<1x4xi1> to vector<1x4xi1>
    %878 = vector.broadcast %877 : vector<1x4xi1> to vector<4x4xi1>
    %879 = vector.broadcast %cst_351 : f32 to vector<4x4xf32>
    %880 = arith.select %878, %876, %879 : vector<4x4xi1>, vector<4x4xf32>
    %cst_352 = arith.constant 0.000000e+00 : f32
    %881 = vector.broadcast %cst_352 : f32 to vector<4x2xf32>
    %882 = vector.extract_strided_slice %850 {offsets = [0, 0], sizes = [4, 2], strides = [1, 1]} : vector<4x4xf32> to vector<4x2xf32>
    %883 = tpu.concatenate %881, %882 in 1 : vector<4x2xf32>, vector<4x2xf32> -> vector<4x4xf32>
    %cst_353 = arith.constant 0.000000e+00 : f32
    %884 = vector.broadcast %cst_353 : f32 to vector<4x1xf32>
    %885 = vector.extract_strided_slice %850 {offsets = [0, 0], sizes = [4, 3], strides = [1, 1]} : vector<4x4xf32> to vector<4x3xf32>
    %886 = tpu.concatenate %884, %885 in 1 : vector<4x1xf32>, vector<4x3xf32> -> vector<4x4xf32>
    %cst_354 = arith.constant 0.000000e+00 : f32
    %887 = vector.shape_cast %873 : vector<1x4xi1> to vector<1x4xi1>
    %888 = vector.broadcast %887 : vector<1x4xi1> to vector<4x4xi1>
    %889 = vector.broadcast %cst_354 : f32 to vector<4x4xf32>
    %890 = arith.select %888, %886, %889 : vector<4x4xi1>, vector<4x4xf32>
    %cst_355 = arith.constant 0.000000e+00 : f32
    %891 = vector.broadcast %cst_355 : f32 to vector<4x1xf32>
    %892 = vector.extract_strided_slice %850 {offsets = [0, 0], sizes = [4, 3], strides = [1, 1]} : vector<4x4xf32> to vector<4x3xf32>
    %893 = tpu.concatenate %891, %892 in 1 : vector<4x1xf32>, vector<4x3xf32> -> vector<4x4xf32>
    %cst_356 = arith.constant 0.000000e+00 : f32
    %894 = vector.shape_cast %871 : vector<1x4xi1> to vector<1x4xi1>
    %895 = vector.broadcast %894 : vector<1x4xi1> to vector<4x4xi1>
    %896 = vector.broadcast %cst_356 : f32 to vector<4x4xf32>
    %897 = arith.select %895, %893, %896 : vector<4x4xi1>, vector<4x4xf32>
    %898 = vector.extract_strided_slice %850 {offsets = [0, 1], sizes = [4, 3], strides = [1, 1]} : vector<4x4xf32> to vector<4x3xf32>
    %cst_357 = arith.constant 0.000000e+00 : f32
    %899 = vector.broadcast %cst_357 : f32 to vector<4x1xf32>
    %900 = tpu.concatenate %898, %899 in 1 : vector<4x3xf32>, vector<4x1xf32> -> vector<4x4xf32>
    %cst_358 = arith.constant 0.000000e+00 : f32
    %901 = vector.shape_cast %873 : vector<1x4xi1> to vector<1x4xi1>
    %902 = vector.broadcast %901 : vector<1x4xi1> to vector<4x4xi1>
    %903 = vector.broadcast %cst_358 : f32 to vector<4x4xf32>
    %904 = arith.select %902, %900, %903 : vector<4x4xi1>, vector<4x4xf32>
    %905 = vector.extract_strided_slice %850 {offsets = [0, 1], sizes = [4, 3], strides = [1, 1]} : vector<4x4xf32> to vector<4x3xf32>
    %cst_359 = arith.constant 0.000000e+00 : f32
    %906 = vector.broadcast %cst_359 : f32 to vector<4x1xf32>
    %907 = tpu.concatenate %905, %906 in 1 : vector<4x3xf32>, vector<4x1xf32> -> vector<4x4xf32>
    %cst_360 = arith.constant 0.000000e+00 : f32
    %908 = vector.shape_cast %871 : vector<1x4xi1> to vector<1x4xi1>
    %909 = vector.broadcast %908 : vector<1x4xi1> to vector<4x4xi1>
    %910 = vector.broadcast %cst_360 : f32 to vector<4x4xf32>
    %911 = arith.select %909, %907, %910 : vector<4x4xi1>, vector<4x4xf32>
    %912 = vector.extract_strided_slice %850 {offsets = [0, 2], sizes = [4, 2], strides = [1, 1]} : vector<4x4xf32> to vector<4x2xf32>
    %cst_361 = arith.constant 0.000000e+00 : f32
    %913 = vector.broadcast %cst_361 : f32 to vector<4x2xf32>
    %914 = tpu.concatenate %912, %913 in 1 : vector<4x2xf32>, vector<4x2xf32> -> vector<4x4xf32>
    %915 = vector.extract_strided_slice %850 {offsets = [0, 3], sizes = [4, 1], strides = [1, 1]} : vector<4x4xf32> to vector<4x1xf32>
    %cst_362 = arith.constant 0.000000e+00 : f32
    %916 = vector.broadcast %cst_362 : f32 to vector<4x3xf32>
    %917 = tpu.concatenate %915, %916 in 1 : vector<4x1xf32>, vector<4x3xf32> -> vector<4x4xf32>
    %cst_363 = arith.constant 0.000000e+00 : f32
    %918 = vector.shape_cast %873 : vector<1x4xi1> to vector<1x4xi1>
    %919 = vector.broadcast %918 : vector<1x4xi1> to vector<4x4xi1>
    %920 = vector.broadcast %cst_363 : f32 to vector<4x4xf32>
    %921 = arith.select %919, %917, %920 : vector<4x4xi1>, vector<4x4xf32>
    %922 = tpu.concatenate %880, %883, %890, %897, %850, %904, %911, %914, %921 in 0 : vector<4x4xf32>, vector<4x4xf32>, vector<4x4xf32>, vector<4x4xf32>, vector<4x4xf32>, vector<4x4xf32>, vector<4x4xf32>, vector<4x4xf32>, vector<4x4xf32> -> vector<36x4xf32>
    %923 = arith.truncf %922 : vector<36x4xf32> to vector<36x4xbf16>
    %cst_364 = arith.constant dense<0.000000e+00> : vector<4x4xf32>
    %924 = tpu.matmul %851, %923, %cst_364 {dimension_numbers = #tpu.dot_dimension_numbers<[1], [0], [0], [1], [0, 0, 1, 1], [], []>} : vector<4x36xbf16>, vector<36x4xbf16>, vector<4x4xf32> -> vector<4x4xf32>
    %925 = vector.broadcast %852 : vector<4x1xf32> to vector<4x4xf32>
    %926 = arith.addf %924, %925 : vector<4x4xf32>
    %cst_365 = arith.constant 0.000000e+00 : f32
    %927 = vector.broadcast %cst_365 : f32 to vector<4x4xf32>
    %928 = arith.cmpf ogt, %926, %927 : vector<4x4xf32>
    %cst_366 = arith.constant 0.000000e+00 : f32
    %929 = vector.broadcast %cst_366 : f32 to vector<4x4xf32>
    %930 = arith.minimumf %926, %929 : vector<4x4xf32>
    %931 = math.exp %930 : vector<4x4xf32>
    %cst_367 = arith.constant 1.000000e+00 : f32
    %932 = vector.broadcast %cst_367 : f32 to vector<4x4xf32>
    %933 = arith.subf %931, %932 : vector<4x4xf32>
    %934 = arith.select %928, %926, %933 : vector<4x4xi1>, vector<4x4xf32>
    %c0_368 = arith.constant 0 : index
    %c0_369 = arith.constant 0 : index
    %935 = vector.load %arg42[%c0_368, %c0_369] : memref<4x36xbf16, #tpu.memory_space<vmem>>, vector<4x36xbf16>
    %c0_370 = arith.constant 0 : index
    %c0_371 = arith.constant 0 : index
    %936 = vector.load %arg43[%c0_370, %c0_371] : memref<4x1xf32, #tpu.memory_space<vmem>>, vector<4x1xf32>
    %937 = tpu.iota {dimensions = array<i32: 1>} : vector<1x4xi32>
    %c2_i32_372 = arith.constant 2 : i32
    %c0_i32_373 = arith.constant 0 : i32
    %938 = arith.cmpi eq, %c2_i32_372, %c0_i32_373 : i32
    %c1_i32_374 = arith.constant 1 : i32
    %939 = arith.select %938, %c1_i32_374, %c2_i32_372 : i32
    %940 = vector.broadcast %939 : i32 to vector<1x4xi32>
    %941 = arith.remsi %937, %940 : vector<1x4xi32>
    %c0_i32_375 = arith.constant 0 : i32
    %942 = vector.broadcast %c0_i32_375 : i32 to vector<1x4xi32>
    %943 = arith.cmpi ne, %941, %942 : vector<1x4xi32>
    %c0_i32_376 = arith.constant 0 : i32
    %944 = vector.broadcast %c0_i32_376 : i32 to vector<1x4xi32>
    %945 = arith.cmpi slt, %941, %944 : vector<1x4xi32>
    %c0_i32_377 = arith.constant 0 : i32
    %946 = arith.cmpi slt, %939, %c0_i32_377 : i32
    %947 = vector.broadcast %946 : i1 to vector<1x4xi1>
    %948 = vector.broadcast %947 : vector<1x4xi1> to vector<1x4xi1>
    %949 = arith.xori %945, %948 : vector<1x4xi1>
    %950 = arith.andi %949, %943 : vector<1x4xi1>
    %951 = vector.broadcast %939 : i32 to vector<1x4xi32>
    %952 = arith.addi %941, %951 : vector<1x4xi32>
    %953 = arith.select %950, %952, %941 : vector<1x4xi1>, vector<1x4xi32>
    %c1_i32_378 = arith.constant 1 : i32
    %954 = vector.broadcast %c1_i32_378 : i32 to vector<1x4xi32>
    %955 = arith.cmpi sge, %953, %954 : vector<1x4xi32>
    %c1_i32_379 = arith.constant 1 : i32
    %956 = vector.broadcast %c1_i32_379 : i32 to vector<1x4xi32>
    %957 = arith.cmpi slt, %953, %956 : vector<1x4xi32>
    %cst_380 = arith.constant 0.000000e+00 : f32
    %958 = vector.broadcast %cst_380 : f32 to vector<4x3xf32>
    %959 = vector.extract_strided_slice %934 {offsets = [0, 0], sizes = [4, 1], strides = [1, 1]} : vector<4x4xf32> to vector<4x1xf32>
    %960 = tpu.concatenate %958, %959 in 1 : vector<4x3xf32>, vector<4x1xf32> -> vector<4x4xf32>
    %cst_381 = arith.constant 0.000000e+00 : f32
    %961 = vector.shape_cast %955 : vector<1x4xi1> to vector<1x4xi1>
    %962 = vector.broadcast %961 : vector<1x4xi1> to vector<4x4xi1>
    %963 = vector.broadcast %cst_381 : f32 to vector<4x4xf32>
    %964 = arith.select %962, %960, %963 : vector<4x4xi1>, vector<4x4xf32>
    %cst_382 = arith.constant 0.000000e+00 : f32
    %965 = vector.broadcast %cst_382 : f32 to vector<4x2xf32>
    %966 = vector.extract_strided_slice %934 {offsets = [0, 0], sizes = [4, 2], strides = [1, 1]} : vector<4x4xf32> to vector<4x2xf32>
    %967 = tpu.concatenate %965, %966 in 1 : vector<4x2xf32>, vector<4x2xf32> -> vector<4x4xf32>
    %cst_383 = arith.constant 0.000000e+00 : f32
    %968 = vector.broadcast %cst_383 : f32 to vector<4x1xf32>
    %969 = vector.extract_strided_slice %934 {offsets = [0, 0], sizes = [4, 3], strides = [1, 1]} : vector<4x4xf32> to vector<4x3xf32>
    %970 = tpu.concatenate %968, %969 in 1 : vector<4x1xf32>, vector<4x3xf32> -> vector<4x4xf32>
    %cst_384 = arith.constant 0.000000e+00 : f32
    %971 = vector.shape_cast %957 : vector<1x4xi1> to vector<1x4xi1>
    %972 = vector.broadcast %971 : vector<1x4xi1> to vector<4x4xi1>
    %973 = vector.broadcast %cst_384 : f32 to vector<4x4xf32>
    %974 = arith.select %972, %970, %973 : vector<4x4xi1>, vector<4x4xf32>
    %cst_385 = arith.constant 0.000000e+00 : f32
    %975 = vector.broadcast %cst_385 : f32 to vector<4x1xf32>
    %976 = vector.extract_strided_slice %934 {offsets = [0, 0], sizes = [4, 3], strides = [1, 1]} : vector<4x4xf32> to vector<4x3xf32>
    %977 = tpu.concatenate %975, %976 in 1 : vector<4x1xf32>, vector<4x3xf32> -> vector<4x4xf32>
    %cst_386 = arith.constant 0.000000e+00 : f32
    %978 = vector.shape_cast %955 : vector<1x4xi1> to vector<1x4xi1>
    %979 = vector.broadcast %978 : vector<1x4xi1> to vector<4x4xi1>
    %980 = vector.broadcast %cst_386 : f32 to vector<4x4xf32>
    %981 = arith.select %979, %977, %980 : vector<4x4xi1>, vector<4x4xf32>
    %982 = vector.extract_strided_slice %934 {offsets = [0, 1], sizes = [4, 3], strides = [1, 1]} : vector<4x4xf32> to vector<4x3xf32>
    %cst_387 = arith.constant 0.000000e+00 : f32
    %983 = vector.broadcast %cst_387 : f32 to vector<4x1xf32>
    %984 = tpu.concatenate %982, %983 in 1 : vector<4x3xf32>, vector<4x1xf32> -> vector<4x4xf32>
    %cst_388 = arith.constant 0.000000e+00 : f32
    %985 = vector.shape_cast %957 : vector<1x4xi1> to vector<1x4xi1>
    %986 = vector.broadcast %985 : vector<1x4xi1> to vector<4x4xi1>
    %987 = vector.broadcast %cst_388 : f32 to vector<4x4xf32>
    %988 = arith.select %986, %984, %987 : vector<4x4xi1>, vector<4x4xf32>
    %989 = vector.extract_strided_slice %934 {offsets = [0, 1], sizes = [4, 3], strides = [1, 1]} : vector<4x4xf32> to vector<4x3xf32>
    %cst_389 = arith.constant 0.000000e+00 : f32
    %990 = vector.broadcast %cst_389 : f32 to vector<4x1xf32>
    %991 = tpu.concatenate %989, %990 in 1 : vector<4x3xf32>, vector<4x1xf32> -> vector<4x4xf32>
    %cst_390 = arith.constant 0.000000e+00 : f32
    %992 = vector.shape_cast %955 : vector<1x4xi1> to vector<1x4xi1>
    %993 = vector.broadcast %992 : vector<1x4xi1> to vector<4x4xi1>
    %994 = vector.broadcast %cst_390 : f32 to vector<4x4xf32>
    %995 = arith.select %993, %991, %994 : vector<4x4xi1>, vector<4x4xf32>
    %996 = vector.extract_strided_slice %934 {offsets = [0, 2], sizes = [4, 2], strides = [1, 1]} : vector<4x4xf32> to vector<4x2xf32>
    %cst_391 = arith.constant 0.000000e+00 : f32
    %997 = vector.broadcast %cst_391 : f32 to vector<4x2xf32>
    %998 = tpu.concatenate %996, %997 in 1 : vector<4x2xf32>, vector<4x2xf32> -> vector<4x4xf32>
    %999 = vector.extract_strided_slice %934 {offsets = [0, 3], sizes = [4, 1], strides = [1, 1]} : vector<4x4xf32> to vector<4x1xf32>
    %cst_392 = arith.constant 0.000000e+00 : f32
    %1000 = vector.broadcast %cst_392 : f32 to vector<4x3xf32>
    %1001 = tpu.concatenate %999, %1000 in 1 : vector<4x1xf32>, vector<4x3xf32> -> vector<4x4xf32>
    %cst_393 = arith.constant 0.000000e+00 : f32
    %1002 = vector.shape_cast %957 : vector<1x4xi1> to vector<1x4xi1>
    %1003 = vector.broadcast %1002 : vector<1x4xi1> to vector<4x4xi1>
    %1004 = vector.broadcast %cst_393 : f32 to vector<4x4xf32>
    %1005 = arith.select %1003, %1001, %1004 : vector<4x4xi1>, vector<4x4xf32>
    %1006 = tpu.concatenate %964, %967, %974, %981, %934, %988, %995, %998, %1005 in 0 : vector<4x4xf32>, vector<4x4xf32>, vector<4x4xf32>, vector<4x4xf32>, vector<4x4xf32>, vector<4x4xf32>, vector<4x4xf32>, vector<4x4xf32>, vector<4x4xf32> -> vector<36x4xf32>
    %1007 = arith.truncf %1006 : vector<36x4xf32> to vector<36x4xbf16>
    %cst_394 = arith.constant dense<0.000000e+00> : vector<4x4xf32>
    %1008 = tpu.matmul %935, %1007, %cst_394 {dimension_numbers = #tpu.dot_dimension_numbers<[1], [0], [0], [1], [0, 0, 1, 1], [], []>} : vector<4x36xbf16>, vector<36x4xbf16>, vector<4x4xf32> -> vector<4x4xf32>
    %1009 = vector.broadcast %936 : vector<4x1xf32> to vector<4x4xf32>
    %1010 = arith.addf %1008, %1009 : vector<4x4xf32>
    %cst_395 = arith.constant 0.000000e+00 : f32
    %1011 = vector.broadcast %cst_395 : f32 to vector<4x4xf32>
    %1012 = arith.cmpf ogt, %1010, %1011 : vector<4x4xf32>
    %cst_396 = arith.constant 0.000000e+00 : f32
    %1013 = vector.broadcast %cst_396 : f32 to vector<4x4xf32>
    %1014 = arith.minimumf %1010, %1013 : vector<4x4xf32>
    %1015 = math.exp %1014 : vector<4x4xf32>
    %cst_397 = arith.constant 1.000000e+00 : f32
    %1016 = vector.broadcast %cst_397 : f32 to vector<4x4xf32>
    %1017 = arith.subf %1015, %1016 : vector<4x4xf32>
    %1018 = arith.select %1012, %1010, %1017 : vector<4x4xi1>, vector<4x4xf32>
    %c0_398 = arith.constant 0 : index
    %c0_399 = arith.constant 0 : index
    %1019 = vector.load %arg44[%c0_398, %c0_399] : memref<4x16xbf16, #tpu.memory_space<vmem>>, vector<4x16xbf16>
    %1020 = arith.truncf %1018 : vector<4x4xf32> to vector<4x4xbf16>
    %cst_400 = arith.constant dense<0.000000e+00> : vector<4x16xf32>
    %1021 = tpu.matmul %1020, %1019, %cst_400 {dimension_numbers = #tpu.dot_dimension_numbers<[1], [0], [0], [1], [0, 0, 1, 1], [], []>} : vector<4x4xbf16>, vector<4x16xbf16>, vector<4x16xf32> -> vector<4x16xf32>
    %c0_401 = arith.constant 0 : index
    %c0_402 = arith.constant 0 : index
    %1022 = vector.load %arg45[%c0_401, %c0_402] : memref<4x36xbf16, #tpu.memory_space<vmem>>, vector<4x36xbf16>
    %c0_403 = arith.constant 0 : index
    %c0_404 = arith.constant 0 : index
    %1023 = vector.load %arg46[%c0_403, %c0_404] : memref<4x1xf32, #tpu.memory_space<vmem>>, vector<4x1xf32>
    %1024 = tpu.iota {dimensions = array<i32: 1>} : vector<1x16xi32>
    %c4_i32_405 = arith.constant 4 : i32
    %c0_i32_406 = arith.constant 0 : i32
    %1025 = arith.cmpi eq, %c4_i32_405, %c0_i32_406 : i32
    %c1_i32_407 = arith.constant 1 : i32
    %1026 = arith.select %1025, %c1_i32_407, %c4_i32_405 : i32
    %1027 = vector.broadcast %1026 : i32 to vector<1x16xi32>
    %1028 = arith.remsi %1024, %1027 : vector<1x16xi32>
    %c0_i32_408 = arith.constant 0 : i32
    %1029 = vector.broadcast %c0_i32_408 : i32 to vector<1x16xi32>
    %1030 = arith.cmpi ne, %1028, %1029 : vector<1x16xi32>
    %c0_i32_409 = arith.constant 0 : i32
    %1031 = vector.broadcast %c0_i32_409 : i32 to vector<1x16xi32>
    %1032 = arith.cmpi slt, %1028, %1031 : vector<1x16xi32>
    %c0_i32_410 = arith.constant 0 : i32
    %1033 = arith.cmpi slt, %1026, %c0_i32_410 : i32
    %1034 = vector.broadcast %1033 : i1 to vector<1x16xi1>
    %1035 = vector.broadcast %1034 : vector<1x16xi1> to vector<1x16xi1>
    %1036 = arith.xori %1032, %1035 : vector<1x16xi1>
    %1037 = arith.andi %1036, %1030 : vector<1x16xi1>
    %1038 = vector.broadcast %1026 : i32 to vector<1x16xi32>
    %1039 = arith.addi %1028, %1038 : vector<1x16xi32>
    %1040 = arith.select %1037, %1039, %1028 : vector<1x16xi1>, vector<1x16xi32>
    %c1_i32_411 = arith.constant 1 : i32
    %1041 = vector.broadcast %c1_i32_411 : i32 to vector<1x16xi32>
    %1042 = arith.cmpi sge, %1040, %1041 : vector<1x16xi32>
    %c3_i32_412 = arith.constant 3 : i32
    %1043 = vector.broadcast %c3_i32_412 : i32 to vector<1x16xi32>
    %1044 = arith.cmpi slt, %1040, %1043 : vector<1x16xi32>
    %cst_413 = arith.constant 0.000000e+00 : f32
    %1045 = vector.broadcast %cst_413 : f32 to vector<4x5xf32>
    %1046 = vector.extract_strided_slice %1021 {offsets = [0, 0], sizes = [4, 11], strides = [1, 1]} : vector<4x16xf32> to vector<4x11xf32>
    %1047 = tpu.concatenate %1045, %1046 in 1 : vector<4x5xf32>, vector<4x11xf32> -> vector<4x16xf32>
    %cst_414 = arith.constant 0.000000e+00 : f32
    %1048 = vector.shape_cast %1042 : vector<1x16xi1> to vector<1x16xi1>
    %1049 = vector.broadcast %1048 : vector<1x16xi1> to vector<4x16xi1>
    %1050 = vector.broadcast %cst_414 : f32 to vector<4x16xf32>
    %1051 = arith.select %1049, %1047, %1050 : vector<4x16xi1>, vector<4x16xf32>
    %cst_415 = arith.constant 0.000000e+00 : f32
    %1052 = vector.broadcast %cst_415 : f32 to vector<4x4xf32>
    %1053 = vector.extract_strided_slice %1021 {offsets = [0, 0], sizes = [4, 12], strides = [1, 1]} : vector<4x16xf32> to vector<4x12xf32>
    %1054 = tpu.concatenate %1052, %1053 in 1 : vector<4x4xf32>, vector<4x12xf32> -> vector<4x16xf32>
    %cst_416 = arith.constant 0.000000e+00 : f32
    %1055 = vector.broadcast %cst_416 : f32 to vector<4x3xf32>
    %1056 = vector.extract_strided_slice %1021 {offsets = [0, 0], sizes = [4, 13], strides = [1, 1]} : vector<4x16xf32> to vector<4x13xf32>
    %1057 = tpu.concatenate %1055, %1056 in 1 : vector<4x3xf32>, vector<4x13xf32> -> vector<4x16xf32>
    %cst_417 = arith.constant 0.000000e+00 : f32
    %1058 = vector.shape_cast %1044 : vector<1x16xi1> to vector<1x16xi1>
    %1059 = vector.broadcast %1058 : vector<1x16xi1> to vector<4x16xi1>
    %1060 = vector.broadcast %cst_417 : f32 to vector<4x16xf32>
    %1061 = arith.select %1059, %1057, %1060 : vector<4x16xi1>, vector<4x16xf32>
    %cst_418 = arith.constant 0.000000e+00 : f32
    %1062 = vector.broadcast %cst_418 : f32 to vector<4x1xf32>
    %1063 = vector.extract_strided_slice %1021 {offsets = [0, 0], sizes = [4, 15], strides = [1, 1]} : vector<4x16xf32> to vector<4x15xf32>
    %1064 = tpu.concatenate %1062, %1063 in 1 : vector<4x1xf32>, vector<4x15xf32> -> vector<4x16xf32>
    %cst_419 = arith.constant 0.000000e+00 : f32
    %1065 = vector.shape_cast %1042 : vector<1x16xi1> to vector<1x16xi1>
    %1066 = vector.broadcast %1065 : vector<1x16xi1> to vector<4x16xi1>
    %1067 = vector.broadcast %cst_419 : f32 to vector<4x16xf32>
    %1068 = arith.select %1066, %1064, %1067 : vector<4x16xi1>, vector<4x16xf32>
    %1069 = vector.extract_strided_slice %1021 {offsets = [0, 1], sizes = [4, 15], strides = [1, 1]} : vector<4x16xf32> to vector<4x15xf32>
    %cst_420 = arith.constant 0.000000e+00 : f32
    %1070 = vector.broadcast %cst_420 : f32 to vector<4x1xf32>
    %1071 = tpu.concatenate %1069, %1070 in 1 : vector<4x15xf32>, vector<4x1xf32> -> vector<4x16xf32>
    %cst_421 = arith.constant 0.000000e+00 : f32
    %1072 = vector.shape_cast %1044 : vector<1x16xi1> to vector<1x16xi1>
    %1073 = vector.broadcast %1072 : vector<1x16xi1> to vector<4x16xi1>
    %1074 = vector.broadcast %cst_421 : f32 to vector<4x16xf32>
    %1075 = arith.select %1073, %1071, %1074 : vector<4x16xi1>, vector<4x16xf32>
    %1076 = vector.extract_strided_slice %1021 {offsets = [0, 3], sizes = [4, 13], strides = [1, 1]} : vector<4x16xf32> to vector<4x13xf32>
    %cst_422 = arith.constant 0.000000e+00 : f32
    %1077 = vector.broadcast %cst_422 : f32 to vector<4x3xf32>
    %1078 = tpu.concatenate %1076, %1077 in 1 : vector<4x13xf32>, vector<4x3xf32> -> vector<4x16xf32>
    %cst_423 = arith.constant 0.000000e+00 : f32
    %1079 = vector.shape_cast %1042 : vector<1x16xi1> to vector<1x16xi1>
    %1080 = vector.broadcast %1079 : vector<1x16xi1> to vector<4x16xi1>
    %1081 = vector.broadcast %cst_423 : f32 to vector<4x16xf32>
    %1082 = arith.select %1080, %1078, %1081 : vector<4x16xi1>, vector<4x16xf32>
    %1083 = vector.extract_strided_slice %1021 {offsets = [0, 4], sizes = [4, 12], strides = [1, 1]} : vector<4x16xf32> to vector<4x12xf32>
    %cst_424 = arith.constant 0.000000e+00 : f32
    %1084 = vector.broadcast %cst_424 : f32 to vector<4x4xf32>
    %1085 = tpu.concatenate %1083, %1084 in 1 : vector<4x12xf32>, vector<4x4xf32> -> vector<4x16xf32>
    %1086 = vector.extract_strided_slice %1021 {offsets = [0, 5], sizes = [4, 11], strides = [1, 1]} : vector<4x16xf32> to vector<4x11xf32>
    %cst_425 = arith.constant 0.000000e+00 : f32
    %1087 = vector.broadcast %cst_425 : f32 to vector<4x5xf32>
    %1088 = tpu.concatenate %1086, %1087 in 1 : vector<4x11xf32>, vector<4x5xf32> -> vector<4x16xf32>
    %cst_426 = arith.constant 0.000000e+00 : f32
    %1089 = vector.shape_cast %1044 : vector<1x16xi1> to vector<1x16xi1>
    %1090 = vector.broadcast %1089 : vector<1x16xi1> to vector<4x16xi1>
    %1091 = vector.broadcast %cst_426 : f32 to vector<4x16xf32>
    %1092 = arith.select %1090, %1088, %1091 : vector<4x16xi1>, vector<4x16xf32>
    %1093 = tpu.concatenate %1051, %1054, %1061, %1068, %1021, %1075, %1082, %1085, %1092 in 0 : vector<4x16xf32>, vector<4x16xf32>, vector<4x16xf32>, vector<4x16xf32>, vector<4x16xf32>, vector<4x16xf32>, vector<4x16xf32>, vector<4x16xf32>, vector<4x16xf32> -> vector<36x16xf32>
    %1094 = arith.truncf %1093 : vector<36x16xf32> to vector<36x16xbf16>
    %cst_427 = arith.constant dense<0.000000e+00> : vector<4x16xf32>
    %1095 = tpu.matmul %1022, %1094, %cst_427 {dimension_numbers = #tpu.dot_dimension_numbers<[1], [0], [0], [1], [0, 0, 1, 1], [], []>} : vector<4x36xbf16>, vector<36x16xbf16>, vector<4x16xf32> -> vector<4x16xf32>
    %1096 = vector.broadcast %1023 : vector<4x1xf32> to vector<4x16xf32>
    %1097 = arith.addf %1095, %1096 : vector<4x16xf32>
    %cst_428 = arith.constant 0.000000e+00 : f32
    %1098 = vector.broadcast %cst_428 : f32 to vector<4x16xf32>
    %1099 = arith.cmpf ogt, %1097, %1098 : vector<4x16xf32>
    %cst_429 = arith.constant 0.000000e+00 : f32
    %1100 = vector.broadcast %cst_429 : f32 to vector<4x16xf32>
    %1101 = arith.minimumf %1097, %1100 : vector<4x16xf32>
    %1102 = math.exp %1101 : vector<4x16xf32>
    %cst_430 = arith.constant 1.000000e+00 : f32
    %1103 = vector.broadcast %cst_430 : f32 to vector<4x16xf32>
    %1104 = arith.subf %1102, %1103 : vector<4x16xf32>
    %1105 = arith.select %1099, %1097, %1104 : vector<4x16xi1>, vector<4x16xf32>
    %c0_431 = arith.constant 0 : index
    %c0_432 = arith.constant 0 : index
    %1106 = vector.load %arg47[%c0_431, %c0_432] : memref<4x36xbf16, #tpu.memory_space<vmem>>, vector<4x36xbf16>
    %c0_433 = arith.constant 0 : index
    %c0_434 = arith.constant 0 : index
    %1107 = vector.load %arg48[%c0_433, %c0_434] : memref<4x1xf32, #tpu.memory_space<vmem>>, vector<4x1xf32>
    %1108 = tpu.iota {dimensions = array<i32: 1>} : vector<1x16xi32>
    %c4_i32_435 = arith.constant 4 : i32
    %c0_i32_436 = arith.constant 0 : i32
    %1109 = arith.cmpi eq, %c4_i32_435, %c0_i32_436 : i32
    %c1_i32_437 = arith.constant 1 : i32
    %1110 = arith.select %1109, %c1_i32_437, %c4_i32_435 : i32
    %1111 = vector.broadcast %1110 : i32 to vector<1x16xi32>
    %1112 = arith.remsi %1108, %1111 : vector<1x16xi32>
    %c0_i32_438 = arith.constant 0 : i32
    %1113 = vector.broadcast %c0_i32_438 : i32 to vector<1x16xi32>
    %1114 = arith.cmpi ne, %1112, %1113 : vector<1x16xi32>
    %c0_i32_439 = arith.constant 0 : i32
    %1115 = vector.broadcast %c0_i32_439 : i32 to vector<1x16xi32>
    %1116 = arith.cmpi slt, %1112, %1115 : vector<1x16xi32>
    %c0_i32_440 = arith.constant 0 : i32
    %1117 = arith.cmpi slt, %1110, %c0_i32_440 : i32
    %1118 = vector.broadcast %1117 : i1 to vector<1x16xi1>
    %1119 = vector.broadcast %1118 : vector<1x16xi1> to vector<1x16xi1>
    %1120 = arith.xori %1116, %1119 : vector<1x16xi1>
    %1121 = arith.andi %1120, %1114 : vector<1x16xi1>
    %1122 = vector.broadcast %1110 : i32 to vector<1x16xi32>
    %1123 = arith.addi %1112, %1122 : vector<1x16xi32>
    %1124 = arith.select %1121, %1123, %1112 : vector<1x16xi1>, vector<1x16xi32>
    %c1_i32_441 = arith.constant 1 : i32
    %1125 = vector.broadcast %c1_i32_441 : i32 to vector<1x16xi32>
    %1126 = arith.cmpi sge, %1124, %1125 : vector<1x16xi32>
    %c3_i32_442 = arith.constant 3 : i32
    %1127 = vector.broadcast %c3_i32_442 : i32 to vector<1x16xi32>
    %1128 = arith.cmpi slt, %1124, %1127 : vector<1x16xi32>
    %cst_443 = arith.constant 0.000000e+00 : f32
    %1129 = vector.broadcast %cst_443 : f32 to vector<4x5xf32>
    %1130 = vector.extract_strided_slice %1105 {offsets = [0, 0], sizes = [4, 11], strides = [1, 1]} : vector<4x16xf32> to vector<4x11xf32>
    %1131 = tpu.concatenate %1129, %1130 in 1 : vector<4x5xf32>, vector<4x11xf32> -> vector<4x16xf32>
    %cst_444 = arith.constant 0.000000e+00 : f32
    %1132 = vector.shape_cast %1126 : vector<1x16xi1> to vector<1x16xi1>
    %1133 = vector.broadcast %1132 : vector<1x16xi1> to vector<4x16xi1>
    %1134 = vector.broadcast %cst_444 : f32 to vector<4x16xf32>
    %1135 = arith.select %1133, %1131, %1134 : vector<4x16xi1>, vector<4x16xf32>
    %cst_445 = arith.constant 0.000000e+00 : f32
    %1136 = vector.broadcast %cst_445 : f32 to vector<4x4xf32>
    %1137 = vector.extract_strided_slice %1105 {offsets = [0, 0], sizes = [4, 12], strides = [1, 1]} : vector<4x16xf32> to vector<4x12xf32>
    %1138 = tpu.concatenate %1136, %1137 in 1 : vector<4x4xf32>, vector<4x12xf32> -> vector<4x16xf32>
    %cst_446 = arith.constant 0.000000e+00 : f32
    %1139 = vector.broadcast %cst_446 : f32 to vector<4x3xf32>
    %1140 = vector.extract_strided_slice %1105 {offsets = [0, 0], sizes = [4, 13], strides = [1, 1]} : vector<4x16xf32> to vector<4x13xf32>
    %1141 = tpu.concatenate %1139, %1140 in 1 : vector<4x3xf32>, vector<4x13xf32> -> vector<4x16xf32>
    %cst_447 = arith.constant 0.000000e+00 : f32
    %1142 = vector.shape_cast %1128 : vector<1x16xi1> to vector<1x16xi1>
    %1143 = vector.broadcast %1142 : vector<1x16xi1> to vector<4x16xi1>
    %1144 = vector.broadcast %cst_447 : f32 to vector<4x16xf32>
    %1145 = arith.select %1143, %1141, %1144 : vector<4x16xi1>, vector<4x16xf32>
    %cst_448 = arith.constant 0.000000e+00 : f32
    %1146 = vector.broadcast %cst_448 : f32 to vector<4x1xf32>
    %1147 = vector.extract_strided_slice %1105 {offsets = [0, 0], sizes = [4, 15], strides = [1, 1]} : vector<4x16xf32> to vector<4x15xf32>
    %1148 = tpu.concatenate %1146, %1147 in 1 : vector<4x1xf32>, vector<4x15xf32> -> vector<4x16xf32>
    %cst_449 = arith.constant 0.000000e+00 : f32
    %1149 = vector.shape_cast %1126 : vector<1x16xi1> to vector<1x16xi1>
    %1150 = vector.broadcast %1149 : vector<1x16xi1> to vector<4x16xi1>
    %1151 = vector.broadcast %cst_449 : f32 to vector<4x16xf32>
    %1152 = arith.select %1150, %1148, %1151 : vector<4x16xi1>, vector<4x16xf32>
    %1153 = vector.extract_strided_slice %1105 {offsets = [0, 1], sizes = [4, 15], strides = [1, 1]} : vector<4x16xf32> to vector<4x15xf32>
    %cst_450 = arith.constant 0.000000e+00 : f32
    %1154 = vector.broadcast %cst_450 : f32 to vector<4x1xf32>
    %1155 = tpu.concatenate %1153, %1154 in 1 : vector<4x15xf32>, vector<4x1xf32> -> vector<4x16xf32>
    %cst_451 = arith.constant 0.000000e+00 : f32
    %1156 = vector.shape_cast %1128 : vector<1x16xi1> to vector<1x16xi1>
    %1157 = vector.broadcast %1156 : vector<1x16xi1> to vector<4x16xi1>
    %1158 = vector.broadcast %cst_451 : f32 to vector<4x16xf32>
    %1159 = arith.select %1157, %1155, %1158 : vector<4x16xi1>, vector<4x16xf32>
    %1160 = vector.extract_strided_slice %1105 {offsets = [0, 3], sizes = [4, 13], strides = [1, 1]} : vector<4x16xf32> to vector<4x13xf32>
    %cst_452 = arith.constant 0.000000e+00 : f32
    %1161 = vector.broadcast %cst_452 : f32 to vector<4x3xf32>
    %1162 = tpu.concatenate %1160, %1161 in 1 : vector<4x13xf32>, vector<4x3xf32> -> vector<4x16xf32>
    %cst_453 = arith.constant 0.000000e+00 : f32
    %1163 = vector.shape_cast %1126 : vector<1x16xi1> to vector<1x16xi1>
    %1164 = vector.broadcast %1163 : vector<1x16xi1> to vector<4x16xi1>
    %1165 = vector.broadcast %cst_453 : f32 to vector<4x16xf32>
    %1166 = arith.select %1164, %1162, %1165 : vector<4x16xi1>, vector<4x16xf32>
    %1167 = vector.extract_strided_slice %1105 {offsets = [0, 4], sizes = [4, 12], strides = [1, 1]} : vector<4x16xf32> to vector<4x12xf32>
    %cst_454 = arith.constant 0.000000e+00 : f32
    %1168 = vector.broadcast %cst_454 : f32 to vector<4x4xf32>
    %1169 = tpu.concatenate %1167, %1168 in 1 : vector<4x12xf32>, vector<4x4xf32> -> vector<4x16xf32>
    %1170 = vector.extract_strided_slice %1105 {offsets = [0, 5], sizes = [4, 11], strides = [1, 1]} : vector<4x16xf32> to vector<4x11xf32>
    %cst_455 = arith.constant 0.000000e+00 : f32
    %1171 = vector.broadcast %cst_455 : f32 to vector<4x5xf32>
    %1172 = tpu.concatenate %1170, %1171 in 1 : vector<4x11xf32>, vector<4x5xf32> -> vector<4x16xf32>
    %cst_456 = arith.constant 0.000000e+00 : f32
    %1173 = vector.shape_cast %1128 : vector<1x16xi1> to vector<1x16xi1>
    %1174 = vector.broadcast %1173 : vector<1x16xi1> to vector<4x16xi1>
    %1175 = vector.broadcast %cst_456 : f32 to vector<4x16xf32>
    %1176 = arith.select %1174, %1172, %1175 : vector<4x16xi1>, vector<4x16xf32>
    %1177 = tpu.concatenate %1135, %1138, %1145, %1152, %1105, %1159, %1166, %1169, %1176 in 0 : vector<4x16xf32>, vector<4x16xf32>, vector<4x16xf32>, vector<4x16xf32>, vector<4x16xf32>, vector<4x16xf32>, vector<4x16xf32>, vector<4x16xf32>, vector<4x16xf32> -> vector<36x16xf32>
    %1178 = arith.truncf %1177 : vector<36x16xf32> to vector<36x16xbf16>
    %cst_457 = arith.constant dense<0.000000e+00> : vector<4x16xf32>
    %1179 = tpu.matmul %1106, %1178, %cst_457 {dimension_numbers = #tpu.dot_dimension_numbers<[1], [0], [0], [1], [0, 0, 1, 1], [], []>} : vector<4x36xbf16>, vector<36x16xbf16>, vector<4x16xf32> -> vector<4x16xf32>
    %1180 = vector.broadcast %1107 : vector<4x1xf32> to vector<4x16xf32>
    %1181 = arith.addf %1179, %1180 : vector<4x16xf32>
    %cst_458 = arith.constant 0.000000e+00 : f32
    %1182 = vector.broadcast %cst_458 : f32 to vector<4x16xf32>
    %1183 = arith.cmpf ogt, %1181, %1182 : vector<4x16xf32>
    %cst_459 = arith.constant 0.000000e+00 : f32
    %1184 = vector.broadcast %cst_459 : f32 to vector<4x16xf32>
    %1185 = arith.minimumf %1181, %1184 : vector<4x16xf32>
    %1186 = math.exp %1185 : vector<4x16xf32>
    %cst_460 = arith.constant 1.000000e+00 : f32
    %1187 = vector.broadcast %cst_460 : f32 to vector<4x16xf32>
    %1188 = arith.subf %1186, %1187 : vector<4x16xf32>
    %1189 = arith.select %1183, %1181, %1188 : vector<4x16xi1>, vector<4x16xf32>
    %c0_461 = arith.constant 0 : index
    %c0_462 = arith.constant 0 : index
    %1190 = vector.load %arg49[%c0_461, %c0_462] : memref<16x64xbf16, #tpu.memory_space<vmem>>, vector<16x64xbf16>
    %1191 = arith.truncf %1189 : vector<4x16xf32> to vector<4x16xbf16>
    %cst_463 = arith.constant dense<0.000000e+00> : vector<4x64xf32>
    %1192 = tpu.matmul %1191, %1190, %cst_463 {dimension_numbers = #tpu.dot_dimension_numbers<[1], [0], [0], [1], [0, 0, 1, 1], [], []>} : vector<4x16xbf16>, vector<16x64xbf16>, vector<4x64xf32> -> vector<4x64xf32>
    %c0_464 = arith.constant 0 : index
    %c0_465 = arith.constant 0 : index
    %1193 = vector.load %arg50[%c0_464, %c0_465] : memref<4x36xbf16, #tpu.memory_space<vmem>>, vector<4x36xbf16>
    %c0_466 = arith.constant 0 : index
    %c0_467 = arith.constant 0 : index
    %1194 = vector.load %arg51[%c0_466, %c0_467] : memref<4x1xf32, #tpu.memory_space<vmem>>, vector<4x1xf32>
    %1195 = tpu.iota {dimensions = array<i32: 1>} : vector<1x64xi32>
    %c8_i32_468 = arith.constant 8 : i32
    %c0_i32_469 = arith.constant 0 : i32
    %1196 = arith.cmpi eq, %c8_i32_468, %c0_i32_469 : i32
    %c1_i32_470 = arith.constant 1 : i32
    %1197 = arith.select %1196, %c1_i32_470, %c8_i32_468 : i32
    %1198 = vector.broadcast %1197 : i32 to vector<1x64xi32>
    %1199 = arith.remsi %1195, %1198 : vector<1x64xi32>
    %c0_i32_471 = arith.constant 0 : i32
    %1200 = vector.broadcast %c0_i32_471 : i32 to vector<1x64xi32>
    %1201 = arith.cmpi ne, %1199, %1200 : vector<1x64xi32>
    %c0_i32_472 = arith.constant 0 : i32
    %1202 = vector.broadcast %c0_i32_472 : i32 to vector<1x64xi32>
    %1203 = arith.cmpi slt, %1199, %1202 : vector<1x64xi32>
    %c0_i32_473 = arith.constant 0 : i32
    %1204 = arith.cmpi slt, %1197, %c0_i32_473 : i32
    %1205 = vector.broadcast %1204 : i1 to vector<1x64xi1>
    %1206 = vector.broadcast %1205 : vector<1x64xi1> to vector<1x64xi1>
    %1207 = arith.xori %1203, %1206 : vector<1x64xi1>
    %1208 = arith.andi %1207, %1201 : vector<1x64xi1>
    %1209 = vector.broadcast %1197 : i32 to vector<1x64xi32>
    %1210 = arith.addi %1199, %1209 : vector<1x64xi32>
    %1211 = arith.select %1208, %1210, %1199 : vector<1x64xi1>, vector<1x64xi32>
    %c1_i32_474 = arith.constant 1 : i32
    %1212 = vector.broadcast %c1_i32_474 : i32 to vector<1x64xi32>
    %1213 = arith.cmpi sge, %1211, %1212 : vector<1x64xi32>
    %c7_i32_475 = arith.constant 7 : i32
    %1214 = vector.broadcast %c7_i32_475 : i32 to vector<1x64xi32>
    %1215 = arith.cmpi slt, %1211, %1214 : vector<1x64xi32>
    %cst_476 = arith.constant 0.000000e+00 : f32
    %1216 = vector.broadcast %cst_476 : f32 to vector<4x9xf32>
    %1217 = vector.extract_strided_slice %1192 {offsets = [0, 0], sizes = [4, 55], strides = [1, 1]} : vector<4x64xf32> to vector<4x55xf32>
    %1218 = tpu.concatenate %1216, %1217 in 1 : vector<4x9xf32>, vector<4x55xf32> -> vector<4x64xf32>
    %cst_477 = arith.constant 0.000000e+00 : f32
    %1219 = vector.shape_cast %1213 : vector<1x64xi1> to vector<1x64xi1>
    %1220 = vector.broadcast %1219 : vector<1x64xi1> to vector<4x64xi1>
    %1221 = vector.broadcast %cst_477 : f32 to vector<4x64xf32>
    %1222 = arith.select %1220, %1218, %1221 : vector<4x64xi1>, vector<4x64xf32>
    %cst_478 = arith.constant 0.000000e+00 : f32
    %1223 = vector.broadcast %cst_478 : f32 to vector<4x8xf32>
    %1224 = vector.extract_strided_slice %1192 {offsets = [0, 0], sizes = [4, 56], strides = [1, 1]} : vector<4x64xf32> to vector<4x56xf32>
    %1225 = tpu.concatenate %1223, %1224 in 1 : vector<4x8xf32>, vector<4x56xf32> -> vector<4x64xf32>
    %cst_479 = arith.constant 0.000000e+00 : f32
    %1226 = vector.broadcast %cst_479 : f32 to vector<4x7xf32>
    %1227 = vector.extract_strided_slice %1192 {offsets = [0, 0], sizes = [4, 57], strides = [1, 1]} : vector<4x64xf32> to vector<4x57xf32>
    %1228 = tpu.concatenate %1226, %1227 in 1 : vector<4x7xf32>, vector<4x57xf32> -> vector<4x64xf32>
    %cst_480 = arith.constant 0.000000e+00 : f32
    %1229 = vector.shape_cast %1215 : vector<1x64xi1> to vector<1x64xi1>
    %1230 = vector.broadcast %1229 : vector<1x64xi1> to vector<4x64xi1>
    %1231 = vector.broadcast %cst_480 : f32 to vector<4x64xf32>
    %1232 = arith.select %1230, %1228, %1231 : vector<4x64xi1>, vector<4x64xf32>
    %cst_481 = arith.constant 0.000000e+00 : f32
    %1233 = vector.broadcast %cst_481 : f32 to vector<4x1xf32>
    %1234 = vector.extract_strided_slice %1192 {offsets = [0, 0], sizes = [4, 63], strides = [1, 1]} : vector<4x64xf32> to vector<4x63xf32>
    %1235 = tpu.concatenate %1233, %1234 in 1 : vector<4x1xf32>, vector<4x63xf32> -> vector<4x64xf32>
    %cst_482 = arith.constant 0.000000e+00 : f32
    %1236 = vector.shape_cast %1213 : vector<1x64xi1> to vector<1x64xi1>
    %1237 = vector.broadcast %1236 : vector<1x64xi1> to vector<4x64xi1>
    %1238 = vector.broadcast %cst_482 : f32 to vector<4x64xf32>
    %1239 = arith.select %1237, %1235, %1238 : vector<4x64xi1>, vector<4x64xf32>
    %1240 = vector.extract_strided_slice %1192 {offsets = [0, 1], sizes = [4, 63], strides = [1, 1]} : vector<4x64xf32> to vector<4x63xf32>
    %cst_483 = arith.constant 0.000000e+00 : f32
    %1241 = vector.broadcast %cst_483 : f32 to vector<4x1xf32>
    %1242 = tpu.concatenate %1240, %1241 in 1 : vector<4x63xf32>, vector<4x1xf32> -> vector<4x64xf32>
    %cst_484 = arith.constant 0.000000e+00 : f32
    %1243 = vector.shape_cast %1215 : vector<1x64xi1> to vector<1x64xi1>
    %1244 = vector.broadcast %1243 : vector<1x64xi1> to vector<4x64xi1>
    %1245 = vector.broadcast %cst_484 : f32 to vector<4x64xf32>
    %1246 = arith.select %1244, %1242, %1245 : vector<4x64xi1>, vector<4x64xf32>
    %1247 = vector.extract_strided_slice %1192 {offsets = [0, 7], sizes = [4, 57], strides = [1, 1]} : vector<4x64xf32> to vector<4x57xf32>
    %cst_485 = arith.constant 0.000000e+00 : f32
    %1248 = vector.broadcast %cst_485 : f32 to vector<4x7xf32>
    %1249 = tpu.concatenate %1247, %1248 in 1 : vector<4x57xf32>, vector<4x7xf32> -> vector<4x64xf32>
    %cst_486 = arith.constant 0.000000e+00 : f32
    %1250 = vector.shape_cast %1213 : vector<1x64xi1> to vector<1x64xi1>
    %1251 = vector.broadcast %1250 : vector<1x64xi1> to vector<4x64xi1>
    %1252 = vector.broadcast %cst_486 : f32 to vector<4x64xf32>
    %1253 = arith.select %1251, %1249, %1252 : vector<4x64xi1>, vector<4x64xf32>
    %1254 = vector.extract_strided_slice %1192 {offsets = [0, 8], sizes = [4, 56], strides = [1, 1]} : vector<4x64xf32> to vector<4x56xf32>
    %cst_487 = arith.constant 0.000000e+00 : f32
    %1255 = vector.broadcast %cst_487 : f32 to vector<4x8xf32>
    %1256 = tpu.concatenate %1254, %1255 in 1 : vector<4x56xf32>, vector<4x8xf32> -> vector<4x64xf32>
    %1257 = vector.extract_strided_slice %1192 {offsets = [0, 9], sizes = [4, 55], strides = [1, 1]} : vector<4x64xf32> to vector<4x55xf32>
    %cst_488 = arith.constant 0.000000e+00 : f32
    %1258 = vector.broadcast %cst_488 : f32 to vector<4x9xf32>
    %1259 = tpu.concatenate %1257, %1258 in 1 : vector<4x55xf32>, vector<4x9xf32> -> vector<4x64xf32>
    %cst_489 = arith.constant 0.000000e+00 : f32
    %1260 = vector.shape_cast %1215 : vector<1x64xi1> to vector<1x64xi1>
    %1261 = vector.broadcast %1260 : vector<1x64xi1> to vector<4x64xi1>
    %1262 = vector.broadcast %cst_489 : f32 to vector<4x64xf32>
    %1263 = arith.select %1261, %1259, %1262 : vector<4x64xi1>, vector<4x64xf32>
    %1264 = tpu.concatenate %1222, %1225, %1232, %1239, %1192, %1246, %1253, %1256, %1263 in 0 : vector<4x64xf32>, vector<4x64xf32>, vector<4x64xf32>, vector<4x64xf32>, vector<4x64xf32>, vector<4x64xf32>, vector<4x64xf32>, vector<4x64xf32>, vector<4x64xf32> -> vector<36x64xf32>
    %1265 = arith.truncf %1264 : vector<36x64xf32> to vector<36x64xbf16>
    %cst_490 = arith.constant dense<0.000000e+00> : vector<4x64xf32>
    %1266 = tpu.matmul %1193, %1265, %cst_490 {dimension_numbers = #tpu.dot_dimension_numbers<[1], [0], [0], [1], [0, 0, 1, 1], [], []>} : vector<4x36xbf16>, vector<36x64xbf16>, vector<4x64xf32> -> vector<4x64xf32>
    %1267 = vector.broadcast %1194 : vector<4x1xf32> to vector<4x64xf32>
    %1268 = arith.addf %1266, %1267 : vector<4x64xf32>
    %cst_491 = arith.constant 0.000000e+00 : f32
    %1269 = vector.broadcast %cst_491 : f32 to vector<4x64xf32>
    %1270 = arith.cmpf ogt, %1268, %1269 : vector<4x64xf32>
    %cst_492 = arith.constant 0.000000e+00 : f32
    %1271 = vector.broadcast %cst_492 : f32 to vector<4x64xf32>
    %1272 = arith.minimumf %1268, %1271 : vector<4x64xf32>
    %1273 = math.exp %1272 : vector<4x64xf32>
    %cst_493 = arith.constant 1.000000e+00 : f32
    %1274 = vector.broadcast %cst_493 : f32 to vector<4x64xf32>
    %1275 = arith.subf %1273, %1274 : vector<4x64xf32>
    %1276 = arith.select %1270, %1268, %1275 : vector<4x64xi1>, vector<4x64xf32>
    %c0_494 = arith.constant 0 : index
    %c0_495 = arith.constant 0 : index
    %1277 = vector.load %arg52[%c0_494, %c0_495] : memref<4x36xbf16, #tpu.memory_space<vmem>>, vector<4x36xbf16>
    %c0_496 = arith.constant 0 : index
    %c0_497 = arith.constant 0 : index
    %1278 = vector.load %arg53[%c0_496, %c0_497] : memref<4x1xf32, #tpu.memory_space<vmem>>, vector<4x1xf32>
    %1279 = tpu.iota {dimensions = array<i32: 1>} : vector<1x64xi32>
    %c8_i32_498 = arith.constant 8 : i32
    %c0_i32_499 = arith.constant 0 : i32
    %1280 = arith.cmpi eq, %c8_i32_498, %c0_i32_499 : i32
    %c1_i32_500 = arith.constant 1 : i32
    %1281 = arith.select %1280, %c1_i32_500, %c8_i32_498 : i32
    %1282 = vector.broadcast %1281 : i32 to vector<1x64xi32>
    %1283 = arith.remsi %1279, %1282 : vector<1x64xi32>
    %c0_i32_501 = arith.constant 0 : i32
    %1284 = vector.broadcast %c0_i32_501 : i32 to vector<1x64xi32>
    %1285 = arith.cmpi ne, %1283, %1284 : vector<1x64xi32>
    %c0_i32_502 = arith.constant 0 : i32
    %1286 = vector.broadcast %c0_i32_502 : i32 to vector<1x64xi32>
    %1287 = arith.cmpi slt, %1283, %1286 : vector<1x64xi32>
    %c0_i32_503 = arith.constant 0 : i32
    %1288 = arith.cmpi slt, %1281, %c0_i32_503 : i32
    %1289 = vector.broadcast %1288 : i1 to vector<1x64xi1>
    %1290 = vector.broadcast %1289 : vector<1x64xi1> to vector<1x64xi1>
    %1291 = arith.xori %1287, %1290 : vector<1x64xi1>
    %1292 = arith.andi %1291, %1285 : vector<1x64xi1>
    %1293 = vector.broadcast %1281 : i32 to vector<1x64xi32>
    %1294 = arith.addi %1283, %1293 : vector<1x64xi32>
    %1295 = arith.select %1292, %1294, %1283 : vector<1x64xi1>, vector<1x64xi32>
    %c1_i32_504 = arith.constant 1 : i32
    %1296 = vector.broadcast %c1_i32_504 : i32 to vector<1x64xi32>
    %1297 = arith.cmpi sge, %1295, %1296 : vector<1x64xi32>
    %c7_i32_505 = arith.constant 7 : i32
    %1298 = vector.broadcast %c7_i32_505 : i32 to vector<1x64xi32>
    %1299 = arith.cmpi slt, %1295, %1298 : vector<1x64xi32>
    %cst_506 = arith.constant 0.000000e+00 : f32
    %1300 = vector.broadcast %cst_506 : f32 to vector<4x9xf32>
    %1301 = vector.extract_strided_slice %1276 {offsets = [0, 0], sizes = [4, 55], strides = [1, 1]} : vector<4x64xf32> to vector<4x55xf32>
    %1302 = tpu.concatenate %1300, %1301 in 1 : vector<4x9xf32>, vector<4x55xf32> -> vector<4x64xf32>
    %cst_507 = arith.constant 0.000000e+00 : f32
    %1303 = vector.shape_cast %1297 : vector<1x64xi1> to vector<1x64xi1>
    %1304 = vector.broadcast %1303 : vector<1x64xi1> to vector<4x64xi1>
    %1305 = vector.broadcast %cst_507 : f32 to vector<4x64xf32>
    %1306 = arith.select %1304, %1302, %1305 : vector<4x64xi1>, vector<4x64xf32>
    %cst_508 = arith.constant 0.000000e+00 : f32
    %1307 = vector.broadcast %cst_508 : f32 to vector<4x8xf32>
    %1308 = vector.extract_strided_slice %1276 {offsets = [0, 0], sizes = [4, 56], strides = [1, 1]} : vector<4x64xf32> to vector<4x56xf32>
    %1309 = tpu.concatenate %1307, %1308 in 1 : vector<4x8xf32>, vector<4x56xf32> -> vector<4x64xf32>
    %cst_509 = arith.constant 0.000000e+00 : f32
    %1310 = vector.broadcast %cst_509 : f32 to vector<4x7xf32>
    %1311 = vector.extract_strided_slice %1276 {offsets = [0, 0], sizes = [4, 57], strides = [1, 1]} : vector<4x64xf32> to vector<4x57xf32>
    %1312 = tpu.concatenate %1310, %1311 in 1 : vector<4x7xf32>, vector<4x57xf32> -> vector<4x64xf32>
    %cst_510 = arith.constant 0.000000e+00 : f32
    %1313 = vector.shape_cast %1299 : vector<1x64xi1> to vector<1x64xi1>
    %1314 = vector.broadcast %1313 : vector<1x64xi1> to vector<4x64xi1>
    %1315 = vector.broadcast %cst_510 : f32 to vector<4x64xf32>
    %1316 = arith.select %1314, %1312, %1315 : vector<4x64xi1>, vector<4x64xf32>
    %cst_511 = arith.constant 0.000000e+00 : f32
    %1317 = vector.broadcast %cst_511 : f32 to vector<4x1xf32>
    %1318 = vector.extract_strided_slice %1276 {offsets = [0, 0], sizes = [4, 63], strides = [1, 1]} : vector<4x64xf32> to vector<4x63xf32>
    %1319 = tpu.concatenate %1317, %1318 in 1 : vector<4x1xf32>, vector<4x63xf32> -> vector<4x64xf32>
    %cst_512 = arith.constant 0.000000e+00 : f32
    %1320 = vector.shape_cast %1297 : vector<1x64xi1> to vector<1x64xi1>
    %1321 = vector.broadcast %1320 : vector<1x64xi1> to vector<4x64xi1>
    %1322 = vector.broadcast %cst_512 : f32 to vector<4x64xf32>
    %1323 = arith.select %1321, %1319, %1322 : vector<4x64xi1>, vector<4x64xf32>
    %1324 = vector.extract_strided_slice %1276 {offsets = [0, 1], sizes = [4, 63], strides = [1, 1]} : vector<4x64xf32> to vector<4x63xf32>
    %cst_513 = arith.constant 0.000000e+00 : f32
    %1325 = vector.broadcast %cst_513 : f32 to vector<4x1xf32>
    %1326 = tpu.concatenate %1324, %1325 in 1 : vector<4x63xf32>, vector<4x1xf32> -> vector<4x64xf32>
    %cst_514 = arith.constant 0.000000e+00 : f32
    %1327 = vector.shape_cast %1299 : vector<1x64xi1> to vector<1x64xi1>
    %1328 = vector.broadcast %1327 : vector<1x64xi1> to vector<4x64xi1>
    %1329 = vector.broadcast %cst_514 : f32 to vector<4x64xf32>
    %1330 = arith.select %1328, %1326, %1329 : vector<4x64xi1>, vector<4x64xf32>
    %1331 = vector.extract_strided_slice %1276 {offsets = [0, 7], sizes = [4, 57], strides = [1, 1]} : vector<4x64xf32> to vector<4x57xf32>
    %cst_515 = arith.constant 0.000000e+00 : f32
    %1332 = vector.broadcast %cst_515 : f32 to vector<4x7xf32>
    %1333 = tpu.concatenate %1331, %1332 in 1 : vector<4x57xf32>, vector<4x7xf32> -> vector<4x64xf32>
    %cst_516 = arith.constant 0.000000e+00 : f32
    %1334 = vector.shape_cast %1297 : vector<1x64xi1> to vector<1x64xi1>
    %1335 = vector.broadcast %1334 : vector<1x64xi1> to vector<4x64xi1>
    %1336 = vector.broadcast %cst_516 : f32 to vector<4x64xf32>
    %1337 = arith.select %1335, %1333, %1336 : vector<4x64xi1>, vector<4x64xf32>
    %1338 = vector.extract_strided_slice %1276 {offsets = [0, 8], sizes = [4, 56], strides = [1, 1]} : vector<4x64xf32> to vector<4x56xf32>
    %cst_517 = arith.constant 0.000000e+00 : f32
    %1339 = vector.broadcast %cst_517 : f32 to vector<4x8xf32>
    %1340 = tpu.concatenate %1338, %1339 in 1 : vector<4x56xf32>, vector<4x8xf32> -> vector<4x64xf32>
    %1341 = vector.extract_strided_slice %1276 {offsets = [0, 9], sizes = [4, 55], strides = [1, 1]} : vector<4x64xf32> to vector<4x55xf32>
    %cst_518 = arith.constant 0.000000e+00 : f32
    %1342 = vector.broadcast %cst_518 : f32 to vector<4x9xf32>
    %1343 = tpu.concatenate %1341, %1342 in 1 : vector<4x55xf32>, vector<4x9xf32> -> vector<4x64xf32>
    %cst_519 = arith.constant 0.000000e+00 : f32
    %1344 = vector.shape_cast %1299 : vector<1x64xi1> to vector<1x64xi1>
    %1345 = vector.broadcast %1344 : vector<1x64xi1> to vector<4x64xi1>
    %1346 = vector.broadcast %cst_519 : f32 to vector<4x64xf32>
    %1347 = arith.select %1345, %1343, %1346 : vector<4x64xi1>, vector<4x64xf32>
    %1348 = tpu.concatenate %1306, %1309, %1316, %1323, %1276, %1330, %1337, %1340, %1347 in 0 : vector<4x64xf32>, vector<4x64xf32>, vector<4x64xf32>, vector<4x64xf32>, vector<4x64xf32>, vector<4x64xf32>, vector<4x64xf32>, vector<4x64xf32>, vector<4x64xf32> -> vector<36x64xf32>
    %1349 = arith.truncf %1348 : vector<36x64xf32> to vector<36x64xbf16>
    %cst_520 = arith.constant dense<0.000000e+00> : vector<4x64xf32>
    %1350 = tpu.matmul %1277, %1349, %cst_520 {dimension_numbers = #tpu.dot_dimension_numbers<[1], [0], [0], [1], [0, 0, 1, 1], [], []>} : vector<4x36xbf16>, vector<36x64xbf16>, vector<4x64xf32> -> vector<4x64xf32>
    %1351 = vector.broadcast %1278 : vector<4x1xf32> to vector<4x64xf32>
    %1352 = arith.addf %1350, %1351 : vector<4x64xf32>
    %cst_521 = arith.constant 0.000000e+00 : f32
    %1353 = vector.broadcast %cst_521 : f32 to vector<4x64xf32>
    %1354 = arith.cmpf ogt, %1352, %1353 : vector<4x64xf32>
    %cst_522 = arith.constant 0.000000e+00 : f32
    %1355 = vector.broadcast %cst_522 : f32 to vector<4x64xf32>
    %1356 = arith.minimumf %1352, %1355 : vector<4x64xf32>
    %1357 = math.exp %1356 : vector<4x64xf32>
    %cst_523 = arith.constant 1.000000e+00 : f32
    %1358 = vector.broadcast %cst_523 : f32 to vector<4x64xf32>
    %1359 = arith.subf %1357, %1358 : vector<4x64xf32>
    %1360 = arith.select %1354, %1352, %1359 : vector<4x64xi1>, vector<4x64xf32>
    %c0_524 = arith.constant 0 : index
    %c0_525 = arith.constant 0 : index
    %1361 = vector.load %arg54[%c0_524, %c0_525] : memref<64x256xbf16, #tpu.memory_space<vmem>>, vector<64x256xbf16>
    %1362 = arith.truncf %1360 : vector<4x64xf32> to vector<4x64xbf16>
    %cst_526 = arith.constant dense<0.000000e+00> : vector<4x256xf32>
    %1363 = tpu.matmul %1362, %1361, %cst_526 {dimension_numbers = #tpu.dot_dimension_numbers<[1], [0], [0], [1], [0, 0, 1, 1], [], []>} : vector<4x64xbf16>, vector<64x256xbf16>, vector<4x256xf32> -> vector<4x256xf32>
    %c0_527 = arith.constant 0 : index
    %c0_528 = arith.constant 0 : index
    %1364 = vector.load %arg55[%c0_527, %c0_528] : memref<4x36xbf16, #tpu.memory_space<vmem>>, vector<4x36xbf16>
    %c0_529 = arith.constant 0 : index
    %c0_530 = arith.constant 0 : index
    %1365 = vector.load %arg56[%c0_529, %c0_530] : memref<4x1xf32, #tpu.memory_space<vmem>>, vector<4x1xf32>
    %1366 = tpu.iota {dimensions = array<i32: 1>} : vector<1x256xi32>
    %c16_i32_531 = arith.constant 16 : i32
    %c0_i32_532 = arith.constant 0 : i32
    %1367 = arith.cmpi eq, %c16_i32_531, %c0_i32_532 : i32
    %c1_i32_533 = arith.constant 1 : i32
    %1368 = arith.select %1367, %c1_i32_533, %c16_i32_531 : i32
    %1369 = vector.broadcast %1368 : i32 to vector<1x256xi32>
    %1370 = arith.remsi %1366, %1369 : vector<1x256xi32>
    %c0_i32_534 = arith.constant 0 : i32
    %1371 = vector.broadcast %c0_i32_534 : i32 to vector<1x256xi32>
    %1372 = arith.cmpi ne, %1370, %1371 : vector<1x256xi32>
    %c0_i32_535 = arith.constant 0 : i32
    %1373 = vector.broadcast %c0_i32_535 : i32 to vector<1x256xi32>
    %1374 = arith.cmpi slt, %1370, %1373 : vector<1x256xi32>
    %c0_i32_536 = arith.constant 0 : i32
    %1375 = arith.cmpi slt, %1368, %c0_i32_536 : i32
    %1376 = vector.broadcast %1375 : i1 to vector<1x256xi1>
    %1377 = vector.broadcast %1376 : vector<1x256xi1> to vector<1x256xi1>
    %1378 = arith.xori %1374, %1377 : vector<1x256xi1>
    %1379 = arith.andi %1378, %1372 : vector<1x256xi1>
    %1380 = vector.broadcast %1368 : i32 to vector<1x256xi32>
    %1381 = arith.addi %1370, %1380 : vector<1x256xi32>
    %1382 = arith.select %1379, %1381, %1370 : vector<1x256xi1>, vector<1x256xi32>
    %c1_i32_537 = arith.constant 1 : i32
    %1383 = vector.broadcast %c1_i32_537 : i32 to vector<1x256xi32>
    %1384 = arith.cmpi sge, %1382, %1383 : vector<1x256xi32>
    %c15_i32_538 = arith.constant 15 : i32
    %1385 = vector.broadcast %c15_i32_538 : i32 to vector<1x256xi32>
    %1386 = arith.cmpi slt, %1382, %1385 : vector<1x256xi32>
    %cst_539 = arith.constant 0.000000e+00 : f32
    %1387 = vector.broadcast %cst_539 : f32 to vector<4x17xf32>
    %1388 = vector.extract_strided_slice %1363 {offsets = [0, 0], sizes = [4, 239], strides = [1, 1]} : vector<4x256xf32> to vector<4x239xf32>
    %1389 = tpu.concatenate %1387, %1388 in 1 : vector<4x17xf32>, vector<4x239xf32> -> vector<4x256xf32>
    %cst_540 = arith.constant 0.000000e+00 : f32
    %1390 = vector.shape_cast %1384 : vector<1x256xi1> to vector<1x256xi1>
    %1391 = vector.broadcast %1390 : vector<1x256xi1> to vector<4x256xi1>
    %1392 = vector.broadcast %cst_540 : f32 to vector<4x256xf32>
    %1393 = arith.select %1391, %1389, %1392 : vector<4x256xi1>, vector<4x256xf32>
    %cst_541 = arith.constant 0.000000e+00 : f32
    %1394 = vector.broadcast %cst_541 : f32 to vector<4x16xf32>
    %1395 = vector.extract_strided_slice %1363 {offsets = [0, 0], sizes = [4, 240], strides = [1, 1]} : vector<4x256xf32> to vector<4x240xf32>
    %1396 = tpu.concatenate %1394, %1395 in 1 : vector<4x16xf32>, vector<4x240xf32> -> vector<4x256xf32>
    %cst_542 = arith.constant 0.000000e+00 : f32
    %1397 = vector.broadcast %cst_542 : f32 to vector<4x15xf32>
    %1398 = vector.extract_strided_slice %1363 {offsets = [0, 0], sizes = [4, 241], strides = [1, 1]} : vector<4x256xf32> to vector<4x241xf32>
    %1399 = tpu.concatenate %1397, %1398 in 1 : vector<4x15xf32>, vector<4x241xf32> -> vector<4x256xf32>
    %cst_543 = arith.constant 0.000000e+00 : f32
    %1400 = vector.shape_cast %1386 : vector<1x256xi1> to vector<1x256xi1>
    %1401 = vector.broadcast %1400 : vector<1x256xi1> to vector<4x256xi1>
    %1402 = vector.broadcast %cst_543 : f32 to vector<4x256xf32>
    %1403 = arith.select %1401, %1399, %1402 : vector<4x256xi1>, vector<4x256xf32>
    %cst_544 = arith.constant 0.000000e+00 : f32
    %1404 = vector.broadcast %cst_544 : f32 to vector<4x1xf32>
    %1405 = vector.extract_strided_slice %1363 {offsets = [0, 0], sizes = [4, 255], strides = [1, 1]} : vector<4x256xf32> to vector<4x255xf32>
    %1406 = tpu.concatenate %1404, %1405 in 1 : vector<4x1xf32>, vector<4x255xf32> -> vector<4x256xf32>
    %cst_545 = arith.constant 0.000000e+00 : f32
    %1407 = vector.shape_cast %1384 : vector<1x256xi1> to vector<1x256xi1>
    %1408 = vector.broadcast %1407 : vector<1x256xi1> to vector<4x256xi1>
    %1409 = vector.broadcast %cst_545 : f32 to vector<4x256xf32>
    %1410 = arith.select %1408, %1406, %1409 : vector<4x256xi1>, vector<4x256xf32>
    %1411 = vector.extract_strided_slice %1363 {offsets = [0, 1], sizes = [4, 255], strides = [1, 1]} : vector<4x256xf32> to vector<4x255xf32>
    %cst_546 = arith.constant 0.000000e+00 : f32
    %1412 = vector.broadcast %cst_546 : f32 to vector<4x1xf32>
    %1413 = tpu.concatenate %1411, %1412 in 1 : vector<4x255xf32>, vector<4x1xf32> -> vector<4x256xf32>
    %cst_547 = arith.constant 0.000000e+00 : f32
    %1414 = vector.shape_cast %1386 : vector<1x256xi1> to vector<1x256xi1>
    %1415 = vector.broadcast %1414 : vector<1x256xi1> to vector<4x256xi1>
    %1416 = vector.broadcast %cst_547 : f32 to vector<4x256xf32>
    %1417 = arith.select %1415, %1413, %1416 : vector<4x256xi1>, vector<4x256xf32>
    %1418 = vector.extract_strided_slice %1363 {offsets = [0, 15], sizes = [4, 241], strides = [1, 1]} : vector<4x256xf32> to vector<4x241xf32>
    %cst_548 = arith.constant 0.000000e+00 : f32
    %1419 = vector.broadcast %cst_548 : f32 to vector<4x15xf32>
    %1420 = tpu.concatenate %1418, %1419 in 1 : vector<4x241xf32>, vector<4x15xf32> -> vector<4x256xf32>
    %cst_549 = arith.constant 0.000000e+00 : f32
    %1421 = vector.shape_cast %1384 : vector<1x256xi1> to vector<1x256xi1>
    %1422 = vector.broadcast %1421 : vector<1x256xi1> to vector<4x256xi1>
    %1423 = vector.broadcast %cst_549 : f32 to vector<4x256xf32>
    %1424 = arith.select %1422, %1420, %1423 : vector<4x256xi1>, vector<4x256xf32>
    %1425 = vector.extract_strided_slice %1363 {offsets = [0, 16], sizes = [4, 240], strides = [1, 1]} : vector<4x256xf32> to vector<4x240xf32>
    %cst_550 = arith.constant 0.000000e+00 : f32
    %1426 = vector.broadcast %cst_550 : f32 to vector<4x16xf32>
    %1427 = tpu.concatenate %1425, %1426 in 1 : vector<4x240xf32>, vector<4x16xf32> -> vector<4x256xf32>
    %1428 = vector.extract_strided_slice %1363 {offsets = [0, 17], sizes = [4, 239], strides = [1, 1]} : vector<4x256xf32> to vector<4x239xf32>
    %cst_551 = arith.constant 0.000000e+00 : f32
    %1429 = vector.broadcast %cst_551 : f32 to vector<4x17xf32>
    %1430 = tpu.concatenate %1428, %1429 in 1 : vector<4x239xf32>, vector<4x17xf32> -> vector<4x256xf32>
    %cst_552 = arith.constant 0.000000e+00 : f32
    %1431 = vector.shape_cast %1386 : vector<1x256xi1> to vector<1x256xi1>
    %1432 = vector.broadcast %1431 : vector<1x256xi1> to vector<4x256xi1>
    %1433 = vector.broadcast %cst_552 : f32 to vector<4x256xf32>
    %1434 = arith.select %1432, %1430, %1433 : vector<4x256xi1>, vector<4x256xf32>
    %1435 = tpu.concatenate %1393, %1396, %1403, %1410, %1363, %1417, %1424, %1427, %1434 in 0 : vector<4x256xf32>, vector<4x256xf32>, vector<4x256xf32>, vector<4x256xf32>, vector<4x256xf32>, vector<4x256xf32>, vector<4x256xf32>, vector<4x256xf32>, vector<4x256xf32> -> vector<36x256xf32>
    %1436 = arith.truncf %1435 : vector<36x256xf32> to vector<36x256xbf16>
    %cst_553 = arith.constant dense<0.000000e+00> : vector<4x256xf32>
    %1437 = tpu.matmul %1364, %1436, %cst_553 {dimension_numbers = #tpu.dot_dimension_numbers<[1], [0], [0], [1], [0, 0, 1, 1], [], []>} : vector<4x36xbf16>, vector<36x256xbf16>, vector<4x256xf32> -> vector<4x256xf32>
    %1438 = vector.broadcast %1365 : vector<4x1xf32> to vector<4x256xf32>
    %1439 = arith.addf %1437, %1438 : vector<4x256xf32>
    %cst_554 = arith.constant 0.000000e+00 : f32
    %1440 = vector.broadcast %cst_554 : f32 to vector<4x256xf32>
    %1441 = arith.cmpf ogt, %1439, %1440 : vector<4x256xf32>
    %cst_555 = arith.constant 0.000000e+00 : f32
    %1442 = vector.broadcast %cst_555 : f32 to vector<4x256xf32>
    %1443 = arith.minimumf %1439, %1442 : vector<4x256xf32>
    %1444 = math.exp %1443 : vector<4x256xf32>
    %cst_556 = arith.constant 1.000000e+00 : f32
    %1445 = vector.broadcast %cst_556 : f32 to vector<4x256xf32>
    %1446 = arith.subf %1444, %1445 : vector<4x256xf32>
    %1447 = arith.select %1441, %1439, %1446 : vector<4x256xi1>, vector<4x256xf32>
    %c0_557 = arith.constant 0 : index
    %c0_558 = arith.constant 0 : index
    %1448 = vector.load %arg57[%c0_557, %c0_558] : memref<4x36xbf16, #tpu.memory_space<vmem>>, vector<4x36xbf16>
    %c0_559 = arith.constant 0 : index
    %c0_560 = arith.constant 0 : index
    %1449 = vector.load %arg58[%c0_559, %c0_560] : memref<4x1xf32, #tpu.memory_space<vmem>>, vector<4x1xf32>
    %1450 = tpu.iota {dimensions = array<i32: 1>} : vector<1x256xi32>
    %c16_i32_561 = arith.constant 16 : i32
    %c0_i32_562 = arith.constant 0 : i32
    %1451 = arith.cmpi eq, %c16_i32_561, %c0_i32_562 : i32
    %c1_i32_563 = arith.constant 1 : i32
    %1452 = arith.select %1451, %c1_i32_563, %c16_i32_561 : i32
    %1453 = vector.broadcast %1452 : i32 to vector<1x256xi32>
    %1454 = arith.remsi %1450, %1453 : vector<1x256xi32>
    %c0_i32_564 = arith.constant 0 : i32
    %1455 = vector.broadcast %c0_i32_564 : i32 to vector<1x256xi32>
    %1456 = arith.cmpi ne, %1454, %1455 : vector<1x256xi32>
    %c0_i32_565 = arith.constant 0 : i32
    %1457 = vector.broadcast %c0_i32_565 : i32 to vector<1x256xi32>
    %1458 = arith.cmpi slt, %1454, %1457 : vector<1x256xi32>
    %c0_i32_566 = arith.constant 0 : i32
    %1459 = arith.cmpi slt, %1452, %c0_i32_566 : i32
    %1460 = vector.broadcast %1459 : i1 to vector<1x256xi1>
    %1461 = vector.broadcast %1460 : vector<1x256xi1> to vector<1x256xi1>
    %1462 = arith.xori %1458, %1461 : vector<1x256xi1>
    %1463 = arith.andi %1462, %1456 : vector<1x256xi1>
    %1464 = vector.broadcast %1452 : i32 to vector<1x256xi32>
    %1465 = arith.addi %1454, %1464 : vector<1x256xi32>
    %1466 = arith.select %1463, %1465, %1454 : vector<1x256xi1>, vector<1x256xi32>
    %c1_i32_567 = arith.constant 1 : i32
    %1467 = vector.broadcast %c1_i32_567 : i32 to vector<1x256xi32>
    %1468 = arith.cmpi sge, %1466, %1467 : vector<1x256xi32>
    %c15_i32_568 = arith.constant 15 : i32
    %1469 = vector.broadcast %c15_i32_568 : i32 to vector<1x256xi32>
    %1470 = arith.cmpi slt, %1466, %1469 : vector<1x256xi32>
    %cst_569 = arith.constant 0.000000e+00 : f32
    %1471 = vector.broadcast %cst_569 : f32 to vector<4x17xf32>
    %1472 = vector.extract_strided_slice %1447 {offsets = [0, 0], sizes = [4, 239], strides = [1, 1]} : vector<4x256xf32> to vector<4x239xf32>
    %1473 = tpu.concatenate %1471, %1472 in 1 : vector<4x17xf32>, vector<4x239xf32> -> vector<4x256xf32>
    %cst_570 = arith.constant 0.000000e+00 : f32
    %1474 = vector.shape_cast %1468 : vector<1x256xi1> to vector<1x256xi1>
    %1475 = vector.broadcast %1474 : vector<1x256xi1> to vector<4x256xi1>
    %1476 = vector.broadcast %cst_570 : f32 to vector<4x256xf32>
    %1477 = arith.select %1475, %1473, %1476 : vector<4x256xi1>, vector<4x256xf32>
    %cst_571 = arith.constant 0.000000e+00 : f32
    %1478 = vector.broadcast %cst_571 : f32 to vector<4x16xf32>
    %1479 = vector.extract_strided_slice %1447 {offsets = [0, 0], sizes = [4, 240], strides = [1, 1]} : vector<4x256xf32> to vector<4x240xf32>
    %1480 = tpu.concatenate %1478, %1479 in 1 : vector<4x16xf32>, vector<4x240xf32> -> vector<4x256xf32>
    %cst_572 = arith.constant 0.000000e+00 : f32
    %1481 = vector.broadcast %cst_572 : f32 to vector<4x15xf32>
    %1482 = vector.extract_strided_slice %1447 {offsets = [0, 0], sizes = [4, 241], strides = [1, 1]} : vector<4x256xf32> to vector<4x241xf32>
    %1483 = tpu.concatenate %1481, %1482 in 1 : vector<4x15xf32>, vector<4x241xf32> -> vector<4x256xf32>
    %cst_573 = arith.constant 0.000000e+00 : f32
    %1484 = vector.shape_cast %1470 : vector<1x256xi1> to vector<1x256xi1>
    %1485 = vector.broadcast %1484 : vector<1x256xi1> to vector<4x256xi1>
    %1486 = vector.broadcast %cst_573 : f32 to vector<4x256xf32>
    %1487 = arith.select %1485, %1483, %1486 : vector<4x256xi1>, vector<4x256xf32>
    %cst_574 = arith.constant 0.000000e+00 : f32
    %1488 = vector.broadcast %cst_574 : f32 to vector<4x1xf32>
    %1489 = vector.extract_strided_slice %1447 {offsets = [0, 0], sizes = [4, 255], strides = [1, 1]} : vector<4x256xf32> to vector<4x255xf32>
    %1490 = tpu.concatenate %1488, %1489 in 1 : vector<4x1xf32>, vector<4x255xf32> -> vector<4x256xf32>
    %cst_575 = arith.constant 0.000000e+00 : f32
    %1491 = vector.shape_cast %1468 : vector<1x256xi1> to vector<1x256xi1>
    %1492 = vector.broadcast %1491 : vector<1x256xi1> to vector<4x256xi1>
    %1493 = vector.broadcast %cst_575 : f32 to vector<4x256xf32>
    %1494 = arith.select %1492, %1490, %1493 : vector<4x256xi1>, vector<4x256xf32>
    %1495 = vector.extract_strided_slice %1447 {offsets = [0, 1], sizes = [4, 255], strides = [1, 1]} : vector<4x256xf32> to vector<4x255xf32>
    %cst_576 = arith.constant 0.000000e+00 : f32
    %1496 = vector.broadcast %cst_576 : f32 to vector<4x1xf32>
    %1497 = tpu.concatenate %1495, %1496 in 1 : vector<4x255xf32>, vector<4x1xf32> -> vector<4x256xf32>
    %cst_577 = arith.constant 0.000000e+00 : f32
    %1498 = vector.shape_cast %1470 : vector<1x256xi1> to vector<1x256xi1>
    %1499 = vector.broadcast %1498 : vector<1x256xi1> to vector<4x256xi1>
    %1500 = vector.broadcast %cst_577 : f32 to vector<4x256xf32>
    %1501 = arith.select %1499, %1497, %1500 : vector<4x256xi1>, vector<4x256xf32>
    %1502 = vector.extract_strided_slice %1447 {offsets = [0, 15], sizes = [4, 241], strides = [1, 1]} : vector<4x256xf32> to vector<4x241xf32>
    %cst_578 = arith.constant 0.000000e+00 : f32
    %1503 = vector.broadcast %cst_578 : f32 to vector<4x15xf32>
    %1504 = tpu.concatenate %1502, %1503 in 1 : vector<4x241xf32>, vector<4x15xf32> -> vector<4x256xf32>
    %cst_579 = arith.constant 0.000000e+00 : f32
    %1505 = vector.shape_cast %1468 : vector<1x256xi1> to vector<1x256xi1>
    %1506 = vector.broadcast %1505 : vector<1x256xi1> to vector<4x256xi1>
    %1507 = vector.broadcast %cst_579 : f32 to vector<4x256xf32>
    %1508 = arith.select %1506, %1504, %1507 : vector<4x256xi1>, vector<4x256xf32>
    %1509 = vector.extract_strided_slice %1447 {offsets = [0, 16], sizes = [4, 240], strides = [1, 1]} : vector<4x256xf32> to vector<4x240xf32>
    %cst_580 = arith.constant 0.000000e+00 : f32
    %1510 = vector.broadcast %cst_580 : f32 to vector<4x16xf32>
    %1511 = tpu.concatenate %1509, %1510 in 1 : vector<4x240xf32>, vector<4x16xf32> -> vector<4x256xf32>
    %1512 = vector.extract_strided_slice %1447 {offsets = [0, 17], sizes = [4, 239], strides = [1, 1]} : vector<4x256xf32> to vector<4x239xf32>
    %cst_581 = arith.constant 0.000000e+00 : f32
    %1513 = vector.broadcast %cst_581 : f32 to vector<4x17xf32>
    %1514 = tpu.concatenate %1512, %1513 in 1 : vector<4x239xf32>, vector<4x17xf32> -> vector<4x256xf32>
    %cst_582 = arith.constant 0.000000e+00 : f32
    %1515 = vector.shape_cast %1470 : vector<1x256xi1> to vector<1x256xi1>
    %1516 = vector.broadcast %1515 : vector<1x256xi1> to vector<4x256xi1>
    %1517 = vector.broadcast %cst_582 : f32 to vector<4x256xf32>
    %1518 = arith.select %1516, %1514, %1517 : vector<4x256xi1>, vector<4x256xf32>
    %1519 = tpu.concatenate %1477, %1480, %1487, %1494, %1447, %1501, %1508, %1511, %1518 in 0 : vector<4x256xf32>, vector<4x256xf32>, vector<4x256xf32>, vector<4x256xf32>, vector<4x256xf32>, vector<4x256xf32>, vector<4x256xf32>, vector<4x256xf32>, vector<4x256xf32> -> vector<36x256xf32>
    %1520 = arith.truncf %1519 : vector<36x256xf32> to vector<36x256xbf16>
    %cst_583 = arith.constant dense<0.000000e+00> : vector<4x256xf32>
    %1521 = tpu.matmul %1448, %1520, %cst_583 {dimension_numbers = #tpu.dot_dimension_numbers<[1], [0], [0], [1], [0, 0, 1, 1], [], []>} : vector<4x36xbf16>, vector<36x256xbf16>, vector<4x256xf32> -> vector<4x256xf32>
    %1522 = vector.broadcast %1449 : vector<4x1xf32> to vector<4x256xf32>
    %1523 = arith.addf %1521, %1522 : vector<4x256xf32>
    %cst_584 = arith.constant 0.000000e+00 : f32
    %1524 = vector.broadcast %cst_584 : f32 to vector<4x256xf32>
    %1525 = arith.cmpf ogt, %1523, %1524 : vector<4x256xf32>
    %cst_585 = arith.constant 0.000000e+00 : f32
    %1526 = vector.broadcast %cst_585 : f32 to vector<4x256xf32>
    %1527 = arith.minimumf %1523, %1526 : vector<4x256xf32>
    %1528 = math.exp %1527 : vector<4x256xf32>
    %cst_586 = arith.constant 1.000000e+00 : f32
    %1529 = vector.broadcast %cst_586 : f32 to vector<4x256xf32>
    %1530 = arith.subf %1528, %1529 : vector<4x256xf32>
    %1531 = arith.select %1525, %1523, %1530 : vector<4x256xi1>, vector<4x256xf32>
    %c0_587 = arith.constant 0 : index
    %c0_588 = arith.constant 0 : index
    %1532 = vector.load %arg59[%c0_587, %c0_588] : memref<3x36xbf16, #tpu.memory_space<vmem>>, vector<3x36xbf16>
    %c0_589 = arith.constant 0 : index
    %c0_590 = arith.constant 0 : index
    %1533 = vector.load %arg60[%c0_589, %c0_590] : memref<3x1xf32, #tpu.memory_space<vmem>>, vector<3x1xf32>
    %1534 = tpu.iota {dimensions = array<i32: 1>} : vector<1x256xi32>
    %c16_i32_591 = arith.constant 16 : i32
    %c0_i32_592 = arith.constant 0 : i32
    %1535 = arith.cmpi eq, %c16_i32_591, %c0_i32_592 : i32
    %c1_i32_593 = arith.constant 1 : i32
    %1536 = arith.select %1535, %c1_i32_593, %c16_i32_591 : i32
    %1537 = vector.broadcast %1536 : i32 to vector<1x256xi32>
    %1538 = arith.remsi %1534, %1537 : vector<1x256xi32>
    %c0_i32_594 = arith.constant 0 : i32
    %1539 = vector.broadcast %c0_i32_594 : i32 to vector<1x256xi32>
    %1540 = arith.cmpi ne, %1538, %1539 : vector<1x256xi32>
    %c0_i32_595 = arith.constant 0 : i32
    %1541 = vector.broadcast %c0_i32_595 : i32 to vector<1x256xi32>
    %1542 = arith.cmpi slt, %1538, %1541 : vector<1x256xi32>
    %c0_i32_596 = arith.constant 0 : i32
    %1543 = arith.cmpi slt, %1536, %c0_i32_596 : i32
    %1544 = vector.broadcast %1543 : i1 to vector<1x256xi1>
    %1545 = vector.broadcast %1544 : vector<1x256xi1> to vector<1x256xi1>
    %1546 = arith.xori %1542, %1545 : vector<1x256xi1>
    %1547 = arith.andi %1546, %1540 : vector<1x256xi1>
    %1548 = vector.broadcast %1536 : i32 to vector<1x256xi32>
    %1549 = arith.addi %1538, %1548 : vector<1x256xi32>
    %1550 = arith.select %1547, %1549, %1538 : vector<1x256xi1>, vector<1x256xi32>
    %c1_i32_597 = arith.constant 1 : i32
    %1551 = vector.broadcast %c1_i32_597 : i32 to vector<1x256xi32>
    %1552 = arith.cmpi sge, %1550, %1551 : vector<1x256xi32>
    %c15_i32_598 = arith.constant 15 : i32
    %1553 = vector.broadcast %c15_i32_598 : i32 to vector<1x256xi32>
    %1554 = arith.cmpi slt, %1550, %1553 : vector<1x256xi32>
    %cst_599 = arith.constant 0.000000e+00 : f32
    %1555 = vector.broadcast %cst_599 : f32 to vector<4x17xf32>
    %1556 = vector.extract_strided_slice %1531 {offsets = [0, 0], sizes = [4, 239], strides = [1, 1]} : vector<4x256xf32> to vector<4x239xf32>
    %1557 = tpu.concatenate %1555, %1556 in 1 : vector<4x17xf32>, vector<4x239xf32> -> vector<4x256xf32>
    %cst_600 = arith.constant 0.000000e+00 : f32
    %1558 = vector.shape_cast %1552 : vector<1x256xi1> to vector<1x256xi1>
    %1559 = vector.broadcast %1558 : vector<1x256xi1> to vector<4x256xi1>
    %1560 = vector.broadcast %cst_600 : f32 to vector<4x256xf32>
    %1561 = arith.select %1559, %1557, %1560 : vector<4x256xi1>, vector<4x256xf32>
    %cst_601 = arith.constant 0.000000e+00 : f32
    %1562 = vector.broadcast %cst_601 : f32 to vector<4x16xf32>
    %1563 = vector.extract_strided_slice %1531 {offsets = [0, 0], sizes = [4, 240], strides = [1, 1]} : vector<4x256xf32> to vector<4x240xf32>
    %1564 = tpu.concatenate %1562, %1563 in 1 : vector<4x16xf32>, vector<4x240xf32> -> vector<4x256xf32>
    %cst_602 = arith.constant 0.000000e+00 : f32
    %1565 = vector.broadcast %cst_602 : f32 to vector<4x15xf32>
    %1566 = vector.extract_strided_slice %1531 {offsets = [0, 0], sizes = [4, 241], strides = [1, 1]} : vector<4x256xf32> to vector<4x241xf32>
    %1567 = tpu.concatenate %1565, %1566 in 1 : vector<4x15xf32>, vector<4x241xf32> -> vector<4x256xf32>
    %cst_603 = arith.constant 0.000000e+00 : f32
    %1568 = vector.shape_cast %1554 : vector<1x256xi1> to vector<1x256xi1>
    %1569 = vector.broadcast %1568 : vector<1x256xi1> to vector<4x256xi1>
    %1570 = vector.broadcast %cst_603 : f32 to vector<4x256xf32>
    %1571 = arith.select %1569, %1567, %1570 : vector<4x256xi1>, vector<4x256xf32>
    %cst_604 = arith.constant 0.000000e+00 : f32
    %1572 = vector.broadcast %cst_604 : f32 to vector<4x1xf32>
    %1573 = vector.extract_strided_slice %1531 {offsets = [0, 0], sizes = [4, 255], strides = [1, 1]} : vector<4x256xf32> to vector<4x255xf32>
    %1574 = tpu.concatenate %1572, %1573 in 1 : vector<4x1xf32>, vector<4x255xf32> -> vector<4x256xf32>
    %cst_605 = arith.constant 0.000000e+00 : f32
    %1575 = vector.shape_cast %1552 : vector<1x256xi1> to vector<1x256xi1>
    %1576 = vector.broadcast %1575 : vector<1x256xi1> to vector<4x256xi1>
    %1577 = vector.broadcast %cst_605 : f32 to vector<4x256xf32>
    %1578 = arith.select %1576, %1574, %1577 : vector<4x256xi1>, vector<4x256xf32>
    %1579 = vector.extract_strided_slice %1531 {offsets = [0, 1], sizes = [4, 255], strides = [1, 1]} : vector<4x256xf32> to vector<4x255xf32>
    %cst_606 = arith.constant 0.000000e+00 : f32
    %1580 = vector.broadcast %cst_606 : f32 to vector<4x1xf32>
    %1581 = tpu.concatenate %1579, %1580 in 1 : vector<4x255xf32>, vector<4x1xf32> -> vector<4x256xf32>
    %cst_607 = arith.constant 0.000000e+00 : f32
    %1582 = vector.shape_cast %1554 : vector<1x256xi1> to vector<1x256xi1>
    %1583 = vector.broadcast %1582 : vector<1x256xi1> to vector<4x256xi1>
    %1584 = vector.broadcast %cst_607 : f32 to vector<4x256xf32>
    %1585 = arith.select %1583, %1581, %1584 : vector<4x256xi1>, vector<4x256xf32>
    %1586 = vector.extract_strided_slice %1531 {offsets = [0, 15], sizes = [4, 241], strides = [1, 1]} : vector<4x256xf32> to vector<4x241xf32>
    %cst_608 = arith.constant 0.000000e+00 : f32
    %1587 = vector.broadcast %cst_608 : f32 to vector<4x15xf32>
    %1588 = tpu.concatenate %1586, %1587 in 1 : vector<4x241xf32>, vector<4x15xf32> -> vector<4x256xf32>
    %cst_609 = arith.constant 0.000000e+00 : f32
    %1589 = vector.shape_cast %1552 : vector<1x256xi1> to vector<1x256xi1>
    %1590 = vector.broadcast %1589 : vector<1x256xi1> to vector<4x256xi1>
    %1591 = vector.broadcast %cst_609 : f32 to vector<4x256xf32>
    %1592 = arith.select %1590, %1588, %1591 : vector<4x256xi1>, vector<4x256xf32>
    %1593 = vector.extract_strided_slice %1531 {offsets = [0, 16], sizes = [4, 240], strides = [1, 1]} : vector<4x256xf32> to vector<4x240xf32>
    %cst_610 = arith.constant 0.000000e+00 : f32
    %1594 = vector.broadcast %cst_610 : f32 to vector<4x16xf32>
    %1595 = tpu.concatenate %1593, %1594 in 1 : vector<4x240xf32>, vector<4x16xf32> -> vector<4x256xf32>
    %1596 = vector.extract_strided_slice %1531 {offsets = [0, 17], sizes = [4, 239], strides = [1, 1]} : vector<4x256xf32> to vector<4x239xf32>
    %cst_611 = arith.constant 0.000000e+00 : f32
    %1597 = vector.broadcast %cst_611 : f32 to vector<4x17xf32>
    %1598 = tpu.concatenate %1596, %1597 in 1 : vector<4x239xf32>, vector<4x17xf32> -> vector<4x256xf32>
    %cst_612 = arith.constant 0.000000e+00 : f32
    %1599 = vector.shape_cast %1554 : vector<1x256xi1> to vector<1x256xi1>
    %1600 = vector.broadcast %1599 : vector<1x256xi1> to vector<4x256xi1>
    %1601 = vector.broadcast %cst_612 : f32 to vector<4x256xf32>
    %1602 = arith.select %1600, %1598, %1601 : vector<4x256xi1>, vector<4x256xf32>
    %1603 = tpu.concatenate %1561, %1564, %1571, %1578, %1531, %1585, %1592, %1595, %1602 in 0 : vector<4x256xf32>, vector<4x256xf32>, vector<4x256xf32>, vector<4x256xf32>, vector<4x256xf32>, vector<4x256xf32>, vector<4x256xf32>, vector<4x256xf32>, vector<4x256xf32> -> vector<36x256xf32>
    %1604 = arith.truncf %1603 : vector<36x256xf32> to vector<36x256xbf16>
    %cst_613 = arith.constant dense<0.000000e+00> : vector<3x256xf32>
    %1605 = tpu.matmul %1532, %1604, %cst_613 {dimension_numbers = #tpu.dot_dimension_numbers<[1], [0], [0], [1], [0, 0, 1, 1], [], []>} : vector<3x36xbf16>, vector<36x256xbf16>, vector<3x256xf32> -> vector<3x256xf32>
    %1606 = vector.broadcast %1533 : vector<3x1xf32> to vector<3x256xf32>
    %1607 = arith.addf %1605, %1606 : vector<3x256xf32>
    %1608 = math.tanh %1607 : vector<3x256xf32>
    %1609 = vector.shape_cast %1608 : vector<3x256xf32> to vector<1x3x256xf32>
    %c0_614 = arith.constant 0 : index
    %c0_615 = arith.constant 0 : index
    %c0_616 = arith.constant 0 : index
    %1610 = vector.load %arg61[%c0_614, %c0_615, %c0_616] : memref<1x3x256xf32, #tpu.memory_space<vmem>>, vector<1x3x256xf32>
    tpu.vector_store %arg61[%c0_614, %c0_615, %c0_616], %1609 {strides = array<i32>} : memref<1x3x256xf32, #tpu.memory_space<vmem>>, vector<1x3x256xf32>,
    return
  }
  func.func @transform_0(%arg0: i32) -> (i32, i32, i32) {
    %c0_i32 = arith.constant 0 : i32
    %c0_i32_0 = arith.constant 0 : i32
    %c0_i32_1 = arith.constant 0 : i32
    return %arg0, %c0_i32, %c0_i32_0 : i32, i32, i32
  }
  func.func @transform_1(%arg0: i32) -> (i32, i32) {
    %c0_i32 = arith.constant 0 : i32
    %c0_i32_0 = arith.constant 0 : i32
    %c0_i32_1 = arith.constant 0 : i32
    return %c0_i32, %c0_i32_0 : i32, i32
  }
  func.func @transform_2(%arg0: i32) -> (i32, i32) {
    %c0_i32 = arith.constant 0 : i32
    %c0_i32_0 = arith.constant 0 : i32
    %c0_i32_1 = arith.constant 0 : i32
    return %c0_i32, %c0_i32_0 : i32, i32
  }
  func.func @transform_3(%arg0: i32) -> (i32, i32) {
    %c0_i32 = arith.constant 0 : i32
    %c0_i32_0 = arith.constant 0 : i32
    %c0_i32_1 = arith.constant 0 : i32
    return %c0_i32, %c0_i32_0 : i32, i32
  }
  func.func @transform_4(%arg0: i32) -> (i32, i32) {
    %c0_i32 = arith.constant 0 : i32
    %c0_i32_0 = arith.constant 0 : i32
    %c0_i32_1 = arith.constant 0 : i32
    return %c0_i32, %c0_i32_0 : i32, i32
  }
  func.func @transform_5(%arg0: i32) -> (i32, i32) {
    %c0_i32 = arith.constant 0 : i32
    %c0_i32_0 = arith.constant 0 : i32
    %c0_i32_1 = arith.constant 0 : i32
    return %c0_i32, %c0_i32_0 : i32, i32
  }
  func.func @transform_6(%arg0: i32) -> (i32, i32) {
    %c0_i32 = arith.constant 0 : i32
    %c0_i32_0 = arith.constant 0 : i32
    %c0_i32_1 = arith.constant 0 : i32
    return %c0_i32, %c0_i32_0 : i32, i32
  }
  func.func @transform_7(%arg0: i32) -> (i32, i32) {
    %c0_i32 = arith.constant 0 : i32
    %c0_i32_0 = arith.constant 0 : i32
    %c0_i32_1 = arith.constant 0 : i32
    return %c0_i32, %c0_i32_0 : i32, i32
  }
  func.func @transform_8(%arg0: i32) -> (i32, i32) {
    %c0_i32 = arith.constant 0 : i32
    %c0_i32_0 = arith.constant 0 : i32
    %c0_i32_1 = arith.constant 0 : i32
    return %c0_i32, %c0_i32_0 : i32, i32
  }
  func.func @transform_9(%arg0: i32) -> (i32, i32) {
    %c0_i32 = arith.constant 0 : i32
    %c0_i32_0 = arith.constant 0 : i32
    %c0_i32_1 = arith.constant 0 : i32
    return %c0_i32, %c0_i32_0 : i32, i32
  }
  func.func @transform_10(%arg0: i32) -> (i32, i32) {
    %c0_i32 = arith.constant 0 : i32
    %c0_i32_0 = arith.constant 0 : i32
    %c0_i32_1 = arith.constant 0 : i32
    return %c0_i32, %c0_i32_0 : i32, i32
  }
  func.func @transform_11(%arg0: i32) -> (i32, i32) {
    %c0_i32 = arith.constant 0 : i32
    %c0_i32_0 = arith.constant 0 : i32
    %c0_i32_1 = arith.constant 0 : i32
    return %c0_i32, %c0_i32_0 : i32, i32
  }
  func.func @transform_12(%arg0: i32) -> (i32, i32) {
    %c0_i32 = arith.constant 0 : i32
    %c0_i32_0 = arith.constant 0 : i32
    %c0_i32_1 = arith.constant 0 : i32
    return %c0_i32, %c0_i32_0 : i32, i32
  }
  func.func @transform_13(%arg0: i32) -> (i32, i32) {
    %c0_i32 = arith.constant 0 : i32
    %c0_i32_0 = arith.constant 0 : i32
    %c0_i32_1 = arith.constant 0 : i32
    return %c0_i32, %c0_i32_0 : i32, i32
  }
  func.func @transform_14(%arg0: i32) -> (i32, i32) {
    %c0_i32 = arith.constant 0 : i32
    %c0_i32_0 = arith.constant 0 : i32
    %c0_i32_1 = arith.constant 0 : i32
    return %c0_i32, %c0_i32_0 : i32, i32
  }
  func.func @transform_15(%arg0: i32) -> (i32, i32) {
    %c0_i32 = arith.constant 0 : i32
    %c0_i32_0 = arith.constant 0 : i32
    %c0_i32_1 = arith.constant 0 : i32
    return %c0_i32, %c0_i32_0 : i32, i32
  }
  func.func @transform_16(%arg0: i32) -> (i32, i32) {
    %c0_i32 = arith.constant 0 : i32
    %c0_i32_0 = arith.constant 0 : i32
    %c0_i32_1 = arith.constant 0 : i32
    return %c0_i32, %c0_i32_0 : i32, i32
  }
  func.func @transform_17(%arg0: i32) -> (i32, i32) {
    %c0_i32 = arith.constant 0 : i32
    %c0_i32_0 = arith.constant 0 : i32
    %c0_i32_1 = arith.constant 0 : i32
    return %c0_i32, %c0_i32_0 : i32, i32
  }
  func.func @transform_18(%arg0: i32) -> (i32, i32) {
    %c0_i32 = arith.constant 0 : i32
    %c0_i32_0 = arith.constant 0 : i32
    %c0_i32_1 = arith.constant 0 : i32
    return %c0_i32, %c0_i32_0 : i32, i32
  }
  func.func @transform_19(%arg0: i32) -> (i32, i32) {
    %c0_i32 = arith.constant 0 : i32
    %c0_i32_0 = arith.constant 0 : i32
    %c0_i32_1 = arith.constant 0 : i32
    return %c0_i32, %c0_i32_0 : i32, i32
  }
  func.func @transform_20(%arg0: i32) -> (i32, i32) {
    %c0_i32 = arith.constant 0 : i32
    %c0_i32_0 = arith.constant 0 : i32
    %c0_i32_1 = arith.constant 0 : i32
    return %c0_i32, %c0_i32_0 : i32, i32
  }
  func.func @transform_21(%arg0: i32) -> (i32, i32) {
    %c0_i32 = arith.constant 0 : i32
    %c0_i32_0 = arith.constant 0 : i32
    %c0_i32_1 = arith.constant 0 : i32
    return %c0_i32, %c0_i32_0 : i32, i32
  }
  func.func @transform_22(%arg0: i32) -> (i32, i32) {
    %c0_i32 = arith.constant 0 : i32
    %c0_i32_0 = arith.constant 0 : i32
    %c0_i32_1 = arith.constant 0 : i32
    return %c0_i32, %c0_i32_0 : i32, i32
  }
  func.func @transform_23(%arg0: i32) -> (i32, i32) {
    %c0_i32 = arith.constant 0 : i32
    %c0_i32_0 = arith.constant 0 : i32
    %c0_i32_1 = arith.constant 0 : i32
    return %c0_i32, %c0_i32_0 : i32, i32
  }
  func.func @transform_24(%arg0: i32) -> (i32, i32) {
    %c0_i32 = arith.constant 0 : i32
    %c0_i32_0 = arith.constant 0 : i32
    %c0_i32_1 = arith.constant 0 : i32
    return %c0_i32, %c0_i32_0 : i32, i32
  }
  func.func @transform_25(%arg0: i32) -> (i32, i32) {
    %c0_i32 = arith.constant 0 : i32
    %c0_i32_0 = arith.constant 0 : i32
    %c0_i32_1 = arith.constant 0 : i32
    return %c0_i32, %c0_i32_0 : i32, i32
  }
  func.func @transform_26(%arg0: i32) -> (i32, i32) {
    %c0_i32 = arith.constant 0 : i32
    %c0_i32_0 = arith.constant 0 : i32
    %c0_i32_1 = arith.constant 0 : i32
    return %c0_i32, %c0_i32_0 : i32, i32
  }
  func.func @transform_27(%arg0: i32) -> (i32, i32) {
    %c0_i32 = arith.constant 0 : i32
    %c0_i32_0 = arith.constant 0 : i32
    %c0_i32_1 = arith.constant 0 : i32
    return %c0_i32, %c0_i32_0 : i32, i32
  }
  func.func @transform_28(%arg0: i32) -> (i32, i32) {
    %c0_i32 = arith.constant 0 : i32
    %c0_i32_0 = arith.constant 0 : i32
    %c0_i32_1 = arith.constant 0 : i32
    return %c0_i32, %c0_i32_0 : i32, i32
  }
  func.func @transform_29(%arg0: i32) -> (i32, i32) {
    %c0_i32 = arith.constant 0 : i32
    %c0_i32_0 = arith.constant 0 : i32
    %c0_i32_1 = arith.constant 0 : i32
    return %c0_i32, %c0_i32_0 : i32, i32
  }
  func.func @transform_30(%arg0: i32) -> (i32, i32) {
    %c0_i32 = arith.constant 0 : i32
    %c0_i32_0 = arith.constant 0 : i32
    %c0_i32_1 = arith.constant 0 : i32
    return %c0_i32, %c0_i32_0 : i32, i32
  }
  func.func @transform_31(%arg0: i32) -> (i32, i32, i32) {
    %c0_i32 = arith.constant 0 : i32
    %c0_i32_0 = arith.constant 0 : i32
    %c0_i32_1 = arith.constant 0 : i32
    %c0_i32_2 = arith.constant 0 : i32
    return %c0_i32, %c0_i32_0, %c0_i32_1 : i32, i32, i32
  }
  func.func @transform_32(%arg0: i32) -> (i32, i32) {
    %c0_i32 = arith.constant 0 : i32
    %c0_i32_0 = arith.constant 0 : i32
    %c0_i32_1 = arith.constant 0 : i32
    return %c0_i32, %c0_i32_0 : i32, i32
  }
  func.func @transform_33(%arg0: i32) -> (i32, i32, i32) {
    %c0_i32 = arith.constant 0 : i32
    %c0_i32_0 = arith.constant 0 : i32
    %c0_i32_1 = arith.constant 0 : i32
    %c0_i32_2 = arith.constant 0 : i32
    return %c0_i32, %c0_i32_0, %c0_i32_1 : i32, i32, i32
  }
  func.func @transform_34(%arg0: i32) -> (i32, i32) {
    %c0_i32 = arith.constant 0 : i32
    %c0_i32_0 = arith.constant 0 : i32
    %c0_i32_1 = arith.constant 0 : i32
    return %c0_i32, %c0_i32_0 : i32, i32
  }
  func.func @transform_35(%arg0: i32) -> (i32, i32) {
    %c0_i32 = arith.constant 0 : i32
    %c0_i32_0 = arith.constant 0 : i32
    %c0_i32_1 = arith.constant 0 : i32
    return %c0_i32, %c0_i32_0 : i32, i32
  }
  func.func @transform_36(%arg0: i32) -> (i32, i32) {
    %c0_i32 = arith.constant 0 : i32
    %c0_i32_0 = arith.constant 0 : i32
    %c0_i32_1 = arith.constant 0 : i32
    return %c0_i32, %c0_i32_0 : i32, i32
  }
  func.func @transform_37(%arg0: i32) -> (i32, i32) {
    %c0_i32 = arith.constant 0 : i32
    %c0_i32_0 = arith.constant 0 : i32
    %c0_i32_1 = arith.constant 0 : i32
    return %c0_i32, %c0_i32_0 : i32, i32
  }
  func.func @transform_38(%arg0: i32) -> (i32, i32) {
    %c0_i32 = arith.constant 0 : i32
    %c0_i32_0 = arith.constant 0 : i32
    %c0_i32_1 = arith.constant 0 : i32
    return %c0_i32, %c0_i32_0 : i32, i32
  }
  func.func @transform_39(%arg0: i32) -> (i32, i32) {
    %c0_i32 = arith.constant 0 : i32
    %c0_i32_0 = arith.constant 0 : i32
    %c0_i32_1 = arith.constant 0 : i32
    return %c0_i32, %c0_i32_0 : i32, i32
  }
  func.func @transform_40(%arg0: i32) -> (i32, i32) {
    %c0_i32 = arith.constant 0 : i32
    %c0_i32_0 = arith.constant 0 : i32
    %c0_i32_1 = arith.constant 0 : i32
    return %c0_i32, %c0_i32_0 : i32, i32
  }
  func.func @transform_41(%arg0: i32) -> (i32, i32) {
    %c0_i32 = arith.constant 0 : i32
    %c0_i32_0 = arith.constant 0 : i32
    %c0_i32_1 = arith.constant 0 : i32
    return %c0_i32, %c0_i32_0 : i32, i32
  }
  func.func @transform_42(%arg0: i32) -> (i32, i32) {
    %c0_i32 = arith.constant 0 : i32
    %c0_i32_0 = arith.constant 0 : i32
    %c0_i32_1 = arith.constant 0 : i32
    return %c0_i32, %c0_i32_0 : i32, i32
  }
  func.func @transform_43(%arg0: i32) -> (i32, i32) {
    %c0_i32 = arith.constant 0 : i32
    %c0_i32_0 = arith.constant 0 : i32
    %c0_i32_1 = arith.constant 0 : i32
    return %c0_i32, %c0_i32_0 : i32, i32
  }
  func.func @transform_44(%arg0: i32) -> (i32, i32) {
    %c0_i32 = arith.constant 0 : i32
    %c0_i32_0 = arith.constant 0 : i32
    %c0_i32_1 = arith.constant 0 : i32
    return %c0_i32, %c0_i32_0 : i32, i32
  }
  func.func @transform_45(%arg0: i32) -> (i32, i32) {
    %c0_i32 = arith.constant 0 : i32
    %c0_i32_0 = arith.constant 0 : i32
    %c0_i32_1 = arith.constant 0 : i32
    return %c0_i32, %c0_i32_0 : i32, i32
  }
  func.func @transform_46(%arg0: i32) -> (i32, i32) {
    %c0_i32 = arith.constant 0 : i32
    %c0_i32_0 = arith.constant 0 : i32
    %c0_i32_1 = arith.constant 0 : i32
    return %c0_i32, %c0_i32_0 : i32, i32
  }
  func.func @transform_47(%arg0: i32) -> (i32, i32) {
    %c0_i32 = arith.constant 0 : i32
    %c0_i32_0 = arith.constant 0 : i32
    %c0_i32_1 = arith.constant 0 : i32
    return %c0_i32, %c0_i32_0 : i32, i32
  }
  func.func @transform_48(%arg0: i32) -> (i32, i32) {
    %c0_i32 = arith.constant 0 : i32
    %c0_i32_0 = arith.constant 0 : i32
    %c0_i32_1 = arith.constant 0 : i32
    return %c0_i32, %c0_i32_0 : i32, i32
  }
  func.func @transform_49(%arg0: i32) -> (i32, i32) {
    %c0_i32 = arith.constant 0 : i32
    %c0_i32_0 = arith.constant 0 : i32
    %c0_i32_1 = arith.constant 0 : i32
    return %c0_i32, %c0_i32_0 : i32, i32
  }
  func.func @transform_50(%arg0: i32) -> (i32, i32) {
    %c0_i32 = arith.constant 0 : i32
    %c0_i32_0 = arith.constant 0 : i32
    %c0_i32_1 = arith.constant 0 : i32
    return %c0_i32, %c0_i32_0 : i32, i32
  }
  func.func @transform_51(%arg0: i32) -> (i32, i32) {
    %c0_i32 = arith.constant 0 : i32
    %c0_i32_0 = arith.constant 0 : i32
    %c0_i32_1 = arith.constant 0 : i32
    return %c0_i32, %c0_i32_0 : i32, i32
  }
  func.func @transform_52(%arg0: i32) -> (i32, i32) {
    %c0_i32 = arith.constant 0 : i32
    %c0_i32_0 = arith.constant 0 : i32
    %c0_i32_1 = arith.constant 0 : i32
    return %c0_i32, %c0_i32_0 : i32, i32
  }
  func.func @transform_53(%arg0: i32) -> (i32, i32) {
    %c0_i32 = arith.constant 0 : i32
    %c0_i32_0 = arith.constant 0 : i32
    %c0_i32_1 = arith.constant 0 : i32
    return %c0_i32, %c0_i32_0 : i32, i32
  }
  func.func @transform_54(%arg0: i32) -> (i32, i32) {
    %c0_i32 = arith.constant 0 : i32
    %c0_i32_0 = arith.constant 0 : i32
    %c0_i32_1 = arith.constant 0 : i32
    return %c0_i32, %c0_i32_0 : i32, i32
  }
  func.func @transform_55(%arg0: i32) -> (i32, i32) {
    %c0_i32 = arith.constant 0 : i32
    %c0_i32_0 = arith.constant 0 : i32
    %c0_i32_1 = arith.constant 0 : i32
    return %c0_i32, %c0_i32_0 : i32, i32
  }
  func.func @transform_56(%arg0: i32) -> (i32, i32) {
    %c0_i32 = arith.constant 0 : i32
    %c0_i32_0 = arith.constant 0 : i32
    %c0_i32_1 = arith.constant 0 : i32
    return %c0_i32, %c0_i32_0 : i32, i32
  }
  func.func @transform_57(%arg0: i32) -> (i32, i32) {
    %c0_i32 = arith.constant 0 : i32
    %c0_i32_0 = arith.constant 0 : i32
    %c0_i32_1 = arith.constant 0 : i32
    return %c0_i32, %c0_i32_0 : i32, i32
  }
  func.func @transform_58(%arg0: i32) -> (i32, i32) {
    %c0_i32 = arith.constant 0 : i32
    %c0_i32_0 = arith.constant 0 : i32
    %c0_i32_1 = arith.constant 0 : i32
    return %c0_i32, %c0_i32_0 : i32, i32
  }
  func.func @transform_59(%arg0: i32) -> (i32, i32) {
    %c0_i32 = arith.constant 0 : i32
    %c0_i32_0 = arith.constant 0 : i32
    %c0_i32_1 = arith.constant 0 : i32
    return %c0_i32, %c0_i32_0 : i32, i32
  }
  func.func @transform_60(%arg0: i32) -> (i32, i32, i32) {
    %c0_i32 = arith.constant 0 : i32
    %c0_i32_0 = arith.constant 0 : i32
    %c0_i32_1 = arith.constant 0 : i32
    return %arg0, %c0_i32, %c0_i32_0 : i32, i32, i32
  }
}

</mosaic_0001>

<llo_original>
// kernel: d_forward.1
$region0: #{d_forward.1}
  #allocation0 [shape = 'u32[]', space=smem, size = 0x4, offset = 0x4, fixed_abs, tag = 'smem constant byte address 0x4 - core index']
  #allocation1 [shape = 'u32[144,128]{1,0:T(1,128)}', space=vmem, size = 0x12000, scoped, tag = 'internal scratch']
  %s0 = inlined_call_operand.smem [shape: u32[61], index: -1, kind: input, shape index: {}]
  %s1 = sld [smem:[%s0]]
  %s2 = scalar_lea.smem %s0, 1
  %s3 = sld [smem:[%s2]]
  %s4 = scalar_lea.smem %s0, 2
  %s5 = sld [smem:[%s4]]
  %s6 = scalar_lea.smem %s0, 3
  %s7 = sld [smem:[%s6]]
  %s8 = scalar_lea.smem %s0, 4
  %s9 = sld [smem:[%s8]]
  %s10 = scalar_lea.smem %s0, 5
  %s11 = sld [smem:[%s10]]
  %s12 = scalar_lea.smem %s0, 6
  %s13 = sld [smem:[%s12]]
  %s14 = scalar_lea.smem %s0, 7
  %s15 = sld [smem:[%s14]]
  %s16 = scalar_lea.smem %s0, 8
  %s17 = sld [smem:[%s16]]
  %s18 = scalar_lea.smem %s0, 9
  %s19 = sld [smem:[%s18]]
  %s20 = scalar_lea.smem %s0, 10
  %s21 = sld [smem:[%s20]]
  %s22 = scalar_lea.smem %s0, 11
  %s23 = sld [smem:[%s22]]
  %s24 = scalar_lea.smem %s0, 12
  %s25 = sld [smem:[%s24]]
  %s26 = scalar_lea.smem %s0, 13
  %s27 = sld [smem:[%s26]]
  %s28 = scalar_lea.smem %s0, 14
  %s29 = sld [smem:[%s28]]
  %s30 = scalar_lea.smem %s0, 15
  %s31 = sld [smem:[%s30]]
  %s32 = scalar_lea.smem %s0, 16
  %s33 = sld [smem:[%s32]]
  %s34 = scalar_lea.smem %s0, 17
  %s35 = sld [smem:[%s34]]
  %s36 = scalar_lea.smem %s0, 18
  %s37 = sld [smem:[%s36]]
  %s38 = scalar_lea.smem %s0, 19
  %s39 = sld [smem:[%s38]]
  %s40 = scalar_lea.smem %s0, 20
  %s41 = sld [smem:[%s40]]
  %s42 = scalar_lea.smem %s0, 21
  %s43 = sld [smem:[%s42]]
  %s44 = scalar_lea.smem %s0, 22
  %s45 = sld [smem:[%s44]]
  %s46 = scalar_lea.smem %s0, 23
  %s47 = sld [smem:[%s46]]
  %s48 = scalar_lea.smem %s0, 24
  %s49 = sld [smem:[%s48]]
  %s50 = scalar_lea.smem %s0, 25
  %s51 = sld [smem:[%s50]]
  %s52 = scalar_lea.smem %s0, 26
  %s53 = sld [smem:[%s52]]
  %s54 = scalar_lea.smem %s0, 27
  %s55 = sld [smem:[%s54]]
  %s56 = scalar_lea.smem %s0, 28
  %s57 = sld [smem:[%s56]]
  %s58 = scalar_lea.smem %s0, 29
  %s59 = sld [smem:[%s58]]
  %s60 = scalar_lea.smem %s0, 30
  %s61 = sld [smem:[%s60]]
  %s62 = scalar_lea.smem %s0, 31
  %s63 = sld [smem:[%s62]]
  %s64 = scalar_lea.smem %s0, 32
  %s65 = sld [smem:[%s64]]
  %s66 = scalar_lea.smem %s0, 33
  %s67 = sld [smem:[%s66]]
  %s68 = scalar_lea.smem %s0, 34
  %s69 = sld [smem:[%s68]]
  %s70 = scalar_lea.smem %s0, 35
  %s71 = sld [smem:[%s70]]
  %s72 = scalar_lea.smem %s0, 36
  %s73 = sld [smem:[%s72]]
  %s74 = scalar_lea.smem %s0, 37
  %s75 = sld [smem:[%s74]]
  %s76 = scalar_lea.smem %s0, 38
  %s77 = sld [smem:[%s76]]
  %s78 = scalar_lea.smem %s0, 39
  %s79 = sld [smem:[%s78]]
  %s80 = scalar_lea.smem %s0, 40
  %s81 = sld [smem:[%s80]]
  %s82 = scalar_lea.smem %s0, 41
  %s83 = sld [smem:[%s82]]
  %s84 = scalar_lea.smem %s0, 42
  %s85 = sld [smem:[%s84]]
  %s86 = scalar_lea.smem %s0, 43
  %s87 = sld [smem:[%s86]]
  %s88 = scalar_lea.smem %s0, 44
  %s89 = sld [smem:[%s88]]
  %s90 = scalar_lea.smem %s0, 45
  %s91 = sld [smem:[%s90]]
  %s92 = scalar_lea.smem %s0, 46
  %s93 = sld [smem:[%s92]]
  %s94 = scalar_lea.smem %s0, 47
  %s95 = sld [smem:[%s94]]
  %s96 = scalar_lea.smem %s0, 48
  %s97 = sld [smem:[%s96]]
  %s98 = scalar_lea.smem %s0, 49
  %s99 = sld [smem:[%s98]]
  %s100 = scalar_lea.smem %s0, 50
  %s101 = sld [smem:[%s100]]
  %s102 = scalar_lea.smem %s0, 51
  %s103 = sld [smem:[%s102]]
  %s104 = scalar_lea.smem %s0, 52
  %s105 = sld [smem:[%s104]]
  %s106 = scalar_lea.smem %s0, 53
  %s107 = sld [smem:[%s106]]
  %s108 = scalar_lea.smem %s0, 54
  %s109 = sld [smem:[%s108]]
  %s110 = scalar_lea.smem %s0, 55
  %s111 = sld [smem:[%s110]]
  %s112 = scalar_lea.smem %s0, 56
  %s113 = sld [smem:[%s112]]
  %s114 = scalar_lea.smem %s0, 57
  %s115 = sld [smem:[%s114]]
  %s116 = scalar_lea.smem %s0, 58
  %s117 = sld [smem:[%s116]]
  %s118 = scalar_lea.smem %s0, 59
  %s119 = sld [smem:[%s118]]
  %s120 = scalar_lea.smem %s0, 60
  %s121 = sld [smem:[%s120]]
  %s122 = sld [smem:[#allocation0]]
  $region273: #{d_forward.1} parent=0
    _
  %s124 = ssub.s32 1, %s122
  %s125 = scalar_select 0, %s124, %s122
  loop: start=0, step=1, limit=4
  $region2: #{d_forward.1} parent=0 // loop_pre_header
    _
  $region3: #{d_forward.1} parent=0 // loop_header
    %s127 = sphi 0, %s131
    %p128 = scmp.ge.s32.totalorder %s127, 4
    %s137 = sphi 0, %s139
    %s140 = sphi 0, %s137
    %s141 = sphi 0, %s140
    %s157 = sphi 0, %s141
    %s161 = sphi 0, %s161
    %s163 = sphi 0, %s161
    %s164 = sphi 0, %s163
    %s178 = sphi 0, %s164
    %s182 = sphi 0, %s182
    %s184 = sphi 0, %s182
    %s185 = sphi 0, %s184
    %s199 = sphi 0, %s185
    %s203 = sphi 0, %s203
    %s205 = sphi 0, %s203
    %s206 = sphi 0, %s205
    %s220 = sphi 0, %s206
    %s224 = sphi 0, %s224
    %s226 = sphi 0, %s224
    %s227 = sphi 0, %s226
    %s241 = sphi 0, %s227
    %s245 = sphi 0, %s245
    %s247 = sphi 0, %s245
    %s248 = sphi 0, %s247
    %s262 = sphi 0, %s248
    %s266 = sphi 0, %s266
    %s268 = sphi 0, %s266
    %s269 = sphi 0, %s268
    %s283 = sphi 0, %s269
    %s287 = sphi 0, %s287
    %s289 = sphi 0, %s287
    %s290 = sphi 0, %s289
    %s304 = sphi 0, %s290
    %s308 = sphi 0, %s308
    %s310 = sphi 0, %s308
    %s311 = sphi 0, %s310
    %s325 = sphi 0, %s311
    %s329 = sphi 0, %s329
    %s331 = sphi 0, %s329
    %s332 = sphi 0, %s331
    %s346 = sphi 0, %s332
    %s350 = sphi 0, %s350
    %s352 = sphi 0, %s350
    %s353 = sphi 0, %s352
    %s367 = sphi 0, %s353
    %s371 = sphi 0, %s371
    %s373 = sphi 0, %s371
    %s374 = sphi 0, %s373
    %s388 = sphi 0, %s374
    %s392 = sphi 0, %s392
    %s394 = sphi 0, %s392
    %s395 = sphi 0, %s394
    %s409 = sphi 0, %s395
    %s413 = sphi 0, %s413
    %s415 = sphi 0, %s413
    %s416 = sphi 0, %s415
    %s430 = sphi 0, %s416
    %s434 = sphi 0, %s434
    %s436 = sphi 0, %s434
    %s437 = sphi 0, %s436
    %s451 = sphi 0, %s437
    %s455 = sphi 0, %s455
    %s457 = sphi 0, %s455
    %s458 = sphi 0, %s457
    %s472 = sphi 0, %s458
    %s476 = sphi 0, %s476
    %s478 = sphi 0, %s476
    %s479 = sphi 0, %s478
    %s493 = sphi 0, %s479
    %s497 = sphi 0, %s497
    %s499 = sphi 0, %s497
    %s500 = sphi 0, %s499
    %s514 = sphi 0, %s500
    %s518 = sphi 0, %s518
    %s520 = sphi 0, %s518
    %s521 = sphi 0, %s520
    %s535 = sphi 0, %s521
    %s539 = sphi 0, %s539
    %s541 = sphi 0, %s539
    %s542 = sphi 0, %s541
    %s556 = sphi 0, %s542
    %s560 = sphi 0, %s560
    %s562 = sphi 0, %s560
    %s563 = sphi 0, %s562
    %s577 = sphi 0, %s563
    %s581 = sphi 0, %s581
    %s583 = sphi 0, %s581
    %s584 = sphi 0, %s583
    %s598 = sphi 0, %s584
    %s602 = sphi 0, %s602
    %s604 = sphi 0, %s602
    %s605 = sphi 0, %s604
    %s619 = sphi 0, %s605
    %s623 = sphi 0, %s623
    %s625 = sphi 0, %s623
    %s626 = sphi 0, %s625
    %s640 = sphi 0, %s626
    %s644 = sphi 0, %s644
    %s646 = sphi 0, %s644
    %s647 = sphi 0, %s646
    %s661 = sphi 0, %s647
    %s665 = sphi 0, %s665
    %s667 = sphi 0, %s665
    %s668 = sphi 0, %s667
    %s682 = sphi 0, %s668
    %s686 = sphi 0, %s686
    %s688 = sphi 0, %s686
    %s689 = sphi 0, %s688
    %s703 = sphi 0, %s689
    %s707 = sphi 0, %s707
    %s709 = sphi 0, %s707
    %s710 = sphi 0, %s709
    %s724 = sphi 0, %s710
    %s728 = sphi 0, %s728
    %s730 = sphi 0, %s728
    %s731 = sphi 0, %s730
    %s745 = sphi 0, %s731
    %s749 = sphi 0, %s749
    %s751 = sphi 0, %s749
    %s752 = sphi 0, %s751
    %s766 = sphi 0, %s752
    %s770 = sphi 0, %s770
    %s772 = sphi 0, %s770
    %s773 = sphi 0, %s772
    %s787 = sphi 0, %s773
    %s791 = sphi 0, %s791
    %s793 = sphi 0, %s791
    %s794 = sphi 0, %s793
    %s808 = sphi 0, %s794
    %s812 = sphi 0, %s812
    %s814 = sphi 0, %s812
    %s815 = sphi 0, %s814
    %s829 = sphi 0, %s815
    %s833 = sphi 0, %s833
    %s835 = sphi 0, %s833
    %s836 = sphi 0, %s835
    %s850 = sphi 0, %s836
    %s854 = sphi 0, %s854
    %s856 = sphi 0, %s854
    %s857 = sphi 0, %s856
    %s871 = sphi 0, %s857
    %s875 = sphi 0, %s875
    %s877 = sphi 0, %s875
    %s878 = sphi 0, %s877
    %s892 = sphi 0, %s878
    %s896 = sphi 0, %s896
    %s898 = sphi 0, %s896
    %s899 = sphi 0, %s898
    %s913 = sphi 0, %s899
    %s917 = sphi 0, %s917
    %s919 = sphi 0, %s917
    %s920 = sphi 0, %s919
    %s934 = sphi 0, %s920
    %s938 = sphi 0, %s938
    %s940 = sphi 0, %s938
    %s941 = sphi 0, %s940
    %s955 = sphi 0, %s941
    %s959 = sphi 0, %s959
    %s961 = sphi 0, %s959
    %s962 = sphi 0, %s961
    %s976 = sphi 0, %s962
    %s980 = sphi 0, %s980
    %s982 = sphi 0, %s980
    %s983 = sphi 0, %s982
    %s997 = sphi 0, %s983
    %s1001 = sphi 0, %s1001
    %s1003 = sphi 0, %s1001
    %s1004 = sphi 0, %s1003
    %s1018 = sphi 0, %s1004
    %s1022 = sphi 0, %s1022
    %s1024 = sphi 0, %s1022
    %s1025 = sphi 0, %s1024
    %s1039 = sphi 0, %s1025
    %s1043 = sphi 0, %s1043
    %s1045 = sphi 0, %s1043
    %s1046 = sphi 0, %s1045
    %s1060 = sphi 0, %s1046
    %s1064 = sphi 0, %s1064
    %s1066 = sphi 0, %s1064
    %s1067 = sphi 0, %s1066
    %s1081 = sphi 0, %s1067
    %s1085 = sphi 0, %s1085
    %s1087 = sphi 0, %s1085
    %s1088 = sphi 0, %s1087
    %s1102 = sphi 0, %s1088
    %s1106 = sphi 0, %s1106
    %s1108 = sphi 0, %s1106
    %s1109 = sphi 0, %s1108
    %s1123 = sphi 0, %s1109
    %s1127 = sphi 0, %s1127
    %s1129 = sphi 0, %s1127
    %s1130 = sphi 0, %s1129
    %s1144 = sphi 0, %s1130
    %s1148 = sphi 0, %s1148
    %s1150 = sphi 0, %s1148
    %s1151 = sphi 0, %s1150
    %s1165 = sphi 0, %s1151
    %s1169 = sphi 0, %s1169
    %s1171 = sphi 0, %s1169
    %s1172 = sphi 0, %s1171
    %s1186 = sphi 0, %s1172
    %s1190 = sphi 0, %s1190
    %s1192 = sphi 0, %s1190
    %s1193 = sphi 0, %s1192
    %s1207 = sphi 0, %s1193
    %s1211 = sphi 0, %s1211
    %s1213 = sphi 0, %s1211
    %s1214 = sphi 0, %s1213
    %s1228 = sphi 0, %s1214
    %s1232 = sphi 0, %s1232
    %s1234 = sphi 0, %s1232
    %s1235 = sphi 0, %s1234
    %s1249 = sphi 0, %s1235
    %s1253 = sphi 0, %s1253
    %s1255 = sphi 0, %s1253
    %s1256 = sphi 0, %s1255
    %s1270 = sphi 0, %s1256
    %s1274 = sphi 0, %s1274
    %s1276 = sphi 0, %s1274
    %s1277 = sphi 0, %s1276
    %s1291 = sphi 0, %s1277
    %s1295 = sphi 0, %s1295
    %s1297 = sphi 0, %s1295
    %s1298 = sphi 0, %s1297
    %s1312 = sphi 0, %s1298
    %s1316 = sphi 0, %s1316
    %s1318 = sphi 0, %s1316
    %s1319 = sphi 0, %s1318
    %s1333 = sphi 0, %s1319
    %s1337 = sphi 0, %s1337
    %s1339 = sphi 0, %s1337
    %s1340 = sphi 0, %s1339
    %s1354 = sphi 0, %s1340
    %s1358 = sphi 0, %s1358
    %s1360 = sphi 0, %s1358
    %s1361 = sphi 0, %s1360
    %s1375 = sphi 0, %s1361
    %s1379 = sphi 0, %s1379
    %s1381 = sphi 0, %s1379
    %s1382 = sphi 0, %s1381
    %s1396 = sphi 0, %s1382
    %s1402 = sphi 0, %s1404
    %s1405 = sphi 0, %s1402
    %s1406 = sphi 0, %s1405
    %s1422 = sphi 0, %s1406
  $region4: #{d_forward.1} parent=0 // loop_header_branch
    %130 = sbr.rel (%p128) target = $region8
  $region5: #{d_forward.1} parent=0 // loop_body
    %s132 = ssub.s32 %s127, 1
    %s133 = ssub.s32 %s127, 2
    %s134 = sadd.s32 %s127, 1
    %s135 = ssub.s32 %s127, %s134
    %p136 = scmp.eq.s32.totalorder %s135, 0
    %s138 = sadd.s32 %s137, 1
    %s139 = scalar_select %p136, %s137, %s138
    %p142 = pneg %p136
    %p143 = scmp.eq.s32.totalorder %s127, 1
    %p144 = por %p142, %p143
    %p145 = scmp.ne.s32.totalorder %s137, %s140
    %p146 = scmp.eq.s32.totalorder %s127, 0
    %p147 = por %p145, %p146
    %p148 = scmp.ne.s32.totalorder %s137, %s140
    %p149 = scmp.eq.s32.totalorder %s132, 1
    %p150 = por %p148, %p149
    %p151 = scmp.ne.s32.totalorder %s140, %s141
    %p152 = scmp.eq.s32.totalorder %s132, 0
    %p153 = por %p151, %p152
    %p154 = scmp.ne.s32.totalorder %s140, %s141
    %p155 = scmp.eq.s32.totalorder %s133, 1
    %p156 = por %p154, %p155
    %p158 = scmp.ne.s32.totalorder %s141, %s157
    %p159 = scmp.eq.s32.totalorder %s133, 0
    %p160 = por %p158, %p159
    %s162 = sadd.s32 %s161, 1
    %p165 = scmp.eq.s32.totalorder %s127, 1
    %p166 = scmp.ne.s32.totalorder %s161, %s163
    %p167 = scmp.eq.s32.totalorder %s127, 0
    %p168 = por %p166, %p167
    %p169 = scmp.ne.s32.totalorder %s161, %s163
    %p170 = scmp.eq.s32.totalorder %s132, 1
    %p171 = por %p169, %p170
    %p172 = scmp.ne.s32.totalorder %s163, %s164
    %p173 = scmp.eq.s32.totalorder %s132, 0
    %p174 = por %p172, %p173
    %p175 = scmp.ne.s32.totalorder %s163, %s164
    %p176 = scmp.eq.s32.totalorder %s133, 1
    %p177 = por %p175, %p176
    %p179 = scmp.ne.s32.totalorder %s164, %s178
    %p180 = scmp.eq.s32.totalorder %s133, 0
    %p181 = por %p179, %p180
    %s183 = sadd.s32 %s182, 1
    %p186 = scmp.eq.s32.totalorder %s127, 1
    %p187 = scmp.ne.s32.totalorder %s182, %s184
    %p188 = scmp.eq.s32.totalorder %s127, 0
    %p189 = por %p187, %p188
    %p190 = scmp.ne.s32.totalorder %s182, %s184
    %p191 = scmp.eq.s32.totalorder %s132, 1
    %p192 = por %p190, %p191
    %p193 = scmp.ne.s32.totalorder %s184, %s185
    %p194 = scmp.eq.s32.totalorder %s132, 0
    %p195 = por %p193, %p194
    %p196 = scmp.ne.s32.totalorder %s184, %s185
    %p197 = scmp.eq.s32.totalorder %s133, 1
    %p198 = por %p196, %p197
    %p200 = scmp.ne.s32.totalorder %s185, %s199
    %p201 = scmp.eq.s32.totalorder %s133, 0
    %p202 = por %p200, %p201
    %s204 = sadd.s32 %s203, 1
    %p207 = scmp.eq.s32.totalorder %s127, 1
    %p208 = scmp.ne.s32.totalorder %s203, %s205
    %p209 = scmp.eq.s32.totalorder %s127, 0
    %p210 = por %p208, %p209
    %p211 = scmp.ne.s32.totalorder %s203, %s205
    %p212 = scmp.eq.s32.totalorder %s132, 1
    %p213 = por %p211, %p212
    %p214 = scmp.ne.s32.totalorder %s205, %s206
    %p215 = scmp.eq.s32.totalorder %s132, 0
    %p216 = por %p214, %p215
    %p217 = scmp.ne.s32.totalorder %s205, %s206
    %p218 = scmp.eq.s32.totalorder %s133, 1
    %p219 = por %p217, %p218
    %p221 = scmp.ne.s32.totalorder %s206, %s220
    %p222 = scmp.eq.s32.totalorder %s133, 0
    %p223 = por %p221, %p222
    %s225 = sadd.s32 %s224, 1
    %p228 = scmp.eq.s32.totalorder %s127, 1
    %p229 = scmp.ne.s32.totalorder %s224, %s226
    %p230 = scmp.eq.s32.totalorder %s127, 0
    %p231 = por %p229, %p230
    %p232 = scmp.ne.s32.totalorder %s224, %s226
    %p233 = scmp.eq.s32.totalorder %s132, 1
    %p234 = por %p232, %p233
    %p235 = scmp.ne.s32.totalorder %s226, %s227
    %p236 = scmp.eq.s32.totalorder %s132, 0
    %p237 = por %p235, %p236
    %p238 = scmp.ne.s32.totalorder %s226, %s227
    %p239 = scmp.eq.s32.totalorder %s133, 1
    %p240 = por %p238, %p239
    %p242 = scmp.ne.s32.totalorder %s227, %s241
    %p243 = scmp.eq.s32.totalorder %s133, 0
    %p244 = por %p242, %p243
    %s246 = sadd.s32 %s245, 1
    %p249 = scmp.eq.s32.totalorder %s127, 1
    %p250 = scmp.ne.s32.totalorder %s245, %s247
    %p251 = scmp.eq.s32.totalorder %s127, 0
    %p252 = por %p250, %p251
    %p253 = scmp.ne.s32.totalorder %s245, %s247
    %p254 = scmp.eq.s32.totalorder %s132, 1
    %p255 = por %p253, %p254
    %p256 = scmp.ne.s32.totalorder %s247, %s248
    %p257 = scmp.eq.s32.totalorder %s132, 0
    %p258 = por %p256, %p257
    %p259 = scmp.ne.s32.totalorder %s247, %s248
    %p260 = scmp.eq.s32.totalorder %s133, 1
    %p261 = por %p259, %p260
    %p263 = scmp.ne.s32.totalorder %s248, %s262
    %p264 = scmp.eq.s32.totalorder %s133, 0
    %p265 = por %p263, %p264
    %s267 = sadd.s32 %s266, 1
    %p270 = scmp.eq.s32.totalorder %s127, 1
    %p271 = scmp.ne.s32.totalorder %s266, %s268
    %p272 = scmp.eq.s32.totalorder %s127, 0
    %p273 = por %p271, %p272
    %p274 = scmp.ne.s32.totalorder %s266, %s268
    %p275 = scmp.eq.s32.totalorder %s132, 1
    %p276 = por %p274, %p275
    %p277 = scmp.ne.s32.totalorder %s268, %s269
    %p278 = scmp.eq.s32.totalorder %s132, 0
    %p279 = por %p277, %p278
    %p280 = scmp.ne.s32.totalorder %s268, %s269
    %p281 = scmp.eq.s32.totalorder %s133, 1
    %p282 = por %p280, %p281
    %p284 = scmp.ne.s32.totalorder %s269, %s283
    %p285 = scmp.eq.s32.totalorder %s133, 0
    %p286 = por %p284, %p285
    %s288 = sadd.s32 %s287, 1
    %p291 = scmp.eq.s32.totalorder %s127, 1
    %p292 = scmp.ne.s32.totalorder %s287, %s289
    %p293 = scmp.eq.s32.totalorder %s127, 0
    %p294 = por %p292, %p293
    %p295 = scmp.ne.s32.totalorder %s287, %s289
    %p296 = scmp.eq.s32.totalorder %s132, 1
    %p297 = por %p295, %p296
    %p298 = scmp.ne.s32.totalorder %s289, %s290
    %p299 = scmp.eq.s32.totalorder %s132, 0
    %p300 = por %p298, %p299
    %p301 = scmp.ne.s32.totalorder %s289, %s290
    %p302 = scmp.eq.s32.totalorder %s133, 1
    %p303 = por %p301, %p302
    %p305 = scmp.ne.s32.totalorder %s290, %s304
    %p306 = scmp.eq.s32.totalorder %s133, 0
    %p307 = por %p305, %p306
    %s309 = sadd.s32 %s308, 1
    %p312 = scmp.eq.s32.totalorder %s127, 1
    %p313 = scmp.ne.s32.totalorder %s308, %s310
    %p314 = scmp.eq.s32.totalorder %s127, 0
    %p315 = por %p313, %p314
    %p316 = scmp.ne.s32.totalorder %s308, %s310
    %p317 = scmp.eq.s32.totalorder %s132, 1
    %p318 = por %p316, %p317
    %p319 = scmp.ne.s32.totalorder %s310, %s311
    %p320 = scmp.eq.s32.totalorder %s132, 0
    %p321 = por %p319, %p320
    %p322 = scmp.ne.s32.totalorder %s310, %s311
    %p323 = scmp.eq.s32.totalorder %s133, 1
    %p324 = por %p322, %p323
    %p326 = scmp.ne.s32.totalorder %s311, %s325
    %p327 = scmp.eq.s32.totalorder %s133, 0
    %p328 = por %p326, %p327
    %s330 = sadd.s32 %s329, 1
    %p333 = scmp.eq.s32.totalorder %s127, 1
    %p334 = scmp.ne.s32.totalorder %s329, %s331
    %p335 = scmp.eq.s32.totalorder %s127, 0
    %p336 = por %p334, %p335
    %p337 = scmp.ne.s32.totalorder %s329, %s331
    %p338 = scmp.eq.s32.totalorder %s132, 1
    %p339 = por %p337, %p338
    %p340 = scmp.ne.s32.totalorder %s331, %s332
    %p341 = scmp.eq.s32.totalorder %s132, 0
    %p342 = por %p340, %p341
    %p343 = scmp.ne.s32.totalorder %s331, %s332
    %p344 = scmp.eq.s32.totalorder %s133, 1
    %p345 = por %p343, %p344
    %p347 = scmp.ne.s32.totalorder %s332, %s346
    %p348 = scmp.eq.s32.totalorder %s133, 0
    %p349 = por %p347, %p348
    %s351 = sadd.s32 %s350, 1
    %p354 = scmp.eq.s32.totalorder %s127, 1
    %p355 = scmp.ne.s32.totalorder %s350, %s352
    %p356 = scmp.eq.s32.totalorder %s127, 0
    %p357 = por %p355, %p356
    %p358 = scmp.ne.s32.totalorder %s350, %s352
    %p359 = scmp.eq.s32.totalorder %s132, 1
    %p360 = por %p358, %p359
    %p361 = scmp.ne.s32.totalorder %s352, %s353
    %p362 = scmp.eq.s32.totalorder %s132, 0
    %p363 = por %p361, %p362
    %p364 = scmp.ne.s32.totalorder %s352, %s353
    %p365 = scmp.eq.s32.totalorder %s133, 1
    %p366 = por %p364, %p365
    %p368 = scmp.ne.s32.totalorder %s353, %s367
    %p369 = scmp.eq.s32.totalorder %s133, 0
    %p370 = por %p368, %p369
    %s372 = sadd.s32 %s371, 1
    %p375 = scmp.eq.s32.totalorder %s127, 1
    %p376 = scmp.ne.s32.totalorder %s371, %s373
    %p377 = scmp.eq.s32.totalorder %s127, 0
    %p378 = por %p376, %p377
    %p379 = scmp.ne.s32.totalorder %s371, %s373
    %p380 = scmp.eq.s32.totalorder %s132, 1
    %p381 = por %p379, %p380
    %p382 = scmp.ne.s32.totalorder %s373, %s374
    %p383 = scmp.eq.s32.totalorder %s132, 0
    %p384 = por %p382, %p383
    %p385 = scmp.ne.s32.totalorder %s373, %s374
    %p386 = scmp.eq.s32.totalorder %s133, 1
    %p387 = por %p385, %p386
    %p389 = scmp.ne.s32.totalorder %s374, %s388
    %p390 = scmp.eq.s32.totalorder %s133, 0
    %p391 = por %p389, %p390
    %s393 = sadd.s32 %s392, 1
    %p396 = scmp.eq.s32.totalorder %s127, 1
    %p397 = scmp.ne.s32.totalorder %s392, %s394
    %p398 = scmp.eq.s32.totalorder %s127, 0
    %p399 = por %p397, %p398
    %p400 = scmp.ne.s32.totalorder %s392, %s394
    %p401 = scmp.eq.s32.totalorder %s132, 1
    %p402 = por %p400, %p401
    %p403 = scmp.ne.s32.totalorder %s394, %s395
    %p404 = scmp.eq.s32.totalorder %s132, 0
    %p405 = por %p403, %p404
    %p406 = scmp.ne.s32.totalorder %s394, %s395
    %p407 = scmp.eq.s32.totalorder %s133, 1
    %p408 = por %p406, %p407
    %p410 = scmp.ne.s32.totalorder %s395, %s409
    %p411 = scmp.eq.s32.totalorder %s133, 0
    %p412 = por %p410, %p411
    %s414 = sadd.s32 %s413, 1
    %p417 = scmp.eq.s32.totalorder %s127, 1
    %p418 = scmp.ne.s32.totalorder %s413, %s415
    %p419 = scmp.eq.s32.totalorder %s127, 0
    %p420 = por %p418, %p419
    %p421 = scmp.ne.s32.totalorder %s413, %s415
    %p422 = scmp.eq.s32.totalorder %s132, 1
    %p423 = por %p421, %p422
    %p424 = scmp.ne.s32.totalorder %s415, %s416
    %p425 = scmp.eq.s32.totalorder %s132, 0
    %p426 = por %p424, %p425
    %p427 = scmp.ne.s32.totalorder %s415, %s416
    %p428 = scmp.eq.s32.totalorder %s133, 1
    %p429 = por %p427, %p428
    %p431 = scmp.ne.s32.totalorder %s416, %s430
    %p432 = scmp.eq.s32.totalorder %s133, 0
    %p433 = por %p431, %p432
    %s435 = sadd.s32 %s434, 1
    %p438 = scmp.eq.s32.totalorder %s127, 1
    %p439 = scmp.ne.s32.totalorder %s434, %s436
    %p440 = scmp.eq.s32.totalorder %s127, 0
    %p441 = por %p439, %p440
    %p442 = scmp.ne.s32.totalorder %s434, %s436
    %p443 = scmp.eq.s32.totalorder %s132, 1
    %p444 = por %p442, %p443
    %p445 = scmp.ne.s32.totalorder %s436, %s437
    %p446 = scmp.eq.s32.totalorder %s132, 0
    %p447 = por %p445, %p446
    %p448 = scmp.ne.s32.totalorder %s436, %s437
    %p449 = scmp.eq.s32.totalorder %s133, 1
    %p450 = por %p448, %p449
    %p452 = scmp.ne.s32.totalorder %s437, %s451
    %p453 = scmp.eq.s32.totalorder %s133, 0
    %p454 = por %p452, %p453
    %s456 = sadd.s32 %s455, 1
    %p459 = scmp.eq.s32.totalorder %s127, 1
    %p460 = scmp.ne.s32.totalorder %s455, %s457
    %p461 = scmp.eq.s32.totalorder %s127, 0
    %p462 = por %p460, %p461
    %p463 = scmp.ne.s32.totalorder %s455, %s457
    %p464 = scmp.eq.s32.totalorder %s132, 1
    %p465 = por %p463, %p464
    %p466 = scmp.ne.s32.totalorder %s457, %s458
    %p467 = scmp.eq.s32.totalorder %s132, 0
    %p468 = por %p466, %p467
    %p469 = scmp.ne.s32.totalorder %s457, %s458
    %p470 = scmp.eq.s32.totalorder %s133, 1
    %p471 = por %p469, %p470
    %p473 = scmp.ne.s32.totalorder %s458, %s472
    %p474 = scmp.eq.s32.totalorder %s133, 0
    %p475 = por %p473, %p474
    %s477 = sadd.s32 %s476, 1
    %p480 = scmp.eq.s32.totalorder %s127, 1
    %p481 = scmp.ne.s32.totalorder %s476, %s478
    %p482 = scmp.eq.s32.totalorder %s127, 0
    %p483 = por %p481, %p482
    %p484 = scmp.ne.s32.totalorder %s476, %s478
    %p485 = scmp.eq.s32.totalorder %s132, 1
    %p486 = por %p484, %p485
    %p487 = scmp.ne.s32.totalorder %s478, %s479
    %p488 = scmp.eq.s32.totalorder %s132, 0
    %p489 = por %p487, %p488
    %p490 = scmp.ne.s32.totalorder %s478, %s479
    %p491 = scmp.eq.s32.totalorder %s133, 1
    %p492 = por %p490, %p491
    %p494 = scmp.ne.s32.totalorder %s479, %s493
    %p495 = scmp.eq.s32.totalorder %s133, 0
    %p496 = por %p494, %p495
    %s498 = sadd.s32 %s497, 1
    %p501 = scmp.eq.s32.totalorder %s127, 1
    %p502 = scmp.ne.s32.totalorder %s497, %s499
    %p503 = scmp.eq.s32.totalorder %s127, 0
    %p504 = por %p502, %p503
    %p505 = scmp.ne.s32.totalorder %s497, %s499
    %p506 = scmp.eq.s32.totalorder %s132, 1
    %p507 = por %p505, %p506
    %p508 = scmp.ne.s32.totalorder %s499, %s500
    %p509 = scmp.eq.s32.totalorder %s132, 0
    %p510 = por %p508, %p509
    %p511 = scmp.ne.s32.totalorder %s499, %s500
    %p512 = scmp.eq.s32.totalorder %s133, 1
    %p513 = por %p511, %p512
    %p515 = scmp.ne.s32.totalorder %s500, %s514
    %p516 = scmp.eq.s32.totalorder %s133, 0
    %p517 = por %p515, %p516
    %s519 = sadd.s32 %s518, 1
    %p522 = scmp.eq.s32.totalorder %s127, 1
    %p523 = scmp.ne.s32.totalorder %s518, %s520
    %p524 = scmp.eq.s32.totalorder %s127, 0
    %p525 = por %p523, %p524
    %p526 = scmp.ne.s32.totalorder %s518, %s520
    %p527 = scmp.eq.s32.totalorder %s132, 1
    %p528 = por %p526, %p527
    %p529 = scmp.ne.s32.totalorder %s520, %s521
    %p530 = scmp.eq.s32.totalorder %s132, 0
    %p531 = por %p529, %p530
    %p532 = scmp.ne.s32.totalorder %s520, %s521
    %p533 = scmp.eq.s32.totalorder %s133, 1
    %p534 = por %p532, %p533
    %p536 = scmp.ne.s32.totalorder %s521, %s535
    %p537 = scmp.eq.s32.totalorder %s133, 0
    %p538 = por %p536, %p537
    %s540 = sadd.s32 %s539, 1
    %p543 = scmp.eq.s32.totalorder %s127, 1
    %p544 = scmp.ne.s32.totalorder %s539, %s541
    %p545 = scmp.eq.s32.totalorder %s127, 0
    %p546 = por %p544, %p545
    %p547 = scmp.ne.s32.totalorder %s539, %s541
    %p548 = scmp.eq.s32.totalorder %s132, 1
    %p549 = por %p547, %p548
    %p550 = scmp.ne.s32.totalorder %s541, %s542
    %p551 = scmp.eq.s32.totalorder %s132, 0
    %p552 = por %p550, %p551
    %p553 = scmp.ne.s32.totalorder %s541, %s542
    %p554 = scmp.eq.s32.totalorder %s133, 1
    %p555 = por %p553, %p554
    %p557 = scmp.ne.s32.totalorder %s542, %s556
    %p558 = scmp.eq.s32.totalorder %s133, 0
    %p559 = por %p557, %p558
    %s561 = sadd.s32 %s560, 1
    %p564 = scmp.eq.s32.totalorder %s127, 1
    %p565 = scmp.ne.s32.totalorder %s560, %s562
    %p566 = scmp.eq.s32.totalorder %s127, 0
    %p567 = por %p565, %p566
    %p568 = scmp.ne.s32.totalorder %s560, %s562
    %p569 = scmp.eq.s32.totalorder %s132, 1
    %p570 = por %p568, %p569
    %p571 = scmp.ne.s32.totalorder %s562, %s563
    %p572 = scmp.eq.s32.totalorder %s132, 0
    %p573 = por %p571, %p572
    %p574 = scmp.ne.s32.totalorder %s562, %s563
    %p575 = scmp.eq.s32.totalorder %s133, 1
    %p576 = por %p574, %p575
    %p578 = scmp.ne.s32.totalorder %s563, %s577
    %p579 = scmp.eq.s32.totalorder %s133, 0
    %p580 = por %p578, %p579
    %s582 = sadd.s32 %s581, 1
    %p585 = scmp.eq.s32.totalorder %s127, 1
    %p586 = scmp.ne.s32.totalorder %s581, %s583
    %p587 = scmp.eq.s32.totalorder %s127, 0
    %p588 = por %p586, %p587
    %p589 = scmp.ne.s32.totalorder %s581, %s583
    %p590 = scmp.eq.s32.totalorder %s132, 1
    %p591 = por %p589, %p590
    %p592 = scmp.ne.s32.totalorder %s583, %s584
    %p593 = scmp.eq.s32.totalorder %s132, 0
    %p594 = por %p592, %p593
    %p595 = scmp.ne.s32.totalorder %s583, %s584
    %p596 = scmp.eq.s32.totalorder %s133, 1
    %p597 = por %p595, %p596
    %p599 = scmp.ne.s32.totalorder %s584, %s598
    %p600 = scmp.eq.s32.totalorder %s133, 0
    %p601 = por %p599, %p600
    %s603 = sadd.s32 %s602, 1
    %p606 = scmp.eq.s32.totalorder %s127, 1
    %p607 = scmp.ne.s32.totalorder %s602, %s604
    %p608 = scmp.eq.s32.totalorder %s127, 0
    %p609 = por %p607, %p608
    %p610 = scmp.ne.s32.totalorder %s602, %s604
    %p611 = scmp.eq.s32.totalorder %s132, 1
    %p612 = por %p610, %p611
    %p613 = scmp.ne.s32.totalorder %s604, %s605
    %p614 = scmp.eq.s32.totalorder %s132, 0
    %p615 = por %p613, %p614
    %p616 = scmp.ne.s32.totalorder %s604, %s605
    %p617 = scmp.eq.s32.totalorder %s133, 1
    %p618 = por %p616, %p617
    %p620 = scmp.ne.s32.totalorder %s605, %s619
    %p621 = scmp.eq.s32.totalorder %s133, 0
    %p622 = por %p620, %p621
    %s624 = sadd.s32 %s623, 1
    %p627 = scmp.eq.s32.totalorder %s127, 1
    %p628 = scmp.ne.s32.totalorder %s623, %s625
    %p629 = scmp.eq.s32.totalorder %s127, 0
    %p630 = por %p628, %p629
    %p631 = scmp.ne.s32.totalorder %s623, %s625
    %p632 = scmp.eq.s32.totalorder %s132, 1
    %p633 = por %p631, %p632
    %p634 = scmp.ne.s32.totalorder %s625, %s626
    %p635 = scmp.eq.s32.totalorder %s132, 0
    %p636 = por %p634, %p635
    %p637 = scmp.ne.s32.totalorder %s625, %s626
    %p638 = scmp.eq.s32.totalorder %s133, 1
    %p639 = por %p637, %p638
    %p641 = scmp.ne.s32.totalorder %s626, %s640
    %p642 = scmp.eq.s32.totalorder %s133, 0
    %p643 = por %p641, %p642
    %s645 = sadd.s32 %s644, 1
    %p648 = scmp.eq.s32.totalorder %s127, 1
    %p649 = scmp.ne.s32.totalorder %s644, %s646
    %p650 = scmp.eq.s32.totalorder %s127, 0
    %p651 = por %p649, %p650
    %p652 = scmp.ne.s32.totalorder %s644, %s646
    %p653 = scmp.eq.s32.totalorder %s132, 1
    %p654 = por %p652, %p653
    %p655 = scmp.ne.s32.totalorder %s646, %s647
    %p656 = scmp.eq.s32.totalorder %s132, 0
    %p657 = por %p655, %p656
    %p658 = scmp.ne.s32.totalorder %s646, %s647
    %p659 = scmp.eq.s32.totalorder %s133, 1
    %p660 = por %p658, %p659
    %p662 = scmp.ne.s32.totalorder %s647, %s661
    %p663 = scmp.eq.s32.totalorder %s133, 0
    %p664 = por %p662, %p663
    %s666 = sadd.s32 %s665, 1
    %p669 = scmp.eq.s32.totalorder %s127, 1
    %p670 = scmp.ne.s32.totalorder %s665, %s667
    %p671 = scmp.eq.s32.totalorder %s127, 0
    %p672 = por %p670, %p671
    %p673 = scmp.ne.s32.totalorder %s665, %s667
    %p674 = scmp.eq.s32.totalorder %s132, 1
    %p675 = por %p673, %p674
    %p676 = scmp.ne.s32.totalorder %s667, %s668
    %p677 = scmp.eq.s32.totalorder %s132, 0
    %p678 = por %p676, %p677
    %p679 = scmp.ne.s32.totalorder %s667, %s668
    %p680 = scmp.eq.s32.totalorder %s133, 1
    %p681 = por %p679, %p680
    %p683 = scmp.ne.s32.totalorder %s668, %s682
    %p684 = scmp.eq.s32.totalorder %s133, 0
    %p685 = por %p683, %p684
    %s687 = sadd.s32 %s686, 1
    %p690 = scmp.eq.s32.totalorder %s127, 1
    %p691 = scmp.ne.s32.totalorder %s686, %s688
    %p692 = scmp.eq.s32.totalorder %s127, 0
    %p693 = por %p691, %p692
    %p694 = scmp.ne.s32.totalorder %s686, %s688
    %p695 = scmp.eq.s32.totalorder %s132, 1
    %p696 = por %p694, %p695
    %p697 = scmp.ne.s32.totalorder %s688, %s689
    %p698 = scmp.eq.s32.totalorder %s132, 0
    %p699 = por %p697, %p698
    %p700 = scmp.ne.s32.totalorder %s688, %s689
    %p701 = scmp.eq.s32.totalorder %s133, 1
    %p702 = por %p700, %p701
    %p704 = scmp.ne.s32.totalorder %s689, %s703
    %p705 = scmp.eq.s32.totalorder %s133, 0
    %p706 = por %p704, %p705
    %s708 = sadd.s32 %s707, 1
    %p711 = scmp.eq.s32.totalorder %s127, 1
    %p712 = scmp.ne.s32.totalorder %s707, %s709
    %p713 = scmp.eq.s32.totalorder %s127, 0
    %p714 = por %p712, %p713
    %p715 = scmp.ne.s32.totalorder %s707, %s709
    %p716 = scmp.eq.s32.totalorder %s132, 1
    %p717 = por %p715, %p716
    %p718 = scmp.ne.s32.totalorder %s709, %s710
    %p719 = scmp.eq.s32.totalorder %s132, 0
    %p720 = por %p718, %p719
    %p721 = scmp.ne.s32.totalorder %s709, %s710
    %p722 = scmp.eq.s32.totalorder %s133, 1
    %p723 = por %p721, %p722
    %p725 = scmp.ne.s32.totalorder %s710, %s724
    %p726 = scmp.eq.s32.totalorder %s133, 0
    %p727 = por %p725, %p726
    %s729 = sadd.s32 %s728, 1
    %p732 = scmp.eq.s32.totalorder %s127, 1
    %p733 = scmp.ne.s32.totalorder %s728, %s730
    %p734 = scmp.eq.s32.totalorder %s127, 0
    %p735 = por %p733, %p734
    %p736 = scmp.ne.s32.totalorder %s728, %s730
    %p737 = scmp.eq.s32.totalorder %s132, 1
    %p738 = por %p736, %p737
    %p739 = scmp.ne.s32.totalorder %s730, %s731
    %p740 = scmp.eq.s32.totalorder %s132, 0
    %p741 = por %p739, %p740
    %p742 = scmp.ne.s32.totalorder %s730, %s731
    %p743 = scmp.eq.s32.totalorder %s133, 1
    %p744 = por %p742, %p743
    %p746 = scmp.ne.s32.totalorder %s731, %s745
    %p747 = scmp.eq.s32.totalorder %s133, 0
    %p748 = por %p746, %p747
    %s750 = sadd.s32 %s749, 1
    %p753 = scmp.eq.s32.totalorder %s127, 1
    %p754 = scmp.ne.s32.totalorder %s749, %s751
    %p755 = scmp.eq.s32.totalorder %s127, 0
    %p756 = por %p754, %p755
    %p757 = scmp.ne.s32.totalorder %s749, %s751
    %p758 = scmp.eq.s32.totalorder %s132, 1
    %p759 = por %p757, %p758
    %p760 = scmp.ne.s32.totalorder %s751, %s752
    %p761 = scmp.eq.s32.totalorder %s132, 0
    %p762 = por %p760, %p761
    %p763 = scmp.ne.s32.totalorder %s751, %s752
    %p764 = scmp.eq.s32.totalorder %s133, 1
    %p765 = por %p763, %p764
    %p767 = scmp.ne.s32.totalorder %s752, %s766
    %p768 = scmp.eq.s32.totalorder %s133, 0
    %p769 = por %p767, %p768
    %s771 = sadd.s32 %s770, 1
    %p774 = scmp.eq.s32.totalorder %s127, 1
    %p775 = scmp.ne.s32.totalorder %s770, %s772
    %p776 = scmp.eq.s32.totalorder %s127, 0
    %p777 = por %p775, %p776
    %p778 = scmp.ne.s32.totalorder %s770, %s772
    %p779 = scmp.eq.s32.totalorder %s132, 1
    %p780 = por %p778, %p779
    %p781 = scmp.ne.s32.totalorder %s772, %s773
    %p782 = scmp.eq.s32.totalorder %s132, 0
    %p783 = por %p781, %p782
    %p784 = scmp.ne.s32.totalorder %s772, %s773
    %p785 = scmp.eq.s32.totalorder %s133, 1
    %p786 = por %p784, %p785
    %p788 = scmp.ne.s32.totalorder %s773, %s787
    %p789 = scmp.eq.s32.totalorder %s133, 0
    %p790 = por %p788, %p789
    %s792 = sadd.s32 %s791, 1
    %p795 = scmp.eq.s32.totalorder %s127, 1
    %p796 = scmp.ne.s32.totalorder %s791, %s793
    %p797 = scmp.eq.s32.totalorder %s127, 0
    %p798 = por %p796, %p797
    %p799 = scmp.ne.s32.totalorder %s791, %s793
    %p800 = scmp.eq.s32.totalorder %s132, 1
    %p801 = por %p799, %p800
    %p802 = scmp.ne.s32.totalorder %s793, %s794
    %p803 = scmp.eq.s32.totalorder %s132, 0
    %p804 = por %p802, %p803
    %p805 = scmp.ne.s32.totalorder %s793, %s794
    %p806 = scmp.eq.s32.totalorder %s133, 1
    %p807 = por %p805, %p806
    %p809 = scmp.ne.s32.totalorder %s794, %s808
    %p810 = scmp.eq.s32.totalorder %s133, 0
    %p811 = por %p809, %p810
    %s813 = sadd.s32 %s812, 1
    %p816 = scmp.eq.s32.totalorder %s127, 1
    %p817 = scmp.ne.s32.totalorder %s812, %s814
    %p818 = scmp.eq.s32.totalorder %s127, 0
    %p819 = por %p817, %p818
    %p820 = scmp.ne.s32.totalorder %s812, %s814
    %p821 = scmp.eq.s32.totalorder %s132, 1
    %p822 = por %p820, %p821
    %p823 = scmp.ne.s32.totalorder %s814, %s815
    %p824 = scmp.eq.s32.totalorder %s132, 0
    %p825 = por %p823, %p824
    %p826 = scmp.ne.s32.totalorder %s814, %s815
    %p827 = scmp.eq.s32.totalorder %s133, 1
    %p828 = por %p826, %p827
    %p830 = scmp.ne.s32.totalorder %s815, %s829
    %p831 = scmp.eq.s32.totalorder %s133, 0
    %p832 = por %p830, %p831
    %s834 = sadd.s32 %s833, 1
    %p837 = scmp.eq.s32.totalorder %s127, 1
    %p838 = scmp.ne.s32.totalorder %s833, %s835
    %p839 = scmp.eq.s32.totalorder %s127, 0
    %p840 = por %p838, %p839
    %p841 = scmp.ne.s32.totalorder %s833, %s835
    %p842 = scmp.eq.s32.totalorder %s132, 1
    %p843 = por %p841, %p842
    %p844 = scmp.ne.s32.totalorder %s835, %s836
    %p845 = scmp.eq.s32.totalorder %s132, 0
    %p846 = por %p844, %p845
    %p847 = scmp.ne.s32.totalorder %s835, %s836
    %p848 = scmp.eq.s32.totalorder %s133, 1
    %p849 = por %p847, %p848
    %p851 = scmp.ne.s32.totalorder %s836, %s850
    %p852 = scmp.eq.s32.totalorder %s133, 0
    %p853 = por %p851, %p852
    %s855 = sadd.s32 %s854, 1
    %p858 = scmp.eq.s32.totalorder %s127, 1
    %p859 = scmp.ne.s32.totalorder %s854, %s856
    %p860 = scmp.eq.s32.totalorder %s127, 0
    %p861 = por %p859, %p860
    %p862 = scmp.ne.s32.totalorder %s854, %s856
    %p863 = scmp.eq.s32.totalorder %s132, 1
    %p864 = por %p862, %p863
    %p865 = scmp.ne.s32.totalorder %s856, %s857
    %p866 = scmp.eq.s32.totalorder %s132, 0
    %p867 = por %p865, %p866
    %p868 = scmp.ne.s32.totalorder %s856, %s857
    %p869 = scmp.eq.s32.totalorder %s133, 1
    %p870 = por %p868, %p869
    %p872 = scmp.ne.s32.totalorder %s857, %s871
    %p873 = scmp.eq.s32.totalorder %s133, 0
    %p874 = por %p872, %p873
    %s876 = sadd.s32 %s875, 1
    %p879 = scmp.eq.s32.totalorder %s127, 1
    %p880 = scmp.ne.s32.totalorder %s875, %s877
    %p881 = scmp.eq.s32.totalorder %s127, 0
    %p882 = por %p880, %p881
    %p883 = scmp.ne.s32.totalorder %s875, %s877
    %p884 = scmp.eq.s32.totalorder %s132, 1
    %p885 = por %p883, %p884
    %p886 = scmp.ne.s32.totalorder %s877, %s878
    %p887 = scmp.eq.s32.totalorder %s132, 0
    %p888 = por %p886, %p887
    %p889 = scmp.ne.s32.totalorder %s877, %s878
    %p890 = scmp.eq.s32.totalorder %s133, 1
    %p891 = por %p889, %p890
    %p893 = scmp.ne.s32.totalorder %s878, %s892
    %p894 = scmp.eq.s32.totalorder %s133, 0
    %p895 = por %p893, %p894
    %s897 = sadd.s32 %s896, 1
    %p900 = scmp.eq.s32.totalorder %s127, 1
    %p901 = scmp.ne.s32.totalorder %s896, %s898
    %p902 = scmp.eq.s32.totalorder %s127, 0
    %p903 = por %p901, %p902
    %p904 = scmp.ne.s32.totalorder %s896, %s898
    %p905 = scmp.eq.s32.totalorder %s132, 1
    %p906 = por %p904, %p905
    %p907 = scmp.ne.s32.totalorder %s898, %s899
    %p908 = scmp.eq.s32.totalorder %s132, 0
    %p909 = por %p907, %p908
    %p910 = scmp.ne.s32.totalorder %s898, %s899
    %p911 = scmp.eq.s32.totalorder %s133, 1
    %p912 = por %p910, %p911
    %p914 = scmp.ne.s32.totalorder %s899, %s913
    %p915 = scmp.eq.s32.totalorder %s133, 0
    %p916 = por %p914, %p915
    %s918 = sadd.s32 %s917, 1
    %p921 = scmp.eq.s32.totalorder %s127, 1
    %p922 = scmp.ne.s32.totalorder %s917, %s919
    %p923 = scmp.eq.s32.totalorder %s127, 0
    %p924 = por %p922, %p923
    %p925 = scmp.ne.s32.totalorder %s917, %s919
    %p926 = scmp.eq.s32.totalorder %s132, 1
    %p927 = por %p925, %p926
    %p928 = scmp.ne.s32.totalorder %s919, %s920
    %p929 = scmp.eq.s32.totalorder %s132, 0
    %p930 = por %p928, %p929
    %p931 = scmp.ne.s32.totalorder %s919, %s920
    %p932 = scmp.eq.s32.totalorder %s133, 1
    %p933 = por %p931, %p932
    %p935 = scmp.ne.s32.totalorder %s920, %s934
    %p936 = scmp.eq.s32.totalorder %s133, 0
    %p937 = por %p935, %p936
    %s939 = sadd.s32 %s938, 1
    %p942 = scmp.eq.s32.totalorder %s127, 1
    %p943 = scmp.ne.s32.totalorder %s938, %s940
    %p944 = scmp.eq.s32.totalorder %s127, 0
    %p945 = por %p943, %p944
    %p946 = scmp.ne.s32.totalorder %s938, %s940
    %p947 = scmp.eq.s32.totalorder %s132, 1
    %p948 = por %p946, %p947
    %p949 = scmp.ne.s32.totalorder %s940, %s941
    %p950 = scmp.eq.s32.totalorder %s132, 0
    %p951 = por %p949, %p950
    %p952 = scmp.ne.s32.totalorder %s940, %s941
    %p953 = scmp.eq.s32.totalorder %s133, 1
    %p954 = por %p952, %p953
    %p956 = scmp.ne.s32.totalorder %s941, %s955
    %p957 = scmp.eq.s32.totalorder %s133, 0
    %p958 = por %p956, %p957
    %s960 = sadd.s32 %s959, 1
    %p963 = scmp.eq.s32.totalorder %s127, 1
    %p964 = scmp.ne.s32.totalorder %s959, %s961
    %p965 = scmp.eq.s32.totalorder %s127, 0
    %p966 = por %p964, %p965
    %p967 = scmp.ne.s32.totalorder %s959, %s961
    %p968 = scmp.eq.s32.totalorder %s132, 1
    %p969 = por %p967, %p968
    %p970 = scmp.ne.s32.totalorder %s961, %s962
    %p971 = scmp.eq.s32.totalorder %s132, 0
    %p972 = por %p970, %p971
    %p973 = scmp.ne.s32.totalorder %s961, %s962
    %p974 = scmp.eq.s32.totalorder %s133, 1
    %p975 = por %p973, %p974
    %p977 = scmp.ne.s32.totalorder %s962, %s976
    %p978 = scmp.eq.s32.totalorder %s133, 0
    %p979 = por %p977, %p978
    %s981 = sadd.s32 %s980, 1
    %p984 = scmp.eq.s32.totalorder %s127, 1
    %p985 = scmp.ne.s32.totalorder %s980, %s982
    %p986 = scmp.eq.s32.totalorder %s127, 0
    %p987 = por %p985, %p986
    %p988 = scmp.ne.s32.totalorder %s980, %s982
    %p989 = scmp.eq.s32.totalorder %s132, 1
    %p990 = por %p988, %p989
    %p991 = scmp.ne.s32.totalorder %s982, %s983
    %p992 = scmp.eq.s32.totalorder %s132, 0
    %p993 = por %p991, %p992
    %p994 = scmp.ne.s32.totalorder %s982, %s983
    %p995 = scmp.eq.s32.totalorder %s133, 1
    %p996 = por %p994, %p995
    %p998 = scmp.ne.s32.totalorder %s983, %s997
    %p999 = scmp.eq.s32.totalorder %s133, 0
    %p1000 = por %p998, %p999
    %s1002 = sadd.s32 %s1001, 1
    %p1005 = scmp.eq.s32.totalorder %s127, 1
    %p1006 = scmp.ne.s32.totalorder %s1001, %s1003
    %p1007 = scmp.eq.s32.totalorder %s127, 0
    %p1008 = por %p1006, %p1007
    %p1009 = scmp.ne.s32.totalorder %s1001, %s1003
    %p1010 = scmp.eq.s32.totalorder %s132, 1
    %p1011 = por %p1009, %p1010
    %p1012 = scmp.ne.s32.totalorder %s1003, %s1004
    %p1013 = scmp.eq.s32.totalorder %s132, 0
    %p1014 = por %p1012, %p1013
    %p1015 = scmp.ne.s32.totalorder %s1003, %s1004
    %p1016 = scmp.eq.s32.totalorder %s133, 1
    %p1017 = por %p1015, %p1016
    %p1019 = scmp.ne.s32.totalorder %s1004, %s1018
    %p1020 = scmp.eq.s32.totalorder %s133, 0
    %p1021 = por %p1019, %p1020
    %s1023 = sadd.s32 %s1022, 1
    %p1026 = scmp.eq.s32.totalorder %s127, 1
    %p1027 = scmp.ne.s32.totalorder %s1022, %s1024
    %p1028 = scmp.eq.s32.totalorder %s127, 0
    %p1029 = por %p1027, %p1028
    %p1030 = scmp.ne.s32.totalorder %s1022, %s1024
    %p1031 = scmp.eq.s32.totalorder %s132, 1
    %p1032 = por %p1030, %p1031
    %p1033 = scmp.ne.s32.totalorder %s1024, %s1025
    %p1034 = scmp.eq.s32.totalorder %s132, 0
    %p1035 = por %p1033, %p1034
    %p1036 = scmp.ne.s32.totalorder %s1024, %s1025
    %p1037 = scmp.eq.s32.totalorder %s133, 1
    %p1038 = por %p1036, %p1037
    %p1040 = scmp.ne.s32.totalorder %s1025, %s1039
    %p1041 = scmp.eq.s32.totalorder %s133, 0
    %p1042 = por %p1040, %p1041
    %s1044 = sadd.s32 %s1043, 1
    %p1047 = scmp.eq.s32.totalorder %s127, 1
    %p1048 = scmp.ne.s32.totalorder %s1043, %s1045
    %p1049 = scmp.eq.s32.totalorder %s127, 0
    %p1050 = por %p1048, %p1049
    %p1051 = scmp.ne.s32.totalorder %s1043, %s1045
    %p1052 = scmp.eq.s32.totalorder %s132, 1
    %p1053 = por %p1051, %p1052
    %p1054 = scmp.ne.s32.totalorder %s1045, %s1046
    %p1055 = scmp.eq.s32.totalorder %s132, 0
    %p1056 = por %p1054, %p1055
    %p1057 = scmp.ne.s32.totalorder %s1045, %s1046
    %p1058 = scmp.eq.s32.totalorder %s133, 1
    %p1059 = por %p1057, %p1058
    %p1061 = scmp.ne.s32.totalorder %s1046, %s1060
    %p1062 = scmp.eq.s32.totalorder %s133, 0
    %p1063 = por %p1061, %p1062
    %s1065 = sadd.s32 %s1064, 1
    %p1068 = scmp.eq.s32.totalorder %s127, 1
    %p1069 = scmp.ne.s32.totalorder %s1064, %s1066
    %p1070 = scmp.eq.s32.totalorder %s127, 0
    %p1071 = por %p1069, %p1070
    %p1072 = scmp.ne.s32.totalorder %s1064, %s1066
    %p1073 = scmp.eq.s32.totalorder %s132, 1
    %p1074 = por %p1072, %p1073
    %p1075 = scmp.ne.s32.totalorder %s1066, %s1067
    %p1076 = scmp.eq.s32.totalorder %s132, 0
    %p1077 = por %p1075, %p1076
    %p1078 = scmp.ne.s32.totalorder %s1066, %s1067
    %p1079 = scmp.eq.s32.totalorder %s133, 1
    %p1080 = por %p1078, %p1079
    %p1082 = scmp.ne.s32.totalorder %s1067, %s1081
    %p1083 = scmp.eq.s32.totalorder %s133, 0
    %p1084 = por %p1082, %p1083
    %s1086 = sadd.s32 %s1085, 1
    %p1089 = scmp.eq.s32.totalorder %s127, 1
    %p1090 = scmp.ne.s32.totalorder %s1085, %s1087
    %p1091 = scmp.eq.s32.totalorder %s127, 0
    %p1092 = por %p1090, %p1091
    %p1093 = scmp.ne.s32.totalorder %s1085, %s1087
    %p1094 = scmp.eq.s32.totalorder %s132, 1
    %p1095 = por %p1093, %p1094
    %p1096 = scmp.ne.s32.totalorder %s1087, %s1088
    %p1097 = scmp.eq.s32.totalorder %s132, 0
    %p1098 = por %p1096, %p1097
    %p1099 = scmp.ne.s32.totalorder %s1087, %s1088
    %p1100 = scmp.eq.s32.totalorder %s133, 1
    %p1101 = por %p1099, %p1100
    %p1103 = scmp.ne.s32.totalorder %s1088, %s1102
    %p1104 = scmp.eq.s32.totalorder %s133, 0
    %p1105 = por %p1103, %p1104
    %s1107 = sadd.s32 %s1106, 1
    %p1110 = scmp.eq.s32.totalorder %s127, 1
    %p1111 = scmp.ne.s32.totalorder %s1106, %s1108
    %p1112 = scmp.eq.s32.totalorder %s127, 0
    %p1113 = por %p1111, %p1112
    %p1114 = scmp.ne.s32.totalorder %s1106, %s1108
    %p1115 = scmp.eq.s32.totalorder %s132, 1
    %p1116 = por %p1114, %p1115
    %p1117 = scmp.ne.s32.totalorder %s1108, %s1109
    %p1118 = scmp.eq.s32.totalorder %s132, 0
    %p1119 = por %p1117, %p1118
    %p1120 = scmp.ne.s32.totalorder %s1108, %s1109
    %p1121 = scmp.eq.s32.totalorder %s133, 1
    %p1122 = por %p1120, %p1121
    %p1124 = scmp.ne.s32.totalorder %s1109, %s1123
    %p1125 = scmp.eq.s32.totalorder %s133, 0
    %p1126 = por %p1124, %p1125
    %s1128 = sadd.s32 %s1127, 1
    %p1131 = scmp.eq.s32.totalorder %s127, 1
    %p1132 = scmp.ne.s32.totalorder %s1127, %s1129
    %p1133 = scmp.eq.s32.totalorder %s127, 0
    %p1134 = por %p1132, %p1133
    %p1135 = scmp.ne.s32.totalorder %s1127, %s1129
    %p1136 = scmp.eq.s32.totalorder %s132, 1
    %p1137 = por %p1135, %p1136
    %p1138 = scmp.ne.s32.totalorder %s1129, %s1130
    %p1139 = scmp.eq.s32.totalorder %s132, 0
    %p1140 = por %p1138, %p1139
    %p1141 = scmp.ne.s32.totalorder %s1129, %s1130
    %p1142 = scmp.eq.s32.totalorder %s133, 1
    %p1143 = por %p1141, %p1142
    %p1145 = scmp.ne.s32.totalorder %s1130, %s1144
    %p1146 = scmp.eq.s32.totalorder %s133, 0
    %p1147 = por %p1145, %p1146
    %s1149 = sadd.s32 %s1148, 1
    %p1152 = scmp.eq.s32.totalorder %s127, 1
    %p1153 = scmp.ne.s32.totalorder %s1148, %s1150
    %p1154 = scmp.eq.s32.totalorder %s127, 0
    %p1155 = por %p1153, %p1154
    %p1156 = scmp.ne.s32.totalorder %s1148, %s1150
    %p1157 = scmp.eq.s32.totalorder %s132, 1
    %p1158 = por %p1156, %p1157
    %p1159 = scmp.ne.s32.totalorder %s1150, %s1151
    %p1160 = scmp.eq.s32.totalorder %s132, 0
    %p1161 = por %p1159, %p1160
    %p1162 = scmp.ne.s32.totalorder %s1150, %s1151
    %p1163 = scmp.eq.s32.totalorder %s133, 1
    %p1164 = por %p1162, %p1163
    %p1166 = scmp.ne.s32.totalorder %s1151, %s1165
    %p1167 = scmp.eq.s32.totalorder %s133, 0
    %p1168 = por %p1166, %p1167
    %s1170 = sadd.s32 %s1169, 1
    %p1173 = scmp.eq.s32.totalorder %s127, 1
    %p1174 = scmp.ne.s32.totalorder %s1169, %s1171
    %p1175 = scmp.eq.s32.totalorder %s127, 0
    %p1176 = por %p1174, %p1175
    %p1177 = scmp.ne.s32.totalorder %s1169, %s1171
    %p1178 = scmp.eq.s32.totalorder %s132, 1
    %p1179 = por %p1177, %p1178
    %p1180 = scmp.ne.s32.totalorder %s1171, %s1172
    %p1181 = scmp.eq.s32.totalorder %s132, 0
    %p1182 = por %p1180, %p1181
    %p1183 = scmp.ne.s32.totalorder %s1171, %s1172
    %p1184 = scmp.eq.s32.totalorder %s133, 1
    %p1185 = por %p1183, %p1184
    %p1187 = scmp.ne.s32.totalorder %s1172, %s1186
    %p1188 = scmp.eq.s32.totalorder %s133, 0
    %p1189 = por %p1187, %p1188
    %s1191 = sadd.s32 %s1190, 1
    %p1194 = scmp.eq.s32.totalorder %s127, 1
    %p1195 = scmp.ne.s32.totalorder %s1190, %s1192
    %p1196 = scmp.eq.s32.totalorder %s127, 0
    %p1197 = por %p1195, %p1196
    %p1198 = scmp.ne.s32.totalorder %s1190, %s1192
    %p1199 = scmp.eq.s32.totalorder %s132, 1
    %p1200 = por %p1198, %p1199
    %p1201 = scmp.ne.s32.totalorder %s1192, %s1193
    %p1202 = scmp.eq.s32.totalorder %s132, 0
    %p1203 = por %p1201, %p1202
    %p1204 = scmp.ne.s32.totalorder %s1192, %s1193
    %p1205 = scmp.eq.s32.totalorder %s133, 1
    %p1206 = por %p1204, %p1205
    %p1208 = scmp.ne.s32.totalorder %s1193, %s1207
    %p1209 = scmp.eq.s32.totalorder %s133, 0
    %p1210 = por %p1208, %p1209
    %s1212 = sadd.s32 %s1211, 1
    %p1215 = scmp.eq.s32.totalorder %s127, 1
    %p1216 = scmp.ne.s32.totalorder %s1211, %s1213
    %p1217 = scmp.eq.s32.totalorder %s127, 0
    %p1218 = por %p1216, %p1217
    %p1219 = scmp.ne.s32.totalorder %s1211, %s1213
    %p1220 = scmp.eq.s32.totalorder %s132, 1
    %p1221 = por %p1219, %p1220
    %p1222 = scmp.ne.s32.totalorder %s1213, %s1214
    %p1223 = scmp.eq.s32.totalorder %s132, 0
    %p1224 = por %p1222, %p1223
    %p1225 = scmp.ne.s32.totalorder %s1213, %s1214
    %p1226 = scmp.eq.s32.totalorder %s133, 1
    %p1227 = por %p1225, %p1226
    %p1229 = scmp.ne.s32.totalorder %s1214, %s1228
    %p1230 = scmp.eq.s32.totalorder %s133, 0
    %p1231 = por %p1229, %p1230
    %s1233 = sadd.s32 %s1232, 1
    %p1236 = scmp.eq.s32.totalorder %s127, 1
    %p1237 = scmp.ne.s32.totalorder %s1232, %s1234
    %p1238 = scmp.eq.s32.totalorder %s127, 0
    %p1239 = por %p1237, %p1238
    %p1240 = scmp.ne.s32.totalorder %s1232, %s1234
    %p1241 = scmp.eq.s32.totalorder %s132, 1
    %p1242 = por %p1240, %p1241
    %p1243 = scmp.ne.s32.totalorder %s1234, %s1235
    %p1244 = scmp.eq.s32.totalorder %s132, 0
    %p1245 = por %p1243, %p1244
    %p1246 = scmp.ne.s32.totalorder %s1234, %s1235
    %p1247 = scmp.eq.s32.totalorder %s133, 1
    %p1248 = por %p1246, %p1247
    %p1250 = scmp.ne.s32.totalorder %s1235, %s1249
    %p1251 = scmp.eq.s32.totalorder %s133, 0
    %p1252 = por %p1250, %p1251
    %s1254 = sadd.s32 %s1253, 1
    %p1257 = scmp.eq.s32.totalorder %s127, 1
    %p1258 = scmp.ne.s32.totalorder %s1253, %s1255
    %p1259 = scmp.eq.s32.totalorder %s127, 0
    %p1260 = por %p1258, %p1259
    %p1261 = scmp.ne.s32.totalorder %s1253, %s1255
    %p1262 = scmp.eq.s32.totalorder %s132, 1
    %p1263 = por %p1261, %p1262
    %p1264 = scmp.ne.s32.totalorder %s1255, %s1256
    %p1265 = scmp.eq.s32.totalorder %s132, 0
    %p1266 = por %p1264, %p1265
    %p1267 = scmp.ne.s32.totalorder %s1255, %s1256
    %p1268 = scmp.eq.s32.totalorder %s133, 1
    %p1269 = por %p1267, %p1268
    %p1271 = scmp.ne.s32.totalorder %s1256, %s1270
    %p1272 = scmp.eq.s32.totalorder %s133, 0
    %p1273 = por %p1271, %p1272
    %s1275 = sadd.s32 %s1274, 1
    %p1278 = scmp.eq.s32.totalorder %s127, 1
    %p1279 = scmp.ne.s32.totalorder %s1274, %s1276
    %p1280 = scmp.eq.s32.totalorder %s127, 0
    %p1281 = por %p1279, %p1280
    %p1282 = scmp.ne.s32.totalorder %s1274, %s1276
    %p1283 = scmp.eq.s32.totalorder %s132, 1
    %p1284 = por %p1282, %p1283
    %p1285 = scmp.ne.s32.totalorder %s1276, %s1277
    %p1286 = scmp.eq.s32.totalorder %s132, 0
    %p1287 = por %p1285, %p1286
    %p1288 = scmp.ne.s32.totalorder %s1276, %s1277
    %p1289 = scmp.eq.s32.totalorder %s133, 1
    %p1290 = por %p1288, %p1289
    %p1292 = scmp.ne.s32.totalorder %s1277, %s1291
    %p1293 = scmp.eq.s32.totalorder %s133, 0
    %p1294 = por %p1292, %p1293
    %s1296 = sadd.s32 %s1295, 1
    %p1299 = scmp.eq.s32.totalorder %s127, 1
    %p1300 = scmp.ne.s32.totalorder %s1295, %s1297
    %p1301 = scmp.eq.s32.totalorder %s127, 0
    %p1302 = por %p1300, %p1301
    %p1303 = scmp.ne.s32.totalorder %s1295, %s1297
    %p1304 = scmp.eq.s32.totalorder %s132, 1
    %p1305 = por %p1303, %p1304
    %p1306 = scmp.ne.s32.totalorder %s1297, %s1298
    %p1307 = scmp.eq.s32.totalorder %s132, 0
    %p1308 = por %p1306, %p1307
    %p1309 = scmp.ne.s32.totalorder %s1297, %s1298
    %p1310 = scmp.eq.s32.totalorder %s133, 1
    %p1311 = por %p1309, %p1310
    %p1313 = scmp.ne.s32.totalorder %s1298, %s1312
    %p1314 = scmp.eq.s32.totalorder %s133, 0
    %p1315 = por %p1313, %p1314
    %s1317 = sadd.s32 %s1316, 1
    %p1320 = scmp.eq.s32.totalorder %s127, 1
    %p1321 = scmp.ne.s32.totalorder %s1316, %s1318
    %p1322 = scmp.eq.s32.totalorder %s127, 0
    %p1323 = por %p1321, %p1322
    %p1324 = scmp.ne.s32.totalorder %s1316, %s1318
    %p1325 = scmp.eq.s32.totalorder %s132, 1
    %p1326 = por %p1324, %p1325
    %p1327 = scmp.ne.s32.totalorder %s1318, %s1319
    %p1328 = scmp.eq.s32.totalorder %s132, 0
    %p1329 = por %p1327, %p1328
    %p1330 = scmp.ne.s32.totalorder %s1318, %s1319
    %p1331 = scmp.eq.s32.totalorder %s133, 1
    %p1332 = por %p1330, %p1331
    %p1334 = scmp.ne.s32.totalorder %s1319, %s1333
    %p1335 = scmp.eq.s32.totalorder %s133, 0
    %p1336 = por %p1334, %p1335
    %s1338 = sadd.s32 %s1337, 1
    %p1341 = scmp.eq.s32.totalorder %s127, 1
    %p1342 = scmp.ne.s32.totalorder %s1337, %s1339
    %p1343 = scmp.eq.s32.totalorder %s127, 0
    %p1344 = por %p1342, %p1343
    %p1345 = scmp.ne.s32.totalorder %s1337, %s1339
    %p1346 = scmp.eq.s32.totalorder %s132, 1
    %p1347 = por %p1345, %p1346
    %p1348 = scmp.ne.s32.totalorder %s1339, %s1340
    %p1349 = scmp.eq.s32.totalorder %s132, 0
    %p1350 = por %p1348, %p1349
    %p1351 = scmp.ne.s32.totalorder %s1339, %s1340
    %p1352 = scmp.eq.s32.totalorder %s133, 1
    %p1353 = por %p1351, %p1352
    %p1355 = scmp.ne.s32.totalorder %s1340, %s1354
    %p1356 = scmp.eq.s32.totalorder %s133, 0
    %p1357 = por %p1355, %p1356
    %s1359 = sadd.s32 %s1358, 1
    %p1362 = scmp.eq.s32.totalorder %s127, 1
    %p1363 = scmp.ne.s32.totalorder %s1358, %s1360
    %p1364 = scmp.eq.s32.totalorder %s127, 0
    %p1365 = por %p1363, %p1364
    %p1366 = scmp.ne.s32.totalorder %s1358, %s1360
    %p1367 = scmp.eq.s32.totalorder %s132, 1
    %p1368 = por %p1366, %p1367
    %p1369 = scmp.ne.s32.totalorder %s1360, %s1361
    %p1370 = scmp.eq.s32.totalorder %s132, 0
    %p1371 = por %p1369, %p1370
    %p1372 = scmp.ne.s32.totalorder %s1360, %s1361
    %p1373 = scmp.eq.s32.totalorder %s133, 1
    %p1374 = por %p1372, %p1373
    %p1376 = scmp.ne.s32.totalorder %s1361, %s1375
    %p1377 = scmp.eq.s32.totalorder %s133, 0
    %p1378 = por %p1376, %p1377
    %s1380 = sadd.s32 %s1379, 1
    %p1383 = scmp.eq.s32.totalorder %s127, 1
    %p1384 = scmp.ne.s32.totalorder %s1379, %s1381
    %p1385 = scmp.eq.s32.totalorder %s127, 0
    %p1386 = por %p1384, %p1385
    %p1387 = scmp.ne.s32.totalorder %s1379, %s1381
    %p1388 = scmp.eq.s32.totalorder %s132, 1
    %p1389 = por %p1387, %p1388
    %p1390 = scmp.ne.s32.totalorder %s1381, %s1382
    %p1391 = scmp.eq.s32.totalorder %s132, 0
    %p1392 = por %p1390, %p1391
    %p1393 = scmp.ne.s32.totalorder %s1381, %s1382
    %p1394 = scmp.eq.s32.totalorder %s133, 1
    %p1395 = por %p1393, %p1394
    %p1397 = scmp.ne.s32.totalorder %s1382, %s1396
    %p1398 = scmp.eq.s32.totalorder %s133, 0
    %p1399 = por %p1397, %p1398
    %s1400 = ssub.s32 %s127, %s134
    %p1401 = scmp.eq.s32.totalorder %s1400, 0
    %s1403 = sadd.s32 %s1402, 1
    %s1404 = scalar_select %p1401, %s1402, %s1403
    %p1407 = pneg %p1401
    %p1408 = scmp.eq.s32.totalorder %s127, 1
    %p1409 = por %p1407, %p1408
    %p1410 = scmp.ne.s32.totalorder %s1402, %s1405
    %p1411 = scmp.eq.s32.totalorder %s127, 0
    %p1412 = por %p1410, %p1411
    %p1413 = scmp.ne.s32.totalorder %s1402, %s1405
    %p1414 = scmp.eq.s32.totalorder %s132, 1
    %p1415 = por %p1413, %p1414
    %p1416 = scmp.ne.s32.totalorder %s1405, %s1406
    %p1417 = scmp.eq.s32.totalorder %s132, 0
    %p1418 = por %p1416, %p1417
    %p1419 = scmp.ne.s32.totalorder %s1405, %s1406
    %p1420 = scmp.eq.s32.totalorder %s133, 1
    %p1421 = por %p1419, %p1420
    %p1423 = scmp.ne.s32.totalorder %s1406, %s1422
    %p1424 = scmp.eq.s32.totalorder %s133, 0
    %p1425 = por %p1423, %p1424
    %p1426 = scmp.le.s32.totalorder 1, %s127
    %p1427 = scmp.lt.s32.totalorder %s127, 3
    %p1428 = pnand %p1426, %p1427
    %p1429 = pneg %p1428
    // Predicated region
    $region9: #{d_forward.1} parent=5 // pred_check
      _
    $region10: #{d_forward.1} parent=5 // pred_check_branch
      %1431 = sbr.rel (%p1428) target = $region12
    $region11: #{d_forward.1} parent=5 // pred_region
      %s1432 = ssub.s32 %s127, 1
      // Predicated region
      $region13: #{d_forward.1} parent=11 // pred_check
        %p1433 = pneg %p174
      $region14: #{d_forward.1} parent=11 // pred_check_branch
        %1435 = sbr.rel (%p1433) target = $region16
      $region15: #{d_forward.1} parent=11 // pred_region
        _
      $region16: #{d_forward.1} parent=11 // pred_fallthru
        _
      // Predicated region
      $region17: #{d_forward.1} parent=11 // pred_check
        %p1436 = pneg %p195
      $region18: #{d_forward.1} parent=11 // pred_check_branch
        %1438 = sbr.rel (%p1436) target = $region20
      $region19: #{d_forward.1} parent=11 // pred_region
        _
      $region20: #{d_forward.1} parent=11 // pred_fallthru
        _
      // Predicated region
      $region21: #{d_forward.1} parent=11 // pred_check
        %p1439 = pneg %p216
      $region22: #{d_forward.1} parent=11 // pred_check_branch
        %1441 = sbr.rel (%p1439) target = $region24
      $region23: #{d_forward.1} parent=11 // pred_region
        _
      $region24: #{d_forward.1} parent=11 // pred_fallthru
        _
      // Predicated region
      $region25: #{d_forward.1} parent=11 // pred_check
        %p1442 = pneg %p237
      $region26: #{d_forward.1} parent=11 // pred_check_branch
        %1444 = sbr.rel (%p1442) target = $region28
      $region27: #{d_forward.1} parent=11 // pred_region
        _
      $region28: #{d_forward.1} parent=11 // pred_fallthru
        _
      // Predicated region
      $region29: #{d_forward.1} parent=11 // pred_check
        %p1445 = pneg %p258
      $region30: #{d_forward.1} parent=11 // pred_check_branch
        %1447 = sbr.rel (%p1445) target = $region32
      $region31: #{d_forward.1} parent=11 // pred_region
        _
      $region32: #{d_forward.1} parent=11 // pred_fallthru
        _
      // Predicated region
      $region33: #{d_forward.1} parent=11 // pred_check
        %p1448 = pneg %p279
      $region34: #{d_forward.1} parent=11 // pred_check_branch
        %1450 = sbr.rel (%p1448) target = $region36
      $region35: #{d_forward.1} parent=11 // pred_region
        _
      $region36: #{d_forward.1} parent=11 // pred_fallthru
        _
      // Predicated region
      $region37: #{d_forward.1} parent=11 // pred_check
        %p1451 = pneg %p300
      $region38: #{d_forward.1} parent=11 // pred_check_branch
        %1453 = sbr.rel (%p1451) target = $region40
      $region39: #{d_forward.1} parent=11 // pred_region
        _
      $region40: #{d_forward.1} parent=11 // pred_fallthru
        _
      // Predicated region
      $region41: #{d_forward.1} parent=11 // pred_check
        %p1454 = pneg %p321
      $region42: #{d_forward.1} parent=11 // pred_check_branch
        %1456 = sbr.rel (%p1454) target = $region44
      $region43: #{d_forward.1} parent=11 // pred_region
        _
      $region44: #{d_forward.1} parent=11 // pred_fallthru
        _
      // Predicated region
      $region45: #{d_forward.1} parent=11 // pred_check
        %p1457 = pneg %p342
      $region46: #{d_forward.1} parent=11 // pred_check_branch
        %1459 = sbr.rel (%p1457) target = $region48
      $region47: #{d_forward.1} parent=11 // pred_region
        _
      $region48: #{d_forward.1} parent=11 // pred_fallthru
        _
      // Predicated region
      $region49: #{d_forward.1} parent=11 // pred_check
        %p1460 = pneg %p363
      $region50: #{d_forward.1} parent=11 // pred_check_branch
        %1462 = sbr.rel (%p1460) target = $region52
      $region51: #{d_forward.1} parent=11 // pred_region
        _
      $region52: #{d_forward.1} parent=11 // pred_fallthru
        _
      // Predicated region
      $region53: #{d_forward.1} parent=11 // pred_check
        %p1463 = pneg %p384
      $region54: #{d_forward.1} parent=11 // pred_check_branch
        %1465 = sbr.rel (%p1463) target = $region56
      $region55: #{d_forward.1} parent=11 // pred_region
        _
      $region56: #{d_forward.1} parent=11 // pred_fallthru
        _
      // Predicated region
      $region57: #{d_forward.1} parent=11 // pred_check
        %p1466 = pneg %p405
      $region58: #{d_forward.1} parent=11 // pred_check_branch
        %1468 = sbr.rel (%p1466) target = $region60
      $region59: #{d_forward.1} parent=11 // pred_region
        _
      $region60: #{d_forward.1} parent=11 // pred_fallthru
        _
      // Predicated region
      $region61: #{d_forward.1} parent=11 // pred_check
        %p1469 = pneg %p426
      $region62: #{d_forward.1} parent=11 // pred_check_branch
        %1471 = sbr.rel (%p1469) target = $region64
      $region63: #{d_forward.1} parent=11 // pred_region
        _
      $region64: #{d_forward.1} parent=11 // pred_fallthru
        _
      // Predicated region
      $region65: #{d_forward.1} parent=11 // pred_check
        %p1472 = pneg %p447
      $region66: #{d_forward.1} parent=11 // pred_check_branch
        %1474 = sbr.rel (%p1472) target = $region68
      $region67: #{d_forward.1} parent=11 // pred_region
        _
      $region68: #{d_forward.1} parent=11 // pred_fallthru
        _
      // Predicated region
      $region69: #{d_forward.1} parent=11 // pred_check
        %p1475 = pneg %p468
      $region70: #{d_forward.1} parent=11 // pred_check_branch
        %1477 = sbr.rel (%p1475) target = $region72
      $region71: #{d_forward.1} parent=11 // pred_region
        _
      $region72: #{d_forward.1} parent=11 // pred_fallthru
        _
      // Predicated region
      $region73: #{d_forward.1} parent=11 // pred_check
        %p1478 = pneg %p489
      $region74: #{d_forward.1} parent=11 // pred_check_branch
        %1480 = sbr.rel (%p1478) target = $region76
      $region75: #{d_forward.1} parent=11 // pred_region
        _
      $region76: #{d_forward.1} parent=11 // pred_fallthru
        _
      // Predicated region
      $region77: #{d_forward.1} parent=11 // pred_check
        %p1481 = pneg %p510
      $region78: #{d_forward.1} parent=11 // pred_check_branch
        %1483 = sbr.rel (%p1481) target = $region80
      $region79: #{d_forward.1} parent=11 // pred_region
        _
      $region80: #{d_forward.1} parent=11 // pred_fallthru
        _
      // Predicated region
      $region81: #{d_forward.1} parent=11 // pred_check
        %p1484 = pneg %p531
      $region82: #{d_forward.1} parent=11 // pred_check_branch
        %1486 = sbr.rel (%p1484) target = $region84
      $region83: #{d_forward.1} parent=11 // pred_region
        _
      $region84: #{d_forward.1} parent=11 // pred_fallthru
        _
      // Predicated region
      $region85: #{d_forward.1} parent=11 // pred_check
        %p1487 = pneg %p552
      $region86: #{d_forward.1} parent=11 // pred_check_branch
        %1489 = sbr.rel (%p1487) target = $region88
      $region87: #{d_forward.1} parent=11 // pred_region
        _
      $region88: #{d_forward.1} parent=11 // pred_fallthru
        _
      // Predicated region
      $region89: #{d_forward.1} parent=11 // pred_check
        %p1490 = pneg %p573
      $region90: #{d_forward.1} parent=11 // pred_check_branch
        %1492 = sbr.rel (%p1490) target = $region92
      $region91: #{d_forward.1} parent=11 // pred_region
        _
      $region92: #{d_forward.1} parent=11 // pred_fallthru
        _
      // Predicated region
      $region93: #{d_forward.1} parent=11 // pred_check
        %p1493 = pneg %p594
      $region94: #{d_forward.1} parent=11 // pred_check_branch
        %1495 = sbr.rel (%p1493) target = $region96
      $region95: #{d_forward.1} parent=11 // pred_region
        _
      $region96: #{d_forward.1} parent=11 // pred_fallthru
        _
      // Predicated region
      $region97: #{d_forward.1} parent=11 // pred_check
        %p1496 = pneg %p615
      $region98: #{d_forward.1} parent=11 // pred_check_branch
        %1498 = sbr.rel (%p1496) target = $region100
      $region99: #{d_forward.1} parent=11 // pred_region
        _
      $region100: #{d_forward.1} parent=11 // pred_fallthru
        _
      // Predicated region
      $region101: #{d_forward.1} parent=11 // pred_check
        %p1499 = pneg %p636
      $region102: #{d_forward.1} parent=11 // pred_check_branch
        %1501 = sbr.rel (%p1499) target = $region104
      $region103: #{d_forward.1} parent=11 // pred_region
        _
      $region104: #{d_forward.1} parent=11 // pred_fallthru
        _
      // Predicated region
      $region105: #{d_forward.1} parent=11 // pred_check
        %p1502 = pneg %p657
      $region106: #{d_forward.1} parent=11 // pred_check_branch
        %1504 = sbr.rel (%p1502) target = $region108
      $region107: #{d_forward.1} parent=11 // pred_region
        _
      $region108: #{d_forward.1} parent=11 // pred_fallthru
        _
      // Predicated region
      $region109: #{d_forward.1} parent=11 // pred_check
        %p1505 = pneg %p678
      $region110: #{d_forward.1} parent=11 // pred_check_branch
        %1507 = sbr.rel (%p1505) target = $region112
      $region111: #{d_forward.1} parent=11 // pred_region
        _
      $region112: #{d_forward.1} parent=11 // pred_fallthru
        _
      // Predicated region
      $region113: #{d_forward.1} parent=11 // pred_check
        %p1508 = pneg %p699
      $region114: #{d_forward.1} parent=11 // pred_check_branch
        %1510 = sbr.rel (%p1508) target = $region116
      $region115: #{d_forward.1} parent=11 // pred_region
        _
      $region116: #{d_forward.1} parent=11 // pred_fallthru
        _
      // Predicated region
      $region117: #{d_forward.1} parent=11 // pred_check
        %p1511 = pneg %p720
      $region118: #{d_forward.1} parent=11 // pred_check_branch
        %1513 = sbr.rel (%p1511) target = $region120
      $region119: #{d_forward.1} parent=11 // pred_region
        _
      $region120: #{d_forward.1} parent=11 // pred_fallthru
        _
      // Predicated region
      $region121: #{d_forward.1} parent=11 // pred_check
        %p1514 = pneg %p741
      $region122: #{d_forward.1} parent=11 // pred_check_branch
        %1516 = sbr.rel (%p1514) target = $region124
      $region123: #{d_forward.1} parent=11 // pred_region
        _
      $region124: #{d_forward.1} parent=11 // pred_fallthru
        _
      // Predicated region
      $region125: #{d_forward.1} parent=11 // pred_check
        %p1517 = pneg %p762
      $region126: #{d_forward.1} parent=11 // pred_check_branch
        %1519 = sbr.rel (%p1517) target = $region128
      $region127: #{d_forward.1} parent=11 // pred_region
        _
      $region128: #{d_forward.1} parent=11 // pred_fallthru
        _
      // Predicated region
      $region129: #{d_forward.1} parent=11 // pred_check
        %p1520 = pneg %p783
      $region130: #{d_forward.1} parent=11 // pred_check_branch
        %1522 = sbr.rel (%p1520) target = $region132
      $region131: #{d_forward.1} parent=11 // pred_region
        _
      $region132: #{d_forward.1} parent=11 // pred_fallthru
        _
      // Predicated region
      $region133: #{d_forward.1} parent=11 // pred_check
        %p1523 = pneg %p804
      $region134: #{d_forward.1} parent=11 // pred_check_branch
        %1525 = sbr.rel (%p1523) target = $region136
      $region135: #{d_forward.1} parent=11 // pred_region
        _
      $region136: #{d_forward.1} parent=11 // pred_fallthru
        _
      // Predicated region
      $region137: #{d_forward.1} parent=11 // pred_check
        %p1526 = pneg %p825
      $region138: #{d_forward.1} parent=11 // pred_check_branch
        %1528 = sbr.rel (%p1526) target = $region140
      $region139: #{d_forward.1} parent=11 // pred_region
        _
      $region140: #{d_forward.1} parent=11 // pred_fallthru
        _
      // Predicated region
      $region141: #{d_forward.1} parent=11 // pred_check
        %p1529 = pneg %p846
      $region142: #{d_forward.1} parent=11 // pred_check_branch
        %1531 = sbr.rel (%p1529) target = $region144
      $region143: #{d_forward.1} parent=11 // pred_region
        _
      $region144: #{d_forward.1} parent=11 // pred_fallthru
        _
      // Predicated region
      $region145: #{d_forward.1} parent=11 // pred_check
        %p1532 = pneg %p867
      $region146: #{d_forward.1} parent=11 // pred_check_branch
        %1534 = sbr.rel (%p1532) target = $region148
      $region147: #{d_forward.1} parent=11 // pred_region
        _
      $region148: #{d_forward.1} parent=11 // pred_fallthru
        _
      // Predicated region
      $region149: #{d_forward.1} parent=11 // pred_check
        %p1535 = pneg %p888
      $region150: #{d_forward.1} parent=11 // pred_check_branch
        %1537 = sbr.rel (%p1535) target = $region152
      $region151: #{d_forward.1} parent=11 // pred_region
        _
      $region152: #{d_forward.1} parent=11 // pred_fallthru
        _
      // Predicated region
      $region153: #{d_forward.1} parent=11 // pred_check
        %p1538 = pneg %p909
      $region154: #{d_forward.1} parent=11 // pred_check_branch
        %1540 = sbr.rel (%p1538) target = $region156
      $region155: #{d_forward.1} parent=11 // pred_region
        _
      $region156: #{d_forward.1} parent=11 // pred_fallthru
        _
      // Predicated region
      $region157: #{d_forward.1} parent=11 // pred_check
        %p1541 = pneg %p930
      $region158: #{d_forward.1} parent=11 // pred_check_branch
        %1543 = sbr.rel (%p1541) target = $region160
      $region159: #{d_forward.1} parent=11 // pred_region
        _
      $region160: #{d_forward.1} parent=11 // pred_fallthru
        _
      // Predicated region
      $region161: #{d_forward.1} parent=11 // pred_check
        %p1544 = pneg %p951
      $region162: #{d_forward.1} parent=11 // pred_check_branch
        %1546 = sbr.rel (%p1544) target = $region164
      $region163: #{d_forward.1} parent=11 // pred_region
        _
      $region164: #{d_forward.1} parent=11 // pred_fallthru
        _
      // Predicated region
      $region165: #{d_forward.1} parent=11 // pred_check
        %p1547 = pneg %p972
      $region166: #{d_forward.1} parent=11 // pred_check_branch
        %1549 = sbr.rel (%p1547) target = $region168
      $region167: #{d_forward.1} parent=11 // pred_region
        _
      $region168: #{d_forward.1} parent=11 // pred_fallthru
        _
      // Predicated region
      $region169: #{d_forward.1} parent=11 // pred_check
        %p1550 = pneg %p993
      $region170: #{d_forward.1} parent=11 // pred_check_branch
        %1552 = sbr.rel (%p1550) target = $region172
      $region171: #{d_forward.1} parent=11 // pred_region
        _
      $region172: #{d_forward.1} parent=11 // pred_fallthru
        _
      // Predicated region
      $region173: #{d_forward.1} parent=11 // pred_check
        %p1553 = pneg %p1014
      $region174: #{d_forward.1} parent=11 // pred_check_branch
        %1555 = sbr.rel (%p1553) target = $region176
      $region175: #{d_forward.1} parent=11 // pred_region
        _
      $region176: #{d_forward.1} parent=11 // pred_fallthru
        _
      // Predicated region
      $region177: #{d_forward.1} parent=11 // pred_check
        %p1556 = pneg %p1035
      $region178: #{d_forward.1} parent=11 // pred_check_branch
        %1558 = sbr.rel (%p1556) target = $region180
      $region179: #{d_forward.1} parent=11 // pred_region
        _
      $region180: #{d_forward.1} parent=11 // pred_fallthru
        _
      // Predicated region
      $region181: #{d_forward.1} parent=11 // pred_check
        %p1559 = pneg %p1056
      $region182: #{d_forward.1} parent=11 // pred_check_branch
        %1561 = sbr.rel (%p1559) target = $region184
      $region183: #{d_forward.1} parent=11 // pred_region
        _
      $region184: #{d_forward.1} parent=11 // pred_fallthru
        _
      // Predicated region
      $region185: #{d_forward.1} parent=11 // pred_check
        %p1562 = pneg %p1077
      $region186: #{d_forward.1} parent=11 // pred_check_branch
        %1564 = sbr.rel (%p1562) target = $region188
      $region187: #{d_forward.1} parent=11 // pred_region
        _
      $region188: #{d_forward.1} parent=11 // pred_fallthru
        _
      // Predicated region
      $region189: #{d_forward.1} parent=11 // pred_check
        %p1565 = pneg %p1098
      $region190: #{d_forward.1} parent=11 // pred_check_branch
        %1567 = sbr.rel (%p1565) target = $region192
      $region191: #{d_forward.1} parent=11 // pred_region
        _
      $region192: #{d_forward.1} parent=11 // pred_fallthru
        _
      // Predicated region
      $region193: #{d_forward.1} parent=11 // pred_check
        %p1568 = pneg %p1119
      $region194: #{d_forward.1} parent=11 // pred_check_branch
        %1570 = sbr.rel (%p1568) target = $region196
      $region195: #{d_forward.1} parent=11 // pred_region
        _
      $region196: #{d_forward.1} parent=11 // pred_fallthru
        _
      // Predicated region
      $region197: #{d_forward.1} parent=11 // pred_check
        %p1571 = pneg %p1140
      $region198: #{d_forward.1} parent=11 // pred_check_branch
        %1573 = sbr.rel (%p1571) target = $region200
      $region199: #{d_forward.1} parent=11 // pred_region
        _
      $region200: #{d_forward.1} parent=11 // pred_fallthru
        _
      // Predicated region
      $region201: #{d_forward.1} parent=11 // pred_check
        %p1574 = pneg %p1161
      $region202: #{d_forward.1} parent=11 // pred_check_branch
        %1576 = sbr.rel (%p1574) target = $region204
      $region203: #{d_forward.1} parent=11 // pred_region
        _
      $region204: #{d_forward.1} parent=11 // pred_fallthru
        _
      // Predicated region
      $region205: #{d_forward.1} parent=11 // pred_check
        %p1577 = pneg %p1182
      $region206: #{d_forward.1} parent=11 // pred_check_branch
        %1579 = sbr.rel (%p1577) target = $region208
      $region207: #{d_forward.1} parent=11 // pred_region
        _
      $region208: #{d_forward.1} parent=11 // pred_fallthru
        _
      // Predicated region
      $region209: #{d_forward.1} parent=11 // pred_check
        %p1580 = pneg %p1203
      $region210: #{d_forward.1} parent=11 // pred_check_branch
        %1582 = sbr.rel (%p1580) target = $region212
      $region211: #{d_forward.1} parent=11 // pred_region
        _
      $region212: #{d_forward.1} parent=11 // pred_fallthru
        _
      // Predicated region
      $region213: #{d_forward.1} parent=11 // pred_check
        %p1583 = pneg %p1224
      $region214: #{d_forward.1} parent=11 // pred_check_branch
        %1585 = sbr.rel (%p1583) target = $region216
      $region215: #{d_forward.1} parent=11 // pred_region
        _
      $region216: #{d_forward.1} parent=11 // pred_fallthru
        _
      // Predicated region
      $region217: #{d_forward.1} parent=11 // pred_check
        %p1586 = pneg %p1245
      $region218: #{d_forward.1} parent=11 // pred_check_branch
        %1588 = sbr.rel (%p1586) target = $region220
      $region219: #{d_forward.1} parent=11 // pred_region
        _
      $region220: #{d_forward.1} parent=11 // pred_fallthru
        _
      // Predicated region
      $region221: #{d_forward.1} parent=11 // pred_check
        %p1589 = pneg %p1266
      $region222: #{d_forward.1} parent=11 // pred_check_branch
        %1591 = sbr.rel (%p1589) target = $region224
      $region223: #{d_forward.1} parent=11 // pred_region
        _
      $region224: #{d_forward.1} parent=11 // pred_fallthru
        _
      // Predicated region
      $region225: #{d_forward.1} parent=11 // pred_check
        %p1592 = pneg %p1287
      $region226: #{d_forward.1} parent=11 // pred_check_branch
        %1594 = sbr.rel (%p1592) target = $region228
      $region227: #{d_forward.1} parent=11 // pred_region
        _
      $region228: #{d_forward.1} parent=11 // pred_fallthru
        _
      // Predicated region
      $region229: #{d_forward.1} parent=11 // pred_check
        %p1595 = pneg %p1308
      $region230: #{d_forward.1} parent=11 // pred_check_branch
        %1597 = sbr.rel (%p1595) target = $region232
      $region231: #{d_forward.1} parent=11 // pred_region
        _
      $region232: #{d_forward.1} parent=11 // pred_fallthru
        _
      // Predicated region
      $region233: #{d_forward.1} parent=11 // pred_check
        %p1598 = pneg %p1329
      $region234: #{d_forward.1} parent=11 // pred_check_branch
        %1600 = sbr.rel (%p1598) target = $region236
      $region235: #{d_forward.1} parent=11 // pred_region
        _
      $region236: #{d_forward.1} parent=11 // pred_fallthru
        _
      // Predicated region
      $region237: #{d_forward.1} parent=11 // pred_check
        %p1601 = pneg %p1350
      $region238: #{d_forward.1} parent=11 // pred_check_branch
        %1603 = sbr.rel (%p1601) target = $region240
      $region239: #{d_forward.1} parent=11 // pred_region
        _
      $region240: #{d_forward.1} parent=11 // pred_fallthru
        _
      // Predicated region
      $region241: #{d_forward.1} parent=11 // pred_check
        %p1604 = pneg %p1371
      $region242: #{d_forward.1} parent=11 // pred_check_branch
        %1606 = sbr.rel (%p1604) target = $region244
      $region243: #{d_forward.1} parent=11 // pred_region
        _
      $region244: #{d_forward.1} parent=11 // pred_fallthru
        _
      // Predicated region
      $region245: #{d_forward.1} parent=11 // pred_check
        %p1607 = pneg %p1392
      $region246: #{d_forward.1} parent=11 // pred_check_branch
        %1609 = sbr.rel (%p1607) target = $region248
      $region247: #{d_forward.1} parent=11 // pred_region
        _
      $region248: #{d_forward.1} parent=11 // pred_fallthru
        _
    $region12: #{d_forward.1} parent=5 // pred_fallthru
      _
    %p1610 = scmp.lt.s32.totalorder %s127, 2
    // Predicated region
    $region249: #{d_forward.1} parent=5 // pred_check
      %p1611 = pneg %p1610
    $region250: #{d_forward.1} parent=5 // pred_check_branch
      %1613 = sbr.rel (%p1611) target = $region252
    $region251: #{d_forward.1} parent=5 // pred_region
      // Predicated region
      $region253: #{d_forward.1} parent=251 // pred_check
        %p1614 = pneg %p147
      $region254: #{d_forward.1} parent=251 // pred_check_branch
        %1616 = sbr.rel (%p1614) target = $region256
      $region255: #{d_forward.1} parent=251 // pred_region
        %p1617 = scmp.lt.s32.totalorder %s127, 1
        %s1618 = scalar_select %p1617, %s127, 1
        %s1619 = smul.addr %s1618, 2
        %s1620 = smul.addr %s1619, 4
        %s1621 = scalar_lea.vmem %s1, %s1620
      $region256: #{d_forward.1} parent=251 // pred_fallthru
        _
    $region252: #{d_forward.1} parent=5 // pred_fallthru
      _
    %p1622 = scmp.le.s32.totalorder 1, %s127
    %p1623 = scmp.lt.s32.totalorder %s127, 3
    %p1624 = pnand %p1622, %p1623
    %p1625 = pneg %p1624
    // Predicated region
    $region257: #{d_forward.1} parent=5 // pred_check
      _
    $region258: #{d_forward.1} parent=5 // pred_check_branch
      %1627 = sbr.rel (%p1624) target = $region260
    $region259: #{d_forward.1} parent=5 // pred_region
      %s1628 = ssub.s32 %s127, 1
      %p1629 = scmp.lt.s32.totalorder %s132, 1
      %s1630 = scalar_select %p1629, %s132, 1
      %s1631 = smul.addr %s1630, 2
      %s1632 = smul.addr %s1631, 4
      %s1633 = scalar_lea.vmem %s1, %s1632
      %p1634 = pneg %p153
      %p1635 = pneg %p150
      %p1636 = pneg %p174
      %p1637 = pneg %p171
      %p1638 = pneg %p195
      %p1639 = pneg %p192
      %p1640 = pneg %p216
      %p1641 = pneg %p213
      %p1642 = pneg %p237
      %p1643 = pneg %p234
      %p1644 = pneg %p258
      %p1645 = pneg %p255
      %p1646 = pneg %p279
      %p1647 = pneg %p276
      %p1648 = pneg %p300
      %p1649 = pneg %p297
      %p1650 = pneg %p321
      %p1651 = pneg %p318
      %p1652 = pneg %p342
      %p1653 = pneg %p339
      %p1654 = pneg %p363
      %p1655 = pneg %p360
      %p1656 = pneg %p384
      %p1657 = pneg %p381
      %p1658 = pneg %p405
      %p1659 = pneg %p402
      %p1660 = pneg %p426
      %p1661 = pneg %p423
      %p1662 = pneg %p447
      %p1663 = pneg %p444
      %p1664 = pneg %p468
      %p1665 = pneg %p465
      %p1666 = pneg %p489
      %p1667 = pneg %p486
      %p1668 = pneg %p510
      %p1669 = pneg %p507
      %p1670 = pneg %p531
      %p1671 = pneg %p528
      %p1672 = pneg %p552
      %p1673 = pneg %p549
      %p1674 = pneg %p573
      %p1675 = pneg %p570
      %p1676 = pneg %p594
      %p1677 = pneg %p591
      %p1678 = pneg %p615
      %p1679 = pneg %p612
      %p1680 = pneg %p636
      %p1681 = pneg %p633
      %p1682 = pneg %p657
      %p1683 = pneg %p654
      %p1684 = pneg %p678
      %p1685 = pneg %p675
      %p1686 = pneg %p699
      %p1687 = pneg %p696
      %p1688 = pneg %p720
      %p1689 = pneg %p717
      %p1690 = pneg %p741
      %p1691 = pneg %p738
      %p1692 = pneg %p762
      %p1693 = pneg %p759
      %p1694 = pneg %p783
      %p1695 = pneg %p780
      %p1696 = pneg %p804
      %p1697 = pneg %p801
      %p1698 = pneg %p825
      %p1699 = pneg %p822
      %p1700 = pneg %p846
      %p1701 = pneg %p843
      %p1702 = pneg %p867
      %p1703 = pneg %p864
      %p1704 = pneg %p888
      %p1705 = pneg %p885
      %p1706 = pneg %p909
      %p1707 = pneg %p906
      %p1708 = pneg %p930
      %p1709 = pneg %p927
      %p1710 = pneg %p951
      %p1711 = pneg %p948
      %p1712 = pneg %p972
      %p1713 = pneg %p969
      %p1714 = pneg %p993
      %p1715 = pneg %p990
      %p1716 = pneg %p1014
      %p1717 = pneg %p1011
      %p1718 = pneg %p1035
      %p1719 = pneg %p1032
      %p1720 = pneg %p1056
      %p1721 = pneg %p1053
      %p1722 = pneg %p1077
      %p1723 = pneg %p1074
      %p1724 = pneg %p1098
      %p1725 = pneg %p1095
      %p1726 = pneg %p1119
      %p1727 = pneg %p1116
      %p1728 = pneg %p1140
      %p1729 = pneg %p1137
      %p1730 = pneg %p1161
      %p1731 = pneg %p1158
      %p1732 = pneg %p1182
      %p1733 = pneg %p1179
      %p1734 = pneg %p1203
      %p1735 = pneg %p1200
      %p1736 = pneg %p1224
      %p1737 = pneg %p1221
      %p1738 = pneg %p1245
      %p1739 = pneg %p1242
      %p1740 = pneg %p1266
      %p1741 = pneg %p1263
      %p1742 = pneg %p1287
      %p1743 = pneg %p1284
      %p1744 = pneg %p1308
      %p1745 = pneg %p1305
      %p1746 = pneg %p1329
      %p1747 = pneg %p1326
      %p1748 = pneg %p1350
      %p1749 = pneg %p1347
      %p1750 = pneg %p1371
      %p1751 = pneg %p1368
      %p1752 = pneg %p1392
      %p1753 = pneg %p1389
      %p1754 = pneg %p1418
      %p1755 = pneg %p1415
      %p1756 = scmp.lt.s32.totalorder %s132, 1
      %s1757 = scalar_select %p1756, %s132, 1
      %s1758 = smul.addr %s1757, 2
      %s1759 = smul.addr %s1758, 4
      %s1760 = scalar_lea.vmem %s121, %s1759
      %p1761 = scmp.lt.s32.totalorder %s132, 1
      %s1762 = scalar_select %p1761, %s132, 1
      %s1763 = smul.addr %s1762, 2
      %s1764 = smul.addr %s1763, 4
      %s1765 = scalar_lea.vmem %s1, %s1764
      %p1766 = scmp.lt.s32.totalorder %s132, 1
      %s1767 = scalar_select %p1766, %s132, 1
      %s1768 = smul.addr %s1767, 2
      %s1769 = smul.addr %s1768, 4
      %s1770 = scalar_lea.vmem %s121, %s1769
      %v1772 = vld [vmem:[%s1765] sm:$0x77]
      %v1773 = vld [vmem:[%s3] sm:$0x3]
      %v1774 = vld [vmem:[%s5] sm:$0xf]
      %v1775 = vlaneseq
      %v1776 = vand.u32 %v1775, 127
      %v1777 = vadd.s32 %v1776, 128
      %vm1778 = vcmp.lt.s32.totalorder %v1776, 0
      %v1779 = vsub.s32 0, %v1776
      %v1780 = vsel %vm1778, %v1779, %v1776
      %v1781 = vshrl.u32 %v1780, 4
      %v1782 = vand.u32 %v1780, 15
      %v1783 = vsub.s32 0, %v1782
      %v1784 = vsel %vm1778, %v1783, %v1782
      %vm1785 = vcmp.lt.s32.totalorder %v1777, 0
      %v1786 = vsub.s32 0, %v1777
      %v1787 = vsel %vm1785, %v1786, %v1777
      %v1788 = vshrl.u32 %v1787, 4
      %v1789 = vand.u32 %v1787, 15
      %v1790 = vsub.s32 0, %v1789
      %v1791 = vsel %vm1785, %v1790, %v1789
      %vm1792 = vcmp.ne.s32.totalorder %v1784, 0
      %vm1793 = vcmp.ne.s32.totalorder %v1791, 0
      %vm1794 = vcmp.lt.s32.totalorder %v1784, 0
      %vm1795 = vcmp.lt.s32.totalorder %v1791, 0
      %vm1796 = vmand %vm1794, %vm1792
      %vm1797 = vmand %vm1795, %vm1793
      %v1798 = vadd.s32 %v1784, 16
      %v1799 = vadd.s32 %v1791, 16
      %v1800 = vsel %vm1796, %v1798, %v1784
      %v1801 = vsel %vm1797, %v1799, %v1791
      %vm1802 = vcmp.ge.s32.totalorder %v1800, 1
      %vm1803 = vcmp.ge.s32.totalorder %v1801, 1
      %vm1804 = vcmp.lt.s32.totalorder %v1800, 15
      %vm1805 = vcmp.lt.s32.totalorder %v1801, 15
      %v1807 = vcombine.high %v1772, %v1772
      %1808 = vrot.lane.b32.xlu0 %v1772, 17
      %v1809 = vpop.permute.xlu0 %1808
      %1810 = vrot.lane.b32.xlu0 %v1807, 17
      %v1811 = vpop.permute.xlu0 %1810
      %vm1812 = vcmask 138240
      %v1813 = vsel %vm1812, %v1809, %v1811
      %v1816 = vsel %vm1812, 0.0, %v1809
      %v1817 = vsel %vm1802, 1, 0
      %v1818 = vsel %vm1803, 1, 0
      %vm1819 = vcmp.eq.s32.totalorder %v1817, 1
      %vm1820 = vcmp.eq.s32.totalorder %v1818, 1
      %v1821 = vsel %vm1819, %v1816, 0.0
      %v1822 = vsel %vm1820, %v1813, 0.0
      %1823 = vrot.lane.b32.xlu0 %v1772, 16
      %v1824 = vpop.permute.xlu0 %1823
      %1825 = vrot.lane.b32.xlu0 %v1807, 16
      %v1826 = vpop.permute.xlu0 %1825
      %vm1827 = vcmask 130048
      %v1828 = vsel %vm1827, %v1824, %v1826
      %v1830 = vsel %vm1827, 0.0, %v1824
      %1831 = vrot.lane.b32.xlu0 %v1772, 15
      %v1832 = vpop.permute.xlu0 %1831
      %1833 = vrot.lane.b32.xlu0 %v1807, 15
      %v1834 = vpop.permute.xlu0 %1833
      %vm1835 = vcmask 121856
      %v1836 = vsel %vm1835, %v1832, %v1834
      %v1839 = vsel %vm1835, 0.0, %v1832
      %v1840 = vsel %vm1804, 1, 0
      %v1841 = vsel %vm1805, 1, 0
      %vm1842 = vcmp.eq.s32.totalorder %v1840, 1
      %vm1843 = vcmp.eq.s32.totalorder %v1841, 1
      %v1844 = vsel %vm1842, %v1839, 0.0
      %v1845 = vsel %vm1843, %v1836, 0.0
      %1846 = vrot.lane.b32.xlu0 %v1772, 1
      %v1847 = vpop.permute.xlu0 %1846
      %1848 = vrot.lane.b32.xlu0 %v1807, 1
      %v1849 = vpop.permute.xlu0 %1848
      %vm1850 = vcmask 7168
      %v1851 = vsel %vm1850, %v1847, %v1849
      %v1854 = vsel %vm1850, 0.0, %v1847
      %v1855 = vsel %vm1819, %v1854, 0.0
      %v1856 = vsel %vm1820, %v1851, 0.0
      %1857 = vrot.lane.b32.xlu0 %v1772, 127
      %v1858 = vpop.permute.xlu0 %1857
      %1859 = vrot.lane.b32.xlu0 %v1807, 127
      %v1860 = vpop.permute.xlu0 %1859
      %vm1861 = vcmask 1039360
      %v1862 = vsel %vm1861, %v1858, %v1860
      %v1865 = vsel %vm1861, %v1860, 0.0
      %v1866 = vsel %vm1842, %v1862, 0.0
      %v1867 = vsel %vm1843, %v1865, 0.0
      %1868 = vrot.lane.b32.xlu0 %v1772, 113
      %v1869 = vpop.permute.xlu0 %1868
      %1870 = vrot.lane.b32.xlu0 %v1807, 113
      %v1871 = vpop.permute.xlu0 %1870
      %vm1872 = vcmask 924672
      %v1873 = vsel %vm1872, %v1869, %v1871
      %v1876 = vsel %vm1872, %v1871, 0.0
      %v1877 = vsel %vm1819, %v1873, 0.0
      %v1878 = vsel %vm1820, %v1876, 0.0
      %1879 = vrot.lane.b32.xlu0 %v1772, 112
      %v1880 = vpop.permute.xlu0 %1879
      %1881 = vrot.lane.b32.xlu0 %v1807, 112
      %v1882 = vpop.permute.xlu0 %1881
      %vm1883 = vcmask 916480
      %v1884 = vsel %vm1883, %v1880, %v1882
      %v1886 = vsel %vm1883, %v1882, 0.0
      %1887 = vrot.lane.b32.xlu0 %v1772, 111
      %v1888 = vpop.permute.xlu0 %1887
      %1889 = vrot.lane.b32.xlu0 %v1807, 111
      %v1890 = vpop.permute.xlu0 %1889
      %vm1891 = vcmask 908288
      %v1892 = vsel %vm1891, %v1888, %v1890
      %v1895 = vsel %vm1891, %v1890, 0.0
      %v1896 = vsel %vm1842, %v1892, 0.0
      %v1897 = vsel %vm1843, %v1895, 0.0
      %v1899 = vrot.slane %v1830, 5
      %v1900 = vrot.slane %v1828, 5
      %v1905 = vrot.slane %v1844, 2
      %v1906 = vrot.slane %v1845, 2
      %v1911 = vrot.slane %v1855, 7
      %v1912 = vrot.slane %v1856, 7
      %v1915 = vcombine.low %v1772, %v1772
      %v1919 = vrot.slane %v1866, 1
      %v1920 = vrot.slane %v1867, 1
      %v1925 = vrot.slane %v1877, 6
      %v1926 = vrot.slane %v1878, 6
      %v1930 = vrot.slane %v1884, 3
      %v1931 = vrot.slane %v1886, 3
      %vm1934 = vcmask 1042432
      %v1935 = vsel %vm1934, %v1821, %v1899
      %v1936 = vsel %vm1934, %v1822, %v1900
      %vm1937 = vcmask 1045504
      %v1938 = vsel %vm1937, %v1935, %v1905
      %v1939 = vsel %vm1937, %v1936, %v1906
      %vm1940 = vcmask 1040384
      %v1941 = vsel %vm1940, %v1905, %v1911
      %v1942 = vsel %vm1940, %v1906, %v1912
      %vm1943 = vcmask 1043456
      %v1944 = vsel %vm1943, %v1941, %v1915
      %v1945 = vsel %vm1943, %v1942, %v1772
      %vm1946 = vcmask 1046528
      %v1947 = vsel %vm1946, %v1944, %v1919
      %v1948 = vsel %vm1946, %v1945, %v1920
      %vm1949 = vcmask 1041408
      %v1950 = vsel %vm1949, %v1919, %v1925
      %v1951 = vsel %vm1949, %v1920, %v1926
      %vm1952 = vcmask 1044480
      %v1953 = vsel %vm1952, %v1950, %v1930
      %v1954 = vsel %vm1952, %v1951, %v1931
      %v1955 = vpack.c.bf16 %v1947, %v1938
      %v1956 = vpack.c.bf16 %v1948, %v1939
      %v1957 = vpack.c.bf16 %v1896, %v1953
      %v1958 = vpack.c.bf16 %v1897, %v1954
      %1960 = vset.pattern.permute.xlu0 0
      %1961 = vperm.xlu0 %1960, %v1774
      %v1962 = vpop.permute.xlu0 %1961
      %vm1964 = vcmask 220160
      %v1966 = vsel %vm1964, %v1773, 0
      %v1968 = vsel %vm1952, 4294967295, 65535
      %v1969 = vsel %vm1937, %v1968, 0
      %v1971 = vand.u32 %v1957, %v1969
      %v1974 = vand.u32 %v1958, %v1969
      %1976 = vmatprep.subr.bf16.mxu0 %v1956
      %1977 = vmatpush1.bf16.msra.mxu0 %v1955
      %1978 = vmatprep.subr.bf16.mxu0 %v1974
      %1979 = vmatpush1.bf16.msra.mxu0 %v1971
      %1980 = vmatprep.subr.bf16.mxu0 0
      %1981 = vmatpush1.bf16.msra.mxu0 0
      %1982 = vmatprep.subr.bf16.mxu0 0
      %1983 = vmatpush1.bf16.msra.mxu0 0
      %1984 = vmatprep.subr.bf16.mxu0 0
      %1985 = vmatpush1.bf16.msra.mxu0 0
      %1986 = vmatprep.subr.bf16.mxu0 0
      %1987 = vmatpush1.bf16.msra.mxu0 0
      %1988 = vmatprep.subr.bf16.mxu0 0
      %1989 = vmatpush1.bf16.msra.mxu0 0
      %1990 = vmatprep.subr.bf16.mxu0 0
      %1991 = vmatpush1.bf16.msra.mxu0 0
      %1992 = vmatprep.subr.bf16.mxu0 0
      %1993 = vmatpush1.bf16.msra.mxu0 0
      %1994 = vmatprep.subr.bf16.mxu0 0
      %1995 = vmatpush1.bf16.msra.mxu0 0
      %1996 = vmatprep.subr.bf16.mxu0 0
      %1997 = vmatpush1.bf16.msra.mxu0 0
      %1998 = vmatprep.subr.bf16.mxu0 0
      %1999 = vmatpush1.bf16.msra.mxu0 0
      %2000 = vmatprep.subr.bf16.mxu0 0
      %2001 = vmatpush1.bf16.msra.mxu0 0
      %2002 = vmatprep.subr.bf16.mxu0 0
      %2003 = vmatpush1.bf16.msra.mxu0 0
      %2004 = vmatprep.subr.bf16.mxu0 0
      %2005 = vmatpush1.bf16.msra.mxu0 0
      %2006 = vmatprep.subr.bf16.mxu0 0
      %2007 = vmatpush1.bf16.msra.mxu0 0
      %2008 = vmatprep.mubr.bf16.mxu0 0
      %2009 = vmatmul.mubr.bf16.gmra.mrb[0].mxu0 %v1966
      %v2010 = vpop.f32.mrb[0].mxu0
      %v2011 = vadd.f32 %v1962, %v2010
      %v2012 = vpop.f32.mrb[0].mxu0
      %v2013 = vadd.f32 %v1962, %v2012
      %v2014 = vpop.f32.mrb[0].mxu0
      %v2015 = vpop.f32.mrb[0].mxu0
      %2016 = vdwg.mxu0
      %vm2017 = vcmp.gt.f32.partialorder %v2011, 0.0
      %vm2018 = vcmp.gt.f32.partialorder %v2013, 0.0
      %v2019 = vmin.f32 %v2011, 0.0
      %v2020 = vmin.f32 %v2013, 0.0
      %v2021 = vmul.f32 %v2019, 1.442695
      %v2022 = vpow.pop %v2021
      %v2023 = vmul.f32 %v2020, 1.442695
      %v2024 = vpow.pop %v2023
      %v2025 = vsub.f32 %v2022, 1.0
      %v2026 = vsub.f32 %v2024, 1.0
      %v2027 = vsel %vm2017, %v2011, %v2025
      %v2028 = vsel %vm2018, %v2013, %v2026
      %v2029 = vld [vmem:[%s7] sm:$0x3]
      %v2030 = vld [vmem:[%s9] sm:$0xf]
      %2033 = vrot.lane.b32.xlu0 %v2027, 17
      %v2034 = vpop.permute.xlu0 %2033
      %2035 = vrot.lane.b32.xlu0 %v2028, 17
      %v2036 = vpop.permute.xlu0 %2035
      %v2037 = vsel %vm1812, %v2034, %v2036
      %v2040 = vsel %vm1812, 0.0, %v2034
      %v2041 = vsel %vm1819, %v2040, 0.0
      %v2042 = vsel %vm1820, %v2037, 0.0
      %2043 = vrot.lane.b32.xlu0 %v2027, 16
      %v2044 = vpop.permute.xlu0 %2043
      %2045 = vrot.lane.b32.xlu0 %v2028, 16
      %v2046 = vpop.permute.xlu0 %2045
      %v2047 = vsel %vm1827, %v2044, %v2046
      %v2049 = vsel %vm1827, 0.0, %v2044
      %2050 = vrot.lane.b32.xlu0 %v2027, 15
      %v2051 = vpop.permute.xlu0 %2050
      %2052 = vrot.lane.b32.xlu0 %v2028, 15
      %v2053 = vpop.permute.xlu0 %2052
      %v2054 = vsel %vm1835, %v2051, %v2053
      %v2057 = vsel %vm1835, 0.0, %v2051
      %v2058 = vsel %vm1842, %v2057, 0.0
      %v2059 = vsel %vm1843, %v2054, 0.0
      %2060 = vrot.lane.b32.xlu0 %v2027, 1
      %v2061 = vpop.permute.xlu0 %2060
      %2062 = vrot.lane.b32.xlu0 %v2028, 1
      %v2063 = vpop.permute.xlu0 %2062
      %v2064 = vsel %vm1850, %v2061, %v2063
      %v2067 = vsel %vm1850, 0.0, %v2061
      %v2068 = vsel %vm1819, %v2067, 0.0
      %v2069 = vsel %vm1820, %v2064, 0.0
      %2070 = vrot.lane.b32.xlu0 %v2027, 127
      %v2071 = vpop.permute.xlu0 %2070
      %2072 = vrot.lane.b32.xlu0 %v2028, 127
      %v2073 = vpop.permute.xlu0 %2072
      %v2074 = vsel %vm1861, %v2071, %v2073
      %v2077 = vsel %vm1861, %v2073, 0.0
      %v2078 = vsel %vm1842, %v2074, 0.0
      %v2079 = vsel %vm1843, %v2077, 0.0
      %2080 = vrot.lane.b32.xlu0 %v2027, 113
      %v2081 = vpop.permute.xlu0 %2080
      %2082 = vrot.lane.b32.xlu0 %v2028, 113
      %v2083 = vpop.permute.xlu0 %2082
      %v2084 = vsel %vm1872, %v2081, %v2083
      %v2087 = vsel %vm1872, %v2083, 0.0
      %v2088 = vsel %vm1819, %v2084, 0.0
      %v2089 = vsel %vm1820, %v2087, 0.0
      %2090 = vrot.lane.b32.xlu0 %v2027, 112
      %v2091 = vpop.permute.xlu0 %2090
      %2092 = vrot.lane.b32.xlu0 %v2028, 112
      %v2093 = vpop.permute.xlu0 %2092
      %v2094 = vsel %vm1883, %v2091, %v2093
      %v2096 = vsel %vm1883, %v2093, 0.0
      %2097 = vrot.lane.b32.xlu0 %v2027, 111
      %v2098 = vpop.permute.xlu0 %2097
      %2099 = vrot.lane.b32.xlu0 %v2028, 111
      %v2100 = vpop.permute.xlu0 %2099
      %v2101 = vsel %vm1891, %v2098, %v2100
      %v2104 = vsel %vm1891, %v2100, 0.0
      %v2105 = vsel %vm1842, %v2101, 0.0
      %v2106 = vsel %vm1843, %v2104, 0.0
      %v2108 = vrot.slane %v2049, 4
      %v2109 = vrot.slane %v2047, 4
      %v2114 = vrot.slane %v2068, 4
      %v2115 = vrot.slane %v2069, 4
      %v2120 = vrot.slane %v2078, 4
      %v2121 = vrot.slane %v2079, 4
      %v2125 = vrot.slane %v2094, 4
      %v2126 = vrot.slane %v2096, 4
      %v2129 = vsel %vm1943, %v2041, %v2108
      %v2130 = vsel %vm1943, %v2042, %v2109
      %v2131 = vsel %vm1943, %v2058, %v2114
      %v2132 = vsel %vm1943, %v2059, %v2115
      %v2133 = vsel %vm1943, %v2027, %v2120
      %v2134 = vsel %vm1943, %v2028, %v2121
      %v2135 = vsel %vm1943, %v2088, %v2125
      %v2136 = vsel %vm1943, %v2089, %v2126
      %v2137 = vpack.c.bf16 %v2131, %v2129
      %v2138 = vpack.c.bf16 %v2132, %v2130
      %v2139 = vpack.c.bf16 %v2135, %v2133
      %v2140 = vpack.c.bf16 %v2136, %v2134
      %v2141 = vpack.c.bf16 %v2105, %v2105
      %v2142 = vpack.c.bf16 %v2106, %v2106
      %2144 = vset.pattern.permute.xlu0 0
      %2145 = vperm.xlu0 %2144, %v2030
      %v2146 = vpop.permute.xlu0 %2145
      %vm2148 = vcmask 293888
      %v2150 = vsel %vm2148, %v2029, 0
      %v2153 = vsel %vm1949, %v2141, 0
      %v2156 = vsel %vm1949, %v2142, 0
      %2158 = vmatprep.subr.bf16.mxu0 %v2138
      %2159 = vmatpush1.bf16.msra.mxu0 %v2137
      %2160 = vmatprep.subr.bf16.mxu0 %v2140
      %2161 = vmatpush1.bf16.msra.mxu0 %v2139
      %2162 = vmatprep.subr.bf16.mxu0 %v2156
      %2163 = vmatpush1.bf16.msra.mxu0 %v2153
      %2164 = vmatprep.subr.bf16.mxu0 0
      %2165 = vmatpush1.bf16.msra.mxu0 0
      %2166 = vmatprep.subr.bf16.mxu0 0
      %2167 = vmatpush1.bf16.msra.mxu0 0
      %2168 = vmatprep.subr.bf16.mxu0 0
      %2169 = vmatpush1.bf16.msra.mxu0 0
      %2170 = vmatprep.subr.bf16.mxu0 0
      %2171 = vmatpush1.bf16.msra.mxu0 0
      %2172 = vmatprep.subr.bf16.mxu0 0
      %2173 = vmatpush1.bf16.msra.mxu0 0
      %2174 = vmatprep.subr.bf16.mxu0 0
      %2175 = vmatpush1.bf16.msra.mxu0 0
      %2176 = vmatprep.subr.bf16.mxu0 0
      %2177 = vmatpush1.bf16.msra.mxu0 0
      %2178 = vmatprep.subr.bf16.mxu0 0
      %2179 = vmatpush1.bf16.msra.mxu0 0
      %2180 = vmatprep.subr.bf16.mxu0 0
      %2181 = vmatpush1.bf16.msra.mxu0 0
      %2182 = vmatprep.subr.bf16.mxu0 0
      %2183 = vmatpush1.bf16.msra.mxu0 0
      %2184 = vmatprep.subr.bf16.mxu0 0
      %2185 = vmatpush1.bf16.msra.mxu0 0
      %2186 = vmatprep.subr.bf16.mxu0 0
      %2187 = vmatpush1.bf16.msra.mxu0 0
      %2188 = vmatprep.subr.bf16.mxu0 0
      %2189 = vmatpush1.bf16.msra.mxu0 0
      %2190 = vmatprep.mubr.bf16.mxu0 0
      %2191 = vmatmul.mubr.bf16.gmra.mrb[0].mxu0 %v2150
      %v2192 = vpop.f32.mrb[0].mxu0
      %v2193 = vadd.f32 %v2146, %v2192
      %v2194 = vpop.f32.mrb[0].mxu0
      %v2195 = vadd.f32 %v2146, %v2194
      %v2196 = vpop.f32.mrb[0].mxu0
      %v2197 = vpop.f32.mrb[0].mxu0
      %2198 = vdwg.mxu0
      %vm2199 = vcmp.gt.f32.partialorder %v2193, 0.0
      %vm2200 = vcmp.gt.f32.partialorder %v2195, 0.0
      %v2201 = vmin.f32 %v2193, 0.0
      %v2202 = vmin.f32 %v2195, 0.0
      %v2203 = vmul.f32 %v2201, 1.442695
      %v2204 = vpow.pop %v2203
      %v2205 = vmul.f32 %v2202, 1.442695
      %v2206 = vpow.pop %v2205
      %v2207 = vsub.f32 %v2204, 1.0
      %v2208 = vsub.f32 %v2206, 1.0
      %v2209 = vsel %vm2199, %v2193, %v2207
      %v2210 = vsel %vm2200, %v2195, %v2208
      %v2211 = vld [vmem:[%s11] sm:$0x3]
      %v2212 = vld [vmem:[%s13] sm:$0xf]
      %2215 = vrot.lane.b32.xlu0 %v2209, 17
      %v2216 = vpop.permute.xlu0 %2215
      %2217 = vrot.lane.b32.xlu0 %v2210, 17
      %v2218 = vpop.permute.xlu0 %2217
      %v2219 = vsel %vm1812, %v2216, %v2218
      %v2222 = vsel %vm1812, 0.0, %v2216
      %v2223 = vsel %vm1819, %v2222, 0.0
      %v2224 = vsel %vm1820, %v2219, 0.0
      %2225 = vrot.lane.b32.xlu0 %v2209, 16
      %v2226 = vpop.permute.xlu0 %2225
      %2227 = vrot.lane.b32.xlu0 %v2210, 16
      %v2228 = vpop.permute.xlu0 %2227
      %v2229 = vsel %vm1827, %v2226, %v2228
      %v2231 = vsel %vm1827, 0.0, %v2226
      %2232 = vrot.lane.b32.xlu0 %v2209, 15
      %v2233 = vpop.permute.xlu0 %2232
      %2234 = vrot.lane.b32.xlu0 %v2210, 15
      %v2235 = vpop.permute.xlu0 %2234
      %v2236 = vsel %vm1835, %v2233, %v2235
      %v2239 = vsel %vm1835, 0.0, %v2233
      %v2240 = vsel %vm1842, %v2239, 0.0
      %v2241 = vsel %vm1843, %v2236, 0.0
      %2242 = vrot.lane.b32.xlu0 %v2209, 1
      %v2243 = vpop.permute.xlu0 %2242
      %2244 = vrot.lane.b32.xlu0 %v2210, 1
      %v2245 = vpop.permute.xlu0 %2244
      %v2246 = vsel %vm1850, %v2243, %v2245
      %v2249 = vsel %vm1850, 0.0, %v2243
      %v2250 = vsel %vm1819, %v2249, 0.0
      %v2251 = vsel %vm1820, %v2246, 0.0
      %2252 = vrot.lane.b32.xlu0 %v2209, 127
      %v2253 = vpop.permute.xlu0 %2252
      %2254 = vrot.lane.b32.xlu0 %v2210, 127
      %v2255 = vpop.permute.xlu0 %2254
      %v2256 = vsel %vm1861, %v2253, %v2255
      %v2259 = vsel %vm1861, %v2255, 0.0
      %v2260 = vsel %vm1842, %v2256, 0.0
      %v2261 = vsel %vm1843, %v2259, 0.0
      %2262 = vrot.lane.b32.xlu0 %v2209, 113
      %v2263 = vpop.permute.xlu0 %2262
      %2264 = vrot.lane.b32.xlu0 %v2210, 113
      %v2265 = vpop.permute.xlu0 %2264
      %v2266 = vsel %vm1872, %v2263, %v2265
      %v2269 = vsel %vm1872, %v2265, 0.0
      %v2270 = vsel %vm1819, %v2266, 0.0
      %v2271 = vsel %vm1820, %v2269, 0.0
      %2272 = vrot.lane.b32.xlu0 %v2209, 112
      %v2273 = vpop.permute.xlu0 %2272
      %2274 = vrot.lane.b32.xlu0 %v2210, 112
      %v2275 = vpop.permute.xlu0 %2274
      %v2276 = vsel %vm1883, %v2273, %v2275
      %v2278 = vsel %vm1883, %v2275, 0.0
      %2279 = vrot.lane.b32.xlu0 %v2209, 111
      %v2280 = vpop.permute.xlu0 %2279
      %2281 = vrot.lane.b32.xlu0 %v2210, 111
      %v2282 = vpop.permute.xlu0 %2281
      %v2283 = vsel %vm1891, %v2280, %v2282
      %v2286 = vsel %vm1891, %v2282, 0.0
      %v2287 = vsel %vm1842, %v2283, 0.0
      %v2288 = vsel %vm1843, %v2286, 0.0
      %v2290 = vrot.slane %v2231, 4
      %v2291 = vrot.slane %v2229, 4
      %v2296 = vrot.slane %v2250, 4
      %v2297 = vrot.slane %v2251, 4
      %v2302 = vrot.slane %v2260, 4
      %v2303 = vrot.slane %v2261, 4
      %v2307 = vrot.slane %v2276, 4
      %v2308 = vrot.slane %v2278, 4
      %v2311 = vsel %vm1943, %v2223, %v2290
      %v2312 = vsel %vm1943, %v2224, %v2291
      %v2313 = vsel %vm1943, %v2240, %v2296
      %v2314 = vsel %vm1943, %v2241, %v2297
      %v2315 = vsel %vm1943, %v2209, %v2302
      %v2316 = vsel %vm1943, %v2210, %v2303
      %v2317 = vsel %vm1943, %v2270, %v2307
      %v2318 = vsel %vm1943, %v2271, %v2308
      %v2319 = vpack.c.bf16 %v2313, %v2311
      %v2320 = vpack.c.bf16 %v2314, %v2312
      %v2321 = vpack.c.bf16 %v2317, %v2315
      %v2322 = vpack.c.bf16 %v2318, %v2316
      %v2323 = vpack.c.bf16 %v2287, %v2287
      %v2324 = vpack.c.bf16 %v2288, %v2288
      %2326 = vset.pattern.permute.xlu0 0
      %2327 = vperm.xlu0 %2326, %v2212
      %v2328 = vpop.permute.xlu0 %2327
      %v2331 = vsel %vm2148, %v2211, 0
      %v2334 = vsel %vm1949, %v2323, 0
      %v2337 = vsel %vm1949, %v2324, 0
      %2339 = vmatprep.subr.bf16.mxu0 %v2320
      %2340 = vmatpush1.bf16.msra.mxu0 %v2319
      %2341 = vmatprep.subr.bf16.mxu0 %v2322
      %2342 = vmatpush1.bf16.msra.mxu0 %v2321
      %2343 = vmatprep.subr.bf16.mxu0 %v2337
      %2344 = vmatpush1.bf16.msra.mxu0 %v2334
      %2345 = vmatprep.subr.bf16.mxu0 0
      %2346 = vmatpush1.bf16.msra.mxu0 0
      %2347 = vmatprep.subr.bf16.mxu0 0
      %2348 = vmatpush1.bf16.msra.mxu0 0
      %2349 = vmatprep.subr.bf16.mxu0 0
      %2350 = vmatpush1.bf16.msra.mxu0 0
      %2351 = vmatprep.subr.bf16.mxu0 0
      %2352 = vmatpush1.bf16.msra.mxu0 0
      %2353 = vmatprep.subr.bf16.mxu0 0
      %2354 = vmatpush1.bf16.msra.mxu0 0
      %2355 = vmatprep.subr.bf16.mxu0 0
      %2356 = vmatpush1.bf16.msra.mxu0 0
      %2357 = vmatprep.subr.bf16.mxu0 0
      %2358 = vmatpush1.bf16.msra.mxu0 0
      %2359 = vmatprep.subr.bf16.mxu0 0
      %2360 = vmatpush1.bf16.msra.mxu0 0
      %2361 = vmatprep.subr.bf16.mxu0 0
      %2362 = vmatpush1.bf16.msra.mxu0 0
      %2363 = vmatprep.subr.bf16.mxu0 0
      %2364 = vmatpush1.bf16.msra.mxu0 0
      %2365 = vmatprep.subr.bf16.mxu0 0
      %2366 = vmatpush1.bf16.msra.mxu0 0
      %2367 = vmatprep.subr.bf16.mxu0 0
      %2368 = vmatpush1.bf16.msra.mxu0 0
      %2369 = vmatprep.subr.bf16.mxu0 0
      %2370 = vmatpush1.bf16.msra.mxu0 0
      %2371 = vmatprep.mubr.bf16.mxu0 0
      %2372 = vmatmul.mubr.bf16.gmra.mrb[0].mxu0 %v2331
      %v2373 = vpop.f32.mrb[0].mxu0
      %v2374 = vadd.f32 %v2328, %v2373
      %v2375 = vpop.f32.mrb[0].mxu0
      %v2376 = vadd.f32 %v2328, %v2375
      %v2377 = vpop.f32.mrb[0].mxu0
      %v2378 = vpop.f32.mrb[0].mxu0
      %2379 = vdwg.mxu0
      %vm2380 = vcmp.gt.f32.partialorder %v2374, 0.0
      %vm2381 = vcmp.gt.f32.partialorder %v2376, 0.0
      %v2382 = vmin.f32 %v2374, 0.0
      %v2383 = vmin.f32 %v2376, 0.0
      %v2384 = vmul.f32 %v2382, 1.442695
      %v2385 = vpow.pop %v2384
      %v2386 = vmul.f32 %v2383, 1.442695
      %v2387 = vpow.pop %v2386
      %v2388 = vsub.f32 %v2385, 1.0
      %v2389 = vsub.f32 %v2387, 1.0
      %v2390 = vsel %vm2380, %v2374, %v2388
      %v2391 = vsel %vm2381, %v2376, %v2389
      %v2392 = vld [vmem:[%s15] sm:$0x3]
      %v2393 = vld [vmem:[%s17] sm:$0xf]
      %v2394 = vpack.c.bf16 %v2390, %v2390
      %v2395 = vpack.c.bf16 %v2391, %v2391
      %2397 = vset.pattern.permute.xlu0 0
      %2398 = vperm.xlu0 %2397, %v2393
      %v2399 = vpop.permute.xlu0 %2398
      %vm2401 = vcmask 31744
      %v2403 = vsel %vm2401, %v2392, 0
      %v2406 = vsel %vm1949, %v2394, 0
      %v2409 = vsel %vm1949, %v2395, 0
      %2411 = vmatprep.subr.bf16.mxu0 %v2409
      %2412 = vmatpush1.bf16.msra.mxu0 %v2406
      %2413 = vmatprep.subr.bf16.mxu0 0
      %2414 = vmatpush1.bf16.msra.mxu0 0
      %2415 = vmatprep.subr.bf16.mxu0 0
      %2416 = vmatpush1.bf16.msra.mxu0 0
      %2417 = vmatprep.subr.bf16.mxu0 0
      %2418 = vmatpush1.bf16.msra.mxu0 0
      %2419 = vmatprep.subr.bf16.mxu0 0
      %2420 = vmatpush1.bf16.msra.mxu0 0
      %2421 = vmatprep.subr.bf16.mxu0 0
      %2422 = vmatpush1.bf16.msra.mxu0 0
      %2423 = vmatprep.subr.bf16.mxu0 0
      %2424 = vmatpush1.bf16.msra.mxu0 0
      %2425 = vmatprep.subr.bf16.mxu0 0
      %2426 = vmatpush1.bf16.msra.mxu0 0
      %2427 = vmatprep.subr.bf16.mxu0 0
      %2428 = vmatpush1.bf16.msra.mxu0 0
      %2429 = vmatprep.subr.bf16.mxu0 0
      %2430 = vmatpush1.bf16.msra.mxu0 0
      %2431 = vmatprep.subr.bf16.mxu0 0
      %2432 = vmatpush1.bf16.msra.mxu0 0
      %2433 = vmatprep.subr.bf16.mxu0 0
      %2434 = vmatpush1.bf16.msra.mxu0 0
      %2435 = vmatprep.subr.bf16.mxu0 0
      %2436 = vmatpush1.bf16.msra.mxu0 0
      %2437 = vmatprep.subr.bf16.mxu0 0
      %2438 = vmatpush1.bf16.msra.mxu0 0
      %2439 = vmatprep.subr.bf16.mxu0 0
      %2440 = vmatpush1.bf16.msra.mxu0 0
      %2441 = vmatprep.subr.bf16.mxu0 0
      %2442 = vmatpush1.bf16.msra.mxu0 0
      %2443 = vmatprep.mubr.bf16.mxu0 0
      %2444 = vmatmul.mubr.bf16.gmra.mrb[0].mxu0 %v2403
      %v2445 = vpop.f32.mrb[0].mxu0
      %v2446 = vadd.f32 %v2399, %v2445
      %v2447 = vpop.f32.mrb[0].mxu0
      %v2448 = vadd.f32 %v2399, %v2447
      %v2449 = vpop.f32.mrb[0].mxu0
      %v2450 = vpop.f32.mrb[0].mxu0
      %2451 = vdwg.mxu0
      %v2452 = vld [vmem:[%s19] sm:$0xf]
      %v2453 = vld [vmem:[%s19 + $0x4] sm:$0xf]
      %v2454 = vld [vmem:[%s19 + $0x8] sm:$0xf]
      %v2455 = vld [vmem:[%s19 + $0xc] sm:$0xf]
      %v2456 = vld [vmem:[%s19 + $0x10] sm:$0xf]
      %v2457 = vld [vmem:[%s19 + $0x14] sm:$0xf]
      %v2458 = vld [vmem:[%s19 + $0x18] sm:$0xf]
      %v2459 = vld [vmem:[%s19 + $0x1c] sm:$0xf]
      %v2460 = vld [vmem:[%s19 + $0x20] sm:$0xf]
      %v2461 = vld [vmem:[%s19 + $0x24] sm:$0xf]
      %v2462 = vld [vmem:[%s19 + $0x28] sm:$0xf]
      %v2463 = vld [vmem:[%s19 + $0x2c] sm:$0xf]
      %v2464 = vld [vmem:[%s19 + $0x30] sm:$0xf]
      %v2465 = vld [vmem:[%s19 + $0x34] sm:$0xf]
      %v2466 = vld [vmem:[%s19 + $0x38] sm:$0xf]
      %v2467 = vld [vmem:[%s19 + $0x3c] sm:$0xf]
      %v2468 = vld [vmem:[%s19 + $0x40] sm:$0xf]
      %v2469 = vld [vmem:[%s19 + $0x44] sm:$0xf]
      %v2470 = vld [vmem:[%s19 + $0x48] sm:$0xf]
      %v2471 = vld [vmem:[%s19 + $0x4c] sm:$0xf]
      %v2472 = vld [vmem:[%s19 + $0x50] sm:$0xf]
      %v2473 = vld [vmem:[%s19 + $0x54] sm:$0xf]
      %v2474 = vld [vmem:[%s19 + $0x58] sm:$0xf]
      %v2475 = vld [vmem:[%s19 + $0x5c] sm:$0xf]
      %v2476 = vld [vmem:[%s19 + $0x60] sm:$0xf]
      %v2477 = vld [vmem:[%s19 + $0x64] sm:$0xf]
      %v2478 = vld [vmem:[%s19 + $0x68] sm:$0xf]
      %v2479 = vld [vmem:[%s19 + $0x6c] sm:$0xf]
      %v2480 = vld [vmem:[%s19 + $0x70] sm:$0xf]
      %v2481 = vld [vmem:[%s19 + $0x74] sm:$0xf]
      %v2482 = vld [vmem:[%s19 + $0x78] sm:$0xf]
      %v2483 = vld [vmem:[%s19 + $0x7c] sm:$0xf]
      %v2484 = vpack.c.bf16 %v2446, %v2446
      %v2485 = vpack.c.bf16 %v2448, %v2448
      %v2518 = vunpack.c.l.b16 %v2452
      %v2519 = vunpack.c.l.b16 %v2453
      %v2520 = vunpack.c.l.b16 %v2454
      %v2521 = vunpack.c.l.b16 %v2455
      %v2522 = vunpack.c.l.b16 %v2456
      %v2523 = vunpack.c.l.b16 %v2457
      %v2524 = vunpack.c.l.b16 %v2458
      %v2525 = vunpack.c.l.b16 %v2459
      %v2526 = vunpack.c.l.b16 %v2460
      %v2527 = vunpack.c.l.b16 %v2461
      %v2528 = vunpack.c.l.b16 %v2462
      %v2529 = vunpack.c.l.b16 %v2463
      %v2530 = vunpack.c.l.b16 %v2464
      %v2531 = vunpack.c.l.b16 %v2465
      %v2532 = vunpack.c.l.b16 %v2466
      %v2533 = vunpack.c.l.b16 %v2467
      %v2534 = vunpack.c.l.b16 %v2468
      %v2535 = vunpack.c.l.b16 %v2469
      %v2536 = vunpack.c.l.b16 %v2470
      %v2537 = vunpack.c.l.b16 %v2471
      %v2538 = vunpack.c.l.b16 %v2472
      %v2539 = vunpack.c.l.b16 %v2473
      %v2540 = vunpack.c.l.b16 %v2474
      %v2541 = vunpack.c.l.b16 %v2475
      %v2542 = vunpack.c.l.b16 %v2476
      %v2543 = vunpack.c.l.b16 %v2477
      %v2544 = vunpack.c.l.b16 %v2478
      %v2545 = vunpack.c.l.b16 %v2479
      %v2546 = vunpack.c.l.b16 %v2480
      %v2547 = vunpack.c.l.b16 %v2481
      %v2548 = vunpack.c.l.b16 %v2482
      %v2549 = vunpack.c.l.b16 %v2483
      %v2550 = vpack.c.b16 %v2519, %v2518
      %v2551 = vpack.c.b16 %v2521, %v2520
      %v2552 = vpack.c.b16 %v2523, %v2522
      %v2553 = vpack.c.b16 %v2525, %v2524
      %v2554 = vpack.c.b16 %v2527, %v2526
      %v2555 = vpack.c.b16 %v2529, %v2528
      %v2556 = vpack.c.b16 %v2531, %v2530
      %v2557 = vpack.c.b16 %v2533, %v2532
      %v2558 = vpack.c.b16 %v2535, %v2534
      %v2559 = vpack.c.b16 %v2537, %v2536
      %v2560 = vpack.c.b16 %v2539, %v2538
      %v2561 = vpack.c.b16 %v2541, %v2540
      %v2562 = vpack.c.b16 %v2543, %v2542
      %v2563 = vpack.c.b16 %v2545, %v2544
      %v2564 = vpack.c.b16 %v2547, %v2546
      %v2565 = vpack.c.b16 %v2549, %v2548
      %2582 = vmatprep.subr.bf16.mxu0 0
      %2583 = vmatpush1.bf16.msra.mxu0 %v2550
      %2584 = vmatprep.subr.bf16.mxu0 0
      %2585 = vmatpush1.bf16.msra.mxu0 %v2551
      %2586 = vmatprep.subr.bf16.mxu0 0
      %2587 = vmatpush1.bf16.msra.mxu0 %v2552
      %2588 = vmatprep.subr.bf16.mxu0 0
      %2589 = vmatpush1.bf16.msra.mxu0 %v2553
      %2590 = vmatprep.subr.bf16.mxu0 0
      %2591 = vmatpush1.bf16.msra.mxu0 %v2554
      %2592 = vmatprep.subr.bf16.mxu0 0
      %2593 = vmatpush1.bf16.msra.mxu0 %v2555
      %2594 = vmatprep.subr.bf16.mxu0 0
      %2595 = vmatpush1.bf16.msra.mxu0 %v2556
      %2596 = vmatprep.subr.bf16.mxu0 0
      %2597 = vmatpush1.bf16.msra.mxu0 %v2557
      %2598 = vmatprep.subr.bf16.mxu0 0
      %2599 = vmatpush1.bf16.msra.mxu0 %v2558
      %2600 = vmatprep.subr.bf16.mxu0 0
      %2601 = vmatpush1.bf16.msra.mxu0 %v2559
      %2602 = vmatprep.subr.bf16.mxu0 0
      %2603 = vmatpush1.bf16.msra.mxu0 %v2560
      %2604 = vmatprep.subr.bf16.mxu0 0
      %2605 = vmatpush1.bf16.msra.mxu0 %v2561
      %2606 = vmatprep.subr.bf16.mxu0 0
      %2607 = vmatpush1.bf16.msra.mxu0 %v2562
      %2608 = vmatprep.subr.bf16.mxu0 0
      %2609 = vmatpush1.bf16.msra.mxu0 %v2563
      %2610 = vmatprep.subr.bf16.mxu0 0
      %2611 = vmatpush1.bf16.msra.mxu0 %v2564
      %2612 = vmatprep.subr.bf16.mxu0 0
      %2613 = vmatpush1.bf16.msra.mxu0 %v2565
      %2614 = vmatprep.mubr.bf16.mxu0 %v2485
      %2615 = vmatmul.mubr.bf16.gmra.mrb[0].mxu0 %v2484
      %v2616 = vpop.f32.mrb[0].mxu0
      %v2617 = vadd.f32 0.0, %v2616
      %v2618 = vpop.f32.mrb[0].mxu0
      %v2619 = vpop.f32.mrb[0].mxu0
      %v2620 = vpop.f32.mrb[0].mxu0
      %2621 = vdwg.mxu0
      %v2622 = vld [vmem:[%s21] sm:$0x3]
      %v2623 = vld [vmem:[%s23] sm:$0xf]
      %vm2624 = vcmp.lt.s32.totalorder %v1776, 0
      %v2625 = vsub.s32 0, %v1776
      %v2626 = vsel %vm2624, %v2625, %v1776
      %v2627 = vshrl.u32 %v2626, 3
      %v2628 = vand.u32 %v2626, 7
      %v2629 = vsub.s32 0, %v2628
      %v2630 = vsel %vm2624, %v2629, %v2628
      %vm2631 = vcmp.ne.s32.totalorder %v2630, 0
      %vm2632 = vcmp.lt.s32.totalorder %v2630, 0
      %vm2633 = vmand %vm2632, %vm2631
      %v2634 = vadd.s32 %v2630, 8
      %v2635 = vsel %vm2633, %v2634, %v2630
      %vm2636 = vcmp.ge.s32.totalorder %v2635, 1
      %vm2637 = vcmp.lt.s32.totalorder %v2635, 7
      %2639 = vrot.lane.b32.xlu0 %v2617, 9
      %v2640 = vpop.permute.xlu0 %2639
      %vm2642 = vcmask 72704
      %v2643 = vsel %vm2642, 0.0, %v2640
      %v2644 = vsel %vm2636, 1, 0
      %vm2645 = vcmp.eq.s32.totalorder %v2644, 1
      %v2646 = vsel %vm2645, %v2643, 0.0
      %2647 = vrot.lane.b32.xlu0 %v2617, 8
      %v2648 = vpop.permute.xlu0 %2647
      %vm2650 = vcmask 64512
      %v2651 = vsel %vm2650, 0.0, %v2648
      %2652 = vrot.lane.b32.xlu0 %v2617, 7
      %v2653 = vpop.permute.xlu0 %2652
      %vm2655 = vcmask 56320
      %v2656 = vsel %vm2655, 0.0, %v2653
      %v2657 = vsel %vm2637, 1, 0
      %vm2658 = vcmp.eq.s32.totalorder %v2657, 1
      %v2659 = vsel %vm2658, %v2656, 0.0
      %2660 = vrot.lane.b32.xlu0 %v2617, 1
      %v2661 = vpop.permute.xlu0 %2660
      %v2663 = vsel %vm1850, 0.0, %v2661
      %v2664 = vsel %vm2645, %v2663, 0.0
      %2665 = vrot.lane.b32.xlu0 %v2617, 127
      %v2666 = vpop.permute.xlu0 %2665
      %vm2668 = vcmask 515072
      %v2669 = vsel %vm2668, %v2666, 0.0
      %v2670 = vsel %vm2658, %v2669, 0.0
      %2671 = vrot.lane.b32.xlu0 %v2617, 121
      %v2672 = vpop.permute.xlu0 %2671
      %vm2674 = vcmask 465920
      %v2675 = vsel %vm2674, %v2672, 0.0
      %v2676 = vsel %vm2645, %v2675, 0.0
      %2677 = vrot.lane.b32.xlu0 %v2617, 120
      %v2678 = vpop.permute.xlu0 %2677
      %vm2680 = vcmask 457728
      %v2681 = vsel %vm2680, %v2678, 0.0
      %2682 = vrot.lane.b32.xlu0 %v2617, 119
      %v2683 = vpop.permute.xlu0 %2682
      %vm2685 = vcmask 449536
      %v2686 = vsel %vm2685, %v2683, 0.0
      %v2687 = vsel %vm2658, %v2686, 0.0
      %v2689 = vrot.slane %v2651, 4
      %v2692 = vrot.slane %v2664, 4
      %v2695 = vrot.slane %v2670, 4
      %v2698 = vrot.slane %v2681, 4
      %v2700 = vsel %vm1943, %v2646, %v2689
      %v2701 = vsel %vm1943, %v2659, %v2692
      %v2702 = vsel %vm1943, %v2617, %v2695
      %v2703 = vsel %vm1943, %v2676, %v2698
      %v2704 = vpack.c.bf16 %v2701, %v2700
      %v2705 = vpack.c.bf16 %v2703, %v2702
      %v2706 = vpack.c.bf16 %v2687, %v2687
      %2708 = vset.pattern.permute.xlu0 0
      %2709 = vperm.xlu0 %2708, %v2623
      %v2710 = vpop.permute.xlu0 %2709
      %v2713 = vsel %vm2148, %v2622, 0
      %v2716 = vsel %vm1949, %v2706, 0
      %2718 = vmatprep.subr.bf16.mxu0 0
      %2719 = vmatpush1.bf16.msra.mxu0 %v2704
      %2720 = vmatprep.subr.bf16.mxu0 0
      %2721 = vmatpush1.bf16.msra.mxu0 %v2705
      %2722 = vmatprep.subr.bf16.mxu0 0
      %2723 = vmatpush1.bf16.msra.mxu0 %v2716
      %2724 = vmatprep.subr.bf16.mxu0 0
      %2725 = vmatpush1.bf16.msra.mxu0 0
      %2726 = vmatprep.subr.bf16.mxu0 0
      %2727 = vmatpush1.bf16.msra.mxu0 0
      %2728 = vmatprep.subr.bf16.mxu0 0
      %2729 = vmatpush1.bf16.msra.mxu0 0
      %2730 = vmatprep.subr.bf16.mxu0 0
      %2731 = vmatpush1.bf16.msra.mxu0 0
      %2732 = vmatprep.subr.bf16.mxu0 0
      %2733 = vmatpush1.bf16.msra.mxu0 0
      %2734 = vmatprep.subr.bf16.mxu0 0
      %2735 = vmatpush1.bf16.msra.mxu0 0
      %2736 = vmatprep.subr.bf16.mxu0 0
      %2737 = vmatpush1.bf16.msra.mxu0 0
      %2738 = vmatprep.subr.bf16.mxu0 0
      %2739 = vmatpush1.bf16.msra.mxu0 0
      %2740 = vmatprep.subr.bf16.mxu0 0
      %2741 = vmatpush1.bf16.msra.mxu0 0
      %2742 = vmatprep.subr.bf16.mxu0 0
      %2743 = vmatpush1.bf16.msra.mxu0 0
      %2744 = vmatprep.subr.bf16.mxu0 0
      %2745 = vmatpush1.bf16.msra.mxu0 0
      %2746 = vmatprep.subr.bf16.mxu0 0
      %2747 = vmatpush1.bf16.msra.mxu0 0
      %2748 = vmatprep.subr.bf16.mxu0 0
      %2749 = vmatpush1.bf16.msra.mxu0 0
      %2750 = vmatprep.mubr.bf16.mxu0 0
      %2751 = vmatmul.mubr.bf16.gmra.mrb[0].mxu0 %v2713
      %v2752 = vpop.f32.mrb[0].mxu0
      %v2753 = vadd.f32 %v2710, %v2752
      %v2754 = vpop.f32.mrb[0].mxu0
      %v2755 = vpop.f32.mrb[0].mxu0
      %v2756 = vpop.f32.mrb[0].mxu0
      %2757 = vdwg.mxu0
      %vm2758 = vcmp.gt.f32.partialorder %v2753, 0.0
      %v2759 = vmin.f32 %v2753, 0.0
      %v2760 = vmul.f32 %v2759, 1.442695
      %v2761 = vpow.pop %v2760
      %v2762 = vsub.f32 %v2761, 1.0
      %v2763 = vsel %vm2758, %v2753, %v2762
      %v2764 = vld [vmem:[%s25] sm:$0x3]
      %v2765 = vld [vmem:[%s27] sm:$0xf]
      %2767 = vrot.lane.b32.xlu0 %v2763, 9
      %v2768 = vpop.permute.xlu0 %2767
      %v2770 = vsel %vm2642, 0.0, %v2768
      %v2771 = vsel %vm2645, %v2770, 0.0
      %2772 = vrot.lane.b32.xlu0 %v2763, 8
      %v2773 = vpop.permute.xlu0 %2772
      %v2775 = vsel %vm2650, 0.0, %v2773
      %2776 = vrot.lane.b32.xlu0 %v2763, 7
      %v2777 = vpop.permute.xlu0 %2776
      %v2779 = vsel %vm2655, 0.0, %v2777
      %v2780 = vsel %vm2658, %v2779, 0.0
      %2781 = vrot.lane.b32.xlu0 %v2763, 1
      %v2782 = vpop.permute.xlu0 %2781
      %v2784 = vsel %vm1850, 0.0, %v2782
      %v2785 = vsel %vm2645, %v2784, 0.0
      %2786 = vrot.lane.b32.xlu0 %v2763, 127
      %v2787 = vpop.permute.xlu0 %2786
      %v2789 = vsel %vm2668, %v2787, 0.0
      %v2790 = vsel %vm2658, %v2789, 0.0
      %2791 = vrot.lane.b32.xlu0 %v2763, 121
      %v2792 = vpop.permute.xlu0 %2791
      %v2794 = vsel %vm2674, %v2792, 0.0
      %v2795 = vsel %vm2645, %v2794, 0.0
      %2796 = vrot.lane.b32.xlu0 %v2763, 120
      %v2797 = vpop.permute.xlu0 %2796
      %v2799 = vsel %vm2680, %v2797, 0.0
      %2800 = vrot.lane.b32.xlu0 %v2763, 119
      %v2801 = vpop.permute.xlu0 %2800
      %v2803 = vsel %vm2685, %v2801, 0.0
      %v2804 = vsel %vm2658, %v2803, 0.0
      %v2806 = vrot.slane %v2775, 4
      %v2809 = vrot.slane %v2785, 4
      %v2812 = vrot.slane %v2790, 4
      %v2815 = vrot.slane %v2799, 4
      %v2817 = vsel %vm1943, %v2771, %v2806
      %v2818 = vsel %vm1943, %v2780, %v2809
      %v2819 = vsel %vm1943, %v2763, %v2812
      %v2820 = vsel %vm1943, %v2795, %v2815
      %v2821 = vpack.c.bf16 %v2818, %v2817
      %v2822 = vpack.c.bf16 %v2820, %v2819
      %v2823 = vpack.c.bf16 %v2804, %v2804
      %2825 = vset.pattern.permute.xlu0 0
      %2826 = vperm.xlu0 %2825, %v2765
      %v2827 = vpop.permute.xlu0 %2826
      %v2830 = vsel %vm2148, %v2764, 0
      %v2833 = vsel %vm1949, %v2823, 0
      %2835 = vmatprep.subr.bf16.mxu0 0
      %2836 = vmatpush1.bf16.msra.mxu0 %v2821
      %2837 = vmatprep.subr.bf16.mxu0 0
      %2838 = vmatpush1.bf16.msra.mxu0 %v2822
      %2839 = vmatprep.subr.bf16.mxu0 0
      %2840 = vmatpush1.bf16.msra.mxu0 %v2833
      %2841 = vmatprep.subr.bf16.mxu0 0
      %2842 = vmatpush1.bf16.msra.mxu0 0
      %2843 = vmatprep.subr.bf16.mxu0 0
      %2844 = vmatpush1.bf16.msra.mxu0 0
      %2845 = vmatprep.subr.bf16.mxu0 0
      %2846 = vmatpush1.bf16.msra.mxu0 0
      %2847 = vmatprep.subr.bf16.mxu0 0
      %2848 = vmatpush1.bf16.msra.mxu0 0
      %2849 = vmatprep.subr.bf16.mxu0 0
      %2850 = vmatpush1.bf16.msra.mxu0 0
      %2851 = vmatprep.subr.bf16.mxu0 0
      %2852 = vmatpush1.bf16.msra.mxu0 0
      %2853 = vmatprep.subr.bf16.mxu0 0
      %2854 = vmatpush1.bf16.msra.mxu0 0
      %2855 = vmatprep.subr.bf16.mxu0 0
      %2856 = vmatpush1.bf16.msra.mxu0 0
      %2857 = vmatprep.subr.bf16.mxu0 0
      %2858 = vmatpush1.bf16.msra.mxu0 0
      %2859 = vmatprep.subr.bf16.mxu0 0
      %2860 = vmatpush1.bf16.msra.mxu0 0
      %2861 = vmatprep.subr.bf16.mxu0 0
      %2862 = vmatpush1.bf16.msra.mxu0 0
      %2863 = vmatprep.subr.bf16.mxu0 0
      %2864 = vmatpush1.bf16.msra.mxu0 0
      %2865 = vmatprep.subr.bf16.mxu0 0
      %2866 = vmatpush1.bf16.msra.mxu0 0
      %2867 = vmatprep.mubr.bf16.mxu0 0
      %2868 = vmatmul.mubr.bf16.gmra.mrb[0].mxu0 %v2830
      %v2869 = vpop.f32.mrb[0].mxu0
      %v2870 = vadd.f32 %v2827, %v2869
      %v2871 = vpop.f32.mrb[0].mxu0
      %v2872 = vpop.f32.mrb[0].mxu0
      %v2873 = vpop.f32.mrb[0].mxu0
      %2874 = vdwg.mxu0
      %vm2875 = vcmp.gt.f32.partialorder %v2870, 0.0
      %v2876 = vmin.f32 %v2870, 0.0
      %v2877 = vmul.f32 %v2876, 1.442695
      %v2878 = vpow.pop %v2877
      %v2879 = vsub.f32 %v2878, 1.0
      %v2880 = vsel %vm2875, %v2870, %v2879
      %v2881 = vld [vmem:[%s29] sm:$0xf]
      %v2882 = vld [vmem:[%s31] sm:$0xff]
      %v2883 = vpack.c.bf16 %v2880, %v2880
      %2885 = vset.pattern.permute.xlu0 0
      %2886 = vperm.xlu0 %2885, %v2882
      %v2887 = vpop.permute.xlu0 %2886
      %v2890 = vsel %vm2401, %v2881, 0
      %v2893 = vsel %vm1949, %v2883, 0
      %2895 = vmatprep.subr.bf16.mxu0 0
      %2896 = vmatpush1.bf16.msra.mxu0 %v2893
      %2897 = vmatprep.subr.bf16.mxu0 0
      %2898 = vmatpush1.bf16.msra.mxu0 0
      %2899 = vmatprep.subr.bf16.mxu0 0
      %2900 = vmatpush1.bf16.msra.mxu0 0
      %2901 = vmatprep.subr.bf16.mxu0 0
      %2902 = vmatpush1.bf16.msra.mxu0 0
      %2903 = vmatprep.subr.bf16.mxu0 0
      %2904 = vmatpush1.bf16.msra.mxu0 0
      %2905 = vmatprep.subr.bf16.mxu0 0
      %2906 = vmatpush1.bf16.msra.mxu0 0
      %2907 = vmatprep.subr.bf16.mxu0 0
      %2908 = vmatpush1.bf16.msra.mxu0 0
      %2909 = vmatprep.subr.bf16.mxu0 0
      %2910 = vmatpush1.bf16.msra.mxu0 0
      %2911 = vmatprep.subr.bf16.mxu0 0
      %2912 = vmatpush1.bf16.msra.mxu0 0
      %2913 = vmatprep.subr.bf16.mxu0 0
      %2914 = vmatpush1.bf16.msra.mxu0 0
      %2915 = vmatprep.subr.bf16.mxu0 0
      %2916 = vmatpush1.bf16.msra.mxu0 0
      %2917 = vmatprep.subr.bf16.mxu0 0
      %2918 = vmatpush1.bf16.msra.mxu0 0
      %2919 = vmatprep.subr.bf16.mxu0 0
      %2920 = vmatpush1.bf16.msra.mxu0 0
      %2921 = vmatprep.subr.bf16.mxu0 0
      %2922 = vmatpush1.bf16.msra.mxu0 0
      %2923 = vmatprep.subr.bf16.mxu0 0
      %2924 = vmatpush1.bf16.msra.mxu0 0
      %2925 = vmatprep.subr.bf16.mxu0 0
      %2926 = vmatpush1.bf16.msra.mxu0 0
      %2927 = vmatprep.mubr.bf16.mxu0 0
      %2928 = vmatmul.mubr.bf16.gmra.mrb[0].mxu0 %v2890
      %v2929 = vpop.f32.mrb[0].mxu0
      %v2930 = vadd.f32 %v2887, %v2929
      %v2931 = vpop.f32.mrb[0].mxu0
      %v2932 = vpop.f32.mrb[0].mxu0
      %v2933 = vpop.f32.mrb[0].mxu0
      %2934 = vdwg.mxu0
      %v2935 = vld [vmem:[%s33] sm:$0xf]
      %v2936 = vld [vmem:[%s33 + $0x4] sm:$0xf]
      %v2937 = vld [vmem:[%s33 + $0x8] sm:$0xf]
      %v2938 = vld [vmem:[%s33 + $0xc] sm:$0xf]
      %v2939 = vld [vmem:[%s33 + $0x10] sm:$0xf]
      %v2940 = vld [vmem:[%s33 + $0x14] sm:$0xf]
      %v2941 = vld [vmem:[%s33 + $0x18] sm:$0xf]
      %v2942 = vld [vmem:[%s33 + $0x1c] sm:$0xf]
      %v2943 = vpack.c.bf16 %v2930, %v2930
      %v2952 = vunpack.c.l.b16 %v2935
      %v2953 = vunpack.c.l.b16 %v2936
      %v2954 = vunpack.c.l.b16 %v2937
      %v2955 = vunpack.c.l.b16 %v2938
      %v2956 = vunpack.c.l.b16 %v2939
      %v2957 = vunpack.c.l.b16 %v2940
      %v2958 = vunpack.c.l.b16 %v2941
      %v2959 = vunpack.c.l.b16 %v2942
      %v2960 = vpack.c.b16 %v2953, %v2952
      %v2961 = vpack.c.b16 %v2955, %v2954
      %v2962 = vpack.c.b16 %v2957, %v2956
      %v2963 = vpack.c.b16 %v2959, %v2958
      %vm2968 = vcmask 523264
      %v2970 = vsel %vm2968, %v2943, 0
      %2972 = vmatprep.subr.bf16.mxu0 0
      %2973 = vmatpush1.bf16.msra.mxu0 %v2960
      %2974 = vmatprep.subr.bf16.mxu0 0
      %2975 = vmatpush1.bf16.msra.mxu0 %v2961
      %2976 = vmatprep.subr.bf16.mxu0 0
      %2977 = vmatpush1.bf16.msra.mxu0 %v2962
      %2978 = vmatprep.subr.bf16.mxu0 0
      %2979 = vmatpush1.bf16.msra.mxu0 %v2963
      %2980 = vmatprep.subr.bf16.mxu0 0
      %2981 = vmatpush1.bf16.msra.mxu0 0
      %2982 = vmatprep.subr.bf16.mxu0 0
      %2983 = vmatpush1.bf16.msra.mxu0 0
      %2984 = vmatprep.subr.bf16.mxu0 0
      %2985 = vmatpush1.bf16.msra.mxu0 0
      %2986 = vmatprep.subr.bf16.mxu0 0
      %2987 = vmatpush1.bf16.msra.mxu0 0
      %2988 = vmatprep.subr.bf16.mxu0 0
      %2989 = vmatpush1.bf16.msra.mxu0 0
      %2990 = vmatprep.subr.bf16.mxu0 0
      %2991 = vmatpush1.bf16.msra.mxu0 0
      %2992 = vmatprep.subr.bf16.mxu0 0
      %2993 = vmatpush1.bf16.msra.mxu0 0
      %2994 = vmatprep.subr.bf16.mxu0 0
      %2995 = vmatpush1.bf16.msra.mxu0 0
      %2996 = vmatprep.subr.bf16.mxu0 0
      %2997 = vmatpush1.bf16.msra.mxu0 0
      %2998 = vmatprep.subr.bf16.mxu0 0
      %2999 = vmatpush1.bf16.msra.mxu0 0
      %3000 = vmatprep.subr.bf16.mxu0 0
      %3001 = vmatpush1.bf16.msra.mxu0 0
      %3002 = vmatprep.subr.bf16.mxu0 0
      %3003 = vmatpush1.bf16.msra.mxu0 0
      %3004 = vmatprep.mubr.bf16.mxu0 0
      %3005 = vmatmul.mubr.bf16.gmra.mrb[0].mxu0 %v2970
      %v3006 = vpop.f32.mrb[0].mxu0
      %v3007 = vadd.f32 0.0, %v3006
      %v3008 = vpop.f32.mrb[0].mxu0
      %v3009 = vpop.f32.mrb[0].mxu0
      %v3010 = vpop.f32.mrb[0].mxu0
      %3011 = vdwg.mxu0
      %v3012 = vld [vmem:[%s35] sm:$0xf]
      %v3013 = vld [vmem:[%s37] sm:$0xff]
      %vm3014 = vcmp.lt.s32.totalorder %v1776, 0
      %v3015 = vsub.s32 0, %v1776
      %v3016 = vsel %vm3014, %v3015, %v1776
      %v3017 = vshrl.u32 %v3016, 2
      %v3018 = vand.u32 %v3016, 3
      %v3019 = vsub.s32 0, %v3018
      %v3020 = vsel %vm3014, %v3019, %v3018
      %vm3021 = vcmp.ne.s32.totalorder %v3020, 0
      %vm3022 = vcmp.lt.s32.totalorder %v3020, 0
      %vm3023 = vmand %vm3022, %vm3021
      %v3024 = vadd.s32 %v3020, 4
      %v3025 = vsel %vm3023, %v3024, %v3020
      %vm3026 = vcmp.ge.s32.totalorder %v3025, 1
      %vm3027 = vcmp.lt.s32.totalorder %v3025, 3
      %3029 = vrot.lane.b32.xlu0 %v3007, 5
      %v3030 = vpop.permute.xlu0 %3029
      %vm3032 = vcmask 39936
      %v3033 = vsel %vm3032, 0.0, %v3030
      %v3034 = vsel %vm3026, 1, 0
      %vm3035 = vcmp.eq.s32.totalorder %v3034, 1
      %v3036 = vsel %vm3035, %v3033, 0.0
      %3037 = vrot.lane.b32.xlu0 %v3007, 4
      %v3038 = vpop.permute.xlu0 %3037
      %v3040 = vsel %vm2401, 0.0, %v3038
      %3041 = vrot.lane.b32.xlu0 %v3007, 3
      %v3042 = vpop.permute.xlu0 %3041
      %vm3044 = vcmask 23552
      %v3045 = vsel %vm3044, 0.0, %v3042
      %v3046 = vsel %vm3027, 1, 0
      %vm3047 = vcmp.eq.s32.totalorder %v3046, 1
      %v3048 = vsel %vm3047, %v3045, 0.0
      %3049 = vrot.lane.b32.xlu0 %v3007, 1
      %v3050 = vpop.permute.xlu0 %3049
      %v3052 = vsel %vm1850, 0.0, %v3050
      %v3053 = vsel %vm3035, %v3052, 0.0
      %3054 = vrot.lane.b32.xlu0 %v3007, 127
      %v3055 = vpop.permute.xlu0 %3054
      %v3057 = vsel %vm1835, %v3055, 0.0
      %v3058 = vsel %vm3047, %v3057, 0.0
      %3059 = vrot.lane.b32.xlu0 %v3007, 125
      %v3060 = vpop.permute.xlu0 %3059
      %vm3062 = vcmask 105472
      %v3063 = vsel %vm3062, %v3060, 0.0
      %v3064 = vsel %vm3035, %v3063, 0.0
      %3065 = vrot.lane.b32.xlu0 %v3007, 124
      %v3066 = vpop.permute.xlu0 %3065
      %vm3068 = vcmask 97280
      %v3069 = vsel %vm3068, %v3066, 0.0
      %3070 = vrot.lane.b32.xlu0 %v3007, 123
      %v3071 = vpop.permute.xlu0 %3070
      %vm3073 = vcmask 89088
      %v3074 = vsel %vm3073, %v3071, 0.0
      %v3075 = vsel %vm3047, %v3074, 0.0
      %v3076 = vpack.c.bf16 %v3040, %v3036
      %v3077 = vpack.c.bf16 %v3053, %v3048
      %v3078 = vpack.c.bf16 %v3058, %v3007
      %v3079 = vpack.c.bf16 %v3069, %v3064
      %v3080 = vpack.c.bf16 %v3075, %v3075
      %3082 = vset.pattern.permute.xlu0 0
      %3083 = vperm.xlu0 %3082, %v3013
      %v3084 = vpop.permute.xlu0 %3083
      %vm3086 = vcmask 588800
      %v3088 = vsel %vm3086, %v3012, 0
      %v3091 = vsel %vm1943, %v3080, 0
      %3093 = vmatprep.subr.bf16.mxu0 0
      %3094 = vmatpush1.bf16.msra.mxu0 %v3076
      %3095 = vmatprep.subr.bf16.mxu0 0
      %3096 = vmatpush1.bf16.msra.mxu0 %v3077
      %3097 = vmatprep.subr.bf16.mxu0 0
      %3098 = vmatpush1.bf16.msra.mxu0 %v3078
      %3099 = vmatprep.subr.bf16.mxu0 0
      %3100 = vmatpush1.bf16.msra.mxu0 %v3079
      %3101 = vmatprep.subr.bf16.mxu0 0
      %3102 = vmatpush1.bf16.msra.mxu0 %v3091
      %3103 = vmatprep.subr.bf16.mxu0 0
      %3104 = vmatpush1.bf16.msra.mxu0 0
      %3105 = vmatprep.subr.bf16.mxu0 0
      %3106 = vmatpush1.bf16.msra.mxu0 0
      %3107 = vmatprep.subr.bf16.mxu0 0
      %3108 = vmatpush1.bf16.msra.mxu0 0
      %3109 = vmatprep.subr.bf16.mxu0 0
      %3110 = vmatpush1.bf16.msra.mxu0 0
      %3111 = vmatprep.subr.bf16.mxu0 0
      %3112 = vmatpush1.bf16.msra.mxu0 0
      %3113 = vmatprep.subr.bf16.mxu0 0
      %3114 = vmatpush1.bf16.msra.mxu0 0
      %3115 = vmatprep.subr.bf16.mxu0 0
      %3116 = vmatpush1.bf16.msra.mxu0 0
      %3117 = vmatprep.subr.bf16.mxu0 0
      %3118 = vmatpush1.bf16.msra.mxu0 0
      %3119 = vmatprep.subr.bf16.mxu0 0
      %3120 = vmatpush1.bf16.msra.mxu0 0
      %3121 = vmatprep.subr.bf16.mxu0 0
      %3122 = vmatpush1.bf16.msra.mxu0 0
      %3123 = vmatprep.subr.bf16.mxu0 0
      %3124 = vmatpush1.bf16.msra.mxu0 0
      %3125 = vmatprep.mubr.bf16.mxu0 0
      %3126 = vmatmul.mubr.bf16.gmra.mrb[0].mxu0 %v3088
      %v3127 = vpop.f32.mrb[0].mxu0
      %v3128 = vadd.f32 %v3084, %v3127
      %v3129 = vpop.f32.mrb[0].mxu0
      %v3130 = vpop.f32.mrb[0].mxu0
      %v3131 = vpop.f32.mrb[0].mxu0
      %3132 = vdwg.mxu0
      %vm3133 = vcmp.gt.f32.partialorder %v3128, 0.0
      %v3134 = vmin.f32 %v3128, 0.0
      %v3135 = vmul.f32 %v3134, 1.442695
      %v3136 = vpow.pop %v3135
      %v3137 = vsub.f32 %v3136, 1.0
      %v3138 = vsel %vm3133, %v3128, %v3137
      %v3139 = vld [vmem:[%s39] sm:$0xf]
      %v3140 = vld [vmem:[%s41] sm:$0xff]
      %3142 = vrot.lane.b32.xlu0 %v3138, 5
      %v3143 = vpop.permute.xlu0 %3142
      %v3145 = vsel %vm3032, 0.0, %v3143
      %v3146 = vsel %vm3035, %v3145, 0.0
      %3147 = vrot.lane.b32.xlu0 %v3138, 4
      %v3148 = vpop.permute.xlu0 %3147
      %v3150 = vsel %vm2401, 0.0, %v3148
      %3151 = vrot.lane.b32.xlu0 %v3138, 3
      %v3152 = vpop.permute.xlu0 %3151
      %v3154 = vsel %vm3044, 0.0, %v3152
      %v3155 = vsel %vm3047, %v3154, 0.0
      %3156 = vrot.lane.b32.xlu0 %v3138, 1
      %v3157 = vpop.permute.xlu0 %3156
      %v3159 = vsel %vm1850, 0.0, %v3157
      %v3160 = vsel %vm3035, %v3159, 0.0
      %3161 = vrot.lane.b32.xlu0 %v3138, 127
      %v3162 = vpop.permute.xlu0 %3161
      %v3164 = vsel %vm1835, %v3162, 0.0
      %v3165 = vsel %vm3047, %v3164, 0.0
      %3166 = vrot.lane.b32.xlu0 %v3138, 125
      %v3167 = vpop.permute.xlu0 %3166
      %v3169 = vsel %vm3062, %v3167, 0.0
      %v3170 = vsel %vm3035, %v3169, 0.0
      %3171 = vrot.lane.b32.xlu0 %v3138, 124
      %v3172 = vpop.permute.xlu0 %3171
      %v3174 = vsel %vm3068, %v3172, 0.0
      %3175 = vrot.lane.b32.xlu0 %v3138, 123
      %v3176 = vpop.permute.xlu0 %3175
      %v3178 = vsel %vm3073, %v3176, 0.0
      %v3179 = vsel %vm3047, %v3178, 0.0
      %v3180 = vpack.c.bf16 %v3150, %v3146
      %v3181 = vpack.c.bf16 %v3160, %v3155
      %v3182 = vpack.c.bf16 %v3165, %v3138
      %v3183 = vpack.c.bf16 %v3174, %v3170
      %v3184 = vpack.c.bf16 %v3179, %v3179
      %3186 = vset.pattern.permute.xlu0 0
      %3187 = vperm.xlu0 %3186, %v3140
      %v3188 = vpop.permute.xlu0 %3187
      %v3191 = vsel %vm3086, %v3139, 0
      %v3194 = vsel %vm1943, %v3184, 0
      %3196 = vmatprep.subr.bf16.mxu0 0
      %3197 = vmatpush1.bf16.msra.mxu0 %v3180
      %3198 = vmatprep.subr.bf16.mxu0 0
      %3199 = vmatpush1.bf16.msra.mxu0 %v3181
      %3200 = vmatprep.subr.bf16.mxu0 0
      %3201 = vmatpush1.bf16.msra.mxu0 %v3182
      %3202 = vmatprep.subr.bf16.mxu0 0
      %3203 = vmatpush1.bf16.msra.mxu0 %v3183
      %3204 = vmatprep.subr.bf16.mxu0 0
      %3205 = vmatpush1.bf16.msra.mxu0 %v3194
      %3206 = vmatprep.subr.bf16.mxu0 0
      %3207 = vmatpush1.bf16.msra.mxu0 0
      %3208 = vmatprep.subr.bf16.mxu0 0
      %3209 = vmatpush1.bf16.msra.mxu0 0
      %3210 = vmatprep.subr.bf16.mxu0 0
      %3211 = vmatpush1.bf16.msra.mxu0 0
      %3212 = vmatprep.subr.bf16.mxu0 0
      %3213 = vmatpush1.bf16.msra.mxu0 0
      %3214 = vmatprep.subr.bf16.mxu0 0
      %3215 = vmatpush1.bf16.msra.mxu0 0
      %3216 = vmatprep.subr.bf16.mxu0 0
      %3217 = vmatpush1.bf16.msra.mxu0 0
      %3218 = vmatprep.subr.bf16.mxu0 0
      %3219 = vmatpush1.bf16.msra.mxu0 0
      %3220 = vmatprep.subr.bf16.mxu0 0
      %3221 = vmatpush1.bf16.msra.mxu0 0
      %3222 = vmatprep.subr.bf16.mxu0 0
      %3223 = vmatpush1.bf16.msra.mxu0 0
      %3224 = vmatprep.subr.bf16.mxu0 0
      %3225 = vmatpush1.bf16.msra.mxu0 0
      %3226 = vmatprep.subr.bf16.mxu0 0
      %3227 = vmatpush1.bf16.msra.mxu0 0
      %3228 = vmatprep.mubr.bf16.mxu0 0
      %3229 = vmatmul.mubr.bf16.gmra.mrb[0].mxu0 %v3191
      %v3230 = vpop.f32.mrb[0].mxu0
      %v3231 = vadd.f32 %v3188, %v3230
      %v3232 = vpop.f32.mrb[0].mxu0
      %v3233 = vpop.f32.mrb[0].mxu0
      %v3234 = vpop.f32.mrb[0].mxu0
      %3235 = vdwg.mxu0
      %vm3236 = vcmp.gt.f32.partialorder %v3231, 0.0
      %v3237 = vmin.f32 %v3231, 0.0
      %v3238 = vmul.f32 %v3237, 1.442695
      %v3239 = vpow.pop %v3238
      %v3240 = vsub.f32 %v3239, 1.0
      %v3241 = vsel %vm3236, %v3231, %v3240
      %v3242 = vld [vmem:[%s43] sm:$0xf]
      %v3243 = vld [vmem:[%s43 + $0x4] sm:$0x3]
      %v3244 = vld [vmem:[%s45] sm:$0xff]
      %v3245 = vld [vmem:[%s45 + $0x8] sm:$0xf]
      %v3246 = vpack.c.bf16 %v3241, %v3241
      %3248 = vset.pattern.permute.xlu0 0
      %3249 = vperm.xlu0 %3248, %v3244
      %v3250 = vpop.permute.xlu0 %3249
      %3253 = vset.pattern.permute.xlu0 0
      %3254 = vperm.xlu0 %3253, %v3245
      %v3255 = vpop.permute.xlu0 %3254
      %v3259 = vunpack.c.l.b16 %v3242
      %v3260 = vunpack.c.l.b16 %v3243
      %v3261 = vpack.c.b16 %v3260, %v3259
      %v3263 = vsel %vm2650, %v3261, 0
      %v3266 = vsel %vm1943, %v3246, 0
      %3268 = vmatprep.subr.bf16.mxu0 0
      %3269 = vmatpush1.bf16.msra.mxu0 %v3266
      %3270 = vmatprep.subr.bf16.mxu0 0
      %3271 = vmatpush1.bf16.msra.mxu0 0
      %3272 = vmatprep.subr.bf16.mxu0 0
      %3273 = vmatpush1.bf16.msra.mxu0 0
      %3274 = vmatprep.subr.bf16.mxu0 0
      %3275 = vmatpush1.bf16.msra.mxu0 0
      %3276 = vmatprep.subr.bf16.mxu0 0
      %3277 = vmatpush1.bf16.msra.mxu0 0
      %3278 = vmatprep.subr.bf16.mxu0 0
      %3279 = vmatpush1.bf16.msra.mxu0 0
      %3280 = vmatprep.subr.bf16.mxu0 0
      %3281 = vmatpush1.bf16.msra.mxu0 0
      %3282 = vmatprep.subr.bf16.mxu0 0
      %3283 = vmatpush1.bf16.msra.mxu0 0
      %3284 = vmatprep.subr.bf16.mxu0 0
      %3285 = vmatpush1.bf16.msra.mxu0 0
      %3286 = vmatprep.subr.bf16.mxu0 0
      %3287 = vmatpush1.bf16.msra.mxu0 0
      %3288 = vmatprep.subr.bf16.mxu0 0
      %3289 = vmatpush1.bf16.msra.mxu0 0
      %3290 = vmatprep.subr.bf16.mxu0 0
      %3291 = vmatpush1.bf16.msra.mxu0 0
      %3292 = vmatprep.subr.bf16.mxu0 0
      %3293 = vmatpush1.bf16.msra.mxu0 0
      %3294 = vmatprep.subr.bf16.mxu0 0
      %3295 = vmatpush1.bf16.msra.mxu0 0
      %3296 = vmatprep.subr.bf16.mxu0 0
      %3297 = vmatpush1.bf16.msra.mxu0 0
      %3298 = vmatprep.subr.bf16.mxu0 0
      %3299 = vmatpush1.bf16.msra.mxu0 0
      %3300 = vmatprep.mubr.bf16.mxu0 0
      %3301 = vmatmul.mubr.bf16.gmra.mrb[0].mxu0 %v3263
      %v3302 = vpop.f32.mrb[0].mxu0
      %v3303 = vadd.f32 %v3250, %v3302
      %v3304 = vpop.f32.mrb[0].mxu0
      %v3305 = vpop.f32.mrb[0].mxu0
      %v3306 = vadd.f32 %v3255, %v3305
      %v3307 = vpop.f32.mrb[0].mxu0
      %3308 = vdwg.mxu0
      %v3309 = vld [vmem:[%s47] sm:$0xf]
      %v3310 = vld [vmem:[%s47 + $0x4] sm:$0xf]
      %v3311 = vpack.c.bf16 %v3306, %v3303
      %v3314 = vunpack.c.l.b16 %v3309
      %v3315 = vunpack.c.l.b16 %v3310
      %v3316 = vpack.c.b16 %v3315, %v3314
      %v3319 = vsel %vm1827, %v3311, 0
      %3321 = vmatprep.subr.bf16.mxu0 0
      %3322 = vmatpush1.bf16.msra.mxu0 %v3316
      %3323 = vmatprep.subr.bf16.mxu0 0
      %3324 = vmatpush1.bf16.msra.mxu0 0
      %3325 = vmatprep.subr.bf16.mxu0 0
      %3326 = vmatpush1.bf16.msra.mxu0 0
      %3327 = vmatprep.subr.bf16.mxu0 0
      %3328 = vmatpush1.bf16.msra.mxu0 0
      %3329 = vmatprep.subr.bf16.mxu0 0
      %3330 = vmatpush1.bf16.msra.mxu0 0
      %3331 = vmatprep.subr.bf16.mxu0 0
      %3332 = vmatpush1.bf16.msra.mxu0 0
      %3333 = vmatprep.subr.bf16.mxu0 0
      %3334 = vmatpush1.bf16.msra.mxu0 0
      %3335 = vmatprep.subr.bf16.mxu0 0
      %3336 = vmatpush1.bf16.msra.mxu0 0
      %3337 = vmatprep.subr.bf16.mxu0 0
      %3338 = vmatpush1.bf16.msra.mxu0 0
      %3339 = vmatprep.subr.bf16.mxu0 0
      %3340 = vmatpush1.bf16.msra.mxu0 0
      %3341 = vmatprep.subr.bf16.mxu0 0
      %3342 = vmatpush1.bf16.msra.mxu0 0
      %3343 = vmatprep.subr.bf16.mxu0 0
      %3344 = vmatpush1.bf16.msra.mxu0 0
      %3345 = vmatprep.subr.bf16.mxu0 0
      %3346 = vmatpush1.bf16.msra.mxu0 0
      %3347 = vmatprep.subr.bf16.mxu0 0
      %3348 = vmatpush1.bf16.msra.mxu0 0
      %3349 = vmatprep.subr.bf16.mxu0 0
      %3350 = vmatpush1.bf16.msra.mxu0 0
      %3351 = vmatprep.subr.bf16.mxu0 0
      %3352 = vmatpush1.bf16.msra.mxu0 0
      %3353 = vmatprep.mubr.bf16.mxu0 0
      %3354 = vmatmul.mubr.bf16.gmra.mrb[0].mxu0 %v3319
      %v3355 = vpop.f32.mrb[0].mxu0
      %v3356 = vadd.f32 0.0, %v3355
      %v3357 = vpop.f32.mrb[0].mxu0
      %v3358 = vpop.f32.mrb[0].mxu0
      %v3359 = vadd.f32 0.0, %v3358
      %v3360 = vpop.f32.mrb[0].mxu0
      %3361 = vdwg.mxu0
      %v3362 = vld [vmem:[%s49] sm:$0xf]
      %v3363 = vld [vmem:[%s49 + $0x4] sm:$0x3]
      %v3364 = vld [vmem:[%s51] sm:$0xff]
      %v3365 = vld [vmem:[%s51 + $0x8] sm:$0xf]
      %vm3366 = vcmp.lt.s32.totalorder %v1776, 0
      %v3367 = vsub.s32 0, %v1776
      %v3368 = vsel %vm3366, %v3367, %v1776
      %v3369 = vshrl.u32 %v3368, 1
      %v3370 = vand.u32 %v3368, 1
      %v3371 = vsub.s32 0, %v3370
      %v3372 = vsel %vm3366, %v3371, %v3370
      %vm3373 = vcmp.ne.s32.totalorder %v3372, 0
      %vm3374 = vcmp.lt.s32.totalorder %v3372, 0
      %vm3375 = vmand %vm3374, %vm3373
      %v3376 = vadd.s32 %v3372, 2
      %v3377 = vsel %vm3375, %v3376, %v3372
      %vm3378 = vcmp.ge.s32.totalorder %v3377, 1
      %vm3379 = vcmp.lt.s32.totalorder %v3377, 1
      %3382 = vrot.lane.b32.xlu0 %v3356, 3
      %v3383 = vpop.permute.xlu0 %3382
      %3384 = vrot.lane.b32.xlu0 %v3359, 3
      %v3385 = vpop.permute.xlu0 %3384
      %v3388 = vsel %vm3044, 0.0, %v3383
      %v3389 = vsel %vm3044, 0.0, %v3385
      %v3390 = vsel %vm3378, 1, 0
      %vm3391 = vcmp.eq.s32.totalorder %v3390, 1
      %v3392 = vsel %vm3391, %v3388, 0.0
      %v3393 = vsel %vm3391, %v3389, 0.0
      %3394 = vrot.lane.b32.xlu0 %v3356, 2
      %v3395 = vpop.permute.xlu0 %3394
      %3396 = vrot.lane.b32.xlu0 %v3359, 2
      %v3397 = vpop.permute.xlu0 %3396
      %vm3400 = vcmask 15360
      %v3401 = vsel %vm3400, 0.0, %v3395
      %v3402 = vsel %vm3400, 0.0, %v3397
      %3403 = vrot.lane.b32.xlu0 %v3356, 1
      %v3404 = vpop.permute.xlu0 %3403
      %3405 = vrot.lane.b32.xlu0 %v3359, 1
      %v3406 = vpop.permute.xlu0 %3405
      %v3409 = vsel %vm1850, 0.0, %v3404
      %v3410 = vsel %vm1850, 0.0, %v3406
      %v3411 = vsel %vm3379, 1, 0
      %vm3412 = vcmp.eq.s32.totalorder %v3411, 1
      %v3413 = vsel %vm3412, %v3409, 0.0
      %v3414 = vsel %vm3412, %v3410, 0.0
      %v3415 = vsel %vm3391, %v3409, 0.0
      %v3416 = vsel %vm3391, %v3410, 0.0
      %3417 = vrot.lane.b32.xlu0 %v3356, 127
      %v3418 = vpop.permute.xlu0 %3417
      %3419 = vrot.lane.b32.xlu0 %v3359, 127
      %v3420 = vpop.permute.xlu0 %3419
      %v3423 = vsel %vm3044, %v3418, 0.0
      %v3424 = vsel %vm3044, %v3420, 0.0
      %v3425 = vsel %vm3412, %v3423, 0.0
      %v3426 = vsel %vm3412, %v3424, 0.0
      %v3427 = vsel %vm3391, %v3423, 0.0
      %v3428 = vsel %vm3391, %v3424, 0.0
      %3429 = vrot.lane.b32.xlu0 %v3356, 126
      %v3430 = vpop.permute.xlu0 %3429
      %3431 = vrot.lane.b32.xlu0 %v3359, 126
      %v3432 = vpop.permute.xlu0 %3431
      %v3435 = vsel %vm3400, %v3430, 0.0
      %v3436 = vsel %vm3400, %v3432, 0.0
      %3437 = vrot.lane.b32.xlu0 %v3356, 125
      %v3438 = vpop.permute.xlu0 %3437
      %3439 = vrot.lane.b32.xlu0 %v3359, 125
      %v3440 = vpop.permute.xlu0 %3439
      %v3443 = vsel %vm1850, %v3438, 0.0
      %v3444 = vsel %vm1850, %v3440, 0.0
      %v3445 = vsel %vm3412, %v3443, 0.0
      %v3446 = vsel %vm3412, %v3444, 0.0
      %v3449 = vrot.slane %v3401, 4
      %v3450 = vrot.slane %v3402, 4
      %v3451 = vsel %vm1943, %v3449, %v3450
      %v3456 = vrot.slane %v3415, 4
      %v3457 = vrot.slane %v3416, 4
      %v3458 = vsel %vm1943, %v3456, %v3457
      %v3463 = vrot.slane %v3425, 4
      %v3464 = vrot.slane %v3426, 4
      %v3465 = vsel %vm1943, %v3463, %v3464
      %v3470 = vrot.slane %v3435, 4
      %v3471 = vrot.slane %v3436, 4
      %v3472 = vsel %vm1943, %v3470, %v3471
      %v3475 = vsel %vm1943, %v3393, %v3449
      %v3476 = vsel %vm1943, %v3414, %v3456
      %v3477 = vsel %vm1943, %v3359, %v3463
      %v3478 = vsel %vm1943, %v3428, %v3470
      %v3479 = vpack.c.bf16 %v3475, %v3392
      %v3480 = vpack.c.bf16 %v3413, %v3451
      %v3481 = vpack.c.bf16 %v3458, %v3476
      %v3482 = vpack.c.bf16 %v3477, %v3356
      %v3483 = vpack.c.bf16 %v3427, %v3465
      %v3484 = vpack.c.bf16 %v3472, %v3478
      %v3485 = vpack.c.bf16 %v3446, %v3445
      %3487 = vset.pattern.permute.xlu0 0
      %3488 = vperm.xlu0 %3487, %v3364
      %v3489 = vpop.permute.xlu0 %3488
      %3492 = vset.pattern.permute.xlu0 0
      %3493 = vperm.xlu0 %3492, %v3365
      %v3494 = vpop.permute.xlu0 %3493
      %v3498 = vunpack.c.l.b16 %v3362
      %v3499 = vunpack.c.l.b16 %v3363
      %v3500 = vpack.c.b16 %v3499, %v3498
      %vm3501 = vcmask 883712
      %v3503 = vsel %vm3501, %v3500, 0
      %v3506 = vsel %vm1937, %v3485, 0
      %3508 = vmatprep.subr.bf16.mxu0 0
      %3509 = vmatpush1.bf16.msra.mxu0 %v3479
      %3510 = vmatprep.subr.bf16.mxu0 0
      %3511 = vmatpush1.bf16.msra.mxu0 %v3480
      %3512 = vmatprep.subr.bf16.mxu0 0
      %3513 = vmatpush1.bf16.msra.mxu0 %v3481
      %3514 = vmatprep.subr.bf16.mxu0 0
      %3515 = vmatpush1.bf16.msra.mxu0 %v3482
      %3516 = vmatprep.subr.bf16.mxu0 0
      %3517 = vmatpush1.bf16.msra.mxu0 %v3483
      %3518 = vmatprep.subr.bf16.mxu0 0
      %3519 = vmatpush1.bf16.msra.mxu0 %v3484
      %3520 = vmatprep.subr.bf16.mxu0 0
      %3521 = vmatpush1.bf16.msra.mxu0 %v3506
      %3522 = vmatprep.subr.bf16.mxu0 0
      %3523 = vmatpush1.bf16.msra.mxu0 0
      %3524 = vmatprep.subr.bf16.mxu0 0
      %3525 = vmatpush1.bf16.msra.mxu0 0
      %3526 = vmatprep.subr.bf16.mxu0 0
      %3527 = vmatpush1.bf16.msra.mxu0 0
      %3528 = vmatprep.subr.bf16.mxu0 0
      %3529 = vmatpush1.bf16.msra.mxu0 0
      %3530 = vmatprep.subr.bf16.mxu0 0
      %3531 = vmatpush1.bf16.msra.mxu0 0
      %3532 = vmatprep.subr.bf16.mxu0 0
      %3533 = vmatpush1.bf16.msra.mxu0 0
      %3534 = vmatprep.subr.bf16.mxu0 0
      %3535 = vmatpush1.bf16.msra.mxu0 0
      %3536 = vmatprep.subr.bf16.mxu0 0
      %3537 = vmatpush1.bf16.msra.mxu0 0
      %3538 = vmatprep.subr.bf16.mxu0 0
      %3539 = vmatpush1.bf16.msra.mxu0 0
      %3540 = vmatprep.mubr.bf16.mxu0 0
      %3541 = vmatmul.mubr.bf16.gmra.mrb[0].mxu0 %v3503
      %v3542 = vpop.f32.mrb[0].mxu0
      %v3543 = vadd.f32 %v3489, %v3542
      %v3544 = vpop.f32.mrb[0].mxu0
      %v3545 = vpop.f32.mrb[0].mxu0
      %v3546 = vadd.f32 %v3494, %v3545
      %v3547 = vpop.f32.mrb[0].mxu0
      %3548 = vdwg.mxu0
      %vm3549 = vcmp.gt.f32.partialorder %v3543, 0.0
      %vm3550 = vcmp.gt.f32.partialorder %v3546, 0.0
      %v3551 = vmin.f32 %v3543, 0.0
      %v3552 = vmin.f32 %v3546, 0.0
      %v3553 = vmul.f32 %v3551, 1.442695
      %v3554 = vpow.pop %v3553
      %v3555 = vmul.f32 %v3552, 1.442695
      %v3556 = vpow.pop %v3555
      %v3557 = vsub.f32 %v3554, 1.0
      %v3558 = vsub.f32 %v3556, 1.0
      %v3559 = vsel %vm3549, %v3543, %v3557
      %v3560 = vsel %vm3550, %v3546, %v3558
      %v3561 = vld [vmem:[%s53] sm:$0xf]
      %v3562 = vld [vmem:[%s53 + $0x4] sm:$0x3]
      %v3563 = vld [vmem:[%s55] sm:$0xff]
      %v3564 = vld [vmem:[%s55 + $0x8] sm:$0xf]
      %3567 = vrot.lane.b32.xlu0 %v3559, 3
      %v3568 = vpop.permute.xlu0 %3567
      %3569 = vrot.lane.b32.xlu0 %v3560, 3
      %v3570 = vpop.permute.xlu0 %3569
      %v3573 = vsel %vm3044, 0.0, %v3568
      %v3574 = vsel %vm3044, 0.0, %v3570
      %v3575 = vsel %vm3391, %v3573, 0.0
      %v3576 = vsel %vm3391, %v3574, 0.0
      %3577 = vrot.lane.b32.xlu0 %v3559, 2
      %v3578 = vpop.permute.xlu0 %3577
      %3579 = vrot.lane.b32.xlu0 %v3560, 2
      %v3580 = vpop.permute.xlu0 %3579
      %v3583 = vsel %vm3400, 0.0, %v3578
      %v3584 = vsel %vm3400, 0.0, %v3580
      %3585 = vrot.lane.b32.xlu0 %v3559, 1
      %v3586 = vpop.permute.xlu0 %3585
      %3587 = vrot.lane.b32.xlu0 %v3560, 1
      %v3588 = vpop.permute.xlu0 %3587
      %v3591 = vsel %vm1850, 0.0, %v3586
      %v3592 = vsel %vm1850, 0.0, %v3588
      %v3593 = vsel %vm3412, %v3591, 0.0
      %v3594 = vsel %vm3412, %v3592, 0.0
      %v3595 = vsel %vm3391, %v3591, 0.0
      %v3596 = vsel %vm3391, %v3592, 0.0
      %3597 = vrot.lane.b32.xlu0 %v3559, 127
      %v3598 = vpop.permute.xlu0 %3597
      %3599 = vrot.lane.b32.xlu0 %v3560, 127
      %v3600 = vpop.permute.xlu0 %3599
      %v3603 = vsel %vm3044, %v3598, 0.0
      %v3604 = vsel %vm3044, %v3600, 0.0
      %v3605 = vsel %vm3412, %v3603, 0.0
      %v3606 = vsel %vm3412, %v3604, 0.0
      %v3607 = vsel %vm3391, %v3603, 0.0
      %v3608 = vsel %vm3391, %v3604, 0.0
      %3609 = vrot.lane.b32.xlu0 %v3559, 126
      %v3610 = vpop.permute.xlu0 %3609
      %3611 = vrot.lane.b32.xlu0 %v3560, 126
      %v3612 = vpop.permute.xlu0 %3611
      %v3615 = vsel %vm3400, %v3610, 0.0
      %v3616 = vsel %vm3400, %v3612, 0.0
      %3617 = vrot.lane.b32.xlu0 %v3559, 125
      %v3618 = vpop.permute.xlu0 %3617
      %3619 = vrot.lane.b32.xlu0 %v3560, 125
      %v3620 = vpop.permute.xlu0 %3619
      %v3623 = vsel %vm1850, %v3618, 0.0
      %v3624 = vsel %vm1850, %v3620, 0.0
      %v3625 = vsel %vm3412, %v3623, 0.0
      %v3626 = vsel %vm3412, %v3624, 0.0
      %v3629 = vrot.slane %v3583, 4
      %v3630 = vrot.slane %v3584, 4
      %v3631 = vsel %vm1943, %v3629, %v3630
      %v3636 = vrot.slane %v3595, 4
      %v3637 = vrot.slane %v3596, 4
      %v3638 = vsel %vm1943, %v3636, %v3637
      %v3643 = vrot.slane %v3605, 4
      %v3644 = vrot.slane %v3606, 4
      %v3645 = vsel %vm1943, %v3643, %v3644
      %v3650 = vrot.slane %v3615, 4
      %v3651 = vrot.slane %v3616, 4
      %v3652 = vsel %vm1943, %v3650, %v3651
      %v3655 = vsel %vm1943, %v3576, %v3629
      %v3656 = vsel %vm1943, %v3594, %v3636
      %v3657 = vsel %vm1943, %v3560, %v3643
      %v3658 = vsel %vm1943, %v3608, %v3650
      %v3659 = vpack.c.bf16 %v3655, %v3575
      %v3660 = vpack.c.bf16 %v3593, %v3631
      %v3661 = vpack.c.bf16 %v3638, %v3656
      %v3662 = vpack.c.bf16 %v3657, %v3559
      %v3663 = vpack.c.bf16 %v3607, %v3645
      %v3664 = vpack.c.bf16 %v3652, %v3658
      %v3665 = vpack.c.bf16 %v3626, %v3625
      %3667 = vset.pattern.permute.xlu0 0
      %3668 = vperm.xlu0 %3667, %v3563
      %v3669 = vpop.permute.xlu0 %3668
      %3672 = vset.pattern.permute.xlu0 0
      %3673 = vperm.xlu0 %3672, %v3564
      %v3674 = vpop.permute.xlu0 %3673
      %v3678 = vunpack.c.l.b16 %v3561
      %v3679 = vunpack.c.l.b16 %v3562
      %v3680 = vpack.c.b16 %v3679, %v3678
      %v3682 = vsel %vm3501, %v3680, 0
      %v3685 = vsel %vm1937, %v3665, 0
      %3687 = vmatprep.subr.bf16.mxu0 0
      %3688 = vmatpush1.bf16.msra.mxu0 %v3659
      %3689 = vmatprep.subr.bf16.mxu0 0
      %3690 = vmatpush1.bf16.msra.mxu0 %v3660
      %3691 = vmatprep.subr.bf16.mxu0 0
      %3692 = vmatpush1.bf16.msra.mxu0 %v3661
      %3693 = vmatprep.subr.bf16.mxu0 0
      %3694 = vmatpush1.bf16.msra.mxu0 %v3662
      %3695 = vmatprep.subr.bf16.mxu0 0
      %3696 = vmatpush1.bf16.msra.mxu0 %v3663
      %3697 = vmatprep.subr.bf16.mxu0 0
      %3698 = vmatpush1.bf16.msra.mxu0 %v3664
      %3699 = vmatprep.subr.bf16.mxu0 0
      %3700 = vmatpush1.bf16.msra.mxu0 %v3685
      %3701 = vmatprep.subr.bf16.mxu0 0
      %3702 = vmatpush1.bf16.msra.mxu0 0
      %3703 = vmatprep.subr.bf16.mxu0 0
      %3704 = vmatpush1.bf16.msra.mxu0 0
      %3705 = vmatprep.subr.bf16.mxu0 0
      %3706 = vmatpush1.bf16.msra.mxu0 0
      %3707 = vmatprep.subr.bf16.mxu0 0
      %3708 = vmatpush1.bf16.msra.mxu0 0
      %3709 = vmatprep.subr.bf16.mxu0 0
      %3710 = vmatpush1.bf16.msra.mxu0 0
      %3711 = vmatprep.subr.bf16.mxu0 0
      %3712 = vmatpush1.bf16.msra.mxu0 0
      %3713 = vmatprep.subr.bf16.mxu0 0
      %3714 = vmatpush1.bf16.msra.mxu0 0
      %3715 = vmatprep.subr.bf16.mxu0 0
      %3716 = vmatpush1.bf16.msra.mxu0 0
      %3717 = vmatprep.subr.bf16.mxu0 0
      %3718 = vmatpush1.bf16.msra.mxu0 0
      %3719 = vmatprep.mubr.bf16.mxu0 0
      %3720 = vmatmul.mubr.bf16.gmra.mrb[0].mxu0 %v3682
      %v3721 = vpop.f32.mrb[0].mxu0
      %v3722 = vadd.f32 %v3669, %v3721
      %v3723 = vpop.f32.mrb[0].mxu0
      %v3724 = vpop.f32.mrb[0].mxu0
      %v3725 = vadd.f32 %v3674, %v3724
      %v3726 = vpop.f32.mrb[0].mxu0
      %3727 = vdwg.mxu0
      %vm3728 = vcmp.gt.f32.partialorder %v3722, 0.0
      %vm3729 = vcmp.gt.f32.partialorder %v3725, 0.0
      %v3730 = vmin.f32 %v3722, 0.0
      %v3731 = vmin.f32 %v3725, 0.0
      %v3732 = vmul.f32 %v3730, 1.442695
      %v3733 = vpow.pop %v3732
      %v3734 = vmul.f32 %v3731, 1.442695
      %v3735 = vpow.pop %v3734
      %v3736 = vsub.f32 %v3733, 1.0
      %v3737 = vsub.f32 %v3735, 1.0
      %v3738 = vsel %vm3728, %v3722, %v3736
      %v3739 = vsel %vm3729, %v3725, %v3737
      %v3740 = vld [vmem:[%s57] sm:$0xf]
      %v3741 = vld [vmem:[%s57 + $0x4] sm:$0xf]
      %v3742 = vld [vmem:[%s59] sm:$0xff]
      %v3743 = vld [vmem:[%s59 + $0x8] sm:$0xff]
      %v3744 = vpack.c.bf16 %v3739, %v3738
      %3746 = vset.pattern.permute.xlu0 0
      %3747 = vperm.xlu0 %3746, %v3742
      %v3748 = vpop.permute.xlu0 %3747
      %3751 = vset.pattern.permute.xlu0 0
      %3752 = vperm.xlu0 %3751, %v3743
      %v3753 = vpop.permute.xlu0 %3752
      %v3757 = vunpack.c.l.b16 %v3740
      %v3758 = vunpack.c.l.b16 %v3741
      %v3759 = vpack.c.b16 %v3758, %v3757
      %v3761 = vsel %vm3068, %v3759, 0
      %v3764 = vsel %vm1937, %v3744, 0
      %3766 = vmatprep.subr.bf16.mxu0 0
      %3767 = vmatpush1.bf16.msra.mxu0 %v3764
      %3768 = vmatprep.subr.bf16.mxu0 0
      %3769 = vmatpush1.bf16.msra.mxu0 0
      %3770 = vmatprep.subr.bf16.mxu0 0
      %3771 = vmatpush1.bf16.msra.mxu0 0
      %3772 = vmatprep.subr.bf16.mxu0 0
      %3773 = vmatpush1.bf16.msra.mxu0 0
      %3774 = vmatprep.subr.bf16.mxu0 0
      %3775 = vmatpush1.bf16.msra.mxu0 0
      %3776 = vmatprep.subr.bf16.mxu0 0
      %3777 = vmatpush1.bf16.msra.mxu0 0
      %3778 = vmatprep.subr.bf16.mxu0 0
      %3779 = vmatpush1.bf16.msra.mxu0 0
      %3780 = vmatprep.subr.bf16.mxu0 0
      %3781 = vmatpush1.bf16.msra.mxu0 0
      %3782 = vmatprep.subr.bf16.mxu0 0
      %3783 = vmatpush1.bf16.msra.mxu0 0
      %3784 = vmatprep.subr.bf16.mxu0 0
      %3785 = vmatpush1.bf16.msra.mxu0 0
      %3786 = vmatprep.subr.bf16.mxu0 0
      %3787 = vmatpush1.bf16.msra.mxu0 0
      %3788 = vmatprep.subr.bf16.mxu0 0
      %3789 = vmatpush1.bf16.msra.mxu0 0
      %3790 = vmatprep.subr.bf16.mxu0 0
      %3791 = vmatpush1.bf16.msra.mxu0 0
      %3792 = vmatprep.subr.bf16.mxu0 0
      %3793 = vmatpush1.bf16.msra.mxu0 0
      %3794 = vmatprep.subr.bf16.mxu0 0
      %3795 = vmatpush1.bf16.msra.mxu0 0
      %3796 = vmatprep.subr.bf16.mxu0 0
      %3797 = vmatpush1.bf16.msra.mxu0 0
      %3798 = vmatprep.mubr.bf16.mxu0 0
      %3799 = vmatmul.mubr.bf16.gmra.mrb[0].mxu0 %v3761
      %v3800 = vpop.f32.mrb[0].mxu0
      %v3801 = vadd.f32 %v3748, %v3800
      %v3802 = vpop.f32.mrb[0].mxu0
      %v3803 = vpop.f32.mrb[0].mxu0
      %v3804 = vadd.f32 %v3753, %v3803
      %v3805 = vpop.f32.mrb[0].mxu0
      %3806 = vdwg.mxu0
      %v3807 = vld [vmem:[%s61] sm:$0x3]
      %v3808 = vpack.c.bf16 %v3804, %v3801
      %v3810 = vsel %vm2401, %v3808, 0
      %v3813 = vsel %vm1949, %v3807, 0
      %3815 = vmatprep.subr.bf16.mxu0 0
      %3816 = vmatpush1.bf16.msra.mxu0 %v3813
      %3817 = vmatprep.subr.bf16.mxu0 0
      %3818 = vmatpush1.bf16.msra.mxu0 0
      %3819 = vmatprep.subr.bf16.mxu0 0
      %3820 = vmatpush1.bf16.msra.mxu0 0
      %3821 = vmatprep.subr.bf16.mxu0 0
      %3822 = vmatpush1.bf16.msra.mxu0 0
      %3823 = vmatprep.subr.bf16.mxu0 0
      %3824 = vmatpush1.bf16.msra.mxu0 0
      %3825 = vmatprep.subr.bf16.mxu0 0
      %3826 = vmatpush1.bf16.msra.mxu0 0
      %3827 = vmatprep.subr.bf16.mxu0 0
      %3828 = vmatpush1.bf16.msra.mxu0 0
      %3829 = vmatprep.subr.bf16.mxu0 0
      %3830 = vmatpush1.bf16.msra.mxu0 0
      %3831 = vmatprep.subr.bf16.mxu0 0
      %3832 = vmatpush1.bf16.msra.mxu0 0
      %3833 = vmatprep.subr.bf16.mxu0 0
      %3834 = vmatpush1.bf16.msra.mxu0 0
      %3835 = vmatprep.subr.bf16.mxu0 0
      %3836 = vmatpush1.bf16.msra.mxu0 0
      %3837 = vmatprep.subr.bf16.mxu0 0
      %3838 = vmatpush1.bf16.msra.mxu0 0
      %3839 = vmatprep.subr.bf16.mxu0 0
      %3840 = vmatpush1.bf16.msra.mxu0 0
      %3841 = vmatprep.subr.bf16.mxu0 0
      %3842 = vmatpush1.bf16.msra.mxu0 0
      %3843 = vmatprep.subr.bf16.mxu0 0
      %3844 = vmatpush1.bf16.msra.mxu0 0
      %3845 = vmatprep.subr.bf16.mxu0 0
      %3846 = vmatpush1.bf16.msra.mxu0 0
      %3847 = vmatprep.mubr.bf16.mxu0 0
      %3848 = vmatmul.mubr.bf16.gmra.mrb[0].mxu0 %v3810
      %v3849 = vpop.f32.mrb[0].mxu0
      %v3850 = vadd.f32 0.0, %v3849
      %v3851 = vpop.f32.mrb[0].mxu0
      %v3852 = vpop.f32.mrb[0].mxu0
      %v3853 = vadd.f32 0.0, %v3852
      %v3854 = vpop.f32.mrb[0].mxu0
      %3855 = vdwg.mxu0
      %v3856 = vld [vmem:[%s65] sm:$0xff]
      %v3857 = vpack.c.bf16 %v3853, %v3850
      %v3858 = vld [vmem:[%s63] sm:$0xf]
      %v3860 = vsel %vm1827, %v3858, 0
      %3862 = vmatprep.subr.bf16.mxu0 0
      %3863 = vmatpush1.bf16.msra.mxu0 %v3857
      %3864 = vmatprep.subr.bf16.mxu0 0
      %3865 = vmatpush1.bf16.msra.mxu0 0
      %3866 = vmatprep.subr.bf16.mxu0 0
      %3867 = vmatpush1.bf16.msra.mxu0 0
      %3868 = vmatprep.subr.bf16.mxu0 0
      %3869 = vmatpush1.bf16.msra.mxu0 0
      %3870 = vmatprep.subr.bf16.mxu0 0
      %3871 = vmatpush1.bf16.msra.mxu0 0
      %3872 = vmatprep.subr.bf16.mxu0 0
      %3873 = vmatpush1.bf16.msra.mxu0 0
      %3874 = vmatprep.subr.bf16.mxu0 0
      %3875 = vmatpush1.bf16.msra.mxu0 0
      %3876 = vmatprep.subr.bf16.mxu0 0
      %3877 = vmatpush1.bf16.msra.mxu0 0
      %3878 = vmatprep.subr.bf16.mxu0 0
      %3879 = vmatpush1.bf16.msra.mxu0 0
      %3880 = vmatprep.subr.bf16.mxu0 0
      %3881 = vmatpush1.bf16.msra.mxu0 0
      %3882 = vmatprep.subr.bf16.mxu0 0
      %3883 = vmatpush1.bf16.msra.mxu0 0
      %3884 = vmatprep.subr.bf16.mxu0 0
      %3885 = vmatpush1.bf16.msra.mxu0 0
      %3886 = vmatprep.subr.bf16.mxu0 0
      %3887 = vmatpush1.bf16.msra.mxu0 0
      %3888 = vmatprep.subr.bf16.mxu0 0
      %3889 = vmatpush1.bf16.msra.mxu0 0
      %3890 = vmatprep.subr.bf16.mxu0 0
      %3891 = vmatpush1.bf16.msra.mxu0 0
      %3892 = vmatprep.subr.bf16.mxu0 0
      %3893 = vmatpush1.bf16.msra.mxu0 0
      %3894 = vmatprep.mubr.bf16.mxu0 0
      %3895 = vmatmul.mubr.bf16.gmra.mrb[0].mxu0 %v3860
      %v3896 = vpop.f32.mrb[0].mxu0
      %v3897 = vadd.f32 0.0, %v3896
      %v3898 = vpop.f32.mrb[0].mxu0
      %v3899 = vpop.f32.mrb[0].mxu0
      %v3900 = vpop.f32.mrb[0].mxu0
      %3901 = vdwg.mxu0
      %v3902 = vadd.f32 %v3856, %v3897
      %v3903 = vld [vmem:[%s69] sm:$0xf]
      %v3904 = vpack.c.bf16 %v3902, %v3902
      %v3905 = vld [vmem:[%s67] sm:$0x3]
      %v3907 = vsel %vm2650, %v3905, 0
      %v3910 = vsel %vm1943, %v3904, 0
      %3912 = vmatprep.subr.bf16.mxu0 0
      %3913 = vmatpush1.bf16.msra.mxu0 %v3910
      %3914 = vmatprep.subr.bf16.mxu0 0
      %3915 = vmatpush1.bf16.msra.mxu0 0
      %3916 = vmatprep.subr.bf16.mxu0 0
      %3917 = vmatpush1.bf16.msra.mxu0 0
      %3918 = vmatprep.subr.bf16.mxu0 0
      %3919 = vmatpush1.bf16.msra.mxu0 0
      %3920 = vmatprep.subr.bf16.mxu0 0
      %3921 = vmatpush1.bf16.msra.mxu0 0
      %3922 = vmatprep.subr.bf16.mxu0 0
      %3923 = vmatpush1.bf16.msra.mxu0 0
      %3924 = vmatprep.subr.bf16.mxu0 0
      %3925 = vmatpush1.bf16.msra.mxu0 0
      %3926 = vmatprep.subr.bf16.mxu0 0
      %3927 = vmatpush1.bf16.msra.mxu0 0
      %3928 = vmatprep.subr.bf16.mxu0 0
      %3929 = vmatpush1.bf16.msra.mxu0 0
      %3930 = vmatprep.subr.bf16.mxu0 0
      %3931 = vmatpush1.bf16.msra.mxu0 0
      %3932 = vmatprep.subr.bf16.mxu0 0
      %3933 = vmatpush1.bf16.msra.mxu0 0
      %3934 = vmatprep.subr.bf16.mxu0 0
      %3935 = vmatpush1.bf16.msra.mxu0 0
      %3936 = vmatprep.subr.bf16.mxu0 0
      %3937 = vmatpush1.bf16.msra.mxu0 0
      %3938 = vmatprep.subr.bf16.mxu0 0
      %3939 = vmatpush1.bf16.msra.mxu0 0
      %3940 = vmatprep.subr.bf16.mxu0 0
      %3941 = vmatpush1.bf16.msra.mxu0 0
      %3942 = vmatprep.subr.bf16.mxu0 0
      %3943 = vmatpush1.bf16.msra.mxu0 0
      %3944 = vmatprep.mubr.bf16.mxu0 0
      %3945 = vmatmul.mubr.bf16.gmra.mrb[0].mxu0 %v3907
      %v3946 = vpop.f32.mrb[0].mxu0
      %v3947 = vadd.f32 %v3903, %v3946
      %v3948 = vpop.f32.mrb[0].mxu0
      %v3949 = vpop.f32.mrb[0].mxu0
      %v3950 = vpop.f32.mrb[0].mxu0
      %3951 = vdwg.mxu0
      %v3952 = vld [vmem:[%s71] sm:$0x3]
      %v3953 = vld [vmem:[%s73] sm:$0xf]
      %v3954 = vsel %vm1943, %v3947, 0.0
      %v3955 = vpack.c.bf16 0.0, 0.0
      %v3956 = vpack.c.bf16 0.0, %v3954
      %v3958 = vsel %vm2148, %v3952, 0
      %v3961 = vsel %vm1949, %v3955, 0
      %3963 = vmatprep.subr.bf16.mxu0 0
      %3964 = vmatpush1.bf16.msra.mxu0 %v3955
      %3965 = vmatprep.subr.bf16.mxu0 0
      %3966 = vmatpush1.bf16.msra.mxu0 %v3956
      %3967 = vmatprep.subr.bf16.mxu0 0
      %3968 = vmatpush1.bf16.msra.mxu0 %v3961
      %3969 = vmatprep.subr.bf16.mxu0 0
      %3970 = vmatpush1.bf16.msra.mxu0 0
      %3971 = vmatprep.subr.bf16.mxu0 0
      %3972 = vmatpush1.bf16.msra.mxu0 0
      %3973 = vmatprep.subr.bf16.mxu0 0
      %3974 = vmatpush1.bf16.msra.mxu0 0
      %3975 = vmatprep.subr.bf16.mxu0 0
      %3976 = vmatpush1.bf16.msra.mxu0 0
      %3977 = vmatprep.subr.bf16.mxu0 0
      %3978 = vmatpush1.bf16.msra.mxu0 0
      %3979 = vmatprep.subr.bf16.mxu0 0
      %3980 = vmatpush1.bf16.msra.mxu0 0
      %3981 = vmatprep.subr.bf16.mxu0 0
      %3982 = vmatpush1.bf16.msra.mxu0 0
      %3983 = vmatprep.subr.bf16.mxu0 0
      %3984 = vmatpush1.bf16.msra.mxu0 0
      %3985 = vmatprep.subr.bf16.mxu0 0
      %3986 = vmatpush1.bf16.msra.mxu0 0
      %3987 = vmatprep.subr.bf16.mxu0 0
      %3988 = vmatpush1.bf16.msra.mxu0 0
      %3989 = vmatprep.subr.bf16.mxu0 0
      %3990 = vmatpush1.bf16.msra.mxu0 0
      %3991 = vmatprep.subr.bf16.mxu0 0
      %3992 = vmatpush1.bf16.msra.mxu0 0
      %3993 = vmatprep.subr.bf16.mxu0 0
      %3994 = vmatpush1.bf16.msra.mxu0 0
      %3995 = vmatprep.mubr.bf16.mxu0 0
      %3996 = vmatmul.mubr.bf16.gmra.mrb[0].mxu0 %v3958
      %v3997 = vpop.f32.mrb[0].mxu0
      %v3998 = vadd.f32 %v3953, %v3997
      %v3999 = vpop.f32.mrb[0].mxu0
      %v4000 = vpop.f32.mrb[0].mxu0
      %v4001 = vpop.f32.mrb[0].mxu0
      %4002 = vdwg.mxu0
      %vm4003 = vcmp.gt.f32.partialorder %v3998, 0.0
      %v4004 = vmin.f32 %v3998, 0.0
      %v4005 = vmul.f32 %v4004, 1.442695
      %v4006 = vpow.pop %v4005
      %v4007 = vsub.f32 %v4006, 1.0
      %v4008 = vsel %vm4003, %v3998, %v4007
      %v4009 = vld [vmem:[%s75] sm:$0x3]
      %v4010 = vld [vmem:[%s77] sm:$0xf]
      %v4011 = vsel %vm1943, %v4008, 0.0
      %v4012 = vpack.c.bf16 0.0, %v4011
      %v4014 = vsel %vm2148, %v4009, 0
      %4016 = vmatprep.subr.bf16.mxu0 0
      %4017 = vmatpush1.bf16.msra.mxu0 %v3955
      %4018 = vmatprep.subr.bf16.mxu0 0
      %4019 = vmatpush1.bf16.msra.mxu0 %v4012
      %4020 = vmatprep.subr.bf16.mxu0 0
      %4021 = vmatpush1.bf16.msra.mxu0 %v3961
      %4022 = vmatprep.subr.bf16.mxu0 0
      %4023 = vmatpush1.bf16.msra.mxu0 0
      %4024 = vmatprep.subr.bf16.mxu0 0
      %4025 = vmatpush1.bf16.msra.mxu0 0
      %4026 = vmatprep.subr.bf16.mxu0 0
      %4027 = vmatpush1.bf16.msra.mxu0 0
      %4028 = vmatprep.subr.bf16.mxu0 0
      %4029 = vmatpush1.bf16.msra.mxu0 0
      %4030 = vmatprep.subr.bf16.mxu0 0
      %4031 = vmatpush1.bf16.msra.mxu0 0
      %4032 = vmatprep.subr.bf16.mxu0 0
      %4033 = vmatpush1.bf16.msra.mxu0 0
      %4034 = vmatprep.subr.bf16.mxu0 0
      %4035 = vmatpush1.bf16.msra.mxu0 0
      %4036 = vmatprep.subr.bf16.mxu0 0
      %4037 = vmatpush1.bf16.msra.mxu0 0
      %4038 = vmatprep.subr.bf16.mxu0 0
      %4039 = vmatpush1.bf16.msra.mxu0 0
      %4040 = vmatprep.subr.bf16.mxu0 0
      %4041 = vmatpush1.bf16.msra.mxu0 0
      %4042 = vmatprep.subr.bf16.mxu0 0
      %4043 = vmatpush1.bf16.msra.mxu0 0
      %4044 = vmatprep.subr.bf16.mxu0 0
      %4045 = vmatpush1.bf16.msra.mxu0 0
      %4046 = vmatprep.subr.bf16.mxu0 0
      %4047 = vmatpush1.bf16.msra.mxu0 0
      %4048 = vmatprep.mubr.bf16.mxu0 0
      %4049 = vmatmul.mubr.bf16.gmra.mrb[0].mxu0 %v4014
      %v4050 = vpop.f32.mrb[0].mxu0
      %v4051 = vadd.f32 %v4010, %v4050
      %v4052 = vpop.f32.mrb[0].mxu0
      %v4053 = vpop.f32.mrb[0].mxu0
      %v4054 = vpop.f32.mrb[0].mxu0
      %4055 = vdwg.mxu0
      %vm4056 = vcmp.gt.f32.partialorder %v4051, 0.0
      %v4057 = vmin.f32 %v4051, 0.0
      %v4058 = vmul.f32 %v4057, 1.442695
      %v4059 = vpow.pop %v4058
      %v4060 = vsub.f32 %v4059, 1.0
      %v4061 = vsel %vm4056, %v4051, %v4060
      %4063 = vrot.lane.b32.xlu0 %v4061, 1
      %v4064 = vpop.permute.xlu0 %4063
      %4066 = vrot.lane.b32.xlu0 %v4061, 2
      %v4067 = vpop.permute.xlu0 %4066
      %4069 = vrot.lane.b32.xlu0 %v4061, 3
      %v4070 = vpop.permute.xlu0 %4069
      %v4072 = vsel %vm1850, %v4061, %v4064
      %v4073 = vsel %vm3400, %v4072, %v4067
      %v4074 = vsel %vm3044, %v4073, %v4070
      %v4075 = vld [vmem:[%s79] sm:$0x3]
      %v4076 = vld [vmem:[%s81] sm:$0xf]
      %4078 = vrot.lane.b32.xlu0 %v4074, 3
      %v4079 = vpop.permute.xlu0 %4078
      %v4081 = vsel %vm3044, 0.0, %v4079
      %v4082 = vsel %vm3391, %v4081, 0.0
      %4083 = vrot.lane.b32.xlu0 %v4074, 2
      %v4084 = vpop.permute.xlu0 %4083
      %v4086 = vsel %vm3400, 0.0, %v4084
      %4087 = vrot.lane.b32.xlu0 %v4074, 1
      %v4088 = vpop.permute.xlu0 %4087
      %v4090 = vsel %vm1850, 0.0, %v4088
      %v4091 = vsel %vm3412, %v4090, 0.0
      %v4092 = vsel %vm3391, %v4090, 0.0
      %4093 = vrot.lane.b32.xlu0 %v4074, 127
      %v4094 = vpop.permute.xlu0 %4093
      %v4096 = vsel %vm3044, %v4094, 0.0
      %v4097 = vsel %vm3412, %v4096, 0.0
      %v4098 = vsel %vm3391, %v4096, 0.0
      %4099 = vrot.lane.b32.xlu0 %v4074, 126
      %v4100 = vpop.permute.xlu0 %4099
      %v4102 = vsel %vm3400, %v4100, 0.0
      %4103 = vrot.lane.b32.xlu0 %v4074, 125
      %v4104 = vpop.permute.xlu0 %4103
      %v4106 = vsel %vm1850, %v4104, 0.0
      %v4107 = vsel %vm3412, %v4106, 0.0
      %v4109 = vrot.slane %v4086, 4
      %v4112 = vrot.slane %v4092, 4
      %v4115 = vrot.slane %v4097, 4
      %v4118 = vrot.slane %v4102, 4
      %v4120 = vsel %vm1943, %v4082, %v4109
      %v4121 = vsel %vm1943, %v4091, %v4112
      %v4122 = vsel %vm1943, %v4074, %v4115
      %v4123 = vsel %vm1943, %v4098, %v4118
      %v4124 = vpack.c.bf16 %v4121, %v4120
      %v4125 = vpack.c.bf16 %v4123, %v4122
      %v4126 = vpack.c.bf16 %v4107, %v4107
      %4128 = vset.pattern.permute.xlu0 0
      %4129 = vperm.xlu0 %4128, %v4076
      %v4130 = vpop.permute.xlu0 %4129
      %v4133 = vsel %vm2148, %v4075, 0
      %v4136 = vsel %vm1949, %v4126, 0
      %4138 = vmatprep.subr.bf16.mxu0 0
      %4139 = vmatpush1.bf16.msra.mxu0 %v4124
      %4140 = vmatprep.subr.bf16.mxu0 0
      %4141 = vmatpush1.bf16.msra.mxu0 %v4125
      %4142 = vmatprep.subr.bf16.mxu0 0
      %4143 = vmatpush1.bf16.msra.mxu0 %v4136
      %4144 = vmatprep.subr.bf16.mxu0 0
      %4145 = vmatpush1.bf16.msra.mxu0 0
      %4146 = vmatprep.subr.bf16.mxu0 0
      %4147 = vmatpush1.bf16.msra.mxu0 0
      %4148 = vmatprep.subr.bf16.mxu0 0
      %4149 = vmatpush1.bf16.msra.mxu0 0
      %4150 = vmatprep.subr.bf16.mxu0 0
      %4151 = vmatpush1.bf16.msra.mxu0 0
      %4152 = vmatprep.subr.bf16.mxu0 0
      %4153 = vmatpush1.bf16.msra.mxu0 0
      %4154 = vmatprep.subr.bf16.mxu0 0
      %4155 = vmatpush1.bf16.msra.mxu0 0
      %4156 = vmatprep.subr.bf16.mxu0 0
      %4157 = vmatpush1.bf16.msra.mxu0 0
      %4158 = vmatprep.subr.bf16.mxu0 0
      %4159 = vmatpush1.bf16.msra.mxu0 0
      %4160 = vmatprep.subr.bf16.mxu0 0
      %4161 = vmatpush1.bf16.msra.mxu0 0
      %4162 = vmatprep.subr.bf16.mxu0 0
      %4163 = vmatpush1.bf16.msra.mxu0 0
      %4164 = vmatprep.subr.bf16.mxu0 0
      %4165 = vmatpush1.bf16.msra.mxu0 0
      %4166 = vmatprep.subr.bf16.mxu0 0
      %4167 = vmatpush1.bf16.msra.mxu0 0
      %4168 = vmatprep.subr.bf16.mxu0 0
      %4169 = vmatpush1.bf16.msra.mxu0 0
      %4170 = vmatprep.mubr.bf16.mxu0 0
      %4171 = vmatmul.mubr.bf16.gmra.mrb[0].mxu0 %v4133
      %v4172 = vpop.f32.mrb[0].mxu0
      %v4173 = vadd.f32 %v4130, %v4172
      %v4174 = vpop.f32.mrb[0].mxu0
      %v4175 = vpop.f32.mrb[0].mxu0
      %v4176 = vpop.f32.mrb[0].mxu0
      %4177 = vdwg.mxu0
      %vm4178 = vcmp.gt.f32.partialorder %v4173, 0.0
      %v4179 = vmin.f32 %v4173, 0.0
      %v4180 = vmul.f32 %v4179, 1.442695
      %v4181 = vpow.pop %v4180
      %v4182 = vsub.f32 %v4181, 1.0
      %v4183 = vsel %vm4178, %v4173, %v4182
      %v4184 = vld [vmem:[%s83] sm:$0x3]
      %v4185 = vld [vmem:[%s85] sm:$0xf]
      %4187 = vrot.lane.b32.xlu0 %v4183, 3
      %v4188 = vpop.permute.xlu0 %4187
      %v4190 = vsel %vm3044, 0.0, %v4188
      %v4191 = vsel %vm3391, %v4190, 0.0
      %4192 = vrot.lane.b32.xlu0 %v4183, 2
      %v4193 = vpop.permute.xlu0 %4192
      %v4195 = vsel %vm3400, 0.0, %v4193
      %4196 = vrot.lane.b32.xlu0 %v4183, 1
      %v4197 = vpop.permute.xlu0 %4196
      %v4199 = vsel %vm1850, 0.0, %v4197
      %v4200 = vsel %vm3412, %v4199, 0.0
      %v4201 = vsel %vm3391, %v4199, 0.0
      %4202 = vrot.lane.b32.xlu0 %v4183, 127
      %v4203 = vpop.permute.xlu0 %4202
      %v4205 = vsel %vm3044, %v4203, 0.0
      %v4206 = vsel %vm3412, %v4205, 0.0
      %v4207 = vsel %vm3391, %v4205, 0.0
      %4208 = vrot.lane.b32.xlu0 %v4183, 126
      %v4209 = vpop.permute.xlu0 %4208
      %v4211 = vsel %vm3400, %v4209, 0.0
      %4212 = vrot.lane.b32.xlu0 %v4183, 125
      %v4213 = vpop.permute.xlu0 %4212
      %v4215 = vsel %vm1850, %v4213, 0.0
      %v4216 = vsel %vm3412, %v4215, 0.0
      %v4218 = vrot.slane %v4195, 4
      %v4221 = vrot.slane %v4201, 4
      %v4224 = vrot.slane %v4206, 4
      %v4227 = vrot.slane %v4211, 4
      %v4229 = vsel %vm1943, %v4191, %v4218
      %v4230 = vsel %vm1943, %v4200, %v4221
      %v4231 = vsel %vm1943, %v4183, %v4224
      %v4232 = vsel %vm1943, %v4207, %v4227
      %v4233 = vpack.c.bf16 %v4230, %v4229
      %v4234 = vpack.c.bf16 %v4232, %v4231
      %v4235 = vpack.c.bf16 %v4216, %v4216
      %4237 = vset.pattern.permute.xlu0 0
      %4238 = vperm.xlu0 %4237, %v4185
      %v4239 = vpop.permute.xlu0 %4238
      %v4242 = vsel %vm2148, %v4184, 0
      %v4245 = vsel %vm1949, %v4235, 0
      %4247 = vmatprep.subr.bf16.mxu0 0
      %4248 = vmatpush1.bf16.msra.mxu0 %v4233
      %4249 = vmatprep.subr.bf16.mxu0 0
      %4250 = vmatpush1.bf16.msra.mxu0 %v4234
      %4251 = vmatprep.subr.bf16.mxu0 0
      %4252 = vmatpush1.bf16.msra.mxu0 %v4245
      %4253 = vmatprep.subr.bf16.mxu0 0
      %4254 = vmatpush1.bf16.msra.mxu0 0
      %4255 = vmatprep.subr.bf16.mxu0 0
      %4256 = vmatpush1.bf16.msra.mxu0 0
      %4257 = vmatprep.subr.bf16.mxu0 0
      %4258 = vmatpush1.bf16.msra.mxu0 0
      %4259 = vmatprep.subr.bf16.mxu0 0
      %4260 = vmatpush1.bf16.msra.mxu0 0
      %4261 = vmatprep.subr.bf16.mxu0 0
      %4262 = vmatpush1.bf16.msra.mxu0 0
      %4263 = vmatprep.subr.bf16.mxu0 0
      %4264 = vmatpush1.bf16.msra.mxu0 0
      %4265 = vmatprep.subr.bf16.mxu0 0
      %4266 = vmatpush1.bf16.msra.mxu0 0
      %4267 = vmatprep.subr.bf16.mxu0 0
      %4268 = vmatpush1.bf16.msra.mxu0 0
      %4269 = vmatprep.subr.bf16.mxu0 0
      %4270 = vmatpush1.bf16.msra.mxu0 0
      %4271 = vmatprep.subr.bf16.mxu0 0
      %4272 = vmatpush1.bf16.msra.mxu0 0
      %4273 = vmatprep.subr.bf16.mxu0 0
      %4274 = vmatpush1.bf16.msra.mxu0 0
      %4275 = vmatprep.subr.bf16.mxu0 0
      %4276 = vmatpush1.bf16.msra.mxu0 0
      %4277 = vmatprep.subr.bf16.mxu0 0
      %4278 = vmatpush1.bf16.msra.mxu0 0
      %4279 = vmatprep.mubr.bf16.mxu0 0
      %4280 = vmatmul.mubr.bf16.gmra.mrb[0].mxu0 %v4242
      %v4281 = vpop.f32.mrb[0].mxu0
      %v4282 = vadd.f32 %v4239, %v4281
      %v4283 = vpop.f32.mrb[0].mxu0
      %v4284 = vpop.f32.mrb[0].mxu0
      %v4285 = vpop.f32.mrb[0].mxu0
      %4286 = vdwg.mxu0
      %vm4287 = vcmp.gt.f32.partialorder %v4282, 0.0
      %v4288 = vmin.f32 %v4282, 0.0
      %v4289 = vmul.f32 %v4288, 1.442695
      %v4290 = vpow.pop %v4289
      %v4291 = vsub.f32 %v4290, 1.0
      %v4292 = vsel %vm4287, %v4282, %v4291
      %v4293 = vld [vmem:[%s87] sm:$0x3]
      %v4294 = vpack.c.bf16 %v4292, %v4292
      %v4296 = vsel %vm2401, %v4294, 0
      %v4299 = vsel %vm1949, %v4293, 0
      %4301 = vmatprep.subr.bf16.mxu0 0
      %4302 = vmatpush1.bf16.msra.mxu0 %v4299
      %4303 = vmatprep.subr.bf16.mxu0 0
      %4304 = vmatpush1.bf16.msra.mxu0 0
      %4305 = vmatprep.subr.bf16.mxu0 0
      %4306 = vmatpush1.bf16.msra.mxu0 0
      %4307 = vmatprep.subr.bf16.mxu0 0
      %4308 = vmatpush1.bf16.msra.mxu0 0
      %4309 = vmatprep.subr.bf16.mxu0 0
      %4310 = vmatpush1.bf16.msra.mxu0 0
      %4311 = vmatprep.subr.bf16.mxu0 0
      %4312 = vmatpush1.bf16.msra.mxu0 0
      %4313 = vmatprep.subr.bf16.mxu0 0
      %4314 = vmatpush1.bf16.msra.mxu0 0
      %4315 = vmatprep.subr.bf16.mxu0 0
      %4316 = vmatpush1.bf16.msra.mxu0 0
      %4317 = vmatprep.subr.bf16.mxu0 0
      %4318 = vmatpush1.bf16.msra.mxu0 0
      %4319 = vmatprep.subr.bf16.mxu0 0
      %4320 = vmatpush1.bf16.msra.mxu0 0
      %4321 = vmatprep.subr.bf16.mxu0 0
      %4322 = vmatpush1.bf16.msra.mxu0 0
      %4323 = vmatprep.subr.bf16.mxu0 0
      %4324 = vmatpush1.bf16.msra.mxu0 0
      %4325 = vmatprep.subr.bf16.mxu0 0
      %4326 = vmatpush1.bf16.msra.mxu0 0
      %4327 = vmatprep.subr.bf16.mxu0 0
      %4328 = vmatpush1.bf16.msra.mxu0 0
      %4329 = vmatprep.subr.bf16.mxu0 0
      %4330 = vmatpush1.bf16.msra.mxu0 0
      %4331 = vmatprep.subr.bf16.mxu0 0
      %4332 = vmatpush1.bf16.msra.mxu0 0
      %4333 = vmatprep.mubr.bf16.mxu0 0
      %4334 = vmatmul.mubr.bf16.gmra.mrb[0].mxu0 %v4296
      %v4335 = vpop.f32.mrb[0].mxu0
      %v4336 = vadd.f32 0.0, %v4335
      %v4337 = vpop.f32.mrb[0].mxu0
      %v4338 = vpop.f32.mrb[0].mxu0
      %v4339 = vpop.f32.mrb[0].mxu0
      %4340 = vdwg.mxu0
      %v4341 = vld [vmem:[%s89] sm:$0x3]
      %v4342 = vld [vmem:[%s91] sm:$0xf]
      %4344 = vrot.lane.b32.xlu0 %v4336, 5
      %v4345 = vpop.permute.xlu0 %4344
      %v4347 = vsel %vm3032, 0.0, %v4345
      %v4348 = vsel %vm3035, %v4347, 0.0
      %4349 = vrot.lane.b32.xlu0 %v4336, 4
      %v4350 = vpop.permute.xlu0 %4349
      %v4352 = vsel %vm2401, 0.0, %v4350
      %4353 = vrot.lane.b32.xlu0 %v4336, 3
      %v4354 = vpop.permute.xlu0 %4353
      %v4356 = vsel %vm3044, 0.0, %v4354
      %v4357 = vsel %vm3047, %v4356, 0.0
      %4358 = vrot.lane.b32.xlu0 %v4336, 1
      %v4359 = vpop.permute.xlu0 %4358
      %v4361 = vsel %vm1850, 0.0, %v4359
      %v4362 = vsel %vm3035, %v4361, 0.0
      %4363 = vrot.lane.b32.xlu0 %v4336, 127
      %v4364 = vpop.permute.xlu0 %4363
      %v4366 = vsel %vm1835, %v4364, 0.0
      %v4367 = vsel %vm3047, %v4366, 0.0
      %4368 = vrot.lane.b32.xlu0 %v4336, 125
      %v4369 = vpop.permute.xlu0 %4368
      %v4371 = vsel %vm3062, %v4369, 0.0
      %v4372 = vsel %vm3035, %v4371, 0.0
      %4373 = vrot.lane.b32.xlu0 %v4336, 124
      %v4374 = vpop.permute.xlu0 %4373
      %v4376 = vsel %vm3068, %v4374, 0.0
      %4377 = vrot.lane.b32.xlu0 %v4336, 123
      %v4378 = vpop.permute.xlu0 %4377
      %v4380 = vsel %vm3073, %v4378, 0.0
      %v4381 = vsel %vm3047, %v4380, 0.0
      %v4383 = vrot.slane %v4352, 4
      %v4386 = vrot.slane %v4362, 4
      %v4389 = vrot.slane %v4367, 4
      %v4392 = vrot.slane %v4376, 4
      %v4394 = vsel %vm1943, %v4348, %v4383
      %v4395 = vsel %vm1943, %v4357, %v4386
      %v4396 = vsel %vm1943, %v4336, %v4389
      %v4397 = vsel %vm1943, %v4372, %v4392
      %v4398 = vpack.c.bf16 %v4395, %v4394
      %v4399 = vpack.c.bf16 %v4397, %v4396
      %v4400 = vpack.c.bf16 %v4381, %v4381
      %4402 = vset.pattern.permute.xlu0 0
      %4403 = vperm.xlu0 %4402, %v4342
      %v4404 = vpop.permute.xlu0 %4403
      %v4407 = vsel %vm2148, %v4341, 0
      %v4410 = vsel %vm1949, %v4400, 0
      %4412 = vmatprep.subr.bf16.mxu0 0
      %4413 = vmatpush1.bf16.msra.mxu0 %v4398
      %4414 = vmatprep.subr.bf16.mxu0 0
      %4415 = vmatpush1.bf16.msra.mxu0 %v4399
      %4416 = vmatprep.subr.bf16.mxu0 0
      %4417 = vmatpush1.bf16.msra.mxu0 %v4410
      %4418 = vmatprep.subr.bf16.mxu0 0
      %4419 = vmatpush1.bf16.msra.mxu0 0
      %4420 = vmatprep.subr.bf16.mxu0 0
      %4421 = vmatpush1.bf16.msra.mxu0 0
      %4422 = vmatprep.subr.bf16.mxu0 0
      %4423 = vmatpush1.bf16.msra.mxu0 0
      %4424 = vmatprep.subr.bf16.mxu0 0
      %4425 = vmatpush1.bf16.msra.mxu0 0
      %4426 = vmatprep.subr.bf16.mxu0 0
      %4427 = vmatpush1.bf16.msra.mxu0 0
      %4428 = vmatprep.subr.bf16.mxu0 0
      %4429 = vmatpush1.bf16.msra.mxu0 0
      %4430 = vmatprep.subr.bf16.mxu0 0
      %4431 = vmatpush1.bf16.msra.mxu0 0
      %4432 = vmatprep.subr.bf16.mxu0 0
      %4433 = vmatpush1.bf16.msra.mxu0 0
      %4434 = vmatprep.subr.bf16.mxu0 0
      %4435 = vmatpush1.bf16.msra.mxu0 0
      %4436 = vmatprep.subr.bf16.mxu0 0
      %4437 = vmatpush1.bf16.msra.mxu0 0
      %4438 = vmatprep.subr.bf16.mxu0 0
      %4439 = vmatpush1.bf16.msra.mxu0 0
      %4440 = vmatprep.subr.bf16.mxu0 0
      %4441 = vmatpush1.bf16.msra.mxu0 0
      %4442 = vmatprep.subr.bf16.mxu0 0
      %4443 = vmatpush1.bf16.msra.mxu0 0
      %4444 = vmatprep.mubr.bf16.mxu0 0
      %4445 = vmatmul.mubr.bf16.gmra.mrb[0].mxu0 %v4407
      %v4446 = vpop.f32.mrb[0].mxu0
      %v4447 = vadd.f32 %v4404, %v4446
      %v4448 = vpop.f32.mrb[0].mxu0
      %v4449 = vpop.f32.mrb[0].mxu0
      %v4450 = vpop.f32.mrb[0].mxu0
      %4451 = vdwg.mxu0
      %vm4452 = vcmp.gt.f32.partialorder %v4447, 0.0
      %v4453 = vmin.f32 %v4447, 0.0
      %v4454 = vmul.f32 %v4453, 1.442695
      %v4455 = vpow.pop %v4454
      %v4456 = vsub.f32 %v4455, 1.0
      %v4457 = vsel %vm4452, %v4447, %v4456
      %v4458 = vld [vmem:[%s93] sm:$0x3]
      %v4459 = vld [vmem:[%s95] sm:$0xf]
      %4461 = vrot.lane.b32.xlu0 %v4457, 5
      %v4462 = vpop.permute.xlu0 %4461
      %v4464 = vsel %vm3032, 0.0, %v4462
      %v4465 = vsel %vm3035, %v4464, 0.0
      %4466 = vrot.lane.b32.xlu0 %v4457, 4
      %v4467 = vpop.permute.xlu0 %4466
      %v4469 = vsel %vm2401, 0.0, %v4467
      %4470 = vrot.lane.b32.xlu0 %v4457, 3
      %v4471 = vpop.permute.xlu0 %4470
      %v4473 = vsel %vm3044, 0.0, %v4471
      %v4474 = vsel %vm3047, %v4473, 0.0
      %4475 = vrot.lane.b32.xlu0 %v4457, 1
      %v4476 = vpop.permute.xlu0 %4475
      %v4478 = vsel %vm1850, 0.0, %v4476
      %v4479 = vsel %vm3035, %v4478, 0.0
      %4480 = vrot.lane.b32.xlu0 %v4457, 127
      %v4481 = vpop.permute.xlu0 %4480
      %v4483 = vsel %vm1835, %v4481, 0.0
      %v4484 = vsel %vm3047, %v4483, 0.0
      %4485 = vrot.lane.b32.xlu0 %v4457, 125
      %v4486 = vpop.permute.xlu0 %4485
      %v4488 = vsel %vm3062, %v4486, 0.0
      %v4489 = vsel %vm3035, %v4488, 0.0
      %4490 = vrot.lane.b32.xlu0 %v4457, 124
      %v4491 = vpop.permute.xlu0 %4490
      %v4493 = vsel %vm3068, %v4491, 0.0
      %4494 = vrot.lane.b32.xlu0 %v4457, 123
      %v4495 = vpop.permute.xlu0 %4494
      %v4497 = vsel %vm3073, %v4495, 0.0
      %v4498 = vsel %vm3047, %v4497, 0.0
      %v4500 = vrot.slane %v4469, 4
      %v4503 = vrot.slane %v4479, 4
      %v4506 = vrot.slane %v4484, 4
      %v4509 = vrot.slane %v4493, 4
      %v4511 = vsel %vm1943, %v4465, %v4500
      %v4512 = vsel %vm1943, %v4474, %v4503
      %v4513 = vsel %vm1943, %v4457, %v4506
      %v4514 = vsel %vm1943, %v4489, %v4509
      %v4515 = vpack.c.bf16 %v4512, %v4511
      %v4516 = vpack.c.bf16 %v4514, %v4513
      %v4517 = vpack.c.bf16 %v4498, %v4498
      %4519 = vset.pattern.permute.xlu0 0
      %4520 = vperm.xlu0 %4519, %v4459
      %v4521 = vpop.permute.xlu0 %4520
      %v4524 = vsel %vm2148, %v4458, 0
      %v4527 = vsel %vm1949, %v4517, 0
      %4529 = vmatprep.subr.bf16.mxu0 0
      %4530 = vmatpush1.bf16.msra.mxu0 %v4515
      %4531 = vmatprep.subr.bf16.mxu0 0
      %4532 = vmatpush1.bf16.msra.mxu0 %v4516
      %4533 = vmatprep.subr.bf16.mxu0 0
      %4534 = vmatpush1.bf16.msra.mxu0 %v4527
      %4535 = vmatprep.subr.bf16.mxu0 0
      %4536 = vmatpush1.bf16.msra.mxu0 0
      %4537 = vmatprep.subr.bf16.mxu0 0
      %4538 = vmatpush1.bf16.msra.mxu0 0
      %4539 = vmatprep.subr.bf16.mxu0 0
      %4540 = vmatpush1.bf16.msra.mxu0 0
      %4541 = vmatprep.subr.bf16.mxu0 0
      %4542 = vmatpush1.bf16.msra.mxu0 0
      %4543 = vmatprep.subr.bf16.mxu0 0
      %4544 = vmatpush1.bf16.msra.mxu0 0
      %4545 = vmatprep.subr.bf16.mxu0 0
      %4546 = vmatpush1.bf16.msra.mxu0 0
      %4547 = vmatprep.subr.bf16.mxu0 0
      %4548 = vmatpush1.bf16.msra.mxu0 0
      %4549 = vmatprep.subr.bf16.mxu0 0
      %4550 = vmatpush1.bf16.msra.mxu0 0
      %4551 = vmatprep.subr.bf16.mxu0 0
      %4552 = vmatpush1.bf16.msra.mxu0 0
      %4553 = vmatprep.subr.bf16.mxu0 0
      %4554 = vmatpush1.bf16.msra.mxu0 0
      %4555 = vmatprep.subr.bf16.mxu0 0
      %4556 = vmatpush1.bf16.msra.mxu0 0
      %4557 = vmatprep.subr.bf16.mxu0 0
      %4558 = vmatpush1.bf16.msra.mxu0 0
      %4559 = vmatprep.subr.bf16.mxu0 0
      %4560 = vmatpush1.bf16.msra.mxu0 0
      %4561 = vmatprep.mubr.bf16.mxu0 0
      %4562 = vmatmul.mubr.bf16.gmra.mrb[0].mxu0 %v4524
      %v4563 = vpop.f32.mrb[0].mxu0
      %v4564 = vadd.f32 %v4521, %v4563
      %v4565 = vpop.f32.mrb[0].mxu0
      %v4566 = vpop.f32.mrb[0].mxu0
      %v4567 = vpop.f32.mrb[0].mxu0
      %4568 = vdwg.mxu0
      %vm4569 = vcmp.gt.f32.partialorder %v4564, 0.0
      %v4570 = vmin.f32 %v4564, 0.0
      %v4571 = vmul.f32 %v4570, 1.442695
      %v4572 = vpow.pop %v4571
      %v4573 = vsub.f32 %v4572, 1.0
      %v4574 = vsel %vm4569, %v4564, %v4573
      %v4575 = vld [vmem:[%s97] sm:$0xf]
      %v4576 = vld [vmem:[%s97 + $0x4] sm:$0xf]
      %v4577 = vpack.c.bf16 %v4574, %v4574
      %v4580 = vunpack.c.l.b16 %v4575
      %v4581 = vunpack.c.l.b16 %v4576
      %v4582 = vpack.c.b16 %v4581, %v4580
      %v4585 = vsel %vm1827, %v4577, 0
      %4587 = vmatprep.subr.bf16.mxu0 0
      %4588 = vmatpush1.bf16.msra.mxu0 %v4582
      %4589 = vmatprep.subr.bf16.mxu0 0
      %4590 = vmatpush1.bf16.msra.mxu0 0
      %4591 = vmatprep.subr.bf16.mxu0 0
      %4592 = vmatpush1.bf16.msra.mxu0 0
      %4593 = vmatprep.subr.bf16.mxu0 0
      %4594 = vmatpush1.bf16.msra.mxu0 0
      %4595 = vmatprep.subr.bf16.mxu0 0
      %4596 = vmatpush1.bf16.msra.mxu0 0
      %4597 = vmatprep.subr.bf16.mxu0 0
      %4598 = vmatpush1.bf16.msra.mxu0 0
      %4599 = vmatprep.subr.bf16.mxu0 0
      %4600 = vmatpush1.bf16.msra.mxu0 0
      %4601 = vmatprep.subr.bf16.mxu0 0
      %4602 = vmatpush1.bf16.msra.mxu0 0
      %4603 = vmatprep.subr.bf16.mxu0 0
      %4604 = vmatpush1.bf16.msra.mxu0 0
      %4605 = vmatprep.subr.bf16.mxu0 0
      %4606 = vmatpush1.bf16.msra.mxu0 0
      %4607 = vmatprep.subr.bf16.mxu0 0
      %4608 = vmatpush1.bf16.msra.mxu0 0
      %4609 = vmatprep.subr.bf16.mxu0 0
      %4610 = vmatpush1.bf16.msra.mxu0 0
      %4611 = vmatprep.subr.bf16.mxu0 0
      %4612 = vmatpush1.bf16.msra.mxu0 0
      %4613 = vmatprep.subr.bf16.mxu0 0
      %4614 = vmatpush1.bf16.msra.mxu0 0
      %4615 = vmatprep.subr.bf16.mxu0 0
      %4616 = vmatpush1.bf16.msra.mxu0 0
      %4617 = vmatprep.subr.bf16.mxu0 0
      %4618 = vmatpush1.bf16.msra.mxu0 0
      %4619 = vmatprep.mubr.bf16.mxu0 0
      %4620 = vmatmul.mubr.bf16.gmra.mrb[0].mxu0 %v4585
      %v4621 = vpop.f32.mrb[0].mxu0
      %v4622 = vadd.f32 0.0, %v4621
      %v4623 = vpop.f32.mrb[0].mxu0
      %v4624 = vpop.f32.mrb[0].mxu0
      %v4625 = vpop.f32.mrb[0].mxu0
      %4626 = vdwg.mxu0
      %v4627 = vld [vmem:[%s99] sm:$0x3]
      %v4628 = vld [vmem:[%s101] sm:$0xf]
      %4630 = vrot.lane.b32.xlu0 %v4622, 9
      %v4631 = vpop.permute.xlu0 %4630
      %v4633 = vsel %vm2642, 0.0, %v4631
      %v4634 = vsel %vm2645, %v4633, 0.0
      %4635 = vrot.lane.b32.xlu0 %v4622, 8
      %v4636 = vpop.permute.xlu0 %4635
      %v4638 = vsel %vm2650, 0.0, %v4636
      %4639 = vrot.lane.b32.xlu0 %v4622, 7
      %v4640 = vpop.permute.xlu0 %4639
      %v4642 = vsel %vm2655, 0.0, %v4640
      %v4643 = vsel %vm2658, %v4642, 0.0
      %4644 = vrot.lane.b32.xlu0 %v4622, 1
      %v4645 = vpop.permute.xlu0 %4644
      %v4647 = vsel %vm1850, 0.0, %v4645
      %v4648 = vsel %vm2645, %v4647, 0.0
      %4649 = vrot.lane.b32.xlu0 %v4622, 127
      %v4650 = vpop.permute.xlu0 %4649
      %v4652 = vsel %vm2668, %v4650, 0.0
      %v4653 = vsel %vm2658, %v4652, 0.0
      %4654 = vrot.lane.b32.xlu0 %v4622, 121
      %v4655 = vpop.permute.xlu0 %4654
      %v4657 = vsel %vm2674, %v4655, 0.0
      %v4658 = vsel %vm2645, %v4657, 0.0
      %4659 = vrot.lane.b32.xlu0 %v4622, 120
      %v4660 = vpop.permute.xlu0 %4659
      %v4662 = vsel %vm2680, %v4660, 0.0
      %4663 = vrot.lane.b32.xlu0 %v4622, 119
      %v4664 = vpop.permute.xlu0 %4663
      %v4666 = vsel %vm2685, %v4664, 0.0
      %v4667 = vsel %vm2658, %v4666, 0.0
      %v4669 = vrot.slane %v4638, 4
      %v4672 = vrot.slane %v4648, 4
      %v4675 = vrot.slane %v4653, 4
      %v4678 = vrot.slane %v4662, 4
      %v4680 = vsel %vm1943, %v4634, %v4669
      %v4681 = vsel %vm1943, %v4643, %v4672
      %v4682 = vsel %vm1943, %v4622, %v4675
      %v4683 = vsel %vm1943, %v4658, %v4678
      %v4684 = vpack.c.bf16 %v4681, %v4680
      %v4685 = vpack.c.bf16 %v4683, %v4682
      %v4686 = vpack.c.bf16 %v4667, %v4667
      %4688 = vset.pattern.permute.xlu0 0
      %4689 = vperm.xlu0 %4688, %v4628
      %v4690 = vpop.permute.xlu0 %4689
      %v4693 = vsel %vm2148, %v4627, 0
      %v4696 = vsel %vm1949, %v4686, 0
      %4698 = vmatprep.subr.bf16.mxu0 0
      %4699 = vmatpush1.bf16.msra.mxu0 %v4684
      %4700 = vmatprep.subr.bf16.mxu0 0
      %4701 = vmatpush1.bf16.msra.mxu0 %v4685
      %4702 = vmatprep.subr.bf16.mxu0 0
      %4703 = vmatpush1.bf16.msra.mxu0 %v4696
      %4704 = vmatprep.subr.bf16.mxu0 0
      %4705 = vmatpush1.bf16.msra.mxu0 0
      %4706 = vmatprep.subr.bf16.mxu0 0
      %4707 = vmatpush1.bf16.msra.mxu0 0
      %4708 = vmatprep.subr.bf16.mxu0 0
      %4709 = vmatpush1.bf16.msra.mxu0 0
      %4710 = vmatprep.subr.bf16.mxu0 0
      %4711 = vmatpush1.bf16.msra.mxu0 0
      %4712 = vmatprep.subr.bf16.mxu0 0
      %4713 = vmatpush1.bf16.msra.mxu0 0
      %4714 = vmatprep.subr.bf16.mxu0 0
      %4715 = vmatpush1.bf16.msra.mxu0 0
      %4716 = vmatprep.subr.bf16.mxu0 0
      %4717 = vmatpush1.bf16.msra.mxu0 0
      %4718 = vmatprep.subr.bf16.mxu0 0
      %4719 = vmatpush1.bf16.msra.mxu0 0
      %4720 = vmatprep.subr.bf16.mxu0 0
      %4721 = vmatpush1.bf16.msra.mxu0 0
      %4722 = vmatprep.subr.bf16.mxu0 0
      %4723 = vmatpush1.bf16.msra.mxu0 0
      %4724 = vmatprep.subr.bf16.mxu0 0
      %4725 = vmatpush1.bf16.msra.mxu0 0
      %4726 = vmatprep.subr.bf16.mxu0 0
      %4727 = vmatpush1.bf16.msra.mxu0 0
      %4728 = vmatprep.subr.bf16.mxu0 0
      %4729 = vmatpush1.bf16.msra.mxu0 0
      %4730 = vmatprep.mubr.bf16.mxu0 0
      %4731 = vmatmul.mubr.bf16.gmra.mrb[0].mxu0 %v4693
      %v4732 = vpop.f32.mrb[0].mxu0
      %v4733 = vadd.f32 %v4690, %v4732
      %v4734 = vpop.f32.mrb[0].mxu0
      %v4735 = vpop.f32.mrb[0].mxu0
      %v4736 = vpop.f32.mrb[0].mxu0
      %4737 = vdwg.mxu0
      %vm4738 = vcmp.gt.f32.partialorder %v4733, 0.0
      %v4739 = vmin.f32 %v4733, 0.0
      %v4740 = vmul.f32 %v4739, 1.442695
      %v4741 = vpow.pop %v4740
      %v4742 = vsub.f32 %v4741, 1.0
      %v4743 = vsel %vm4738, %v4733, %v4742
      %v4744 = vld [vmem:[%s103] sm:$0x3]
      %v4745 = vld [vmem:[%s105] sm:$0xf]
      %4747 = vrot.lane.b32.xlu0 %v4743, 9
      %v4748 = vpop.permute.xlu0 %4747
      %v4750 = vsel %vm2642, 0.0, %v4748
      %v4751 = vsel %vm2645, %v4750, 0.0
      %4752 = vrot.lane.b32.xlu0 %v4743, 8
      %v4753 = vpop.permute.xlu0 %4752
      %v4755 = vsel %vm2650, 0.0, %v4753
      %4756 = vrot.lane.b32.xlu0 %v4743, 7
      %v4757 = vpop.permute.xlu0 %4756
      %v4759 = vsel %vm2655, 0.0, %v4757
      %v4760 = vsel %vm2658, %v4759, 0.0
      %4761 = vrot.lane.b32.xlu0 %v4743, 1
      %v4762 = vpop.permute.xlu0 %4761
      %v4764 = vsel %vm1850, 0.0, %v4762
      %v4765 = vsel %vm2645, %v4764, 0.0
      %4766 = vrot.lane.b32.xlu0 %v4743, 127
      %v4767 = vpop.permute.xlu0 %4766
      %v4769 = vsel %vm2668, %v4767, 0.0
      %v4770 = vsel %vm2658, %v4769, 0.0
      %4771 = vrot.lane.b32.xlu0 %v4743, 121
      %v4772 = vpop.permute.xlu0 %4771
      %v4774 = vsel %vm2674, %v4772, 0.0
      %v4775 = vsel %vm2645, %v4774, 0.0
      %4776 = vrot.lane.b32.xlu0 %v4743, 120
      %v4777 = vpop.permute.xlu0 %4776
      %v4779 = vsel %vm2680, %v4777, 0.0
      %4780 = vrot.lane.b32.xlu0 %v4743, 119
      %v4781 = vpop.permute.xlu0 %4780
      %v4783 = vsel %vm2685, %v4781, 0.0
      %v4784 = vsel %vm2658, %v4783, 0.0
      %v4786 = vrot.slane %v4755, 4
      %v4789 = vrot.slane %v4765, 4
      %v4792 = vrot.slane %v4770, 4
      %v4795 = vrot.slane %v4779, 4
      %v4797 = vsel %vm1943, %v4751, %v4786
      %v4798 = vsel %vm1943, %v4760, %v4789
      %v4799 = vsel %vm1943, %v4743, %v4792
      %v4800 = vsel %vm1943, %v4775, %v4795
      %v4801 = vpack.c.bf16 %v4798, %v4797
      %v4802 = vpack.c.bf16 %v4800, %v4799
      %v4803 = vpack.c.bf16 %v4784, %v4784
      %4805 = vset.pattern.permute.xlu0 0
      %4806 = vperm.xlu0 %4805, %v4745
      %v4807 = vpop.permute.xlu0 %4806
      %v4810 = vsel %vm2148, %v4744, 0
      %v4813 = vsel %vm1949, %v4803, 0
      %4815 = vmatprep.subr.bf16.mxu0 0
      %4816 = vmatpush1.bf16.msra.mxu0 %v4801
      %4817 = vmatprep.subr.bf16.mxu0 0
      %4818 = vmatpush1.bf16.msra.mxu0 %v4802
      %4819 = vmatprep.subr.bf16.mxu0 0
      %4820 = vmatpush1.bf16.msra.mxu0 %v4813
      %4821 = vmatprep.subr.bf16.mxu0 0
      %4822 = vmatpush1.bf16.msra.mxu0 0
      %4823 = vmatprep.subr.bf16.mxu0 0
      %4824 = vmatpush1.bf16.msra.mxu0 0
      %4825 = vmatprep.subr.bf16.mxu0 0
      %4826 = vmatpush1.bf16.msra.mxu0 0
      %4827 = vmatprep.subr.bf16.mxu0 0
      %4828 = vmatpush1.bf16.msra.mxu0 0
      %4829 = vmatprep.subr.bf16.mxu0 0
      %4830 = vmatpush1.bf16.msra.mxu0 0
      %4831 = vmatprep.subr.bf16.mxu0 0
      %4832 = vmatpush1.bf16.msra.mxu0 0
      %4833 = vmatprep.subr.bf16.mxu0 0
      %4834 = vmatpush1.bf16.msra.mxu0 0
      %4835 = vmatprep.subr.bf16.mxu0 0
      %4836 = vmatpush1.bf16.msra.mxu0 0
      %4837 = vmatprep.subr.bf16.mxu0 0
      %4838 = vmatpush1.bf16.msra.mxu0 0
      %4839 = vmatprep.subr.bf16.mxu0 0
      %4840 = vmatpush1.bf16.msra.mxu0 0
      %4841 = vmatprep.subr.bf16.mxu0 0
      %4842 = vmatpush1.bf16.msra.mxu0 0
      %4843 = vmatprep.subr.bf16.mxu0 0
      %4844 = vmatpush1.bf16.msra.mxu0 0
      %4845 = vmatprep.subr.bf16.mxu0 0
      %4846 = vmatpush1.bf16.msra.mxu0 0
      %4847 = vmatprep.mubr.bf16.mxu0 0
      %4848 = vmatmul.mubr.bf16.gmra.mrb[0].mxu0 %v4810
      %v4849 = vpop.f32.mrb[0].mxu0
      %v4850 = vadd.f32 %v4807, %v4849
      %v4851 = vpop.f32.mrb[0].mxu0
      %v4852 = vpop.f32.mrb[0].mxu0
      %v4853 = vpop.f32.mrb[0].mxu0
      %4854 = vdwg.mxu0
      %vm4855 = vcmp.gt.f32.partialorder %v4850, 0.0
      %v4856 = vmin.f32 %v4850, 0.0
      %v4857 = vmul.f32 %v4856, 1.442695
      %v4858 = vpow.pop %v4857
      %v4859 = vsub.f32 %v4858, 1.0
      %v4860 = vsel %vm4855, %v4850, %v4859
      %v4861 = vld [vmem:[%s107] sm:$0xff]
      %v4862 = vld [vmem:[%s107 + $0x8] sm:$0xff]
      %v4863 = vld [vmem:[%s107 + $0x10] sm:$0xff]
      %v4864 = vld [vmem:[%s107 + $0x18] sm:$0xff]
      %v4865 = vld [vmem:[%s107 + $0x20] sm:$0xff]
      %v4866 = vld [vmem:[%s107 + $0x28] sm:$0xff]
      %v4867 = vld [vmem:[%s107 + $0x30] sm:$0xff]
      %v4868 = vld [vmem:[%s107 + $0x38] sm:$0xff]
      %v4869 = vpack.c.bf16 %v4860, %v4860
      %v4878 = vunpack.c.l.b16 %v4861
      %v4879 = vunpack.c.h.b16 %v4861
      %v4880 = vunpack.c.l.b16 %v4862
      %v4881 = vunpack.c.h.b16 %v4862
      %v4882 = vunpack.c.l.b16 %v4863
      %v4883 = vunpack.c.h.b16 %v4863
      %v4884 = vunpack.c.l.b16 %v4864
      %v4885 = vunpack.c.h.b16 %v4864
      %v4886 = vunpack.c.l.b16 %v4865
      %v4887 = vunpack.c.h.b16 %v4865
      %v4888 = vunpack.c.l.b16 %v4866
      %v4889 = vunpack.c.h.b16 %v4866
      %v4890 = vunpack.c.l.b16 %v4867
      %v4891 = vunpack.c.h.b16 %v4867
      %v4892 = vunpack.c.l.b16 %v4868
      %v4893 = vunpack.c.h.b16 %v4868
      %v4894 = vpack.c.b16 %v4880, %v4878
      %v4895 = vpack.c.b16 %v4881, %v4879
      %v4896 = vpack.c.b16 %v4884, %v4882
      %v4897 = vpack.c.b16 %v4885, %v4883
      %v4898 = vpack.c.b16 %v4888, %v4886
      %v4899 = vpack.c.b16 %v4889, %v4887
      %v4900 = vpack.c.b16 %v4892, %v4890
      %v4901 = vpack.c.b16 %v4893, %v4891
      %v4911 = vsel %vm2968, %v4869, 0
      %4913 = vmatprep.subr.bf16.mxu0 %v4895
      %4914 = vmatpush1.bf16.msra.mxu0 %v4894
      %4915 = vmatprep.subr.bf16.mxu0 %v4897
      %4916 = vmatpush1.bf16.msra.mxu0 %v4896
      %4917 = vmatprep.subr.bf16.mxu0 %v4899
      %4918 = vmatpush1.bf16.msra.mxu0 %v4898
      %4919 = vmatprep.subr.bf16.mxu0 %v4901
      %4920 = vmatpush1.bf16.msra.mxu0 %v4900
      %4921 = vmatprep.subr.bf16.mxu0 0
      %4922 = vmatpush1.bf16.msra.mxu0 0
      %4923 = vmatprep.subr.bf16.mxu0 0
      %4924 = vmatpush1.bf16.msra.mxu0 0
      %4925 = vmatprep.subr.bf16.mxu0 0
      %4926 = vmatpush1.bf16.msra.mxu0 0
      %4927 = vmatprep.subr.bf16.mxu0 0
      %4928 = vmatpush1.bf16.msra.mxu0 0
      %4929 = vmatprep.subr.bf16.mxu0 0
      %4930 = vmatpush1.bf16.msra.mxu0 0
      %4931 = vmatprep.subr.bf16.mxu0 0
      %4932 = vmatpush1.bf16.msra.mxu0 0
      %4933 = vmatprep.subr.bf16.mxu0 0
      %4934 = vmatpush1.bf16.msra.mxu0 0
      %4935 = vmatprep.subr.bf16.mxu0 0
      %4936 = vmatpush1.bf16.msra.mxu0 0
      %4937 = vmatprep.subr.bf16.mxu0 0
      %4938 = vmatpush1.bf16.msra.mxu0 0
      %4939 = vmatprep.subr.bf16.mxu0 0
      %4940 = vmatpush1.bf16.msra.mxu0 0
      %4941 = vmatprep.subr.bf16.mxu0 0
      %4942 = vmatpush1.bf16.msra.mxu0 0
      %4943 = vmatprep.subr.bf16.mxu0 0
      %4944 = vmatpush1.bf16.msra.mxu0 0
      %4945 = vmatprep.mubr.bf16.mxu0 0
      %4946 = vmatmul.mubr.bf16.gmra.mrb[0].mxu0 %v4911
      %v4947 = vpop.f32.mrb[0].mxu0
      %v4948 = vadd.f32 0.0, %v4947
      %v4949 = vpop.f32.mrb[0].mxu0
      %v4950 = vadd.f32 0.0, %v4949
      %v4951 = vpop.f32.mrb[0].mxu0
      %v4952 = vpop.f32.mrb[0].mxu0
      %4953 = vdwg.mxu0
      %v4954 = vld [vmem:[%s109] sm:$0x3]
      %v4955 = vld [vmem:[%s111] sm:$0xf]
      %4958 = vrot.lane.b32.xlu0 %v4948, 17
      %v4959 = vpop.permute.xlu0 %4958
      %4960 = vrot.lane.b32.xlu0 %v4950, 17
      %v4961 = vpop.permute.xlu0 %4960
      %v4962 = vsel %vm1812, %v4959, %v4961
      %v4965 = vsel %vm1812, 0.0, %v4959
      %v4966 = vsel %vm1819, %v4965, 0.0
      %v4967 = vsel %vm1820, %v4962, 0.0
      %4968 = vrot.lane.b32.xlu0 %v4948, 16
      %v4969 = vpop.permute.xlu0 %4968
      %4970 = vrot.lane.b32.xlu0 %v4950, 16
      %v4971 = vpop.permute.xlu0 %4970
      %v4972 = vsel %vm1827, %v4969, %v4971
      %v4974 = vsel %vm1827, 0.0, %v4969
      %4975 = vrot.lane.b32.xlu0 %v4948, 15
      %v4976 = vpop.permute.xlu0 %4975
      %4977 = vrot.lane.b32.xlu0 %v4950, 15
      %v4978 = vpop.permute.xlu0 %4977
      %v4979 = vsel %vm1835, %v4976, %v4978
      %v4982 = vsel %vm1835, 0.0, %v4976
      %v4983 = vsel %vm1842, %v4982, 0.0
      %v4984 = vsel %vm1843, %v4979, 0.0
      %4985 = vrot.lane.b32.xlu0 %v4948, 1
      %v4986 = vpop.permute.xlu0 %4985
      %4987 = vrot.lane.b32.xlu0 %v4950, 1
      %v4988 = vpop.permute.xlu0 %4987
      %v4989 = vsel %vm1850, %v4986, %v4988
      %v4992 = vsel %vm1850, 0.0, %v4986
      %v4993 = vsel %vm1819, %v4992, 0.0
      %v4994 = vsel %vm1820, %v4989, 0.0
      %4995 = vrot.lane.b32.xlu0 %v4948, 127
      %v4996 = vpop.permute.xlu0 %4995
      %4997 = vrot.lane.b32.xlu0 %v4950, 127
      %v4998 = vpop.permute.xlu0 %4997
      %v4999 = vsel %vm1861, %v4996, %v4998
      %v5002 = vsel %vm1861, %v4998, 0.0
      %v5003 = vsel %vm1842, %v4999, 0.0
      %v5004 = vsel %vm1843, %v5002, 0.0
      %5005 = vrot.lane.b32.xlu0 %v4948, 113
      %v5006 = vpop.permute.xlu0 %5005
      %5007 = vrot.lane.b32.xlu0 %v4950, 113
      %v5008 = vpop.permute.xlu0 %5007
      %v5009 = vsel %vm1872, %v5006, %v5008
      %v5012 = vsel %vm1872, %v5008, 0.0
      %v5013 = vsel %vm1819, %v5009, 0.0
      %v5014 = vsel %vm1820, %v5012, 0.0
      %5015 = vrot.lane.b32.xlu0 %v4948, 112
      %v5016 = vpop.permute.xlu0 %5015
      %5017 = vrot.lane.b32.xlu0 %v4950, 112
      %v5018 = vpop.permute.xlu0 %5017
      %v5019 = vsel %vm1883, %v5016, %v5018
      %v5021 = vsel %vm1883, %v5018, 0.0
      %5022 = vrot.lane.b32.xlu0 %v4948, 111
      %v5023 = vpop.permute.xlu0 %5022
      %5024 = vrot.lane.b32.xlu0 %v4950, 111
      %v5025 = vpop.permute.xlu0 %5024
      %v5026 = vsel %vm1891, %v5023, %v5025
      %v5029 = vsel %vm1891, %v5025, 0.0
      %v5030 = vsel %vm1842, %v5026, 0.0
      %v5031 = vsel %vm1843, %v5029, 0.0
      %v5033 = vrot.slane %v4974, 4
      %v5034 = vrot.slane %v4972, 4
      %v5039 = vrot.slane %v4993, 4
      %v5040 = vrot.slane %v4994, 4
      %v5045 = vrot.slane %v5003, 4
      %v5046 = vrot.slane %v5004, 4
      %v5050 = vrot.slane %v5019, 4
      %v5051 = vrot.slane %v5021, 4
      %v5054 = vsel %vm1943, %v4966, %v5033
      %v5055 = vsel %vm1943, %v4967, %v5034
      %v5056 = vsel %vm1943, %v4983, %v5039
      %v5057 = vsel %vm1943, %v4984, %v5040
      %v5058 = vsel %vm1943, %v4948, %v5045
      %v5059 = vsel %vm1943, %v4950, %v5046
      %v5060 = vsel %vm1943, %v5013, %v5050
      %v5061 = vsel %vm1943, %v5014, %v5051
      %v5062 = vpack.c.bf16 %v5056, %v5054
      %v5063 = vpack.c.bf16 %v5057, %v5055
      %v5064 = vpack.c.bf16 %v5060, %v5058
      %v5065 = vpack.c.bf16 %v5061, %v5059
      %v5066 = vpack.c.bf16 %v5030, %v5030
      %v5067 = vpack.c.bf16 %v5031, %v5031
      %5069 = vset.pattern.permute.xlu0 0
      %5070 = vperm.xlu0 %5069, %v4955
      %v5071 = vpop.permute.xlu0 %5070
      %v5074 = vsel %vm2148, %v4954, 0
      %v5077 = vsel %vm1949, %v5066, 0
      %v5080 = vsel %vm1949, %v5067, 0
      %5082 = vmatprep.subr.bf16.mxu0 %v5063
      %5083 = vmatpush1.bf16.msra.mxu0 %v5062
      %5084 = vmatprep.subr.bf16.mxu0 %v5065
      %5085 = vmatpush1.bf16.msra.mxu0 %v5064
      %5086 = vmatprep.subr.bf16.mxu0 %v5080
      %5087 = vmatpush1.bf16.msra.mxu0 %v5077
      %5088 = vmatprep.subr.bf16.mxu0 0
      %5089 = vmatpush1.bf16.msra.mxu0 0
      %5090 = vmatprep.subr.bf16.mxu0 0
      %5091 = vmatpush1.bf16.msra.mxu0 0
      %5092 = vmatprep.subr.bf16.mxu0 0
      %5093 = vmatpush1.bf16.msra.mxu0 0
      %5094 = vmatprep.subr.bf16.mxu0 0
      %5095 = vmatpush1.bf16.msra.mxu0 0
      %5096 = vmatprep.subr.bf16.mxu0 0
      %5097 = vmatpush1.bf16.msra.mxu0 0
      %5098 = vmatprep.subr.bf16.mxu0 0
      %5099 = vmatpush1.bf16.msra.mxu0 0
      %5100 = vmatprep.subr.bf16.mxu0 0
      %5101 = vmatpush1.bf16.msra.mxu0 0
      %5102 = vmatprep.subr.bf16.mxu0 0
      %5103 = vmatpush1.bf16.msra.mxu0 0
      %5104 = vmatprep.subr.bf16.mxu0 0
      %5105 = vmatpush1.bf16.msra.mxu0 0
      %5106 = vmatprep.subr.bf16.mxu0 0
      %5107 = vmatpush1.bf16.msra.mxu0 0
      %5108 = vmatprep.subr.bf16.mxu0 0
      %5109 = vmatpush1.bf16.msra.mxu0 0
      %5110 = vmatprep.subr.bf16.mxu0 0
      %5111 = vmatpush1.bf16.msra.mxu0 0
      %5112 = vmatprep.subr.bf16.mxu0 0
      %5113 = vmatpush1.bf16.msra.mxu0 0
      %5114 = vmatprep.mubr.bf16.mxu0 0
      %5115 = vmatmul.mubr.bf16.gmra.mrb[0].mxu0 %v5074
      %v5116 = vpop.f32.mrb[0].mxu0
      %v5117 = vadd.f32 %v5071, %v5116
      %v5118 = vpop.f32.mrb[0].mxu0
      %v5119 = vadd.f32 %v5071, %v5118
      %v5120 = vpop.f32.mrb[0].mxu0
      %v5121 = vpop.f32.mrb[0].mxu0
      %5122 = vdwg.mxu0
      %vm5123 = vcmp.gt.f32.partialorder %v5117, 0.0
      %vm5124 = vcmp.gt.f32.partialorder %v5119, 0.0
      %v5125 = vmin.f32 %v5117, 0.0
      %v5126 = vmin.f32 %v5119, 0.0
      %v5127 = vmul.f32 %v5125, 1.442695
      %v5128 = vpow.pop %v5127
      %v5129 = vmul.f32 %v5126, 1.442695
      %v5130 = vpow.pop %v5129
      %v5131 = vsub.f32 %v5128, 1.0
      %v5132 = vsub.f32 %v5130, 1.0
      %v5133 = vsel %vm5123, %v5117, %v5131
      %v5134 = vsel %vm5124, %v5119, %v5132
      %v5135 = vld [vmem:[%s113] sm:$0x3]
      %v5136 = vld [vmem:[%s115] sm:$0xf]
      %5139 = vrot.lane.b32.xlu0 %v5133, 17
      %v5140 = vpop.permute.xlu0 %5139
      %5141 = vrot.lane.b32.xlu0 %v5134, 17
      %v5142 = vpop.permute.xlu0 %5141
      %v5143 = vsel %vm1812, %v5140, %v5142
      %v5146 = vsel %vm1812, 0.0, %v5140
      %v5147 = vsel %vm1819, %v5146, 0.0
      %v5148 = vsel %vm1820, %v5143, 0.0
      %5149 = vrot.lane.b32.xlu0 %v5133, 16
      %v5150 = vpop.permute.xlu0 %5149
      %5151 = vrot.lane.b32.xlu0 %v5134, 16
      %v5152 = vpop.permute.xlu0 %5151
      %v5153 = vsel %vm1827, %v5150, %v5152
      %v5155 = vsel %vm1827, 0.0, %v5150
      %5156 = vrot.lane.b32.xlu0 %v5133, 15
      %v5157 = vpop.permute.xlu0 %5156
      %5158 = vrot.lane.b32.xlu0 %v5134, 15
      %v5159 = vpop.permute.xlu0 %5158
      %v5160 = vsel %vm1835, %v5157, %v5159
      %v5163 = vsel %vm1835, 0.0, %v5157
      %v5164 = vsel %vm1842, %v5163, 0.0
      %v5165 = vsel %vm1843, %v5160, 0.0
      %5166 = vrot.lane.b32.xlu0 %v5133, 1
      %v5167 = vpop.permute.xlu0 %5166
      %5168 = vrot.lane.b32.xlu0 %v5134, 1
      %v5169 = vpop.permute.xlu0 %5168
      %v5170 = vsel %vm1850, %v5167, %v5169
      %v5173 = vsel %vm1850, 0.0, %v5167
      %v5174 = vsel %vm1819, %v5173, 0.0
      %v5175 = vsel %vm1820, %v5170, 0.0
      %5176 = vrot.lane.b32.xlu0 %v5133, 127
      %v5177 = vpop.permute.xlu0 %5176
      %5178 = vrot.lane.b32.xlu0 %v5134, 127
      %v5179 = vpop.permute.xlu0 %5178
      %v5180 = vsel %vm1861, %v5177, %v5179
      %v5183 = vsel %vm1861, %v5179, 0.0
      %v5184 = vsel %vm1842, %v5180, 0.0
      %v5185 = vsel %vm1843, %v5183, 0.0
      %5186 = vrot.lane.b32.xlu0 %v5133, 113
      %v5187 = vpop.permute.xlu0 %5186
      %5188 = vrot.lane.b32.xlu0 %v5134, 113
      %v5189 = vpop.permute.xlu0 %5188
      %v5190 = vsel %vm1872, %v5187, %v5189
      %v5193 = vsel %vm1872, %v5189, 0.0
      %v5194 = vsel %vm1819, %v5190, 0.0
      %v5195 = vsel %vm1820, %v5193, 0.0
      %5196 = vrot.lane.b32.xlu0 %v5133, 112
      %v5197 = vpop.permute.xlu0 %5196
      %5198 = vrot.lane.b32.xlu0 %v5134, 112
      %v5199 = vpop.permute.xlu0 %5198
      %v5200 = vsel %vm1883, %v5197, %v5199
      %v5202 = vsel %vm1883, %v5199, 0.0
      %5203 = vrot.lane.b32.xlu0 %v5133, 111
      %v5204 = vpop.permute.xlu0 %5203
      %5205 = vrot.lane.b32.xlu0 %v5134, 111
      %v5206 = vpop.permute.xlu0 %5205
      %v5207 = vsel %vm1891, %v5204, %v5206
      %v5210 = vsel %vm1891, %v5206, 0.0
      %v5211 = vsel %vm1842, %v5207, 0.0
      %v5212 = vsel %vm1843, %v5210, 0.0
      %v5214 = vrot.slane %v5155, 4
      %v5215 = vrot.slane %v5153, 4
      %v5220 = vrot.slane %v5174, 4
      %v5221 = vrot.slane %v5175, 4
      %v5226 = vrot.slane %v5184, 4
      %v5227 = vrot.slane %v5185, 4
      %v5231 = vrot.slane %v5200, 4
      %v5232 = vrot.slane %v5202, 4
      %v5235 = vsel %vm1943, %v5147, %v5214
      %v5236 = vsel %vm1943, %v5148, %v5215
      %v5237 = vsel %vm1943, %v5164, %v5220
      %v5238 = vsel %vm1943, %v5165, %v5221
      %v5239 = vsel %vm1943, %v5133, %v5226
      %v5240 = vsel %vm1943, %v5134, %v5227
      %v5241 = vsel %vm1943, %v5194, %v5231
      %v5242 = vsel %vm1943, %v5195, %v5232
      %v5243 = vpack.c.bf16 %v5237, %v5235
      %v5244 = vpack.c.bf16 %v5238, %v5236
      %v5245 = vpack.c.bf16 %v5241, %v5239
      %v5246 = vpack.c.bf16 %v5242, %v5240
      %v5247 = vpack.c.bf16 %v5211, %v5211
      %v5248 = vpack.c.bf16 %v5212, %v5212
      %5250 = vset.pattern.permute.xlu0 0
      %5251 = vperm.xlu0 %5250, %v5136
      %v5252 = vpop.permute.xlu0 %5251
      %v5255 = vsel %vm2148, %v5135, 0
      %v5258 = vsel %vm1949, %v5247, 0
      %v5261 = vsel %vm1949, %v5248, 0
      %5263 = vmatprep.subr.bf16.mxu0 %v5244
      %5264 = vmatpush1.bf16.msra.mxu0 %v5243
      %5265 = vmatprep.subr.bf16.mxu0 %v5246
      %5266 = vmatpush1.bf16.msra.mxu0 %v5245
      %5267 = vmatprep.subr.bf16.mxu0 %v5261
      %5268 = vmatpush1.bf16.msra.mxu0 %v5258
      %5269 = vmatprep.subr.bf16.mxu0 0
      %5270 = vmatpush1.bf16.msra.mxu0 0
      %5271 = vmatprep.subr.bf16.mxu0 0
      %5272 = vmatpush1.bf16.msra.mxu0 0
      %5273 = vmatprep.subr.bf16.mxu0 0
      %5274 = vmatpush1.bf16.msra.mxu0 0
      %5275 = vmatprep.subr.bf16.mxu0 0
      %5276 = vmatpush1.bf16.msra.mxu0 0
      %5277 = vmatprep.subr.bf16.mxu0 0
      %5278 = vmatpush1.bf16.msra.mxu0 0
      %5279 = vmatprep.subr.bf16.mxu0 0
      %5280 = vmatpush1.bf16.msra.mxu0 0
      %5281 = vmatprep.subr.bf16.mxu0 0
      %5282 = vmatpush1.bf16.msra.mxu0 0
      %5283 = vmatprep.subr.bf16.mxu0 0
      %5284 = vmatpush1.bf16.msra.mxu0 0
      %5285 = vmatprep.subr.bf16.mxu0 0
      %5286 = vmatpush1.bf16.msra.mxu0 0
      %5287 = vmatprep.subr.bf16.mxu0 0
      %5288 = vmatpush1.bf16.msra.mxu0 0
      %5289 = vmatprep.subr.bf16.mxu0 0
      %5290 = vmatpush1.bf16.msra.mxu0 0
      %5291 = vmatprep.subr.bf16.mxu0 0
      %5292 = vmatpush1.bf16.msra.mxu0 0
      %5293 = vmatprep.subr.bf16.mxu0 0
      %5294 = vmatpush1.bf16.msra.mxu0 0
      %5295 = vmatprep.mubr.bf16.mxu0 0
      %5296 = vmatmul.mubr.bf16.gmra.mrb[0].mxu0 %v5255
      %v5297 = vpop.f32.mrb[0].mxu0
      %v5298 = vadd.f32 %v5252, %v5297
      %v5299 = vpop.f32.mrb[0].mxu0
      %v5300 = vadd.f32 %v5252, %v5299
      %v5301 = vpop.f32.mrb[0].mxu0
      %v5302 = vpop.f32.mrb[0].mxu0
      %5303 = vdwg.mxu0
      %vm5304 = vcmp.gt.f32.partialorder %v5298, 0.0
      %vm5305 = vcmp.gt.f32.partialorder %v5300, 0.0
      %v5306 = vmin.f32 %v5298, 0.0
      %v5307 = vmin.f32 %v5300, 0.0
      %v5308 = vmul.f32 %v5306, 1.442695
      %v5309 = vpow.pop %v5308
      %v5310 = vmul.f32 %v5307, 1.442695
      %v5311 = vpow.pop %v5310
      %v5312 = vsub.f32 %v5309, 1.0
      %v5313 = vsub.f32 %v5311, 1.0
      %v5314 = vsel %vm5304, %v5298, %v5312
      %v5315 = vsel %vm5305, %v5300, %v5313
      %v5316 = vld [vmem:[%s117] sm:$0x3]
      %v5317 = vld [vmem:[%s119] sm:$0x7]
      %5320 = vrot.lane.b32.xlu0 %v5314, 17
      %v5321 = vpop.permute.xlu0 %5320
      %5322 = vrot.lane.b32.xlu0 %v5315, 17
      %v5323 = vpop.permute.xlu0 %5322
      %v5324 = vsel %vm1812, %v5321, %v5323
      %v5327 = vsel %vm1812, 0.0, %v5321
      %v5328 = vsel %vm1819, %v5327, 0.0
      %v5329 = vsel %vm1820, %v5324, 0.0
      %5330 = vrot.lane.b32.xlu0 %v5314, 16
      %v5331 = vpop.permute.xlu0 %5330
      %5332 = vrot.lane.b32.xlu0 %v5315, 16
      %v5333 = vpop.permute.xlu0 %5332
      %v5334 = vsel %vm1827, %v5331, %v5333
      %v5336 = vsel %vm1827, 0.0, %v5331
      %5337 = vrot.lane.b32.xlu0 %v5314, 15
      %v5338 = vpop.permute.xlu0 %5337
      %5339 = vrot.lane.b32.xlu0 %v5315, 15
      %v5340 = vpop.permute.xlu0 %5339
      %v5341 = vsel %vm1835, %v5338, %v5340
      %v5344 = vsel %vm1835, 0.0, %v5338
      %v5345 = vsel %vm1842, %v5344, 0.0
      %v5346 = vsel %vm1843, %v5341, 0.0
      %5347 = vrot.lane.b32.xlu0 %v5314, 1
      %v5348 = vpop.permute.xlu0 %5347
      %5349 = vrot.lane.b32.xlu0 %v5315, 1
      %v5350 = vpop.permute.xlu0 %5349
      %v5351 = vsel %vm1850, %v5348, %v5350
      %v5354 = vsel %vm1850, 0.0, %v5348
      %v5355 = vsel %vm1819, %v5354, 0.0
      %v5356 = vsel %vm1820, %v5351, 0.0
      %5357 = vrot.lane.b32.xlu0 %v5314, 127
      %v5358 = vpop.permute.xlu0 %5357
      %5359 = vrot.lane.b32.xlu0 %v5315, 127
      %v5360 = vpop.permute.xlu0 %5359
      %v5361 = vsel %vm1861, %v5358, %v5360
      %v5364 = vsel %vm1861, %v5360, 0.0
      %v5365 = vsel %vm1842, %v5361, 0.0
      %v5366 = vsel %vm1843, %v5364, 0.0
      %5367 = vrot.lane.b32.xlu0 %v5314, 113
      %v5368 = vpop.permute.xlu0 %5367
      %5369 = vrot.lane.b32.xlu0 %v5315, 113
      %v5370 = vpop.permute.xlu0 %5369
      %v5371 = vsel %vm1872, %v5368, %v5370
      %v5374 = vsel %vm1872, %v5370, 0.0
      %v5375 = vsel %vm1819, %v5371, 0.0
      %v5376 = vsel %vm1820, %v5374, 0.0
      %5377 = vrot.lane.b32.xlu0 %v5314, 112
      %v5378 = vpop.permute.xlu0 %5377
      %5379 = vrot.lane.b32.xlu0 %v5315, 112
      %v5380 = vpop.permute.xlu0 %5379
      %v5381 = vsel %vm1883, %v5378, %v5380
      %v5383 = vsel %vm1883, %v5380, 0.0
      %5384 = vrot.lane.b32.xlu0 %v5314, 111
      %v5385 = vpop.permute.xlu0 %5384
      %5386 = vrot.lane.b32.xlu0 %v5315, 111
      %v5387 = vpop.permute.xlu0 %5386
      %v5388 = vsel %vm1891, %v5385, %v5387
      %v5391 = vsel %vm1891, %v5387, 0.0
      %v5392 = vsel %vm1842, %v5388, 0.0
      %v5393 = vsel %vm1843, %v5391, 0.0
      %v5395 = vrot.slane %v5336, 4
      %v5396 = vrot.slane %v5334, 4
      %v5401 = vrot.slane %v5355, 4
      %v5402 = vrot.slane %v5356, 4
      %v5407 = vrot.slane %v5365, 4
      %v5408 = vrot.slane %v5366, 4
      %v5412 = vrot.slane %v5381, 4
      %v5413 = vrot.slane %v5383, 4
      %v5416 = vsel %vm1943, %v5328, %v5395
      %v5417 = vsel %vm1943, %v5329, %v5396
      %v5418 = vsel %vm1943, %v5345, %v5401
      %v5419 = vsel %vm1943, %v5346, %v5402
      %v5420 = vsel %vm1943, %v5314, %v5407
      %v5421 = vsel %vm1943, %v5315, %v5408
      %v5422 = vsel %vm1943, %v5375, %v5412
      %v5423 = vsel %vm1943, %v5376, %v5413
      %v5424 = vpack.c.bf16 %v5418, %v5416
      %v5425 = vpack.c.bf16 %v5419, %v5417
      %v5426 = vpack.c.bf16 %v5422, %v5420
      %v5427 = vpack.c.bf16 %v5423, %v5421
      %v5428 = vpack.c.bf16 %v5392, %v5392
      %v5429 = vpack.c.bf16 %v5393, %v5393
      %5431 = vset.pattern.permute.xlu0 0
      %5432 = vperm.xlu0 %5431, %v5317
      %v5433 = vpop.permute.xlu0 %5432
      %v5436 = vsel %vm2148, %v5316, 0
      %v5439 = vsel %vm1949, %v5428, 0
      %v5442 = vsel %vm1949, %v5429, 0
      %5444 = vmatprep.subr.bf16.mxu0 %v5425
      %5445 = vmatpush1.bf16.msra.mxu0 %v5424
      %5446 = vmatprep.subr.bf16.mxu0 %v5427
      %5447 = vmatpush1.bf16.msra.mxu0 %v5426
      %5448 = vmatprep.subr.bf16.mxu0 %v5442
      %5449 = vmatpush1.bf16.msra.mxu0 %v5439
      %5450 = vmatprep.subr.bf16.mxu0 0
      %5451 = vmatpush1.bf16.msra.mxu0 0
      %5452 = vmatprep.subr.bf16.mxu0 0
      %5453 = vmatpush1.bf16.msra.mxu0 0
      %5454 = vmatprep.subr.bf16.mxu0 0
      %5455 = vmatpush1.bf16.msra.mxu0 0
      %5456 = vmatprep.subr.bf16.mxu0 0
      %5457 = vmatpush1.bf16.msra.mxu0 0
      %5458 = vmatprep.subr.bf16.mxu0 0
      %5459 = vmatpush1.bf16.msra.mxu0 0
      %5460 = vmatprep.subr.bf16.mxu0 0
      %5461 = vmatpush1.bf16.msra.mxu0 0
      %5462 = vmatprep.subr.bf16.mxu0 0
      %5463 = vmatpush1.bf16.msra.mxu0 0
      %5464 = vmatprep.subr.bf16.mxu0 0
      %5465 = vmatpush1.bf16.msra.mxu0 0
      %5466 = vmatprep.subr.bf16.mxu0 0
      %5467 = vmatpush1.bf16.msra.mxu0 0
      %5468 = vmatprep.subr.bf16.mxu0 0
      %5469 = vmatpush1.bf16.msra.mxu0 0
      %5470 = vmatprep.subr.bf16.mxu0 0
      %5471 = vmatpush1.bf16.msra.mxu0 0
      %5472 = vmatprep.subr.bf16.mxu0 0
      %5473 = vmatpush1.bf16.msra.mxu0 0
      %5474 = vmatprep.subr.bf16.mxu0 0
      %5475 = vmatpush1.bf16.msra.mxu0 0
      %5476 = vmatprep.mubr.bf16.mxu0 0
      %5477 = vmatmul.mubr.bf16.gmra.mrb[0].mxu0 %v5436
      %v5478 = vpop.f32.mrb[0].mxu0
      %v5479 = vadd.f32 %v5433, %v5478
      %v5480 = vpop.f32.mrb[0].mxu0
      %v5481 = vadd.f32 %v5433, %v5480
      %v5482 = vpop.f32.mrb[0].mxu0
      %v5483 = vpop.f32.mrb[0].mxu0
      %5484 = vdwg.mxu0
      %v5485 = vtanh.pop %v5479
      %v5486 = vtanh.pop %v5481
      %v5489 = vcombine.low %v5485, %v5486
      %5491 = vst [vmem:[%s1770] sm:$0x77] %v5489
      %p5492 = scmp.lt.s32.totalorder %s132, 1
      %s5493 = scalar_select %p5492, %s132, 1
      %s5494 = smul.addr %s5493, 2
      %s5495 = smul.addr %s5494, 4
      %s5496 = scalar_lea.vmem %s121, %s5495
      // Predicated region
      $region261: #{d_forward.1} parent=259 // pred_check
        %p5497 = pneg %p1415
      $region262: #{d_forward.1} parent=259 // pred_check_branch
        %5499 = sbr.rel (%p5497) target = $region264
      $region263: #{d_forward.1} parent=259 // pred_region
        _
      $region264: #{d_forward.1} parent=259 // pred_fallthru
        _
    $region260: #{d_forward.1} parent=5 // pred_fallthru
      _
    %p5500 = scmp.le.s32.totalorder 2, %s127
    // Predicated region
    $region265: #{d_forward.1} parent=5 // pred_check
      %p5501 = pneg %p5500
    $region266: #{d_forward.1} parent=5 // pred_check_branch
      %5503 = sbr.rel (%p5501) target = $region268
    $region267: #{d_forward.1} parent=5 // pred_region
      %s5504 = ssub.s32 %s127, 2
      // Predicated region
      $region269: #{d_forward.1} parent=267 // pred_check
        %p5505 = pneg %p1421
      $region270: #{d_forward.1} parent=267 // pred_check_branch
        %5507 = sbr.rel (%p5505) target = $region272
      $region271: #{d_forward.1} parent=267 // pred_region
        %p5508 = scmp.lt.s32.totalorder %s133, 1
        %s5509 = scalar_select %p5508, %s133, 1
        %s5510 = smul.addr %s5509, 2
        %s5511 = smul.addr %s5510, 4
        %s5512 = scalar_lea.vmem %s121, %s5511
      $region272: #{d_forward.1} parent=267 // pred_fallthru
        _
    $region268: #{d_forward.1} parent=5 // pred_fallthru
      _
  $region6: #{d_forward.1} parent=0 // loop_footer
    %s131 = sadd.s32 1, %s127
  $region7: #{d_forward.1} parent=0 // loop_footer_branch
    %126 = sbr.rel target = $region3
  $region8: #{d_forward.1} parent=0 // loop_exit
    _

</llo_original>
